<compile_context>
chip_gen: v6e
topology: v6e:2x2x1
jax: 0.10.0
libtpu: 0.0.40
codegen_flags: <defaults>
</compile_context>

<pallas_src>
import jax
import jax.numpy as jnp
import numpy as np
from jax import lax
from jax.experimental import pallas as pl
from jax.experimental.pallas import tpu as pltpu


LEAK = 0.2
PADL = 8          # interior start column inside the padded scratch (sublane aligned)


def _leaky(v):
    return jnp.where(v > 0, v, LEAK * v)


def discrim_block_kernel(x_ref, w1_ref, b1_ref, w2_ref, b2_ref, o_ref,
                         pad_ref, vblur_ref, acc1_ref,
                         cols0_ref, cols1_ref, cols2_ref):
    """One batch element per grid step.

    x_ref  : (1, H, W, Cin)        VMEM input tile (f32)
    w1_ref : (9, Cin, Cin)         conv1 weights, tap-major, bf16, LR-scaled
    b1_ref : (1, Cin)              f32
    w2_ref : (9, Cin, Cout)        conv2 weights, tap-major, bf16, LR-scaled, /16 folded in
    b2_ref : (1, Cout)             f32
    o_ref  : (1, H2*W2, Cout)      f32 output block (doubles as conv2 accumulator)

    pad_ref  : (H+2, W+16, Cin)    zero-haloed image, interior at cols [PADL, PADL+W)
    vblur_ref: (H,   W+16, Cin)    vertical [1,2,1] blur pass
    acc1_ref : (H*W, Cin)          f32 accumulator for conv1
    cols*_ref: (H+2, W2, Cin)      stride-2 column phase slabs for conv2 (one per dx)
    """
    H, W, Cin = x_ref.shape[1], x_ref.shape[2], x_ref.shape[3]
    Cout = o_ref.shape[2]
    Wp = pad_ref.shape[1]
    H2, W2 = H // 2, W // 2
    cols_refs = (cols0_ref, cols1_ref, cols2_ref)

    # ---- zero only the halo strips that are ever read (aligned widths).
    # The interior [1:H+1, PADL:PADL+W) is fully overwritten every step and no
    # stage ever writes the halo, so this is all the zeroing that is needed.
    pad_ref[0:1, :, :] = jnp.zeros((1, Wp, Cin), jnp.float32)
    pad_ref[H + 1:H + 2, :, :] = jnp.zeros((1, Wp, Cin), jnp.float32)
    pad_ref[1:H + 1, 0:PADL, :] = jnp.zeros((H, PADL, Cin), jnp.float32)
    pad_ref[1:H + 1, PADL + W:Wp, :] = jnp.zeros((H, Wp - PADL - W, Cin), jnp.float32)

    # ---- conv1: EqualizedLRConv2d (Cin -> Cin, 3x3, pad 1), tap-accumulate --
    pad_ref[1:H + 1, PADL:PADL + W, :] = x_ref[0]          # aligned interior store
    for dy in range(3):
        for dx in range(3):
            t = dy * 3 + dx
            c0 = PADL - 1 + dx
            patch = pad_ref[dy:dy + H, c0:c0 + W, :].reshape(H * W, Cin)
            contrib = jnp.dot(patch.astype(jnp.bfloat16), w1_ref[t],
                              preferred_element_type=jnp.float32)
            if t == 0:
                acc1_ref[...] = contrib                    # no separate zero-init pass
            else:
                acc1_ref[...] += contrib
    h = _leaky(acc1_ref[...] + b1_ref[...]).reshape(H, W, Cin)

    # ---- BlurLayer: separable [1,2,1] x [1,2,1]; 1/16 folded into w2 --------
    pad_ref[1:H + 1, PADL:PADL + W, :] = h                 # re-use halo buffer
    # vertical pass: leading-dim offsets only (free), full width, aligned store
    vblur_ref[...] = (pad_ref[0:H, :, :]
                      + 2.0 * pad_ref[1:H + 1, :, :]
                      + pad_ref[2:H + 2, :, :])
    # horizontal pass (unnormalized; /16 lives in w2)
    blur = (vblur_ref[:, PADL - 1:PADL - 1 + W, :]
            + 2.0 * vblur_ref[:, PADL:PADL + W, :]
            + vblur_ref[:, PADL + 1:PADL + 1 + W, :])
    pad_ref[1:H + 1, PADL:PADL + W, :] = blur              # aligned interior store

    # ---- conv2: EqualizedConv2dDown (Cin -> Cout, 3x3, stride 2, pad 1) -----
    # Phase split: ONE strided sublane gather per dx (columns dx, dx+2, ...),
    # then every tap (dy,dx) is a leading-dim strided read of that slab.
    for dx in range(3):
        cols_refs[dx][...] = pad_ref[:, pl.ds(PADL - 1 + dx, W2, 2), :]
    for dy in range(3):
        for dx in range(3):
            t = dy * 3 + dx
            patch = cols_refs[dx][pl.ds(dy, H2, 2), :, :].reshape(H2 * W2, Cin)
            contrib = jnp.dot(patch.astype(jnp.bfloat16), w2_ref[t],
                              preferred_element_type=jnp.float32)
            if t == 0:
                o_ref[0] = contrib                         # output block is the accumulator
            else:
                o_ref[0] += contrib
    o_ref[0] = _leaky(o_ref[0] + b2_ref[...])


def _padded_bytes(shape, dtype):
    """VMEM footprint incl. lane (128) and sublane (8*4/itemsize) padding."""
    item = jnp.dtype(dtype).itemsize
    sub = 8 * (4 // item)
    s = list(shape)
    s[-1] = -(-s[-1] // 128) * 128
    if len(s) >= 2:
        s[-2] = -(-s[-2] // sub) * sub
    n = 1
    for d in s:
        n *= int(d)
    return n * item


def _vmem_limit_bytes(H, W, Wp, Cin, Cout):
    H2, W2 = H // 2, W // 2
    f32, bf16 = jnp.float32, jnp.bfloat16
    blocks = 2 * (_padded_bytes((1, H, W, Cin), f32)          # input (double-buffered)
                  + _padded_bytes((1, H2 * W2, Cout), f32)    # output
                  + _padded_bytes((9, Cin, Cin), bf16)
                  + _padded_bytes((1, Cin), f32)
                  + _padded_bytes((9, Cin, Cout), bf16)
                  + _padded_bytes((1, Cout), f32))
    scratch = (_padded_bytes((H + 2, Wp, Cin), f32)
               + _padded_bytes((H, Wp, Cin), f32)
               + _padded_bytes((H * W, Cin), f32)
               + 3 * _padded_bytes((H + 2, W2, Cin), f32))
    need = blocks + scratch + (8 << 20)                       # headroom for compiler scratch
    return int(min(max(need, 32 << 20), 112 << 20))


def discrim_block_stylegan(x_nchw, w1_khwio, b1, w2_khwio, b2):
    """x_nchw: (N, Cin, H, W) f32 -> (N, Cout, H//2, W//2) f32 (NCHW, like PyTorch).

    Weights are (kh, kw, in, out), already equalized-LR-scaled (f32 in, cast to
    bf16 here for the MXU).
    """
    N, Cin, H, W = x_nchw.shape
    Cout = w2_khwio.shape[-1]
    assert H % 2 == 0 and W % 2 == 0
    H2, W2 = H // 2, W // 2
    Wp = W + 2 * PADL

    x_nhwc = jnp.transpose(x_nchw, (0, 2, 3, 1)).astype(jnp.float32)
    # Tap-major (dy, dx) weight slabs; blur's 1/16 folded into w2 (exact: power of 2).
    w1_t = w1_khwio.reshape(9, Cin, Cin).astype(jnp.bfloat16)
    w2_t = (w2_khwio.reshape(9, Cin, Cout) * (1.0 / 16.0)).astype(jnp.bfloat16)
    b1_row = b1.reshape(1, Cin).astype(jnp.float32)
    b2_row = b2.reshape(1, Cout).astype(jnp.float32)

    out_flat = pl.pallas_call(
        discrim_block_kernel,
        out_shape=jax.ShapeDtypeStruct((N, H2 * W2, Cout), jnp.float32),
        grid_spec=pltpu.PrefetchScalarGridSpec(
            num_scalar_prefetch=0,
            grid=(N,),
            in_specs=[
                pl.BlockSpec((1, H, W, Cin), lambda b: (b, 0, 0, 0)),
                pl.BlockSpec((9, Cin, Cin), lambda b: (0, 0, 0)),
                pl.BlockSpec((1, Cin), lambda b: (0, 0)),
                pl.BlockSpec((9, Cin, Cout), lambda b: (0, 0, 0)),
                pl.BlockSpec((1, Cout), lambda b: (0, 0)),
            ],
            out_specs=pl.BlockSpec((1, H2 * W2, Cout), lambda b: (b, 0, 0)),
            scratch_shapes=[
                pltpu.VMEM((H + 2, Wp, Cin), jnp.float32),   # zero-haloed image
                pltpu.VMEM((H, Wp, Cin), jnp.float32),       # vertical blur pass
                pltpu.VMEM((H * W, Cin), jnp.float32),       # conv1 accumulator
                pltpu.VMEM((H + 2, W2, Cin), jnp.float32),   # stride-2 column phase dx=0
                pltpu.VMEM((H + 2, W2, Cin), jnp.float32),   # stride-2 column phase dx=1
                pltpu.VMEM((H + 2, W2, Cin), jnp.float32),   # stride-2 column phase dx=2
            ],
        ),
        compiler_params=pltpu.CompilerParams(
            dimension_semantics=("parallel",),               # batch axis -> both TCs on v7x
            vmem_limit_bytes=_vmem_limit_bytes(H, W, Wp, Cin, Cout)),
    )(x_nhwc, w1_t, b1_row, w2_t, b2_row)

    out_nhwc = out_flat.reshape(N, H2, W2, Cout)
    return jnp.transpose(out_nhwc, (0, 3, 1, 2))             # back to NCHW


def reference_forward(x_nchw, w1_oihw, b1, w2_oihw, b2):
    """Pure-JAX f32 reference (lax.conv) with identical semantics, for validation."""
    dn = ("NCHW", "OIHW", "NCHW")
    Cin = x_nchw.shape[1]

    y = lax.conv_general_dilated(x_nchw, w1_oihw, (1, 1), ((1, 1), (1, 1)),
                                 dimension_numbers=dn)
    y = y + b1[None, :, None, None]
    y = jnp.where(y > 0, y, LEAK * y)

    k = jnp.array([1.0, 2.0, 1.0], jnp.float32)
    K = jnp.outer(k, k)
    K = K / K.sum()
    blur_w = jnp.zeros((Cin, 1, 3, 3), jnp.float32).at[:, 0].set(K)
    y = lax.conv_general_dilated(y, blur_w, (1, 1), ((1, 1), (1, 1)),
                                 dimension_numbers=dn, feature_group_count=Cin)

    y = lax.conv_general_dilated(y, w2_oihw, (2, 2), ((1, 1), (1, 1)),
                                 dimension_numbers=dn)
    y = y + b2[None, :, None, None]
    y = jnp.where(y > 0, y, LEAK * y)
    return y


if __name__ == "__main__":
    N, Cin, Cout, H, W = 2, 4, 8, 16, 16

    key = jax.random.PRNGKey(0)
    kx, kw1, kb1, kw2, kb2 = jax.random.split(key, 5)

    x = jax.random.normal(kx, (N, Cin, H, W), jnp.float32)

    # Equalized-LR params: raw weights ~ N(0,1); runtime scale sqrt(2 / fan_in)
    # is applied here (host side), as in the PyTorch modules.
    scale1 = (2.0 / (Cin * 3 * 3)) ** 0.5
    scale2 = (2.0 / (Cin * 3 * 3)) ** 0.5
    w1_oihw = jax.random.normal(kw1, (Cin, Cin, 3, 3), jnp.float32) * scale1
    w2_oihw = jax.random.normal(kw2, (Cout, Cin, 3, 3), jnp.float32) * scale2
    b1 = 0.1 * jax.random.normal(kb1, (Cin,), jnp.float32)
    b2 = 0.1 * jax.random.normal(kb2, (Cout,), jnp.float32)

    # Kernel weight layout: (kh, kw, in, out)
    w1_khwio = jnp.transpose(w1_oihw, (2, 3, 1, 0))
    w2_khwio = jnp.transpose(w2_oihw, (2, 3, 1, 0))

    out = discrim_block_stylegan(x, w1_khwio, b1, w2_khwio, b2)
    out = jax.block_until_ready(out)

    ref = jax.block_until_ready(reference_forward(x, w1_oihw, b1, w2_oihw, b2))

    assert out.shape == (N, Cout, H // 2, W // 2), out.shape
    # Tolerance loosened vs. the f32 reference because the MXU inputs are bf16.
    np.testing.assert_allclose(np.asarray(out), np.asarray(ref), rtol=5e-2, atol=5e-2)

    print("KERNEL_OK")
</pallas_src>

<mosaic_0001>
module attributes {stable_mosaic.version = 11 : i64} {
  func.func @discrim_block_kernel(%arg0: i32, %arg1: memref<1x16x16x4xf32, #tpu.memory_space<vmem>>, %arg2: memref<9x4x4xbf16, #tpu.memory_space<vmem>>, %arg3: memref<1x4xf32, #tpu.memory_space<vmem>>, %arg4: memref<9x4x8xbf16, #tpu.memory_space<vmem>>, %arg5: memref<1x8xf32, #tpu.memory_space<vmem>>, %arg6: memref<1x64x8xf32, #tpu.memory_space<vmem>>, %arg7: memref<18x32x4xf32, #tpu.memory_space<vmem>>, %arg8: memref<16x32x4xf32, #tpu.memory_space<vmem>>, %arg9: memref<256x4xf32, #tpu.memory_space<vmem>>, %arg10: memref<18x8x4xf32, #tpu.memory_space<vmem>>, %arg11: memref<18x8x4xf32, #tpu.memory_space<vmem>>, %arg12: memref<18x8x4xf32, #tpu.memory_space<vmem>>) attributes {dimension_semantics = [#tpu.dimension_semantics<parallel>], iteration_bounds = array<i64: 2>, scalar_prefetch = 0 : i64, scratch_operands = 6 : i64, tpu.core_type = #tpu.core_type<tc>, window_params = [{transform_indices = @transform_0, window_bounds = array<i64: 1, 16, 16, 4>}, {pipeline_mode = #tpu.pipeline_mode<synchronous>, transform_indices = @transform_1, window_bounds = array<i64: 9, 4, 4>}, {pipeline_mode = #tpu.pipeline_mode<synchronous>, transform_indices = @transform_2, window_bounds = array<i64: 1, 4>}, {pipeline_mode = #tpu.pipeline_mode<synchronous>, transform_indices = @transform_3, window_bounds = array<i64: 9, 4, 8>}, {pipeline_mode = #tpu.pipeline_mode<synchronous>, transform_indices = @transform_4, window_bounds = array<i64: 1, 8>}, {transform_indices = @transform_5, window_bounds = array<i64: 1, 64, 8>}]} {
    %cst = arith.constant 0.000000e+00 : f32
    %0 = vector.broadcast %cst : f32 to vector<1x32x4xf32>
    %c0 = arith.constant 0 : index
    %c0_0 = arith.constant 0 : index
    %c0_1 = arith.constant 0 : index
    %1 = vector.load %arg7[%c0, %c0_0, %c0_1] : memref<18x32x4xf32, #tpu.memory_space<vmem>>, vector<1x32x4xf32>
    tpu.vector_store %arg7[%c0, %c0_0, %c0_1], %0 {strides = array<i32>} : memref<18x32x4xf32, #tpu.memory_space<vmem>>, vector<1x32x4xf32>,
    %cst_2 = arith.constant 0.000000e+00 : f32
    %2 = vector.broadcast %cst_2 : f32 to vector<1x32x4xf32>
    %c17 = arith.constant 17 : index
    %c0_3 = arith.constant 0 : index
    %c0_4 = arith.constant 0 : index
    %3 = vector.load %arg7[%c17, %c0_3, %c0_4] : memref<18x32x4xf32, #tpu.memory_space<vmem>>, vector<1x32x4xf32>
    tpu.vector_store %arg7[%c17, %c0_3, %c0_4], %2 {strides = array<i32>} : memref<18x32x4xf32, #tpu.memory_space<vmem>>, vector<1x32x4xf32>,
    %cst_5 = arith.constant 0.000000e+00 : f32
    %4 = vector.broadcast %cst_5 : f32 to vector<16x8x4xf32>
    %c1 = arith.constant 1 : index
    %c0_6 = arith.constant 0 : index
    %c0_7 = arith.constant 0 : index
    %5 = vector.load %arg7[%c1, %c0_6, %c0_7] : memref<18x32x4xf32, #tpu.memory_space<vmem>>, vector<16x8x4xf32>
    tpu.vector_store %arg7[%c1, %c0_6, %c0_7], %4 {strides = array<i32>} : memref<18x32x4xf32, #tpu.memory_space<vmem>>, vector<16x8x4xf32>,
    %cst_8 = arith.constant 0.000000e+00 : f32
    %6 = vector.broadcast %cst_8 : f32 to vector<16x8x4xf32>
    %c1_9 = arith.constant 1 : index
    %c24 = arith.constant 24 : index
    %c0_10 = arith.constant 0 : index
    %7 = vector.load %arg7[%c1_9, %c24, %c0_10] : memref<18x32x4xf32, #tpu.memory_space<vmem>>, vector<16x8x4xf32>
    tpu.vector_store %arg7[%c1_9, %c24, %c0_10], %6 {strides = array<i32>} : memref<18x32x4xf32, #tpu.memory_space<vmem>>, vector<16x8x4xf32>,
    %c0_11 = arith.constant 0 : index
    %c0_12 = arith.constant 0 : index
    %c0_13 = arith.constant 0 : index
    %c0_14 = arith.constant 0 : index
    %8 = vector.load %arg1[%c0_11, %c0_12, %c0_13, %c0_14] : memref<1x16x16x4xf32, #tpu.memory_space<vmem>>, vector<1x16x16x4xf32>
    %9 = vector.shape_cast %8 : vector<1x16x16x4xf32> to vector<16x16x4xf32>
    %c1_15 = arith.constant 1 : index
    %c8 = arith.constant 8 : index
    %c0_16 = arith.constant 0 : index
    %10 = vector.load %arg7[%c1_15, %c8, %c0_16] : memref<18x32x4xf32, #tpu.memory_space<vmem>>, vector<16x16x4xf32>
    tpu.vector_store %arg7[%c1_15, %c8, %c0_16], %9 {strides = array<i32>} : memref<18x32x4xf32, #tpu.memory_space<vmem>>, vector<16x16x4xf32>,
    %c0_17 = arith.constant 0 : index
    %c7 = arith.constant 7 : index
    %c0_18 = arith.constant 0 : index
    %11 = vector.load %arg7[%c0_17, %c7, %c0_18] : memref<18x32x4xf32, #tpu.memory_space<vmem>>, vector<16x16x4xf32>
    %12 = vector.shape_cast %11 : vector<16x16x4xf32> to vector<256x4xf32>
    %13 = arith.truncf %12 : vector<256x4xf32> to vector<256x4xbf16>
    %c0_19 = arith.constant 0 : index
    %c0_20 = arith.constant 0 : index
    %c0_21 = arith.constant 0 : index
    %14 = vector.load %arg2[%c0_19, %c0_20, %c0_21] : memref<9x4x4xbf16, #tpu.memory_space<vmem>>, vector<1x4x4xbf16>
    %15 = vector.shape_cast %14 : vector<1x4x4xbf16> to vector<4x4xbf16>
    %cst_22 = arith.constant dense<0.000000e+00> : vector<256x4xf32>
    %16 = tpu.matmul %13, %15, %cst_22 {dimension_numbers = #tpu.dot_dimension_numbers<[1], [0], [0], [1], [0, 0, 1, 1], [], []>} : vector<256x4xbf16>, vector<4x4xbf16>, vector<256x4xf32> -> vector<256x4xf32>
    %c0_23 = arith.constant 0 : index
    %c0_24 = arith.constant 0 : index
    %17 = vector.load %arg9[%c0_23, %c0_24] : memref<256x4xf32, #tpu.memory_space<vmem>>, vector<256x4xf32>
    tpu.vector_store %arg9[%c0_23, %c0_24], %16 {strides = array<i32>} : memref<256x4xf32, #tpu.memory_space<vmem>>, vector<256x4xf32>,
    %c0_25 = arith.constant 0 : index
    %c8_26 = arith.constant 8 : index
    %c0_27 = arith.constant 0 : index
    %18 = vector.load %arg7[%c0_25, %c8_26, %c0_27] : memref<18x32x4xf32, #tpu.memory_space<vmem>>, vector<16x16x4xf32>
    %19 = vector.shape_cast %18 : vector<16x16x4xf32> to vector<256x4xf32>
    %20 = arith.truncf %19 : vector<256x4xf32> to vector<256x4xbf16>
    %c1_28 = arith.constant 1 : index
    %c0_29 = arith.constant 0 : index
    %c0_30 = arith.constant 0 : index
    %21 = vector.load %arg2[%c1_28, %c0_29, %c0_30] : memref<9x4x4xbf16, #tpu.memory_space<vmem>>, vector<1x4x4xbf16>
    %22 = vector.shape_cast %21 : vector<1x4x4xbf16> to vector<4x4xbf16>
    %cst_31 = arith.constant dense<0.000000e+00> : vector<256x4xf32>
    %23 = tpu.matmul %20, %22, %cst_31 {dimension_numbers = #tpu.dot_dimension_numbers<[1], [0], [0], [1], [0, 0, 1, 1], [], []>} : vector<256x4xbf16>, vector<4x4xbf16>, vector<256x4xf32> -> vector<256x4xf32>
    %c0_32 = arith.constant 0 : index
    %c0_33 = arith.constant 0 : index
    %24 = vector.load %arg9[%c0_32, %c0_33] : memref<256x4xf32, #tpu.memory_space<vmem>>, vector<256x4xf32>
    %25 = arith.addf %24, %23 : vector<256x4xf32>
    %c0_34 = arith.constant 0 : index
    %c0_35 = arith.constant 0 : index
    %26 = vector.load %arg9[%c0_34, %c0_35] : memref<256x4xf32, #tpu.memory_space<vmem>>, vector<256x4xf32>
    tpu.vector_store %arg9[%c0_34, %c0_35], %25 {strides = array<i32>} : memref<256x4xf32, #tpu.memory_space<vmem>>, vector<256x4xf32>,
    %c0_36 = arith.constant 0 : index
    %c9 = arith.constant 9 : index
    %c0_37 = arith.constant 0 : index
    %27 = vector.load %arg7[%c0_36, %c9, %c0_37] : memref<18x32x4xf32, #tpu.memory_space<vmem>>, vector<16x16x4xf32>
    %28 = vector.shape_cast %27 : vector<16x16x4xf32> to vector<256x4xf32>
    %29 = arith.truncf %28 : vector<256x4xf32> to vector<256x4xbf16>
    %c2 = arith.constant 2 : index
    %c0_38 = arith.constant 0 : index
    %c0_39 = arith.constant 0 : index
    %30 = vector.load %arg2[%c2, %c0_38, %c0_39] : memref<9x4x4xbf16, #tpu.memory_space<vmem>>, vector<1x4x4xbf16>
    %31 = vector.shape_cast %30 : vector<1x4x4xbf16> to vector<4x4xbf16>
    %cst_40 = arith.constant dense<0.000000e+00> : vector<256x4xf32>
    %32 = tpu.matmul %29, %31, %cst_40 {dimension_numbers = #tpu.dot_dimension_numbers<[1], [0], [0], [1], [0, 0, 1, 1], [], []>} : vector<256x4xbf16>, vector<4x4xbf16>, vector<256x4xf32> -> vector<256x4xf32>
    %c0_41 = arith.constant 0 : index
    %c0_42 = arith.constant 0 : index
    %33 = vector.load %arg9[%c0_41, %c0_42] : memref<256x4xf32, #tpu.memory_space<vmem>>, vector<256x4xf32>
    %34 = arith.addf %33, %32 : vector<256x4xf32>
    %c0_43 = arith.constant 0 : index
    %c0_44 = arith.constant 0 : index
    %35 = vector.load %arg9[%c0_43, %c0_44] : memref<256x4xf32, #tpu.memory_space<vmem>>, vector<256x4xf32>
    tpu.vector_store %arg9[%c0_43, %c0_44], %34 {strides = array<i32>} : memref<256x4xf32, #tpu.memory_space<vmem>>, vector<256x4xf32>,
    %c1_45 = arith.constant 1 : index
    %c7_46 = arith.constant 7 : index
    %c0_47 = arith.constant 0 : index
    %36 = vector.load %arg7[%c1_45, %c7_46, %c0_47] : memref<18x32x4xf32, #tpu.memory_space<vmem>>, vector<16x16x4xf32>
    %37 = vector.shape_cast %36 : vector<16x16x4xf32> to vector<256x4xf32>
    %38 = arith.truncf %37 : vector<256x4xf32> to vector<256x4xbf16>
    %c3 = arith.constant 3 : index
    %c0_48 = arith.constant 0 : index
    %c0_49 = arith.constant 0 : index
    %39 = vector.load %arg2[%c3, %c0_48, %c0_49] : memref<9x4x4xbf16, #tpu.memory_space<vmem>>, vector<1x4x4xbf16>
    %40 = vector.shape_cast %39 : vector<1x4x4xbf16> to vector<4x4xbf16>
    %cst_50 = arith.constant dense<0.000000e+00> : vector<256x4xf32>
    %41 = tpu.matmul %38, %40, %cst_50 {dimension_numbers = #tpu.dot_dimension_numbers<[1], [0], [0], [1], [0, 0, 1, 1], [], []>} : vector<256x4xbf16>, vector<4x4xbf16>, vector<256x4xf32> -> vector<256x4xf32>
    %c0_51 = arith.constant 0 : index
    %c0_52 = arith.constant 0 : index
    %42 = vector.load %arg9[%c0_51, %c0_52] : memref<256x4xf32, #tpu.memory_space<vmem>>, vector<256x4xf32>
    %43 = arith.addf %42, %41 : vector<256x4xf32>
    %c0_53 = arith.constant 0 : index
    %c0_54 = arith.constant 0 : index
    %44 = vector.load %arg9[%c0_53, %c0_54] : memref<256x4xf32, #tpu.memory_space<vmem>>, vector<256x4xf32>
    tpu.vector_store %arg9[%c0_53, %c0_54], %43 {strides = array<i32>} : memref<256x4xf32, #tpu.memory_space<vmem>>, vector<256x4xf32>,
    %c1_55 = arith.constant 1 : index
    %c8_56 = arith.constant 8 : index
    %c0_57 = arith.constant 0 : index
    %45 = vector.load %arg7[%c1_55, %c8_56, %c0_57] : memref<18x32x4xf32, #tpu.memory_space<vmem>>, vector<16x16x4xf32>
    %46 = vector.shape_cast %45 : vector<16x16x4xf32> to vector<256x4xf32>
    %47 = arith.truncf %46 : vector<256x4xf32> to vector<256x4xbf16>
    %c4 = arith.constant 4 : index
    %c0_58 = arith.constant 0 : index
    %c0_59 = arith.constant 0 : index
    %48 = vector.load %arg2[%c4, %c0_58, %c0_59] : memref<9x4x4xbf16, #tpu.memory_space<vmem>>, vector<1x4x4xbf16>
    %49 = vector.shape_cast %48 : vector<1x4x4xbf16> to vector<4x4xbf16>
    %cst_60 = arith.constant dense<0.000000e+00> : vector<256x4xf32>
    %50 = tpu.matmul %47, %49, %cst_60 {dimension_numbers = #tpu.dot_dimension_numbers<[1], [0], [0], [1], [0, 0, 1, 1], [], []>} : vector<256x4xbf16>, vector<4x4xbf16>, vector<256x4xf32> -> vector<256x4xf32>
    %c0_61 = arith.constant 0 : index
    %c0_62 = arith.constant 0 : index
    %51 = vector.load %arg9[%c0_61, %c0_62] : memref<256x4xf32, #tpu.memory_space<vmem>>, vector<256x4xf32>
    %52 = arith.addf %51, %50 : vector<256x4xf32>
    %c0_63 = arith.constant 0 : index
    %c0_64 = arith.constant 0 : index
    %53 = vector.load %arg9[%c0_63, %c0_64] : memref<256x4xf32, #tpu.memory_space<vmem>>, vector<256x4xf32>
    tpu.vector_store %arg9[%c0_63, %c0_64], %52 {strides = array<i32>} : memref<256x4xf32, #tpu.memory_space<vmem>>, vector<256x4xf32>,
    %c1_65 = arith.constant 1 : index
    %c9_66 = arith.constant 9 : index
    %c0_67 = arith.constant 0 : index
    %54 = vector.load %arg7[%c1_65, %c9_66, %c0_67] : memref<18x32x4xf32, #tpu.memory_space<vmem>>, vector<16x16x4xf32>
    %55 = vector.shape_cast %54 : vector<16x16x4xf32> to vector<256x4xf32>
    %56 = arith.truncf %55 : vector<256x4xf32> to vector<256x4xbf16>
    %c5 = arith.constant 5 : index
    %c0_68 = arith.constant 0 : index
    %c0_69 = arith.constant 0 : index
    %57 = vector.load %arg2[%c5, %c0_68, %c0_69] : memref<9x4x4xbf16, #tpu.memory_space<vmem>>, vector<1x4x4xbf16>
    %58 = vector.shape_cast %57 : vector<1x4x4xbf16> to vector<4x4xbf16>
    %cst_70 = arith.constant dense<0.000000e+00> : vector<256x4xf32>
    %59 = tpu.matmul %56, %58, %cst_70 {dimension_numbers = #tpu.dot_dimension_numbers<[1], [0], [0], [1], [0, 0, 1, 1], [], []>} : vector<256x4xbf16>, vector<4x4xbf16>, vector<256x4xf32> -> vector<256x4xf32>
    %c0_71 = arith.constant 0 : index
    %c0_72 = arith.constant 0 : index
    %60 = vector.load %arg9[%c0_71, %c0_72] : memref<256x4xf32, #tpu.memory_space<vmem>>, vector<256x4xf32>
    %61 = arith.addf %60, %59 : vector<256x4xf32>
    %c0_73 = arith.constant 0 : index
    %c0_74 = arith.constant 0 : index
    %62 = vector.load %arg9[%c0_73, %c0_74] : memref<256x4xf32, #tpu.memory_space<vmem>>, vector<256x4xf32>
    tpu.vector_store %arg9[%c0_73, %c0_74], %61 {strides = array<i32>} : memref<256x4xf32, #tpu.memory_space<vmem>>, vector<256x4xf32>,
    %c2_75 = arith.constant 2 : index
    %c7_76 = arith.constant 7 : index
    %c0_77 = arith.constant 0 : index
    %63 = vector.load %arg7[%c2_75, %c7_76, %c0_77] : memref<18x32x4xf32, #tpu.memory_space<vmem>>, vector<16x16x4xf32>
    %64 = vector.shape_cast %63 : vector<16x16x4xf32> to vector<256x4xf32>
    %65 = arith.truncf %64 : vector<256x4xf32> to vector<256x4xbf16>
    %c6 = arith.constant 6 : index
    %c0_78 = arith.constant 0 : index
    %c0_79 = arith.constant 0 : index
    %66 = vector.load %arg2[%c6, %c0_78, %c0_79] : memref<9x4x4xbf16, #tpu.memory_space<vmem>>, vector<1x4x4xbf16>
    %67 = vector.shape_cast %66 : vector<1x4x4xbf16> to vector<4x4xbf16>
    %cst_80 = arith.constant dense<0.000000e+00> : vector<256x4xf32>
    %68 = tpu.matmul %65, %67, %cst_80 {dimension_numbers = #tpu.dot_dimension_numbers<[1], [0], [0], [1], [0, 0, 1, 1], [], []>} : vector<256x4xbf16>, vector<4x4xbf16>, vector<256x4xf32> -> vector<256x4xf32>
    %c0_81 = arith.constant 0 : index
    %c0_82 = arith.constant 0 : index
    %69 = vector.load %arg9[%c0_81, %c0_82] : memref<256x4xf32, #tpu.memory_space<vmem>>, vector<256x4xf32>
    %70 = arith.addf %69, %68 : vector<256x4xf32>
    %c0_83 = arith.constant 0 : index
    %c0_84 = arith.constant 0 : index
    %71 = vector.load %arg9[%c0_83, %c0_84] : memref<256x4xf32, #tpu.memory_space<vmem>>, vector<256x4xf32>
    tpu.vector_store %arg9[%c0_83, %c0_84], %70 {strides = array<i32>} : memref<256x4xf32, #tpu.memory_space<vmem>>, vector<256x4xf32>,
    %c2_85 = arith.constant 2 : index
    %c8_86 = arith.constant 8 : index
    %c0_87 = arith.constant 0 : index
    %72 = vector.load %arg7[%c2_85, %c8_86, %c0_87] : memref<18x32x4xf32, #tpu.memory_space<vmem>>, vector<16x16x4xf32>
    %73 = vector.shape_cast %72 : vector<16x16x4xf32> to vector<256x4xf32>
    %74 = arith.truncf %73 : vector<256x4xf32> to vector<256x4xbf16>
    %c7_88 = arith.constant 7 : index
    %c0_89 = arith.constant 0 : index
    %c0_90 = arith.constant 0 : index
    %75 = vector.load %arg2[%c7_88, %c0_89, %c0_90] : memref<9x4x4xbf16, #tpu.memory_space<vmem>>, vector<1x4x4xbf16>
    %76 = vector.shape_cast %75 : vector<1x4x4xbf16> to vector<4x4xbf16>
    %cst_91 = arith.constant dense<0.000000e+00> : vector<256x4xf32>
    %77 = tpu.matmul %74, %76, %cst_91 {dimension_numbers = #tpu.dot_dimension_numbers<[1], [0], [0], [1], [0, 0, 1, 1], [], []>} : vector<256x4xbf16>, vector<4x4xbf16>, vector<256x4xf32> -> vector<256x4xf32>
    %c0_92 = arith.constant 0 : index
    %c0_93 = arith.constant 0 : index
    %78 = vector.load %arg9[%c0_92, %c0_93] : memref<256x4xf32, #tpu.memory_space<vmem>>, vector<256x4xf32>
    %79 = arith.addf %78, %77 : vector<256x4xf32>
    %c0_94 = arith.constant 0 : index
    %c0_95 = arith.constant 0 : index
    %80 = vector.load %arg9[%c0_94, %c0_95] : memref<256x4xf32, #tpu.memory_space<vmem>>, vector<256x4xf32>
    tpu.vector_store %arg9[%c0_94, %c0_95], %79 {strides = array<i32>} : memref<256x4xf32, #tpu.memory_space<vmem>>, vector<256x4xf32>,
    %c2_96 = arith.constant 2 : index
    %c9_97 = arith.constant 9 : index
    %c0_98 = arith.constant 0 : index
    %81 = vector.load %arg7[%c2_96, %c9_97, %c0_98] : memref<18x32x4xf32, #tpu.memory_space<vmem>>, vector<16x16x4xf32>
    %82 = vector.shape_cast %81 : vector<16x16x4xf32> to vector<256x4xf32>
    %83 = arith.truncf %82 : vector<256x4xf32> to vector<256x4xbf16>
    %c8_99 = arith.constant 8 : index
    %c0_100 = arith.constant 0 : index
    %c0_101 = arith.constant 0 : index
    %84 = vector.load %arg2[%c8_99, %c0_100, %c0_101] : memref<9x4x4xbf16, #tpu.memory_space<vmem>>, vector<1x4x4xbf16>
    %85 = vector.shape_cast %84 : vector<1x4x4xbf16> to vector<4x4xbf16>
    %cst_102 = arith.constant dense<0.000000e+00> : vector<256x4xf32>
    %86 = tpu.matmul %83, %85, %cst_102 {dimension_numbers = #tpu.dot_dimension_numbers<[1], [0], [0], [1], [0, 0, 1, 1], [], []>} : vector<256x4xbf16>, vector<4x4xbf16>, vector<256x4xf32> -> vector<256x4xf32>
    %c0_103 = arith.constant 0 : index
    %c0_104 = arith.constant 0 : index
    %87 = vector.load %arg9[%c0_103, %c0_104] : memref<256x4xf32, #tpu.memory_space<vmem>>, vector<256x4xf32>
    %88 = arith.addf %87, %86 : vector<256x4xf32>
    %c0_105 = arith.constant 0 : index
    %c0_106 = arith.constant 0 : index
    %89 = vector.load %arg9[%c0_105, %c0_106] : memref<256x4xf32, #tpu.memory_space<vmem>>, vector<256x4xf32>
    tpu.vector_store %arg9[%c0_105, %c0_106], %88 {strides = array<i32>} : memref<256x4xf32, #tpu.memory_space<vmem>>, vector<256x4xf32>,
    %c0_107 = arith.constant 0 : index
    %c0_108 = arith.constant 0 : index
    %90 = vector.load %arg9[%c0_107, %c0_108] : memref<256x4xf32, #tpu.memory_space<vmem>>, vector<256x4xf32>
    %c0_109 = arith.constant 0 : index
    %c0_110 = arith.constant 0 : index
    %91 = vector.load %arg3[%c0_109, %c0_110] : memref<1x4xf32, #tpu.memory_space<vmem>>, vector<1x4xf32>
    %92 = vector.broadcast %91 : vector<1x4xf32> to vector<256x4xf32>
    %93 = arith.addf %90, %92 : vector<256x4xf32>
    %cst_111 = arith.constant 0.000000e+00 : f32
    %94 = vector.broadcast %cst_111 : f32 to vector<256x4xf32>
    %95 = arith.cmpf ogt, %93, %94 : vector<256x4xf32>
    %cst_112 = arith.constant 2.000000e-01 : f32
    %96 = vector.broadcast %cst_112 : f32 to vector<256x4xf32>
    %97 = arith.mulf %96, %93 : vector<256x4xf32>
    %98 = arith.select %95, %93, %97 : vector<256x4xi1>, vector<256x4xf32>
    %99 = vector.shape_cast %98 : vector<256x4xf32> to vector<16x16x4xf32>
    %c1_113 = arith.constant 1 : index
    %c8_114 = arith.constant 8 : index
    %c0_115 = arith.constant 0 : index
    %100 = vector.load %arg7[%c1_113, %c8_114, %c0_115] : memref<18x32x4xf32, #tpu.memory_space<vmem>>, vector<16x16x4xf32>
    tpu.vector_store %arg7[%c1_113, %c8_114, %c0_115], %99 {strides = array<i32>} : memref<18x32x4xf32, #tpu.memory_space<vmem>>, vector<16x16x4xf32>,
    %c0_116 = arith.constant 0 : index
    %c0_117 = arith.constant 0 : index
    %c0_118 = arith.constant 0 : index
    %101 = vector.load %arg7[%c0_116, %c0_117, %c0_118] : memref<18x32x4xf32, #tpu.memory_space<vmem>>, vector<16x32x4xf32>
    %c1_119 = arith.constant 1 : index
    %c0_120 = arith.constant 0 : index
    %c0_121 = arith.constant 0 : index
    %102 = vector.load %arg7[%c1_119, %c0_120, %c0_121] : memref<18x32x4xf32, #tpu.memory_space<vmem>>, vector<16x32x4xf32>
    %cst_122 = arith.constant 2.000000e+00 : f32
    %103 = vector.broadcast %cst_122 : f32 to vector<16x32x4xf32>
    %104 = arith.mulf %103, %102 : vector<16x32x4xf32>
    %105 = arith.addf %101, %104 : vector<16x32x4xf32>
    %c2_123 = arith.constant 2 : index
    %c0_124 = arith.constant 0 : index
    %c0_125 = arith.constant 0 : index
    %106 = vector.load %arg7[%c2_123, %c0_124, %c0_125] : memref<18x32x4xf32, #tpu.memory_space<vmem>>, vector<16x32x4xf32>
    %107 = arith.addf %105, %106 : vector<16x32x4xf32>
    %c0_126 = arith.constant 0 : index
    %c0_127 = arith.constant 0 : index
    %c0_128 = arith.constant 0 : index
    %108 = vector.load %arg8[%c0_126, %c0_127, %c0_128] : memref<16x32x4xf32, #tpu.memory_space<vmem>>, vector<16x32x4xf32>
    tpu.vector_store %arg8[%c0_126, %c0_127, %c0_128], %107 {strides = array<i32>} : memref<16x32x4xf32, #tpu.memory_space<vmem>>, vector<16x32x4xf32>,
    %c0_129 = arith.constant 0 : index
    %c7_130 = arith.constant 7 : index
    %c0_131 = arith.constant 0 : index
    %109 = vector.load %arg8[%c0_129, %c7_130, %c0_131] : memref<16x32x4xf32, #tpu.memory_space<vmem>>, vector<16x16x4xf32>
    %c0_132 = arith.constant 0 : index
    %c8_133 = arith.constant 8 : index
    %c0_134 = arith.constant 0 : index
    %110 = vector.load %arg8[%c0_132, %c8_133, %c0_134] : memref<16x32x4xf32, #tpu.memory_space<vmem>>, vector<16x16x4xf32>
    %cst_135 = arith.constant 2.000000e+00 : f32
    %111 = vector.broadcast %cst_135 : f32 to vector<16x16x4xf32>
    %112 = arith.mulf %111, %110 : vector<16x16x4xf32>
    %113 = arith.addf %109, %112 : vector<16x16x4xf32>
    %c0_136 = arith.constant 0 : index
    %c9_137 = arith.constant 9 : index
    %c0_138 = arith.constant 0 : index
    %114 = vector.load %arg8[%c0_136, %c9_137, %c0_138] : memref<16x32x4xf32, #tpu.memory_space<vmem>>, vector<16x16x4xf32>
    %115 = arith.addf %113, %114 : vector<16x16x4xf32>
    %c1_139 = arith.constant 1 : index
    %c8_140 = arith.constant 8 : index
    %c0_141 = arith.constant 0 : index
    %116 = vector.load %arg7[%c1_139, %c8_140, %c0_141] : memref<18x32x4xf32, #tpu.memory_space<vmem>>, vector<16x16x4xf32>
    tpu.vector_store %arg7[%c1_139, %c8_140, %c0_141], %115 {strides = array<i32>} : memref<18x32x4xf32, #tpu.memory_space<vmem>>, vector<16x16x4xf32>,
    %c0_142 = arith.constant 0 : index
    %c7_143 = arith.constant 7 : index
    %c0_144 = arith.constant 0 : index
    %117 = tpu.strided_load %arg7[%c0_142, %c7_143, %c0_144] {strides = array<i32: 1, 2, 1>} : memref<18x32x4xf32, #tpu.memory_space<vmem>>, vector<18x8x4xf32>
    %c0_145 = arith.constant 0 : index
    %c0_146 = arith.constant 0 : index
    %c0_147 = arith.constant 0 : index
    %118 = vector.load %arg10[%c0_145, %c0_146, %c0_147] : memref<18x8x4xf32, #tpu.memory_space<vmem>>, vector<18x8x4xf32>
    tpu.vector_store %arg10[%c0_145, %c0_146, %c0_147], %117 {strides = array<i32>} : memref<18x8x4xf32, #tpu.memory_space<vmem>>, vector<18x8x4xf32>,
    %c0_148 = arith.constant 0 : index
    %c8_149 = arith.constant 8 : index
    %c0_150 = arith.constant 0 : index
    %119 = tpu.strided_load %arg7[%c0_148, %c8_149, %c0_150] {strides = array<i32: 1, 2, 1>} : memref<18x32x4xf32, #tpu.memory_space<vmem>>, vector<18x8x4xf32>
    %c0_151 = arith.constant 0 : index
    %c0_152 = arith.constant 0 : index
    %c0_153 = arith.constant 0 : index
    %120 = vector.load %arg11[%c0_151, %c0_152, %c0_153] : memref<18x8x4xf32, #tpu.memory_space<vmem>>, vector<18x8x4xf32>
    tpu.vector_store %arg11[%c0_151, %c0_152, %c0_153], %119 {strides = array<i32>} : memref<18x8x4xf32, #tpu.memory_space<vmem>>, vector<18x8x4xf32>,
    %c0_154 = arith.constant 0 : index
    %c9_155 = arith.constant 9 : index
    %c0_156 = arith.constant 0 : index
    %121 = tpu.strided_load %arg7[%c0_154, %c9_155, %c0_156] {strides = array<i32: 1, 2, 1>} : memref<18x32x4xf32, #tpu.memory_space<vmem>>, vector<18x8x4xf32>
    %c0_157 = arith.constant 0 : index
    %c0_158 = arith.constant 0 : index
    %c0_159 = arith.constant 0 : index
    %122 = vector.load %arg12[%c0_157, %c0_158, %c0_159] : memref<18x8x4xf32, #tpu.memory_space<vmem>>, vector<18x8x4xf32>
    tpu.vector_store %arg12[%c0_157, %c0_158, %c0_159], %121 {strides = array<i32>} : memref<18x8x4xf32, #tpu.memory_space<vmem>>, vector<18x8x4xf32>,
    %c0_160 = arith.constant 0 : index
    %c0_161 = arith.constant 0 : index
    %c0_162 = arith.constant 0 : index
    %123 = tpu.strided_load %arg10[%c0_160, %c0_161, %c0_162] {strides = array<i32: 2, 1, 1>} : memref<18x8x4xf32, #tpu.memory_space<vmem>>, vector<8x8x4xf32>
    %124 = vector.shape_cast %123 : vector<8x8x4xf32> to vector<64x4xf32>
    %125 = arith.truncf %124 : vector<64x4xf32> to vector<64x4xbf16>
    %c0_163 = arith.constant 0 : index
    %c0_164 = arith.constant 0 : index
    %c0_165 = arith.constant 0 : index
    %126 = vector.load %arg4[%c0_163, %c0_164, %c0_165] : memref<9x4x8xbf16, #tpu.memory_space<vmem>>, vector<1x4x8xbf16>
    %127 = vector.shape_cast %126 : vector<1x4x8xbf16> to vector<4x8xbf16>
    %cst_166 = arith.constant dense<0.000000e+00> : vector<64x8xf32>
    %128 = tpu.matmul %125, %127, %cst_166 {dimension_numbers = #tpu.dot_dimension_numbers<[1], [0], [0], [1], [0, 0, 1, 1], [], []>} : vector<64x4xbf16>, vector<4x8xbf16>, vector<64x8xf32> -> vector<64x8xf32>
    %c0_167 = arith.constant 0 : index
    %c0_168 = arith.constant 0 : index
    %c0_169 = arith.constant 0 : index
    %129 = vector.load %arg6[%c0_167, %c0_168, %c0_169] : memref<1x64x8xf32, #tpu.memory_space<vmem>>, vector<1x64x8xf32>
    %130 = vector.shape_cast %129 : vector<1x64x8xf32> to vector<64x8xf32>
    %131 = vector.shape_cast %128 : vector<64x8xf32> to vector<1x64x8xf32>
    tpu.vector_store %arg6[%c0_167, %c0_168, %c0_169], %131 {strides = array<i32>} : memref<1x64x8xf32, #tpu.memory_space<vmem>>, vector<1x64x8xf32>,
    %c0_170 = arith.constant 0 : index
    %c0_171 = arith.constant 0 : index
    %c0_172 = arith.constant 0 : index
    %132 = tpu.strided_load %arg11[%c0_170, %c0_171, %c0_172] {strides = array<i32: 2, 1, 1>} : memref<18x8x4xf32, #tpu.memory_space<vmem>>, vector<8x8x4xf32>
    %133 = vector.shape_cast %132 : vector<8x8x4xf32> to vector<64x4xf32>
    %134 = arith.truncf %133 : vector<64x4xf32> to vector<64x4xbf16>
    %c1_173 = arith.constant 1 : index
    %c0_174 = arith.constant 0 : index
    %c0_175 = arith.constant 0 : index
    %135 = vector.load %arg4[%c1_173, %c0_174, %c0_175] : memref<9x4x8xbf16, #tpu.memory_space<vmem>>, vector<1x4x8xbf16>
    %136 = vector.shape_cast %135 : vector<1x4x8xbf16> to vector<4x8xbf16>
    %cst_176 = arith.constant dense<0.000000e+00> : vector<64x8xf32>
    %137 = tpu.matmul %134, %136, %cst_176 {dimension_numbers = #tpu.dot_dimension_numbers<[1], [0], [0], [1], [0, 0, 1, 1], [], []>} : vector<64x4xbf16>, vector<4x8xbf16>, vector<64x8xf32> -> vector<64x8xf32>
    %c0_177 = arith.constant 0 : index
    %c0_178 = arith.constant 0 : index
    %c0_179 = arith.constant 0 : index
    %138 = vector.load %arg6[%c0_177, %c0_178, %c0_179] : memref<1x64x8xf32, #tpu.memory_space<vmem>>, vector<1x64x8xf32>
    %139 = vector.shape_cast %138 : vector<1x64x8xf32> to vector<64x8xf32>
    %140 = arith.addf %139, %137 : vector<64x8xf32>
    %c0_180 = arith.constant 0 : index
    %c0_181 = arith.constant 0 : index
    %c0_182 = arith.constant 0 : index
    %141 = vector.load %arg6[%c0_180, %c0_181, %c0_182] : memref<1x64x8xf32, #tpu.memory_space<vmem>>, vector<1x64x8xf32>
    %142 = vector.shape_cast %141 : vector<1x64x8xf32> to vector<64x8xf32>
    %143 = vector.shape_cast %140 : vector<64x8xf32> to vector<1x64x8xf32>
    tpu.vector_store %arg6[%c0_180, %c0_181, %c0_182], %143 {strides = array<i32>} : memref<1x64x8xf32, #tpu.memory_space<vmem>>, vector<1x64x8xf32>,
    %c0_183 = arith.constant 0 : index
    %c0_184 = arith.constant 0 : index
    %c0_185 = arith.constant 0 : index
    %144 = tpu.strided_load %arg12[%c0_183, %c0_184, %c0_185] {strides = array<i32: 2, 1, 1>} : memref<18x8x4xf32, #tpu.memory_space<vmem>>, vector<8x8x4xf32>
    %145 = vector.shape_cast %144 : vector<8x8x4xf32> to vector<64x4xf32>
    %146 = arith.truncf %145 : vector<64x4xf32> to vector<64x4xbf16>
    %c2_186 = arith.constant 2 : index
    %c0_187 = arith.constant 0 : index
    %c0_188 = arith.constant 0 : index
    %147 = vector.load %arg4[%c2_186, %c0_187, %c0_188] : memref<9x4x8xbf16, #tpu.memory_space<vmem>>, vector<1x4x8xbf16>
    %148 = vector.shape_cast %147 : vector<1x4x8xbf16> to vector<4x8xbf16>
    %cst_189 = arith.constant dense<0.000000e+00> : vector<64x8xf32>
    %149 = tpu.matmul %146, %148, %cst_189 {dimension_numbers = #tpu.dot_dimension_numbers<[1], [0], [0], [1], [0, 0, 1, 1], [], []>} : vector<64x4xbf16>, vector<4x8xbf16>, vector<64x8xf32> -> vector<64x8xf32>
    %c0_190 = arith.constant 0 : index
    %c0_191 = arith.constant 0 : index
    %c0_192 = arith.constant 0 : index
    %150 = vector.load %arg6[%c0_190, %c0_191, %c0_192] : memref<1x64x8xf32, #tpu.memory_space<vmem>>, vector<1x64x8xf32>
    %151 = vector.shape_cast %150 : vector<1x64x8xf32> to vector<64x8xf32>
    %152 = arith.addf %151, %149 : vector<64x8xf32>
    %c0_193 = arith.constant 0 : index
    %c0_194 = arith.constant 0 : index
    %c0_195 = arith.constant 0 : index
    %153 = vector.load %arg6[%c0_193, %c0_194, %c0_195] : memref<1x64x8xf32, #tpu.memory_space<vmem>>, vector<1x64x8xf32>
    %154 = vector.shape_cast %153 : vector<1x64x8xf32> to vector<64x8xf32>
    %155 = vector.shape_cast %152 : vector<64x8xf32> to vector<1x64x8xf32>
    tpu.vector_store %arg6[%c0_193, %c0_194, %c0_195], %155 {strides = array<i32>} : memref<1x64x8xf32, #tpu.memory_space<vmem>>, vector<1x64x8xf32>,
    %c1_196 = arith.constant 1 : index
    %c0_197 = arith.constant 0 : index
    %c0_198 = arith.constant 0 : index
    %156 = tpu.strided_load %arg10[%c1_196, %c0_197, %c0_198] {strides = array<i32: 2, 1, 1>} : memref<18x8x4xf32, #tpu.memory_space<vmem>>, vector<8x8x4xf32>
    %157 = vector.shape_cast %156 : vector<8x8x4xf32> to vector<64x4xf32>
    %158 = arith.truncf %157 : vector<64x4xf32> to vector<64x4xbf16>
    %c3_199 = arith.constant 3 : index
    %c0_200 = arith.constant 0 : index
    %c0_201 = arith.constant 0 : index
    %159 = vector.load %arg4[%c3_199, %c0_200, %c0_201] : memref<9x4x8xbf16, #tpu.memory_space<vmem>>, vector<1x4x8xbf16>
    %160 = vector.shape_cast %159 : vector<1x4x8xbf16> to vector<4x8xbf16>
    %cst_202 = arith.constant dense<0.000000e+00> : vector<64x8xf32>
    %161 = tpu.matmul %158, %160, %cst_202 {dimension_numbers = #tpu.dot_dimension_numbers<[1], [0], [0], [1], [0, 0, 1, 1], [], []>} : vector<64x4xbf16>, vector<4x8xbf16>, vector<64x8xf32> -> vector<64x8xf32>
    %c0_203 = arith.constant 0 : index
    %c0_204 = arith.constant 0 : index
    %c0_205 = arith.constant 0 : index
    %162 = vector.load %arg6[%c0_203, %c0_204, %c0_205] : memref<1x64x8xf32, #tpu.memory_space<vmem>>, vector<1x64x8xf32>
    %163 = vector.shape_cast %162 : vector<1x64x8xf32> to vector<64x8xf32>
    %164 = arith.addf %163, %161 : vector<64x8xf32>
    %c0_206 = arith.constant 0 : index
    %c0_207 = arith.constant 0 : index
    %c0_208 = arith.constant 0 : index
    %165 = vector.load %arg6[%c0_206, %c0_207, %c0_208] : memref<1x64x8xf32, #tpu.memory_space<vmem>>, vector<1x64x8xf32>
    %166 = vector.shape_cast %165 : vector<1x64x8xf32> to vector<64x8xf32>
    %167 = vector.shape_cast %164 : vector<64x8xf32> to vector<1x64x8xf32>
    tpu.vector_store %arg6[%c0_206, %c0_207, %c0_208], %167 {strides = array<i32>} : memref<1x64x8xf32, #tpu.memory_space<vmem>>, vector<1x64x8xf32>,
    %c1_209 = arith.constant 1 : index
    %c0_210 = arith.constant 0 : index
    %c0_211 = arith.constant 0 : index
    %168 = tpu.strided_load %arg11[%c1_209, %c0_210, %c0_211] {strides = array<i32: 2, 1, 1>} : memref<18x8x4xf32, #tpu.memory_space<vmem>>, vector<8x8x4xf32>
    %169 = vector.shape_cast %168 : vector<8x8x4xf32> to vector<64x4xf32>
    %170 = arith.truncf %169 : vector<64x4xf32> to vector<64x4xbf16>
    %c4_212 = arith.constant 4 : index
    %c0_213 = arith.constant 0 : index
    %c0_214 = arith.constant 0 : index
    %171 = vector.load %arg4[%c4_212, %c0_213, %c0_214] : memref<9x4x8xbf16, #tpu.memory_space<vmem>>, vector<1x4x8xbf16>
    %172 = vector.shape_cast %171 : vector<1x4x8xbf16> to vector<4x8xbf16>
    %cst_215 = arith.constant dense<0.000000e+00> : vector<64x8xf32>
    %173 = tpu.matmul %170, %172, %cst_215 {dimension_numbers = #tpu.dot_dimension_numbers<[1], [0], [0], [1], [0, 0, 1, 1], [], []>} : vector<64x4xbf16>, vector<4x8xbf16>, vector<64x8xf32> -> vector<64x8xf32>
    %c0_216 = arith.constant 0 : index
    %c0_217 = arith.constant 0 : index
    %c0_218 = arith.constant 0 : index
    %174 = vector.load %arg6[%c0_216, %c0_217, %c0_218] : memref<1x64x8xf32, #tpu.memory_space<vmem>>, vector<1x64x8xf32>
    %175 = vector.shape_cast %174 : vector<1x64x8xf32> to vector<64x8xf32>
    %176 = arith.addf %175, %173 : vector<64x8xf32>
    %c0_219 = arith.constant 0 : index
    %c0_220 = arith.constant 0 : index
    %c0_221 = arith.constant 0 : index
    %177 = vector.load %arg6[%c0_219, %c0_220, %c0_221] : memref<1x64x8xf32, #tpu.memory_space<vmem>>, vector<1x64x8xf32>
    %178 = vector.shape_cast %177 : vector<1x64x8xf32> to vector<64x8xf32>
    %179 = vector.shape_cast %176 : vector<64x8xf32> to vector<1x64x8xf32>
    tpu.vector_store %arg6[%c0_219, %c0_220, %c0_221], %179 {strides = array<i32>} : memref<1x64x8xf32, #tpu.memory_space<vmem>>, vector<1x64x8xf32>,
    %c1_222 = arith.constant 1 : index
    %c0_223 = arith.constant 0 : index
    %c0_224 = arith.constant 0 : index
    %180 = tpu.strided_load %arg12[%c1_222, %c0_223, %c0_224] {strides = array<i32: 2, 1, 1>} : memref<18x8x4xf32, #tpu.memory_space<vmem>>, vector<8x8x4xf32>
    %181 = vector.shape_cast %180 : vector<8x8x4xf32> to vector<64x4xf32>
    %182 = arith.truncf %181 : vector<64x4xf32> to vector<64x4xbf16>
    %c5_225 = arith.constant 5 : index
    %c0_226 = arith.constant 0 : index
    %c0_227 = arith.constant 0 : index
    %183 = vector.load %arg4[%c5_225, %c0_226, %c0_227] : memref<9x4x8xbf16, #tpu.memory_space<vmem>>, vector<1x4x8xbf16>
    %184 = vector.shape_cast %183 : vector<1x4x8xbf16> to vector<4x8xbf16>
    %cst_228 = arith.constant dense<0.000000e+00> : vector<64x8xf32>
    %185 = tpu.matmul %182, %184, %cst_228 {dimension_numbers = #tpu.dot_dimension_numbers<[1], [0], [0], [1], [0, 0, 1, 1], [], []>} : vector<64x4xbf16>, vector<4x8xbf16>, vector<64x8xf32> -> vector<64x8xf32>
    %c0_229 = arith.constant 0 : index
    %c0_230 = arith.constant 0 : index
    %c0_231 = arith.constant 0 : index
    %186 = vector.load %arg6[%c0_229, %c0_230, %c0_231] : memref<1x64x8xf32, #tpu.memory_space<vmem>>, vector<1x64x8xf32>
    %187 = vector.shape_cast %186 : vector<1x64x8xf32> to vector<64x8xf32>
    %188 = arith.addf %187, %185 : vector<64x8xf32>
    %c0_232 = arith.constant 0 : index
    %c0_233 = arith.constant 0 : index
    %c0_234 = arith.constant 0 : index
    %189 = vector.load %arg6[%c0_232, %c0_233, %c0_234] : memref<1x64x8xf32, #tpu.memory_space<vmem>>, vector<1x64x8xf32>
    %190 = vector.shape_cast %189 : vector<1x64x8xf32> to vector<64x8xf32>
    %191 = vector.shape_cast %188 : vector<64x8xf32> to vector<1x64x8xf32>
    tpu.vector_store %arg6[%c0_232, %c0_233, %c0_234], %191 {strides = array<i32>} : memref<1x64x8xf32, #tpu.memory_space<vmem>>, vector<1x64x8xf32>,
    %c2_235 = arith.constant 2 : index
    %c0_236 = arith.constant 0 : index
    %c0_237 = arith.constant 0 : index
    %192 = tpu.strided_load %arg10[%c2_235, %c0_236, %c0_237] {strides = array<i32: 2, 1, 1>} : memref<18x8x4xf32, #tpu.memory_space<vmem>>, vector<8x8x4xf32>
    %193 = vector.shape_cast %192 : vector<8x8x4xf32> to vector<64x4xf32>
    %194 = arith.truncf %193 : vector<64x4xf32> to vector<64x4xbf16>
    %c6_238 = arith.constant 6 : index
    %c0_239 = arith.constant 0 : index
    %c0_240 = arith.constant 0 : index
    %195 = vector.load %arg4[%c6_238, %c0_239, %c0_240] : memref<9x4x8xbf16, #tpu.memory_space<vmem>>, vector<1x4x8xbf16>
    %196 = vector.shape_cast %195 : vector<1x4x8xbf16> to vector<4x8xbf16>
    %cst_241 = arith.constant dense<0.000000e+00> : vector<64x8xf32>
    %197 = tpu.matmul %194, %196, %cst_241 {dimension_numbers = #tpu.dot_dimension_numbers<[1], [0], [0], [1], [0, 0, 1, 1], [], []>} : vector<64x4xbf16>, vector<4x8xbf16>, vector<64x8xf32> -> vector<64x8xf32>
    %c0_242 = arith.constant 0 : index
    %c0_243 = arith.constant 0 : index
    %c0_244 = arith.constant 0 : index
    %198 = vector.load %arg6[%c0_242, %c0_243, %c0_244] : memref<1x64x8xf32, #tpu.memory_space<vmem>>, vector<1x64x8xf32>
    %199 = vector.shape_cast %198 : vector<1x64x8xf32> to vector<64x8xf32>
    %200 = arith.addf %199, %197 : vector<64x8xf32>
    %c0_245 = arith.constant 0 : index
    %c0_246 = arith.constant 0 : index
    %c0_247 = arith.constant 0 : index
    %201 = vector.load %arg6[%c0_245, %c0_246, %c0_247] : memref<1x64x8xf32, #tpu.memory_space<vmem>>, vector<1x64x8xf32>
    %202 = vector.shape_cast %201 : vector<1x64x8xf32> to vector<64x8xf32>
    %203 = vector.shape_cast %200 : vector<64x8xf32> to vector<1x64x8xf32>
    tpu.vector_store %arg6[%c0_245, %c0_246, %c0_247], %203 {strides = array<i32>} : memref<1x64x8xf32, #tpu.memory_space<vmem>>, vector<1x64x8xf32>,
    %c2_248 = arith.constant 2 : index
    %c0_249 = arith.constant 0 : index
    %c0_250 = arith.constant 0 : index
    %204 = tpu.strided_load %arg11[%c2_248, %c0_249, %c0_250] {strides = array<i32: 2, 1, 1>} : memref<18x8x4xf32, #tpu.memory_space<vmem>>, vector<8x8x4xf32>
    %205 = vector.shape_cast %204 : vector<8x8x4xf32> to vector<64x4xf32>
    %206 = arith.truncf %205 : vector<64x4xf32> to vector<64x4xbf16>
    %c7_251 = arith.constant 7 : index
    %c0_252 = arith.constant 0 : index
    %c0_253 = arith.constant 0 : index
    %207 = vector.load %arg4[%c7_251, %c0_252, %c0_253] : memref<9x4x8xbf16, #tpu.memory_space<vmem>>, vector<1x4x8xbf16>
    %208 = vector.shape_cast %207 : vector<1x4x8xbf16> to vector<4x8xbf16>
    %cst_254 = arith.constant dense<0.000000e+00> : vector<64x8xf32>
    %209 = tpu.matmul %206, %208, %cst_254 {dimension_numbers = #tpu.dot_dimension_numbers<[1], [0], [0], [1], [0, 0, 1, 1], [], []>} : vector<64x4xbf16>, vector<4x8xbf16>, vector<64x8xf32> -> vector<64x8xf32>
    %c0_255 = arith.constant 0 : index
    %c0_256 = arith.constant 0 : index
    %c0_257 = arith.constant 0 : index
    %210 = vector.load %arg6[%c0_255, %c0_256, %c0_257] : memref<1x64x8xf32, #tpu.memory_space<vmem>>, vector<1x64x8xf32>
    %211 = vector.shape_cast %210 : vector<1x64x8xf32> to vector<64x8xf32>
    %212 = arith.addf %211, %209 : vector<64x8xf32>
    %c0_258 = arith.constant 0 : index
    %c0_259 = arith.constant 0 : index
    %c0_260 = arith.constant 0 : index
    %213 = vector.load %arg6[%c0_258, %c0_259, %c0_260] : memref<1x64x8xf32, #tpu.memory_space<vmem>>, vector<1x64x8xf32>
    %214 = vector.shape_cast %213 : vector<1x64x8xf32> to vector<64x8xf32>
    %215 = vector.shape_cast %212 : vector<64x8xf32> to vector<1x64x8xf32>
    tpu.vector_store %arg6[%c0_258, %c0_259, %c0_260], %215 {strides = array<i32>} : memref<1x64x8xf32, #tpu.memory_space<vmem>>, vector<1x64x8xf32>,
    %c2_261 = arith.constant 2 : index
    %c0_262 = arith.constant 0 : index
    %c0_263 = arith.constant 0 : index
    %216 = tpu.strided_load %arg12[%c2_261, %c0_262, %c0_263] {strides = array<i32: 2, 1, 1>} : memref<18x8x4xf32, #tpu.memory_space<vmem>>, vector<8x8x4xf32>
    %217 = vector.shape_cast %216 : vector<8x8x4xf32> to vector<64x4xf32>
    %218 = arith.truncf %217 : vector<64x4xf32> to vector<64x4xbf16>
    %c8_264 = arith.constant 8 : index
    %c0_265 = arith.constant 0 : index
    %c0_266 = arith.constant 0 : index
    %219 = vector.load %arg4[%c8_264, %c0_265, %c0_266] : memref<9x4x8xbf16, #tpu.memory_space<vmem>>, vector<1x4x8xbf16>
    %220 = vector.shape_cast %219 : vector<1x4x8xbf16> to vector<4x8xbf16>
    %cst_267 = arith.constant dense<0.000000e+00> : vector<64x8xf32>
    %221 = tpu.matmul %218, %220, %cst_267 {dimension_numbers = #tpu.dot_dimension_numbers<[1], [0], [0], [1], [0, 0, 1, 1], [], []>} : vector<64x4xbf16>, vector<4x8xbf16>, vector<64x8xf32> -> vector<64x8xf32>
    %c0_268 = arith.constant 0 : index
    %c0_269 = arith.constant 0 : index
    %c0_270 = arith.constant 0 : index
    %222 = vector.load %arg6[%c0_268, %c0_269, %c0_270] : memref<1x64x8xf32, #tpu.memory_space<vmem>>, vector<1x64x8xf32>
    %223 = vector.shape_cast %222 : vector<1x64x8xf32> to vector<64x8xf32>
    %224 = arith.addf %223, %221 : vector<64x8xf32>
    %c0_271 = arith.constant 0 : index
    %c0_272 = arith.constant 0 : index
    %c0_273 = arith.constant 0 : index
    %225 = vector.load %arg6[%c0_271, %c0_272, %c0_273] : memref<1x64x8xf32, #tpu.memory_space<vmem>>, vector<1x64x8xf32>
    %226 = vector.shape_cast %225 : vector<1x64x8xf32> to vector<64x8xf32>
    %227 = vector.shape_cast %224 : vector<64x8xf32> to vector<1x64x8xf32>
    tpu.vector_store %arg6[%c0_271, %c0_272, %c0_273], %227 {strides = array<i32>} : memref<1x64x8xf32, #tpu.memory_space<vmem>>, vector<1x64x8xf32>,
    %c0_274 = arith.constant 0 : index
    %c0_275 = arith.constant 0 : index
    %c0_276 = arith.constant 0 : index
    %228 = vector.load %arg6[%c0_274, %c0_275, %c0_276] : memref<1x64x8xf32, #tpu.memory_space<vmem>>, vector<1x64x8xf32>
    %229 = vector.shape_cast %228 : vector<1x64x8xf32> to vector<64x8xf32>
    %c0_277 = arith.constant 0 : index
    %c0_278 = arith.constant 0 : index
    %230 = vector.load %arg5[%c0_277, %c0_278] : memref<1x8xf32, #tpu.memory_space<vmem>>, vector<1x8xf32>
    %231 = vector.broadcast %230 : vector<1x8xf32> to vector<64x8xf32>
    %232 = arith.addf %229, %231 : vector<64x8xf32>
    %cst_279 = arith.constant 0.000000e+00 : f32
    %233 = vector.broadcast %cst_279 : f32 to vector<64x8xf32>
    %234 = arith.cmpf ogt, %232, %233 : vector<64x8xf32>
    %cst_280 = arith.constant 2.000000e-01 : f32
    %235 = vector.broadcast %cst_280 : f32 to vector<64x8xf32>
    %236 = arith.mulf %235, %232 : vector<64x8xf32>
    %237 = arith.select %234, %232, %236 : vector<64x8xi1>, vector<64x8xf32>
    %c0_281 = arith.constant 0 : index
    %c0_282 = arith.constant 0 : index
    %c0_283 = arith.constant 0 : index
    %238 = vector.load %arg6[%c0_281, %c0_282, %c0_283] : memref<1x64x8xf32, #tpu.memory_space<vmem>>, vector<1x64x8xf32>
    %239 = vector.shape_cast %238 : vector<1x64x8xf32> to vector<64x8xf32>
    %240 = vector.shape_cast %237 : vector<64x8xf32> to vector<1x64x8xf32>
    tpu.vector_store %arg6[%c0_281, %c0_282, %c0_283], %240 {strides = array<i32>} : memref<1x64x8xf32, #tpu.memory_space<vmem>>, vector<1x64x8xf32>,
    return
  }
  func.func @transform_0(%arg0: i32) -> (i32, i32, i32, i32) {
    %c0_i32 = arith.constant 0 : i32
    %c0_i32_0 = arith.constant 0 : i32
    %c0_i32_1 = arith.constant 0 : i32
    %c0_i32_2 = arith.constant 0 : i32
    return %arg0, %c0_i32, %c0_i32_0, %c0_i32_1 : i32, i32, i32, i32
  }
  func.func @transform_1(%arg0: i32) -> (i32, i32, i32) {
    %c0_i32 = arith.constant 0 : i32
    %c0_i32_0 = arith.constant 0 : i32
    %c0_i32_1 = arith.constant 0 : i32
    %c0_i32_2 = arith.constant 0 : i32
    return %c0_i32, %c0_i32_0, %c0_i32_1 : i32, i32, i32
  }
  func.func @transform_2(%arg0: i32) -> (i32, i32) {
    %c0_i32 = arith.constant 0 : i32
    %c0_i32_0 = arith.constant 0 : i32
    %c0_i32_1 = arith.constant 0 : i32
    return %c0_i32, %c0_i32_0 : i32, i32
  }
  func.func @transform_3(%arg0: i32) -> (i32, i32, i32) {
    %c0_i32 = arith.constant 0 : i32
    %c0_i32_0 = arith.constant 0 : i32
    %c0_i32_1 = arith.constant 0 : i32
    %c0_i32_2 = arith.constant 0 : i32
    return %c0_i32, %c0_i32_0, %c0_i32_1 : i32, i32, i32
  }
  func.func @transform_4(%arg0: i32) -> (i32, i32) {
    %c0_i32 = arith.constant 0 : i32
    %c0_i32_0 = arith.constant 0 : i32
    %c0_i32_1 = arith.constant 0 : i32
    return %c0_i32, %c0_i32_0 : i32, i32
  }
  func.func @transform_5(%arg0: i32) -> (i32, i32, i32) {
    %c0_i32 = arith.constant 0 : i32
    %c0_i32_0 = arith.constant 0 : i32
    %c0_i32_1 = arith.constant 0 : i32
    return %arg0, %c0_i32, %c0_i32_0 : i32, i32, i32
  }
}

</mosaic_0001>

<llo_original>
// kernel: tpu_custom_call.1
$region0: #{tpu_custom_call.1}
  #allocation0 [shape = 'u32[]', space=smem, size = 0x4, offset = 0x4, fixed_abs, tag = 'smem constant byte address 0x4 - core index']
  #allocation1 [shape = 'u32[144,128]{1,0:T(1,128)}', space=vmem, size = 0x12000, scoped, tag = 'internal scratch']
  #allocation2 [shape = 'f32[18,32,4]{2,1,0:T(8,128)}', space=vmem, size = 0x48000, scoped, tag = 'scratch operand']
  #allocation3 [shape = 'f32[16,32,4]{2,1,0:T(8,128)}', space=vmem, size = 0x40000, scoped, tag = 'scratch operand']
  #allocation4 [shape = 'f32[256,4]{1,0:T(8,128)}', space=vmem, size = 0x20000, scoped, tag = 'scratch operand']
  #allocation5 [shape = 'f32[18,8,4]{2,1,0:T(8,128)}', space=vmem, size = 0x12000, scoped, tag = 'scratch operand']
  #allocation6 [shape = 'f32[18,8,4]{2,1,0:T(8,128)}', space=vmem, size = 0x12000, scoped, tag = 'scratch operand']
  #allocation7 [shape = 'f32[18,8,4]{2,1,0:T(8,128)}', space=vmem, size = 0x12000, scoped, tag = 'scratch operand']
  %s0 = inlined_call_operand.vmem [shape: f32[2,16,16,4], index: 0, kind: input, shape index: {}]
  %s1 = inlined_call_operand.vmem [shape: bf16[9,4,4], index: 1, kind: input, shape index: {}]
  %s2 = inlined_call_operand.vmem [shape: f32[1,4], index: 2, kind: input, shape index: {}]
  %s3 = inlined_call_operand.vmem [shape: bf16[9,4,8], index: 3, kind: input, shape index: {}]
  %s4 = inlined_call_operand.vmem [shape: f32[1,8], index: 4, kind: input, shape index: {}]
  %s5 = inlined_call_operand.vmem [shape: f32[2,64,8], index: 5, kind: output, shape index: {}]
  %s6 = sld [smem:[#allocation0]]
  $region53: #{tpu_custom_call.1} parent=0
    _
  %s8 = ssub.s32 1, %s6
  %s9 = scalar_select 0, %s8, %s6
  loop: start=0, step=1, limit=4
  $region2: #{tpu_custom_call.1} parent=0 // loop_pre_header
    _
  $region3: #{tpu_custom_call.1} parent=0 // loop_header
    %s11 = sphi 0, %s15
    %p12 = scmp.ge.s32.totalorder %s11, 4
    %s21 = sphi 0, %s23
    %s24 = sphi 0, %s21
    %s25 = sphi 0, %s24
    %s41 = sphi 0, %s25
    %s45 = sphi 0, %s45
    %s47 = sphi 0, %s45
    %s48 = sphi 0, %s47
    %s62 = sphi 0, %s48
    %s66 = sphi 0, %s66
    %s68 = sphi 0, %s66
    %s69 = sphi 0, %s68
    %s83 = sphi 0, %s69
    %s87 = sphi 0, %s87
    %s89 = sphi 0, %s87
    %s90 = sphi 0, %s89
    %s104 = sphi 0, %s90
    %s108 = sphi 0, %s108
    %s110 = sphi 0, %s108
    %s111 = sphi 0, %s110
    %s125 = sphi 0, %s111
    %s131 = sphi 0, %s133
    %s134 = sphi 0, %s131
    %s135 = sphi 0, %s134
    %s151 = sphi 0, %s135
  $region4: #{tpu_custom_call.1} parent=0 // loop_header_branch
    %14 = sbr.rel (%p12) target = $region8
  $region5: #{tpu_custom_call.1} parent=0 // loop_body
    %s16 = ssub.s32 %s11, 1
    %s17 = ssub.s32 %s11, 2
    %s18 = sadd.s32 %s11, 1
    %s19 = ssub.s32 %s11, %s18
    %p20 = scmp.eq.s32.totalorder %s19, 0
    %s22 = sadd.s32 %s21, 1
    %s23 = scalar_select %p20, %s21, %s22
    %p26 = pneg %p20
    %p27 = scmp.eq.s32.totalorder %s11, 1
    %p28 = por %p26, %p27
    %p29 = scmp.ne.s32.totalorder %s21, %s24
    %p30 = scmp.eq.s32.totalorder %s11, 0
    %p31 = por %p29, %p30
    %p32 = scmp.ne.s32.totalorder %s21, %s24
    %p33 = scmp.eq.s32.totalorder %s16, 1
    %p34 = por %p32, %p33
    %p35 = scmp.ne.s32.totalorder %s24, %s25
    %p36 = scmp.eq.s32.totalorder %s16, 0
    %p37 = por %p35, %p36
    %p38 = scmp.ne.s32.totalorder %s24, %s25
    %p39 = scmp.eq.s32.totalorder %s17, 1
    %p40 = por %p38, %p39
    %p42 = scmp.ne.s32.totalorder %s25, %s41
    %p43 = scmp.eq.s32.totalorder %s17, 0
    %p44 = por %p42, %p43
    %s46 = sadd.s32 %s45, 1
    %p49 = scmp.eq.s32.totalorder %s11, 1
    %p50 = scmp.ne.s32.totalorder %s45, %s47
    %p51 = scmp.eq.s32.totalorder %s11, 0
    %p52 = por %p50, %p51
    %p53 = scmp.ne.s32.totalorder %s45, %s47
    %p54 = scmp.eq.s32.totalorder %s16, 1
    %p55 = por %p53, %p54
    %p56 = scmp.ne.s32.totalorder %s47, %s48
    %p57 = scmp.eq.s32.totalorder %s16, 0
    %p58 = por %p56, %p57
    %p59 = scmp.ne.s32.totalorder %s47, %s48
    %p60 = scmp.eq.s32.totalorder %s17, 1
    %p61 = por %p59, %p60
    %p63 = scmp.ne.s32.totalorder %s48, %s62
    %p64 = scmp.eq.s32.totalorder %s17, 0
    %p65 = por %p63, %p64
    %s67 = sadd.s32 %s66, 1
    %p70 = scmp.eq.s32.totalorder %s11, 1
    %p71 = scmp.ne.s32.totalorder %s66, %s68
    %p72 = scmp.eq.s32.totalorder %s11, 0
    %p73 = por %p71, %p72
    %p74 = scmp.ne.s32.totalorder %s66, %s68
    %p75 = scmp.eq.s32.totalorder %s16, 1
    %p76 = por %p74, %p75
    %p77 = scmp.ne.s32.totalorder %s68, %s69
    %p78 = scmp.eq.s32.totalorder %s16, 0
    %p79 = por %p77, %p78
    %p80 = scmp.ne.s32.totalorder %s68, %s69
    %p81 = scmp.eq.s32.totalorder %s17, 1
    %p82 = por %p80, %p81
    %p84 = scmp.ne.s32.totalorder %s69, %s83
    %p85 = scmp.eq.s32.totalorder %s17, 0
    %p86 = por %p84, %p85
    %s88 = sadd.s32 %s87, 1
    %p91 = scmp.eq.s32.totalorder %s11, 1
    %p92 = scmp.ne.s32.totalorder %s87, %s89
    %p93 = scmp.eq.s32.totalorder %s11, 0
    %p94 = por %p92, %p93
    %p95 = scmp.ne.s32.totalorder %s87, %s89
    %p96 = scmp.eq.s32.totalorder %s16, 1
    %p97 = por %p95, %p96
    %p98 = scmp.ne.s32.totalorder %s89, %s90
    %p99 = scmp.eq.s32.totalorder %s16, 0
    %p100 = por %p98, %p99
    %p101 = scmp.ne.s32.totalorder %s89, %s90
    %p102 = scmp.eq.s32.totalorder %s17, 1
    %p103 = por %p101, %p102
    %p105 = scmp.ne.s32.totalorder %s90, %s104
    %p106 = scmp.eq.s32.totalorder %s17, 0
    %p107 = por %p105, %p106
    %s109 = sadd.s32 %s108, 1
    %p112 = scmp.eq.s32.totalorder %s11, 1
    %p113 = scmp.ne.s32.totalorder %s108, %s110
    %p114 = scmp.eq.s32.totalorder %s11, 0
    %p115 = por %p113, %p114
    %p116 = scmp.ne.s32.totalorder %s108, %s110
    %p117 = scmp.eq.s32.totalorder %s16, 1
    %p118 = por %p116, %p117
    %p119 = scmp.ne.s32.totalorder %s110, %s111
    %p120 = scmp.eq.s32.totalorder %s16, 0
    %p121 = por %p119, %p120
    %p122 = scmp.ne.s32.totalorder %s110, %s111
    %p123 = scmp.eq.s32.totalorder %s17, 1
    %p124 = por %p122, %p123
    %p126 = scmp.ne.s32.totalorder %s111, %s125
    %p127 = scmp.eq.s32.totalorder %s17, 0
    %p128 = por %p126, %p127
    %s129 = ssub.s32 %s11, %s18
    %p130 = scmp.eq.s32.totalorder %s129, 0
    %s132 = sadd.s32 %s131, 1
    %s133 = scalar_select %p130, %s131, %s132
    %p136 = pneg %p130
    %p137 = scmp.eq.s32.totalorder %s11, 1
    %p138 = por %p136, %p137
    %p139 = scmp.ne.s32.totalorder %s131, %s134
    %p140 = scmp.eq.s32.totalorder %s11, 0
    %p141 = por %p139, %p140
    %p142 = scmp.ne.s32.totalorder %s131, %s134
    %p143 = scmp.eq.s32.totalorder %s16, 1
    %p144 = por %p142, %p143
    %p145 = scmp.ne.s32.totalorder %s134, %s135
    %p146 = scmp.eq.s32.totalorder %s16, 0
    %p147 = por %p145, %p146
    %p148 = scmp.ne.s32.totalorder %s134, %s135
    %p149 = scmp.eq.s32.totalorder %s17, 1
    %p150 = por %p148, %p149
    %p152 = scmp.ne.s32.totalorder %s135, %s151
    %p153 = scmp.eq.s32.totalorder %s17, 0
    %p154 = por %p152, %p153
    %p155 = scmp.le.s32.totalorder 1, %s11
    %p156 = scmp.lt.s32.totalorder %s11, 3
    %p157 = pnand %p155, %p156
    %p158 = pneg %p157
    // Predicated region
    $region9: #{tpu_custom_call.1} parent=5 // pred_check
      _
    $region10: #{tpu_custom_call.1} parent=5 // pred_check_branch
      %160 = sbr.rel (%p157) target = $region12
    $region11: #{tpu_custom_call.1} parent=5 // pred_region
      %s161 = ssub.s32 %s11, 1
      // Predicated region
      $region13: #{tpu_custom_call.1} parent=11 // pred_check
        %p162 = pneg %p58
      $region14: #{tpu_custom_call.1} parent=11 // pred_check_branch
        %164 = sbr.rel (%p162) target = $region16
      $region15: #{tpu_custom_call.1} parent=11 // pred_region
        _
      $region16: #{tpu_custom_call.1} parent=11 // pred_fallthru
        _
      // Predicated region
      $region17: #{tpu_custom_call.1} parent=11 // pred_check
        %p165 = pneg %p79
      $region18: #{tpu_custom_call.1} parent=11 // pred_check_branch
        %167 = sbr.rel (%p165) target = $region20
      $region19: #{tpu_custom_call.1} parent=11 // pred_region
        _
      $region20: #{tpu_custom_call.1} parent=11 // pred_fallthru
        _
      // Predicated region
      $region21: #{tpu_custom_call.1} parent=11 // pred_check
        %p168 = pneg %p100
      $region22: #{tpu_custom_call.1} parent=11 // pred_check_branch
        %170 = sbr.rel (%p168) target = $region24
      $region23: #{tpu_custom_call.1} parent=11 // pred_region
        _
      $region24: #{tpu_custom_call.1} parent=11 // pred_fallthru
        _
      // Predicated region
      $region25: #{tpu_custom_call.1} parent=11 // pred_check
        %p171 = pneg %p121
      $region26: #{tpu_custom_call.1} parent=11 // pred_check_branch
        %173 = sbr.rel (%p171) target = $region28
      $region27: #{tpu_custom_call.1} parent=11 // pred_region
        _
      $region28: #{tpu_custom_call.1} parent=11 // pred_fallthru
        _
    $region12: #{tpu_custom_call.1} parent=5 // pred_fallthru
      _
    %p174 = scmp.lt.s32.totalorder %s11, 2
    // Predicated region
    $region29: #{tpu_custom_call.1} parent=5 // pred_check
      %p175 = pneg %p174
    $region30: #{tpu_custom_call.1} parent=5 // pred_check_branch
      %177 = sbr.rel (%p175) target = $region32
    $region31: #{tpu_custom_call.1} parent=5 // pred_region
      // Predicated region
      $region33: #{tpu_custom_call.1} parent=31 // pred_check
        %p178 = pneg %p31
      $region34: #{tpu_custom_call.1} parent=31 // pred_check_branch
        %180 = sbr.rel (%p178) target = $region36
      $region35: #{tpu_custom_call.1} parent=31 // pred_region
        %p181 = scmp.lt.s32.totalorder %s11, 1
        %s182 = scalar_select %p181, %s11, 1
        %s183 = smul.addr %s182, 32
        %s184 = smul.addr %s183, 8
        %s185 = scalar_lea.vmem %s0, %s184
      $region36: #{tpu_custom_call.1} parent=31 // pred_fallthru
        _
    $region32: #{tpu_custom_call.1} parent=5 // pred_fallthru
      _
    %p186 = scmp.le.s32.totalorder 1, %s11
    %p187 = scmp.lt.s32.totalorder %s11, 3
    %p188 = pnand %p186, %p187
    %p189 = pneg %p188
    // Predicated region
    $region37: #{tpu_custom_call.1} parent=5 // pred_check
      _
    $region38: #{tpu_custom_call.1} parent=5 // pred_check_branch
      %191 = sbr.rel (%p188) target = $region40
    $region39: #{tpu_custom_call.1} parent=5 // pred_region
      %s192 = ssub.s32 %s11, 1
      %p193 = scmp.lt.s32.totalorder %s16, 1
      %s194 = scalar_select %p193, %s16, 1
      %s195 = smul.addr %s194, 32
      %s196 = smul.addr %s195, 8
      %s197 = scalar_lea.vmem %s0, %s196
      %p198 = pneg %p37
      %p199 = pneg %p34
      %p200 = pneg %p58
      %p201 = pneg %p55
      %p202 = pneg %p79
      %p203 = pneg %p76
      %p204 = pneg %p100
      %p205 = pneg %p97
      %p206 = pneg %p121
      %p207 = pneg %p118
      %p208 = pneg %p147
      %p209 = pneg %p144
      %p210 = scmp.lt.s32.totalorder %s16, 1
      %s211 = scalar_select %p210, %s16, 1
      %s212 = smul.addr %s211, 8
      %s213 = smul.addr %s212, 8
      %s214 = scalar_lea.vmem %s5, %s213
      %p215 = scmp.lt.s32.totalorder %s16, 1
      %s216 = scalar_select %p215, %s16, 1
      %s217 = smul.addr %s216, 32
      %s218 = smul.addr %s217, 8
      %s219 = scalar_lea.vmem %s0, %s218
      %p220 = scmp.lt.s32.totalorder %s16, 1
      %s221 = scalar_select %p220, %s16, 1
      %s222 = smul.addr %s221, 8
      %s223 = smul.addr %s222, 8
      %s224 = scalar_lea.vmem %s5, %s223
      %vm226 = vcmask 31744
      %227 = vst.msk [vmem:[#allocation2] sm:$0xff] %vm226, 0.0
      %228 = vst.msk [vmem:[#allocation2 + $0x8] sm:$0xff] %vm226, 0.0
      %229 = vst.msk [vmem:[#allocation2 + $0x10] sm:$0xff] %vm226, 0.0
      %230 = vst.msk [vmem:[#allocation2 + $0x18] sm:$0xff] %vm226, 0.0
      %s231 = scalar_lea.vmem [#allocation2], 544
      %232 = vst.msk [vmem:[%s231] sm:$0xff] %vm226, 0.0
      %233 = vst.msk [vmem:[%s231 + $0x8] sm:$0xff] %vm226, 0.0
      %234 = vst.msk [vmem:[%s231 + $0x10] sm:$0xff] %vm226, 0.0
      %235 = vst.msk [vmem:[%s231 + $0x18] sm:$0xff] %vm226, 0.0
      %s236 = scalar_lea.vmem [#allocation2], 32
      %237 = vst.msk [vmem:[%s236] sm:$0xff] %vm226, 0.0
      %238 = vst.msk [vmem:[%s236 + $0x20] sm:$0xff] %vm226, 0.0
      %239 = vst.msk [vmem:[%s236 + $0x40] sm:$0xff] %vm226, 0.0
      %240 = vst.msk [vmem:[%s236 + $0x60] sm:$0xff] %vm226, 0.0
      %241 = vst.msk [vmem:[%s236 + $0x80] sm:$0xff] %vm226, 0.0
      %242 = vst.msk [vmem:[%s236 + $0xa0] sm:$0xff] %vm226, 0.0
      %243 = vst.msk [vmem:[%s236 + $0xc0] sm:$0xff] %vm226, 0.0
      %244 = vst.msk [vmem:[%s236 + $0xe0] sm:$0xff] %vm226, 0.0
      %245 = vst.msk [vmem:[%s236 + $0x100] sm:$0xff] %vm226, 0.0
      %246 = vst.msk [vmem:[%s236 + $0x120] sm:$0xff] %vm226, 0.0
      %247 = vst.msk [vmem:[%s236 + $0x140] sm:$0xff] %vm226, 0.0
      %248 = vst.msk [vmem:[%s236 + $0x160] sm:$0xff] %vm226, 0.0
      %249 = vst.msk [vmem:[%s236 + $0x180] sm:$0xff] %vm226, 0.0
      %250 = vst.msk [vmem:[%s236 + $0x1a0] sm:$0xff] %vm226, 0.0
      %251 = vst.msk [vmem:[%s236 + $0x1c0] sm:$0xff] %vm226, 0.0
      %252 = vst.msk [vmem:[%s236 + $0x1e0] sm:$0xff] %vm226, 0.0
      %253 = vst.msk [vmem:[%s236 + $0x18] sm:$0xff] %vm226, 0.0
      %254 = vst.msk [vmem:[%s236 + $0x38] sm:$0xff] %vm226, 0.0
      %255 = vst.msk [vmem:[%s236 + $0x58] sm:$0xff] %vm226, 0.0
      %256 = vst.msk [vmem:[%s236 + $0x78] sm:$0xff] %vm226, 0.0
      %257 = vst.msk [vmem:[%s236 + $0x98] sm:$0xff] %vm226, 0.0
      %258 = vst.msk [vmem:[%s236 + $0xb8] sm:$0xff] %vm226, 0.0
      %259 = vst.msk [vmem:[%s236 + $0xd8] sm:$0xff] %vm226, 0.0
      %260 = vst.msk [vmem:[%s236 + $0xf8] sm:$0xff] %vm226, 0.0
      %261 = vst.msk [vmem:[%s236 + $0x118] sm:$0xff] %vm226, 0.0
      %262 = vst.msk [vmem:[%s236 + $0x138] sm:$0xff] %vm226, 0.0
      %263 = vst.msk [vmem:[%s236 + $0x158] sm:$0xff] %vm226, 0.0
      %264 = vst.msk [vmem:[%s236 + $0x178] sm:$0xff] %vm226, 0.0
      %265 = vst.msk [vmem:[%s236 + $0x198] sm:$0xff] %vm226, 0.0
      %266 = vst.msk [vmem:[%s236 + $0x1b8] sm:$0xff] %vm226, 0.0
      %267 = vst.msk [vmem:[%s236 + $0x1d8] sm:$0xff] %vm226, 0.0
      %268 = vst.msk [vmem:[%s236 + $0x1f8] sm:$0xff] %vm226, 0.0
      %v269 = vld [vmem:[%s219] sm:$0xff]
      %v270 = vld [vmem:[%s219 + $0x8] sm:$0xff]
      %v271 = vld [vmem:[%s219 + $0x10] sm:$0xff]
      %v272 = vld [vmem:[%s219 + $0x18] sm:$0xff]
      %v273 = vld [vmem:[%s219 + $0x20] sm:$0xff]
      %v274 = vld [vmem:[%s219 + $0x28] sm:$0xff]
      %v275 = vld [vmem:[%s219 + $0x30] sm:$0xff]
      %v276 = vld [vmem:[%s219 + $0x38] sm:$0xff]
      %v277 = vld [vmem:[%s219 + $0x40] sm:$0xff]
      %v278 = vld [vmem:[%s219 + $0x48] sm:$0xff]
      %v279 = vld [vmem:[%s219 + $0x50] sm:$0xff]
      %v280 = vld [vmem:[%s219 + $0x58] sm:$0xff]
      %v281 = vld [vmem:[%s219 + $0x60] sm:$0xff]
      %v282 = vld [vmem:[%s219 + $0x68] sm:$0xff]
      %v283 = vld [vmem:[%s219 + $0x70] sm:$0xff]
      %v284 = vld [vmem:[%s219 + $0x78] sm:$0xff]
      %v285 = vld [vmem:[%s219 + $0x80] sm:$0xff]
      %v286 = vld [vmem:[%s219 + $0x88] sm:$0xff]
      %v287 = vld [vmem:[%s219 + $0x90] sm:$0xff]
      %v288 = vld [vmem:[%s219 + $0x98] sm:$0xff]
      %v289 = vld [vmem:[%s219 + $0xa0] sm:$0xff]
      %v290 = vld [vmem:[%s219 + $0xa8] sm:$0xff]
      %v291 = vld [vmem:[%s219 + $0xb0] sm:$0xff]
      %v292 = vld [vmem:[%s219 + $0xb8] sm:$0xff]
      %v293 = vld [vmem:[%s219 + $0xc0] sm:$0xff]
      %v294 = vld [vmem:[%s219 + $0xc8] sm:$0xff]
      %v295 = vld [vmem:[%s219 + $0xd0] sm:$0xff]
      %v296 = vld [vmem:[%s219 + $0xd8] sm:$0xff]
      %v297 = vld [vmem:[%s219 + $0xe0] sm:$0xff]
      %v298 = vld [vmem:[%s219 + $0xe8] sm:$0xff]
      %v299 = vld [vmem:[%s219 + $0xf0] sm:$0xff]
      %v300 = vld [vmem:[%s219 + $0xf8] sm:$0xff]
      %301 = vst.msk [vmem:[%s236 + $0x8] sm:$0xff] %vm226, %v269
      %302 = vst.msk [vmem:[%s236 + $0x10] sm:$0xff] %vm226, %v270
      %303 = vst.msk [vmem:[%s236 + $0x28] sm:$0xff] %vm226, %v271
      %304 = vst.msk [vmem:[%s236 + $0x30] sm:$0xff] %vm226, %v272
      %305 = vst.msk [vmem:[%s236 + $0x48] sm:$0xff] %vm226, %v273
      %306 = vst.msk [vmem:[%s236 + $0x50] sm:$0xff] %vm226, %v274
      %307 = vst.msk [vmem:[%s236 + $0x68] sm:$0xff] %vm226, %v275
      %308 = vst.msk [vmem:[%s236 + $0x70] sm:$0xff] %vm226, %v276
      %309 = vst.msk [vmem:[%s236 + $0x88] sm:$0xff] %vm226, %v277
      %310 = vst.msk [vmem:[%s236 + $0x90] sm:$0xff] %vm226, %v278
      %311 = vst.msk [vmem:[%s236 + $0xa8] sm:$0xff] %vm226, %v279
      %312 = vst.msk [vmem:[%s236 + $0xb0] sm:$0xff] %vm226, %v280
      %313 = vst.msk [vmem:[%s236 + $0xc8] sm:$0xff] %vm226, %v281
      %314 = vst.msk [vmem:[%s236 + $0xd0] sm:$0xff] %vm226, %v282
      %315 = vst.msk [vmem:[%s236 + $0xe8] sm:$0xff] %vm226, %v283
      %316 = vst.msk [vmem:[%s236 + $0xf0] sm:$0xff] %vm226, %v284
      %317 = vst.msk [vmem:[%s236 + $0x108] sm:$0xff] %vm226, %v285
      %318 = vst.msk [vmem:[%s236 + $0x110] sm:$0xff] %vm226, %v286
      %319 = vst.msk [vmem:[%s236 + $0x128] sm:$0xff] %vm226, %v287
      %320 = vst.msk [vmem:[%s236 + $0x130] sm:$0xff] %vm226, %v288
      %321 = vst.msk [vmem:[%s236 + $0x148] sm:$0xff] %vm226, %v289
      %322 = vst.msk [vmem:[%s236 + $0x150] sm:$0xff] %vm226, %v290
      %323 = vst.msk [vmem:[%s236 + $0x168] sm:$0xff] %vm226, %v291
      %324 = vst.msk [vmem:[%s236 + $0x170] sm:$0xff] %vm226, %v292
      %325 = vst.msk [vmem:[%s236 + $0x188] sm:$0xff] %vm226, %v293
      %326 = vst.msk [vmem:[%s236 + $0x190] sm:$0xff] %vm226, %v294
      %327 = vst.msk [vmem:[%s236 + $0x1a8] sm:$0xff] %vm226, %v295
      %328 = vst.msk [vmem:[%s236 + $0x1b0] sm:$0xff] %vm226, %v296
      %329 = vst.msk [vmem:[%s236 + $0x1c8] sm:$0xff] %vm226, %v297
      %330 = vst.msk [vmem:[%s236 + $0x1d0] sm:$0xff] %vm226, %v298
      %331 = vst.msk [vmem:[%s236 + $0x1e8] sm:$0xff] %vm226, %v299
      %332 = vst.msk [vmem:[%s236 + $0x1f0] sm:$0xff] %vm226, %v300
      %v333 = vld [vmem:[#allocation2 + $0x7] sm:$0xff]
      %v334 = vld [vmem:[#allocation2 + $0xf] sm:$0xff]
      %v335 = vld [vmem:[#allocation2 + $0x27] sm:$0xff]
      %v336 = vld [vmem:[#allocation2 + $0x2f] sm:$0xff]
      %v337 = vld [vmem:[#allocation2 + $0x47] sm:$0xff]
      %v338 = vld [vmem:[#allocation2 + $0x4f] sm:$0xff]
      %v339 = vld [vmem:[#allocation2 + $0x67] sm:$0xff]
      %v340 = vld [vmem:[#allocation2 + $0x6f] sm:$0xff]
      %v341 = vld [vmem:[#allocation2 + $0x87] sm:$0xff]
      %v342 = vld [vmem:[#allocation2 + $0x8f] sm:$0xff]
      %v343 = vld [vmem:[#allocation2 + $0xa7] sm:$0xff]
      %v344 = vld [vmem:[#allocation2 + $0xaf] sm:$0xff]
      %v345 = vld [vmem:[#allocation2 + $0xc7] sm:$0xff]
      %v346 = vld [vmem:[#allocation2 + $0xcf] sm:$0xff]
      %v347 = vld [vmem:[#allocation2 + $0xe7] sm:$0xff]
      %v348 = vld [vmem:[#allocation2 + $0xef] sm:$0xff]
      %v349 = vld [vmem:[#allocation2 + $0x107] sm:$0xff]
      %v350 = vld [vmem:[#allocation2 + $0x10f] sm:$0xff]
      %v351 = vld [vmem:[#allocation2 + $0x127] sm:$0xff]
      %v352 = vld [vmem:[#allocation2 + $0x12f] sm:$0xff]
      %v353 = vld [vmem:[#allocation2 + $0x147] sm:$0xff]
      %v354 = vld [vmem:[#allocation2 + $0x14f] sm:$0xff]
      %v355 = vld [vmem:[#allocation2 + $0x167] sm:$0xff]
      %v356 = vld [vmem:[#allocation2 + $0x16f] sm:$0xff]
      %v357 = vld [vmem:[#allocation2 + $0x187] sm:$0xff]
      %v358 = vld [vmem:[#allocation2 + $0x18f] sm:$0xff]
      %v359 = vld [vmem:[#allocation2 + $0x1a7] sm:$0xff]
      %v360 = vld [vmem:[#allocation2 + $0x1af] sm:$0xff]
      %v361 = vld [vmem:[#allocation2 + $0x1c7] sm:$0xff]
      %v362 = vld [vmem:[#allocation2 + $0x1cf] sm:$0xff]
      %v363 = vld [vmem:[#allocation2 + $0x1e7] sm:$0xff]
      %v364 = vld [vmem:[#allocation2 + $0x1ef] sm:$0xff]
      %v365 = vpack.c.bf16 %v334, %v333
      %v366 = vpack.c.bf16 %v336, %v335
      %v367 = vpack.c.bf16 %v338, %v337
      %v368 = vpack.c.bf16 %v340, %v339
      %v369 = vpack.c.bf16 %v342, %v341
      %v370 = vpack.c.bf16 %v344, %v343
      %v371 = vpack.c.bf16 %v346, %v345
      %v372 = vpack.c.bf16 %v348, %v347
      %v373 = vpack.c.bf16 %v350, %v349
      %v374 = vpack.c.bf16 %v352, %v351
      %v375 = vpack.c.bf16 %v354, %v353
      %v376 = vpack.c.bf16 %v356, %v355
      %v377 = vpack.c.bf16 %v358, %v357
      %v378 = vpack.c.bf16 %v360, %v359
      %v379 = vpack.c.bf16 %v362, %v361
      %v380 = vpack.c.bf16 %v364, %v363
      %v381 = vld [vmem:[%s1] sm:$0x3]
      %v383 = vsel %vm226, %v365, 0
      %v386 = vsel %vm226, %v366, 0
      %v389 = vsel %vm226, %v367, 0
      %v392 = vsel %vm226, %v368, 0
      %v395 = vsel %vm226, %v369, 0
      %v398 = vsel %vm226, %v370, 0
      %v401 = vsel %vm226, %v371, 0
      %v404 = vsel %vm226, %v372, 0
      %v407 = vsel %vm226, %v373, 0
      %v410 = vsel %vm226, %v374, 0
      %v413 = vsel %vm226, %v375, 0
      %v416 = vsel %vm226, %v376, 0
      %v419 = vsel %vm226, %v377, 0
      %v422 = vsel %vm226, %v378, 0
      %v425 = vsel %vm226, %v379, 0
      %v428 = vsel %vm226, %v380, 0
      %vm430 = vcmask 1041408
      %v432 = vsel %vm430, %v381, 0
      %434 = vmatprep.subr.bf16.mxu0 0
      %435 = vmatpush1.bf16.msra.mxu0 0
      %436 = vmatprep.subr.bf16.mxu0 0
      %437 = vmatpush1.bf16.msra.mxu0 0
      %438 = vmatprep.subr.bf16.mxu0 0
      %439 = vmatpush1.bf16.msra.mxu0 0
      %440 = vmatprep.subr.bf16.mxu0 0
      %441 = vmatpush1.bf16.msra.mxu0 0
      %442 = vmatprep.subr.bf16.mxu0 0
      %443 = vmatpush1.bf16.msra.mxu0 0
      %444 = vmatprep.subr.bf16.mxu0 0
      %445 = vmatpush1.bf16.msra.mxu0 0
      %446 = vmatprep.subr.bf16.mxu0 0
      %447 = vmatpush1.bf16.msra.mxu0 0
      %448 = vmatprep.subr.bf16.mxu0 0
      %449 = vmatpush1.bf16.msra.mxu0 %v432
      %450 = vmatprep.subr.bf16.mxu0 0
      %451 = vmatpush2.bf16.msra.mxu0 0
      %452 = vmatprep.subr.bf16.mxu0 0
      %453 = vmatpush2.bf16.msra.mxu0 0
      %454 = vmatprep.subr.bf16.mxu0 0
      %455 = vmatpush2.bf16.msra.mxu0 0
      %456 = vmatprep.subr.bf16.mxu0 0
      %457 = vmatpush2.bf16.msra.mxu0 0
      %458 = vmatprep.subr.bf16.mxu0 0
      %459 = vmatpush2.bf16.msra.mxu0 0
      %460 = vmatprep.subr.bf16.mxu0 0
      %461 = vmatpush2.bf16.msra.mxu0 0
      %462 = vmatprep.subr.bf16.mxu0 0
      %463 = vmatpush2.bf16.msra.mxu0 0
      %464 = vmatprep.subr.bf16.mxu0 0
      %465 = vmatpush2.bf16.msra.mxu0 0
      %466 = vmatprep.mubr.bf16.mxu0 0
      %467 = vmatmul.mubr.bf16.gmra.mxu0 %v383
      %v468 = vpop.f32.mrf.mxu0
      %v469 = vadd.f32 0.0, %v468
      %v470 = vpop.f32.mrf.mxu0
      %v471 = vpop.f32.mrf.mxu0
      %v472 = vadd.f32 0.0, %v471
      %v473 = vpop.f32.mrf.mxu0
      %474 = vmatprep.mubr.bf16.mxu0 0
      %475 = vmatmul.mubr.bf16.gmra.mxu0 %v386
      %v476 = vpop.f32.mrf.mxu0
      %v477 = vadd.f32 0.0, %v476
      %v478 = vpop.f32.mrf.mxu0
      %v479 = vpop.f32.mrf.mxu0
      %v480 = vadd.f32 0.0, %v479
      %v481 = vpop.f32.mrf.mxu0
      %482 = vmatprep.mubr.bf16.mxu0 0
      %483 = vmatmul.mubr.bf16.gmra.mxu0 %v389
      %v484 = vpop.f32.mrf.mxu0
      %v485 = vadd.f32 0.0, %v484
      %v486 = vpop.f32.mrf.mxu0
      %v487 = vpop.f32.mrf.mxu0
      %v488 = vadd.f32 0.0, %v487
      %v489 = vpop.f32.mrf.mxu0
      %490 = vmatprep.mubr.bf16.mxu0 0
      %491 = vmatmul.mubr.bf16.gmra.mxu0 %v392
      %v492 = vpop.f32.mrf.mxu0
      %v493 = vadd.f32 0.0, %v492
      %v494 = vpop.f32.mrf.mxu0
      %v495 = vpop.f32.mrf.mxu0
      %v496 = vadd.f32 0.0, %v495
      %v497 = vpop.f32.mrf.mxu0
      %498 = vmatprep.mubr.bf16.mxu0 0
      %499 = vmatmul.mubr.bf16.gmra.mxu0 %v395
      %v500 = vpop.f32.mrf.mxu0
      %v501 = vadd.f32 0.0, %v500
      %v502 = vpop.f32.mrf.mxu0
      %v503 = vpop.f32.mrf.mxu0
      %v504 = vadd.f32 0.0, %v503
      %v505 = vpop.f32.mrf.mxu0
      %506 = vmatprep.mubr.bf16.mxu0 0
      %507 = vmatmul.mubr.bf16.gmra.mxu0 %v398
      %v508 = vpop.f32.mrf.mxu0
      %v509 = vadd.f32 0.0, %v508
      %v510 = vpop.f32.mrf.mxu0
      %v511 = vpop.f32.mrf.mxu0
      %v512 = vadd.f32 0.0, %v511
      %v513 = vpop.f32.mrf.mxu0
      %514 = vmatprep.mubr.bf16.mxu0 0
      %515 = vmatmul.mubr.bf16.gmra.mxu0 %v401
      %v516 = vpop.f32.mrf.mxu0
      %v517 = vadd.f32 0.0, %v516
      %v518 = vpop.f32.mrf.mxu0
      %v519 = vpop.f32.mrf.mxu0
      %v520 = vadd.f32 0.0, %v519
      %v521 = vpop.f32.mrf.mxu0
      %522 = vmatprep.mubr.bf16.mxu0 0
      %523 = vmatmul.mubr.bf16.gmra.mxu0 %v404
      %v524 = vpop.f32.mrf.mxu0
      %v525 = vadd.f32 0.0, %v524
      %v526 = vpop.f32.mrf.mxu0
      %v527 = vpop.f32.mrf.mxu0
      %v528 = vadd.f32 0.0, %v527
      %v529 = vpop.f32.mrf.mxu0
      %530 = vmatprep.mubr.bf16.mxu0 0
      %531 = vmatmul.mubr.bf16.gmra.mxu0 %v407
      %v532 = vpop.f32.mrf.mxu0
      %v533 = vadd.f32 0.0, %v532
      %v534 = vpop.f32.mrf.mxu0
      %v535 = vpop.f32.mrf.mxu0
      %v536 = vadd.f32 0.0, %v535
      %v537 = vpop.f32.mrf.mxu0
      %538 = vmatprep.mubr.bf16.mxu0 0
      %539 = vmatmul.mubr.bf16.gmra.mxu0 %v410
      %v540 = vpop.f32.mrf.mxu0
      %v541 = vadd.f32 0.0, %v540
      %v542 = vpop.f32.mrf.mxu0
      %v543 = vpop.f32.mrf.mxu0
      %v544 = vadd.f32 0.0, %v543
      %v545 = vpop.f32.mrf.mxu0
      %546 = vmatprep.mubr.bf16.mxu0 0
      %547 = vmatmul.mubr.bf16.gmra.mxu0 %v413
      %v548 = vpop.f32.mrf.mxu0
      %v549 = vadd.f32 0.0, %v548
      %v550 = vpop.f32.mrf.mxu0
      %v551 = vpop.f32.mrf.mxu0
      %v552 = vadd.f32 0.0, %v551
      %v553 = vpop.f32.mrf.mxu0
      %554 = vmatprep.mubr.bf16.mxu0 0
      %555 = vmatmul.mubr.bf16.gmra.mxu0 %v416
      %v556 = vpop.f32.mrf.mxu0
      %v557 = vadd.f32 0.0, %v556
      %v558 = vpop.f32.mrf.mxu0
      %v559 = vpop.f32.mrf.mxu0
      %v560 = vadd.f32 0.0, %v559
      %v561 = vpop.f32.mrf.mxu0
      %562 = vmatprep.mubr.bf16.mxu0 0
      %563 = vmatmul.mubr.bf16.gmra.mxu0 %v419
      %v564 = vpop.f32.mrf.mxu0
      %v565 = vadd.f32 0.0, %v564
      %v566 = vpop.f32.mrf.mxu0
      %v567 = vpop.f32.mrf.mxu0
      %v568 = vadd.f32 0.0, %v567
      %v569 = vpop.f32.mrf.mxu0
      %570 = vmatprep.mubr.bf16.mxu0 0
      %571 = vmatmul.mubr.bf16.gmra.mxu0 %v422
      %v572 = vpop.f32.mrf.mxu0
      %v573 = vadd.f32 0.0, %v572
      %v574 = vpop.f32.mrf.mxu0
      %v575 = vpop.f32.mrf.mxu0
      %v576 = vadd.f32 0.0, %v575
      %v577 = vpop.f32.mrf.mxu0
      %578 = vmatprep.mubr.bf16.mxu0 0
      %579 = vmatmul.mubr.bf16.gmra.mxu0 %v425
      %v580 = vpop.f32.mrf.mxu0
      %v581 = vadd.f32 0.0, %v580
      %v582 = vpop.f32.mrf.mxu0
      %v583 = vpop.f32.mrf.mxu0
      %v584 = vadd.f32 0.0, %v583
      %v585 = vpop.f32.mrf.mxu0
      %586 = vmatprep.mubr.bf16.mxu0 0
      %587 = vmatmul.mubr.bf16.gmra.mxu0 %v428
      %v588 = vpop.f32.mrf.mxu0
      %v589 = vadd.f32 0.0, %v588
      %v590 = vpop.f32.mrf.mxu0
      %v591 = vpop.f32.mrf.mxu0
      %v592 = vadd.f32 0.0, %v591
      %v593 = vpop.f32.mrf.mxu0
      %594 = vdwg.mxu0
      %595 = vst.msk [vmem:[#allocation4] sm:$0xff] %vm226, %v469
      %596 = vst.msk [vmem:[#allocation4 + $0x8] sm:$0xff] %vm226, %v472
      %597 = vst.msk [vmem:[#allocation4 + $0x10] sm:$0xff] %vm226, %v477
      %598 = vst.msk [vmem:[#allocation4 + $0x18] sm:$0xff] %vm226, %v480
      %599 = vst.msk [vmem:[#allocation4 + $0x20] sm:$0xff] %vm226, %v485
      %600 = vst.msk [vmem:[#allocation4 + $0x28] sm:$0xff] %vm226, %v488
      %601 = vst.msk [vmem:[#allocation4 + $0x30] sm:$0xff] %vm226, %v493
      %602 = vst.msk [vmem:[#allocation4 + $0x38] sm:$0xff] %vm226, %v496
      %603 = vst.msk [vmem:[#allocation4 + $0x40] sm:$0xff] %vm226, %v501
      %604 = vst.msk [vmem:[#allocation4 + $0x48] sm:$0xff] %vm226, %v504
      %605 = vst.msk [vmem:[#allocation4 + $0x50] sm:$0xff] %vm226, %v509
      %606 = vst.msk [vmem:[#allocation4 + $0x58] sm:$0xff] %vm226, %v512
      %607 = vst.msk [vmem:[#allocation4 + $0x60] sm:$0xff] %vm226, %v517
      %608 = vst.msk [vmem:[#allocation4 + $0x68] sm:$0xff] %vm226, %v520
      %609 = vst.msk [vmem:[#allocation4 + $0x70] sm:$0xff] %vm226, %v525
      %610 = vst.msk [vmem:[#allocation4 + $0x78] sm:$0xff] %vm226, %v528
      %611 = vst.msk [vmem:[#allocation4 + $0x80] sm:$0xff] %vm226, %v533
      %612 = vst.msk [vmem:[#allocation4 + $0x88] sm:$0xff] %vm226, %v536
      %613 = vst.msk [vmem:[#allocation4 + $0x90] sm:$0xff] %vm226, %v541
      %614 = vst.msk [vmem:[#allocation4 + $0x98] sm:$0xff] %vm226, %v544
      %615 = vst.msk [vmem:[#allocation4 + $0xa0] sm:$0xff] %vm226, %v549
      %616 = vst.msk [vmem:[#allocation4 + $0xa8] sm:$0xff] %vm226, %v552
      %617 = vst.msk [vmem:[#allocation4 + $0xb0] sm:$0xff] %vm226, %v557
      %618 = vst.msk [vmem:[#allocation4 + $0xb8] sm:$0xff] %vm226, %v560
      %619 = vst.msk [vmem:[#allocation4 + $0xc0] sm:$0xff] %vm226, %v565
      %620 = vst.msk [vmem:[#allocation4 + $0xc8] sm:$0xff] %vm226, %v568
      %621 = vst.msk [vmem:[#allocation4 + $0xd0] sm:$0xff] %vm226, %v573
      %622 = vst.msk [vmem:[#allocation4 + $0xd8] sm:$0xff] %vm226, %v576
      %623 = vst.msk [vmem:[#allocation4 + $0xe0] sm:$0xff] %vm226, %v581
      %624 = vst.msk [vmem:[#allocation4 + $0xe8] sm:$0xff] %vm226, %v584
      %625 = vst.msk [vmem:[#allocation4 + $0xf0] sm:$0xff] %vm226, %v589
      %626 = vst.msk [vmem:[#allocation4 + $0xf8] sm:$0xff] %vm226, %v592
      %v627 = vld [vmem:[#allocation2 + $0x8] sm:$0xff]
      %v628 = vld [vmem:[#allocation2 + $0x10] sm:$0xff]
      %v629 = vld [vmem:[#allocation2 + $0x28] sm:$0xff]
      %v630 = vld [vmem:[#allocation2 + $0x30] sm:$0xff]
      %v631 = vld [vmem:[#allocation2 + $0x48] sm:$0xff]
      %v632 = vld [vmem:[#allocation2 + $0x50] sm:$0xff]
      %v633 = vld [vmem:[#allocation2 + $0x68] sm:$0xff]
      %v634 = vld [vmem:[#allocation2 + $0x70] sm:$0xff]
      %v635 = vld [vmem:[#allocation2 + $0x88] sm:$0xff]
      %v636 = vld [vmem:[#allocation2 + $0x90] sm:$0xff]
      %v637 = vld [vmem:[#allocation2 + $0xa8] sm:$0xff]
      %v638 = vld [vmem:[#allocation2 + $0xb0] sm:$0xff]
      %v639 = vld [vmem:[#allocation2 + $0xc8] sm:$0xff]
      %v640 = vld [vmem:[#allocation2 + $0xd0] sm:$0xff]
      %v641 = vld [vmem:[#allocation2 + $0xe8] sm:$0xff]
      %v642 = vld [vmem:[#allocation2 + $0xf0] sm:$0xff]
      %v643 = vld [vmem:[#allocation2 + $0x108] sm:$0xff]
      %v644 = vld [vmem:[#allocation2 + $0x110] sm:$0xff]
      %v645 = vld [vmem:[#allocation2 + $0x128] sm:$0xff]
      %v646 = vld [vmem:[#allocation2 + $0x130] sm:$0xff]
      %v647 = vld [vmem:[#allocation2 + $0x148] sm:$0xff]
      %v648 = vld [vmem:[#allocation2 + $0x150] sm:$0xff]
      %v649 = vld [vmem:[#allocation2 + $0x168] sm:$0xff]
      %v650 = vld [vmem:[#allocation2 + $0x170] sm:$0xff]
      %v651 = vld [vmem:[#allocation2 + $0x188] sm:$0xff]
      %v652 = vld [vmem:[#allocation2 + $0x190] sm:$0xff]
      %v653 = vld [vmem:[#allocation2 + $0x1a8] sm:$0xff]
      %v654 = vld [vmem:[#allocation2 + $0x1b0] sm:$0xff]
      %v655 = vld [vmem:[#allocation2 + $0x1c8] sm:$0xff]
      %v656 = vld [vmem:[#allocation2 + $0x1d0] sm:$0xff]
      %v657 = vld [vmem:[#allocation2 + $0x1e8] sm:$0xff]
      %v658 = vld [vmem:[#allocation2 + $0x1f0] sm:$0xff]
      %v659 = vpack.c.bf16 %v628, %v627
      %v660 = vpack.c.bf16 %v630, %v629
      %v661 = vpack.c.bf16 %v632, %v631
      %v662 = vpack.c.bf16 %v634, %v633
      %v663 = vpack.c.bf16 %v636, %v635
      %v664 = vpack.c.bf16 %v638, %v637
      %v665 = vpack.c.bf16 %v640, %v639
      %v666 = vpack.c.bf16 %v642, %v641
      %v667 = vpack.c.bf16 %v644, %v643
      %v668 = vpack.c.bf16 %v646, %v645
      %v669 = vpack.c.bf16 %v648, %v647
      %v670 = vpack.c.bf16 %v650, %v649
      %v671 = vpack.c.bf16 %v652, %v651
      %v672 = vpack.c.bf16 %v654, %v653
      %v673 = vpack.c.bf16 %v656, %v655
      %v674 = vpack.c.bf16 %v658, %v657
      %s675 = scalar_lea.vmem %s1, 2
      %v676 = vld [vmem:[%s675] sm:$0x3]
      %v678 = vsel %vm226, %v659, 0
      %v681 = vsel %vm226, %v660, 0
      %v684 = vsel %vm226, %v661, 0
      %v687 = vsel %vm226, %v662, 0
      %v690 = vsel %vm226, %v663, 0
      %v693 = vsel %vm226, %v664, 0
      %v696 = vsel %vm226, %v665, 0
      %v699 = vsel %vm226, %v666, 0
      %v702 = vsel %vm226, %v667, 0
      %v705 = vsel %vm226, %v668, 0
      %v708 = vsel %vm226, %v669, 0
      %v711 = vsel %vm226, %v670, 0
      %v714 = vsel %vm226, %v671, 0
      %v717 = vsel %vm226, %v672, 0
      %v720 = vsel %vm226, %v673, 0
      %v723 = vsel %vm226, %v674, 0
      %v726 = vsel %vm430, %v676, 0
      %728 = vmatprep.subr.bf16.mxu0 0
      %729 = vmatpush1.bf16.msra.mxu0 0
      %730 = vmatprep.subr.bf16.mxu0 0
      %731 = vmatpush1.bf16.msra.mxu0 0
      %732 = vmatprep.subr.bf16.mxu0 0
      %733 = vmatpush1.bf16.msra.mxu0 0
      %734 = vmatprep.subr.bf16.mxu0 0
      %735 = vmatpush1.bf16.msra.mxu0 0
      %736 = vmatprep.subr.bf16.mxu0 0
      %737 = vmatpush1.bf16.msra.mxu0 0
      %738 = vmatprep.subr.bf16.mxu0 0
      %739 = vmatpush1.bf16.msra.mxu0 0
      %740 = vmatprep.subr.bf16.mxu0 0
      %741 = vmatpush1.bf16.msra.mxu0 0
      %742 = vmatprep.subr.bf16.mxu0 0
      %743 = vmatpush1.bf16.msra.mxu0 %v726
      %744 = vmatprep.subr.bf16.mxu0 0
      %745 = vmatpush2.bf16.msra.mxu0 0
      %746 = vmatprep.subr.bf16.mxu0 0
      %747 = vmatpush2.bf16.msra.mxu0 0
      %748 = vmatprep.subr.bf16.mxu0 0
      %749 = vmatpush2.bf16.msra.mxu0 0
      %750 = vmatprep.subr.bf16.mxu0 0
      %751 = vmatpush2.bf16.msra.mxu0 0
      %752 = vmatprep.subr.bf16.mxu0 0
      %753 = vmatpush2.bf16.msra.mxu0 0
      %754 = vmatprep.subr.bf16.mxu0 0
      %755 = vmatpush2.bf16.msra.mxu0 0
      %756 = vmatprep.subr.bf16.mxu0 0
      %757 = vmatpush2.bf16.msra.mxu0 0
      %758 = vmatprep.subr.bf16.mxu0 0
      %759 = vmatpush2.bf16.msra.mxu0 0
      %760 = vmatprep.mubr.bf16.mxu0 0
      %761 = vmatmul.mubr.bf16.gmra.mxu0 %v678
      %v762 = vpop.f32.mrf.mxu0
      %v763 = vadd.f32 0.0, %v762
      %v764 = vpop.f32.mrf.mxu0
      %v765 = vpop.f32.mrf.mxu0
      %v766 = vadd.f32 0.0, %v765
      %v767 = vpop.f32.mrf.mxu0
      %768 = vmatprep.mubr.bf16.mxu0 0
      %769 = vmatmul.mubr.bf16.gmra.mxu0 %v681
      %v770 = vpop.f32.mrf.mxu0
      %v771 = vadd.f32 0.0, %v770
      %v772 = vpop.f32.mrf.mxu0
      %v773 = vpop.f32.mrf.mxu0
      %v774 = vadd.f32 0.0, %v773
      %v775 = vpop.f32.mrf.mxu0
      %776 = vmatprep.mubr.bf16.mxu0 0
      %777 = vmatmul.mubr.bf16.gmra.mxu0 %v684
      %v778 = vpop.f32.mrf.mxu0
      %v779 = vadd.f32 0.0, %v778
      %v780 = vpop.f32.mrf.mxu0
      %v781 = vpop.f32.mrf.mxu0
      %v782 = vadd.f32 0.0, %v781
      %v783 = vpop.f32.mrf.mxu0
      %784 = vmatprep.mubr.bf16.mxu0 0
      %785 = vmatmul.mubr.bf16.gmra.mxu0 %v687
      %v786 = vpop.f32.mrf.mxu0
      %v787 = vadd.f32 0.0, %v786
      %v788 = vpop.f32.mrf.mxu0
      %v789 = vpop.f32.mrf.mxu0
      %v790 = vadd.f32 0.0, %v789
      %v791 = vpop.f32.mrf.mxu0
      %792 = vmatprep.mubr.bf16.mxu0 0
      %793 = vmatmul.mubr.bf16.gmra.mxu0 %v690
      %v794 = vpop.f32.mrf.mxu0
      %v795 = vadd.f32 0.0, %v794
      %v796 = vpop.f32.mrf.mxu0
      %v797 = vpop.f32.mrf.mxu0
      %v798 = vadd.f32 0.0, %v797
      %v799 = vpop.f32.mrf.mxu0
      %800 = vmatprep.mubr.bf16.mxu0 0
      %801 = vmatmul.mubr.bf16.gmra.mxu0 %v693
      %v802 = vpop.f32.mrf.mxu0
      %v803 = vadd.f32 0.0, %v802
      %v804 = vpop.f32.mrf.mxu0
      %v805 = vpop.f32.mrf.mxu0
      %v806 = vadd.f32 0.0, %v805
      %v807 = vpop.f32.mrf.mxu0
      %808 = vmatprep.mubr.bf16.mxu0 0
      %809 = vmatmul.mubr.bf16.gmra.mxu0 %v696
      %v810 = vpop.f32.mrf.mxu0
      %v811 = vadd.f32 0.0, %v810
      %v812 = vpop.f32.mrf.mxu0
      %v813 = vpop.f32.mrf.mxu0
      %v814 = vadd.f32 0.0, %v813
      %v815 = vpop.f32.mrf.mxu0
      %816 = vmatprep.mubr.bf16.mxu0 0
      %817 = vmatmul.mubr.bf16.gmra.mxu0 %v699
      %v818 = vpop.f32.mrf.mxu0
      %v819 = vadd.f32 0.0, %v818
      %v820 = vpop.f32.mrf.mxu0
      %v821 = vpop.f32.mrf.mxu0
      %v822 = vadd.f32 0.0, %v821
      %v823 = vpop.f32.mrf.mxu0
      %824 = vmatprep.mubr.bf16.mxu0 0
      %825 = vmatmul.mubr.bf16.gmra.mxu0 %v702
      %v826 = vpop.f32.mrf.mxu0
      %v827 = vadd.f32 0.0, %v826
      %v828 = vpop.f32.mrf.mxu0
      %v829 = vpop.f32.mrf.mxu0
      %v830 = vadd.f32 0.0, %v829
      %v831 = vpop.f32.mrf.mxu0
      %832 = vmatprep.mubr.bf16.mxu0 0
      %833 = vmatmul.mubr.bf16.gmra.mxu0 %v705
      %v834 = vpop.f32.mrf.mxu0
      %v835 = vadd.f32 0.0, %v834
      %v836 = vpop.f32.mrf.mxu0
      %v837 = vpop.f32.mrf.mxu0
      %v838 = vadd.f32 0.0, %v837
      %v839 = vpop.f32.mrf.mxu0
      %840 = vmatprep.mubr.bf16.mxu0 0
      %841 = vmatmul.mubr.bf16.gmra.mxu0 %v708
      %v842 = vpop.f32.mrf.mxu0
      %v843 = vadd.f32 0.0, %v842
      %v844 = vpop.f32.mrf.mxu0
      %v845 = vpop.f32.mrf.mxu0
      %v846 = vadd.f32 0.0, %v845
      %v847 = vpop.f32.mrf.mxu0
      %848 = vmatprep.mubr.bf16.mxu0 0
      %849 = vmatmul.mubr.bf16.gmra.mxu0 %v711
      %v850 = vpop.f32.mrf.mxu0
      %v851 = vadd.f32 0.0, %v850
      %v852 = vpop.f32.mrf.mxu0
      %v853 = vpop.f32.mrf.mxu0
      %v854 = vadd.f32 0.0, %v853
      %v855 = vpop.f32.mrf.mxu0
      %856 = vmatprep.mubr.bf16.mxu0 0
      %857 = vmatmul.mubr.bf16.gmra.mxu0 %v714
      %v858 = vpop.f32.mrf.mxu0
      %v859 = vadd.f32 0.0, %v858
      %v860 = vpop.f32.mrf.mxu0
      %v861 = vpop.f32.mrf.mxu0
      %v862 = vadd.f32 0.0, %v861
      %v863 = vpop.f32.mrf.mxu0
      %864 = vmatprep.mubr.bf16.mxu0 0
      %865 = vmatmul.mubr.bf16.gmra.mxu0 %v717
      %v866 = vpop.f32.mrf.mxu0
      %v867 = vadd.f32 0.0, %v866
      %v868 = vpop.f32.mrf.mxu0
      %v869 = vpop.f32.mrf.mxu0
      %v870 = vadd.f32 0.0, %v869
      %v871 = vpop.f32.mrf.mxu0
      %872 = vmatprep.mubr.bf16.mxu0 0
      %873 = vmatmul.mubr.bf16.gmra.mxu0 %v720
      %v874 = vpop.f32.mrf.mxu0
      %v875 = vadd.f32 0.0, %v874
      %v876 = vpop.f32.mrf.mxu0
      %v877 = vpop.f32.mrf.mxu0
      %v878 = vadd.f32 0.0, %v877
      %v879 = vpop.f32.mrf.mxu0
      %880 = vmatprep.mubr.bf16.mxu0 0
      %881 = vmatmul.mubr.bf16.gmra.mxu0 %v723
      %v882 = vpop.f32.mrf.mxu0
      %v883 = vadd.f32 0.0, %v882
      %v884 = vpop.f32.mrf.mxu0
      %v885 = vpop.f32.mrf.mxu0
      %v886 = vadd.f32 0.0, %v885
      %v887 = vpop.f32.mrf.mxu0
      %888 = vdwg.mxu0
      %v889 = vld [vmem:[#allocation4] sm:$0xff]
      %v890 = vld [vmem:[#allocation4 + $0x8] sm:$0xff]
      %v891 = vld [vmem:[#allocation4 + $0x10] sm:$0xff]
      %v892 = vld [vmem:[#allocation4 + $0x18] sm:$0xff]
      %v893 = vld [vmem:[#allocation4 + $0x20] sm:$0xff]
      %v894 = vld [vmem:[#allocation4 + $0x28] sm:$0xff]
      %v895 = vld [vmem:[#allocation4 + $0x30] sm:$0xff]
      %v896 = vld [vmem:[#allocation4 + $0x38] sm:$0xff]
      %v897 = vld [vmem:[#allocation4 + $0x40] sm:$0xff]
      %v898 = vld [vmem:[#allocation4 + $0x48] sm:$0xff]
      %v899 = vld [vmem:[#allocation4 + $0x50] sm:$0xff]
      %v900 = vld [vmem:[#allocation4 + $0x58] sm:$0xff]
      %v901 = vld [vmem:[#allocation4 + $0x60] sm:$0xff]
      %v902 = vld [vmem:[#allocation4 + $0x68] sm:$0xff]
      %v903 = vld [vmem:[#allocation4 + $0x70] sm:$0xff]
      %v904 = vld [vmem:[#allocation4 + $0x78] sm:$0xff]
      %v905 = vld [vmem:[#allocation4 + $0x80] sm:$0xff]
      %v906 = vld [vmem:[#allocation4 + $0x88] sm:$0xff]
      %v907 = vld [vmem:[#allocation4 + $0x90] sm:$0xff]
      %v908 = vld [vmem:[#allocation4 + $0x98] sm:$0xff]
      %v909 = vld [vmem:[#allocation4 + $0xa0] sm:$0xff]
      %v910 = vld [vmem:[#allocation4 + $0xa8] sm:$0xff]
      %v911 = vld [vmem:[#allocation4 + $0xb0] sm:$0xff]
      %v912 = vld [vmem:[#allocation4 + $0xb8] sm:$0xff]
      %v913 = vld [vmem:[#allocation4 + $0xc0] sm:$0xff]
      %v914 = vld [vmem:[#allocation4 + $0xc8] sm:$0xff]
      %v915 = vld [vmem:[#allocation4 + $0xd0] sm:$0xff]
      %v916 = vld [vmem:[#allocation4 + $0xd8] sm:$0xff]
      %v917 = vld [vmem:[#allocation4 + $0xe0] sm:$0xff]
      %v918 = vld [vmem:[#allocation4 + $0xe8] sm:$0xff]
      %v919 = vld [vmem:[#allocation4 + $0xf0] sm:$0xff]
      %v920 = vld [vmem:[#allocation4 + $0xf8] sm:$0xff]
      %v921 = vadd.f32 %v889, %v763
      %v922 = vadd.f32 %v890, %v766
      %v923 = vadd.f32 %v891, %v771
      %v924 = vadd.f32 %v892, %v774
      %v925 = vadd.f32 %v893, %v779
      %v926 = vadd.f32 %v894, %v782
      %v927 = vadd.f32 %v895, %v787
      %v928 = vadd.f32 %v896, %v790
      %v929 = vadd.f32 %v897, %v795
      %v930 = vadd.f32 %v898, %v798
      %v931 = vadd.f32 %v899, %v803
      %v932 = vadd.f32 %v900, %v806
      %v933 = vadd.f32 %v901, %v811
      %v934 = vadd.f32 %v902, %v814
      %v935 = vadd.f32 %v903, %v819
      %v936 = vadd.f32 %v904, %v822
      %v937 = vadd.f32 %v905, %v827
      %v938 = vadd.f32 %v906, %v830
      %v939 = vadd.f32 %v907, %v835
      %v940 = vadd.f32 %v908, %v838
      %v941 = vadd.f32 %v909, %v843
      %v942 = vadd.f32 %v910, %v846
      %v943 = vadd.f32 %v911, %v851
      %v944 = vadd.f32 %v912, %v854
      %v945 = vadd.f32 %v913, %v859
      %v946 = vadd.f32 %v914, %v862
      %v947 = vadd.f32 %v915, %v867
      %v948 = vadd.f32 %v916, %v870
      %v949 = vadd.f32 %v917, %v875
      %v950 = vadd.f32 %v918, %v878
      %v951 = vadd.f32 %v919, %v883
      %v952 = vadd.f32 %v920, %v886
      %953 = vst.msk [vmem:[#allocation4] sm:$0xff] %vm226, %v921
      %954 = vst.msk [vmem:[#allocation4 + $0x8] sm:$0xff] %vm226, %v922
      %955 = vst.msk [vmem:[#allocation4 + $0x10] sm:$0xff] %vm226, %v923
      %956 = vst.msk [vmem:[#allocation4 + $0x18] sm:$0xff] %vm226, %v924
      %957 = vst.msk [vmem:[#allocation4 + $0x20] sm:$0xff] %vm226, %v925
      %958 = vst.msk [vmem:[#allocation4 + $0x28] sm:$0xff] %vm226, %v926
      %959 = vst.msk [vmem:[#allocation4 + $0x30] sm:$0xff] %vm226, %v927
      %960 = vst.msk [vmem:[#allocation4 + $0x38] sm:$0xff] %vm226, %v928
      %961 = vst.msk [vmem:[#allocation4 + $0x40] sm:$0xff] %vm226, %v929
      %962 = vst.msk [vmem:[#allocation4 + $0x48] sm:$0xff] %vm226, %v930
      %963 = vst.msk [vmem:[#allocation4 + $0x50] sm:$0xff] %vm226, %v931
      %964 = vst.msk [vmem:[#allocation4 + $0x58] sm:$0xff] %vm226, %v932
      %965 = vst.msk [vmem:[#allocation4 + $0x60] sm:$0xff] %vm226, %v933
      %966 = vst.msk [vmem:[#allocation4 + $0x68] sm:$0xff] %vm226, %v934
      %967 = vst.msk [vmem:[#allocation4 + $0x70] sm:$0xff] %vm226, %v935
      %968 = vst.msk [vmem:[#allocation4 + $0x78] sm:$0xff] %vm226, %v936
      %969 = vst.msk [vmem:[#allocation4 + $0x80] sm:$0xff] %vm226, %v937
      %970 = vst.msk [vmem:[#allocation4 + $0x88] sm:$0xff] %vm226, %v938
      %971 = vst.msk [vmem:[#allocation4 + $0x90] sm:$0xff] %vm226, %v939
      %972 = vst.msk [vmem:[#allocation4 + $0x98] sm:$0xff] %vm226, %v940
      %973 = vst.msk [vmem:[#allocation4 + $0xa0] sm:$0xff] %vm226, %v941
      %974 = vst.msk [vmem:[#allocation4 + $0xa8] sm:$0xff] %vm226, %v942
      %975 = vst.msk [vmem:[#allocation4 + $0xb0] sm:$0xff] %vm226, %v943
      %976 = vst.msk [vmem:[#allocation4 + $0xb8] sm:$0xff] %vm226, %v944
      %977 = vst.msk [vmem:[#allocation4 + $0xc0] sm:$0xff] %vm226, %v945
      %978 = vst.msk [vmem:[#allocation4 + $0xc8] sm:$0xff] %vm226, %v946
      %979 = vst.msk [vmem:[#allocation4 + $0xd0] sm:$0xff] %vm226, %v947
      %980 = vst.msk [vmem:[#allocation4 + $0xd8] sm:$0xff] %vm226, %v948
      %981 = vst.msk [vmem:[#allocation4 + $0xe0] sm:$0xff] %vm226, %v949
      %982 = vst.msk [vmem:[#allocation4 + $0xe8] sm:$0xff] %vm226, %v950
      %983 = vst.msk [vmem:[#allocation4 + $0xf0] sm:$0xff] %vm226, %v951
      %984 = vst.msk [vmem:[#allocation4 + $0xf8] sm:$0xff] %vm226, %v952
      %v985 = vld [vmem:[#allocation2 + $0x9] sm:$0xff]
      %v986 = vld [vmem:[#allocation2 + $0x11] sm:$0xff]
      %v987 = vld [vmem:[#allocation2 + $0x29] sm:$0xff]
      %v988 = vld [vmem:[#allocation2 + $0x31] sm:$0xff]
      %v989 = vld [vmem:[#allocation2 + $0x49] sm:$0xff]
      %v990 = vld [vmem:[#allocation2 + $0x51] sm:$0xff]
      %v991 = vld [vmem:[#allocation2 + $0x69] sm:$0xff]
      %v992 = vld [vmem:[#allocation2 + $0x71] sm:$0xff]
      %v993 = vld [vmem:[#allocation2 + $0x89] sm:$0xff]
      %v994 = vld [vmem:[#allocation2 + $0x91] sm:$0xff]
      %v995 = vld [vmem:[#allocation2 + $0xa9] sm:$0xff]
      %v996 = vld [vmem:[#allocation2 + $0xb1] sm:$0xff]
      %v997 = vld [vmem:[#allocation2 + $0xc9] sm:$0xff]
      %v998 = vld [vmem:[#allocation2 + $0xd1] sm:$0xff]
      %v999 = vld [vmem:[#allocation2 + $0xe9] sm:$0xff]
      %v1000 = vld [vmem:[#allocation2 + $0xf1] sm:$0xff]
      %v1001 = vld [vmem:[#allocation2 + $0x109] sm:$0xff]
      %v1002 = vld [vmem:[#allocation2 + $0x111] sm:$0xff]
      %v1003 = vld [vmem:[#allocation2 + $0x129] sm:$0xff]
      %v1004 = vld [vmem:[#allocation2 + $0x131] sm:$0xff]
      %v1005 = vld [vmem:[#allocation2 + $0x149] sm:$0xff]
      %v1006 = vld [vmem:[#allocation2 + $0x151] sm:$0xff]
      %v1007 = vld [vmem:[#allocation2 + $0x169] sm:$0xff]
      %v1008 = vld [vmem:[#allocation2 + $0x171] sm:$0xff]
      %v1009 = vld [vmem:[#allocation2 + $0x189] sm:$0xff]
      %v1010 = vld [vmem:[#allocation2 + $0x191] sm:$0xff]
      %v1011 = vld [vmem:[#allocation2 + $0x1a9] sm:$0xff]
      %v1012 = vld [vmem:[#allocation2 + $0x1b1] sm:$0xff]
      %v1013 = vld [vmem:[#allocation2 + $0x1c9] sm:$0xff]
      %v1014 = vld [vmem:[#allocation2 + $0x1d1] sm:$0xff]
      %v1015 = vld [vmem:[#allocation2 + $0x1e9] sm:$0xff]
      %v1016 = vld [vmem:[#allocation2 + $0x1f1] sm:$0xff]
      %v1017 = vpack.c.bf16 %v986, %v985
      %v1018 = vpack.c.bf16 %v988, %v987
      %v1019 = vpack.c.bf16 %v990, %v989
      %v1020 = vpack.c.bf16 %v992, %v991
      %v1021 = vpack.c.bf16 %v994, %v993
      %v1022 = vpack.c.bf16 %v996, %v995
      %v1023 = vpack.c.bf16 %v998, %v997
      %v1024 = vpack.c.bf16 %v1000, %v999
      %v1025 = vpack.c.bf16 %v1002, %v1001
      %v1026 = vpack.c.bf16 %v1004, %v1003
      %v1027 = vpack.c.bf16 %v1006, %v1005
      %v1028 = vpack.c.bf16 %v1008, %v1007
      %v1029 = vpack.c.bf16 %v1010, %v1009
      %v1030 = vpack.c.bf16 %v1012, %v1011
      %v1031 = vpack.c.bf16 %v1014, %v1013
      %v1032 = vpack.c.bf16 %v1016, %v1015
      %s1033 = scalar_lea.vmem %s1, 4
      %v1034 = vld [vmem:[%s1033] sm:$0x3]
      %v1036 = vsel %vm226, %v1017, 0
      %v1039 = vsel %vm226, %v1018, 0
      %v1042 = vsel %vm226, %v1019, 0
      %v1045 = vsel %vm226, %v1020, 0
      %v1048 = vsel %vm226, %v1021, 0
      %v1051 = vsel %vm226, %v1022, 0
      %v1054 = vsel %vm226, %v1023, 0
      %v1057 = vsel %vm226, %v1024, 0
      %v1060 = vsel %vm226, %v1025, 0
      %v1063 = vsel %vm226, %v1026, 0
      %v1066 = vsel %vm226, %v1027, 0
      %v1069 = vsel %vm226, %v1028, 0
      %v1072 = vsel %vm226, %v1029, 0
      %v1075 = vsel %vm226, %v1030, 0
      %v1078 = vsel %vm226, %v1031, 0
      %v1081 = vsel %vm226, %v1032, 0
      %v1084 = vsel %vm430, %v1034, 0
      %1086 = vmatprep.subr.bf16.mxu0 0
      %1087 = vmatpush1.bf16.msra.mxu0 0
      %1088 = vmatprep.subr.bf16.mxu0 0
      %1089 = vmatpush1.bf16.msra.mxu0 0
      %1090 = vmatprep.subr.bf16.mxu0 0
      %1091 = vmatpush1.bf16.msra.mxu0 0
      %1092 = vmatprep.subr.bf16.mxu0 0
      %1093 = vmatpush1.bf16.msra.mxu0 0
      %1094 = vmatprep.subr.bf16.mxu0 0
      %1095 = vmatpush1.bf16.msra.mxu0 0
      %1096 = vmatprep.subr.bf16.mxu0 0
      %1097 = vmatpush1.bf16.msra.mxu0 0
      %1098 = vmatprep.subr.bf16.mxu0 0
      %1099 = vmatpush1.bf16.msra.mxu0 0
      %1100 = vmatprep.subr.bf16.mxu0 0
      %1101 = vmatpush1.bf16.msra.mxu0 %v1084
      %1102 = vmatprep.subr.bf16.mxu0 0
      %1103 = vmatpush2.bf16.msra.mxu0 0
      %1104 = vmatprep.subr.bf16.mxu0 0
      %1105 = vmatpush2.bf16.msra.mxu0 0
      %1106 = vmatprep.subr.bf16.mxu0 0
      %1107 = vmatpush2.bf16.msra.mxu0 0
      %1108 = vmatprep.subr.bf16.mxu0 0
      %1109 = vmatpush2.bf16.msra.mxu0 0
      %1110 = vmatprep.subr.bf16.mxu0 0
      %1111 = vmatpush2.bf16.msra.mxu0 0
      %1112 = vmatprep.subr.bf16.mxu0 0
      %1113 = vmatpush2.bf16.msra.mxu0 0
      %1114 = vmatprep.subr.bf16.mxu0 0
      %1115 = vmatpush2.bf16.msra.mxu0 0
      %1116 = vmatprep.subr.bf16.mxu0 0
      %1117 = vmatpush2.bf16.msra.mxu0 0
      %1118 = vmatprep.mubr.bf16.mxu0 0
      %1119 = vmatmul.mubr.bf16.gmra.mxu0 %v1036
      %v1120 = vpop.f32.mrf.mxu0
      %v1121 = vadd.f32 0.0, %v1120
      %v1122 = vpop.f32.mrf.mxu0
      %v1123 = vpop.f32.mrf.mxu0
      %v1124 = vadd.f32 0.0, %v1123
      %v1125 = vpop.f32.mrf.mxu0
      %1126 = vmatprep.mubr.bf16.mxu0 0
      %1127 = vmatmul.mubr.bf16.gmra.mxu0 %v1039
      %v1128 = vpop.f32.mrf.mxu0
      %v1129 = vadd.f32 0.0, %v1128
      %v1130 = vpop.f32.mrf.mxu0
      %v1131 = vpop.f32.mrf.mxu0
      %v1132 = vadd.f32 0.0, %v1131
      %v1133 = vpop.f32.mrf.mxu0
      %1134 = vmatprep.mubr.bf16.mxu0 0
      %1135 = vmatmul.mubr.bf16.gmra.mxu0 %v1042
      %v1136 = vpop.f32.mrf.mxu0
      %v1137 = vadd.f32 0.0, %v1136
      %v1138 = vpop.f32.mrf.mxu0
      %v1139 = vpop.f32.mrf.mxu0
      %v1140 = vadd.f32 0.0, %v1139
      %v1141 = vpop.f32.mrf.mxu0
      %1142 = vmatprep.mubr.bf16.mxu0 0
      %1143 = vmatmul.mubr.bf16.gmra.mxu0 %v1045
      %v1144 = vpop.f32.mrf.mxu0
      %v1145 = vadd.f32 0.0, %v1144
      %v1146 = vpop.f32.mrf.mxu0
      %v1147 = vpop.f32.mrf.mxu0
      %v1148 = vadd.f32 0.0, %v1147
      %v1149 = vpop.f32.mrf.mxu0
      %1150 = vmatprep.mubr.bf16.mxu0 0
      %1151 = vmatmul.mubr.bf16.gmra.mxu0 %v1048
      %v1152 = vpop.f32.mrf.mxu0
      %v1153 = vadd.f32 0.0, %v1152
      %v1154 = vpop.f32.mrf.mxu0
      %v1155 = vpop.f32.mrf.mxu0
      %v1156 = vadd.f32 0.0, %v1155
      %v1157 = vpop.f32.mrf.mxu0
      %1158 = vmatprep.mubr.bf16.mxu0 0
      %1159 = vmatmul.mubr.bf16.gmra.mxu0 %v1051
      %v1160 = vpop.f32.mrf.mxu0
      %v1161 = vadd.f32 0.0, %v1160
      %v1162 = vpop.f32.mrf.mxu0
      %v1163 = vpop.f32.mrf.mxu0
      %v1164 = vadd.f32 0.0, %v1163
      %v1165 = vpop.f32.mrf.mxu0
      %1166 = vmatprep.mubr.bf16.mxu0 0
      %1167 = vmatmul.mubr.bf16.gmra.mxu0 %v1054
      %v1168 = vpop.f32.mrf.mxu0
      %v1169 = vadd.f32 0.0, %v1168
      %v1170 = vpop.f32.mrf.mxu0
      %v1171 = vpop.f32.mrf.mxu0
      %v1172 = vadd.f32 0.0, %v1171
      %v1173 = vpop.f32.mrf.mxu0
      %1174 = vmatprep.mubr.bf16.mxu0 0
      %1175 = vmatmul.mubr.bf16.gmra.mxu0 %v1057
      %v1176 = vpop.f32.mrf.mxu0
      %v1177 = vadd.f32 0.0, %v1176
      %v1178 = vpop.f32.mrf.mxu0
      %v1179 = vpop.f32.mrf.mxu0
      %v1180 = vadd.f32 0.0, %v1179
      %v1181 = vpop.f32.mrf.mxu0
      %1182 = vmatprep.mubr.bf16.mxu0 0
      %1183 = vmatmul.mubr.bf16.gmra.mxu0 %v1060
      %v1184 = vpop.f32.mrf.mxu0
      %v1185 = vadd.f32 0.0, %v1184
      %v1186 = vpop.f32.mrf.mxu0
      %v1187 = vpop.f32.mrf.mxu0
      %v1188 = vadd.f32 0.0, %v1187
      %v1189 = vpop.f32.mrf.mxu0
      %1190 = vmatprep.mubr.bf16.mxu0 0
      %1191 = vmatmul.mubr.bf16.gmra.mxu0 %v1063
      %v1192 = vpop.f32.mrf.mxu0
      %v1193 = vadd.f32 0.0, %v1192
      %v1194 = vpop.f32.mrf.mxu0
      %v1195 = vpop.f32.mrf.mxu0
      %v1196 = vadd.f32 0.0, %v1195
      %v1197 = vpop.f32.mrf.mxu0
      %1198 = vmatprep.mubr.bf16.mxu0 0
      %1199 = vmatmul.mubr.bf16.gmra.mxu0 %v1066
      %v1200 = vpop.f32.mrf.mxu0
      %v1201 = vadd.f32 0.0, %v1200
      %v1202 = vpop.f32.mrf.mxu0
      %v1203 = vpop.f32.mrf.mxu0
      %v1204 = vadd.f32 0.0, %v1203
      %v1205 = vpop.f32.mrf.mxu0
      %1206 = vmatprep.mubr.bf16.mxu0 0
      %1207 = vmatmul.mubr.bf16.gmra.mxu0 %v1069
      %v1208 = vpop.f32.mrf.mxu0
      %v1209 = vadd.f32 0.0, %v1208
      %v1210 = vpop.f32.mrf.mxu0
      %v1211 = vpop.f32.mrf.mxu0
      %v1212 = vadd.f32 0.0, %v1211
      %v1213 = vpop.f32.mrf.mxu0
      %1214 = vmatprep.mubr.bf16.mxu0 0
      %1215 = vmatmul.mubr.bf16.gmra.mxu0 %v1072
      %v1216 = vpop.f32.mrf.mxu0
      %v1217 = vadd.f32 0.0, %v1216
      %v1218 = vpop.f32.mrf.mxu0
      %v1219 = vpop.f32.mrf.mxu0
      %v1220 = vadd.f32 0.0, %v1219
      %v1221 = vpop.f32.mrf.mxu0
      %1222 = vmatprep.mubr.bf16.mxu0 0
      %1223 = vmatmul.mubr.bf16.gmra.mxu0 %v1075
      %v1224 = vpop.f32.mrf.mxu0
      %v1225 = vadd.f32 0.0, %v1224
      %v1226 = vpop.f32.mrf.mxu0
      %v1227 = vpop.f32.mrf.mxu0
      %v1228 = vadd.f32 0.0, %v1227
      %v1229 = vpop.f32.mrf.mxu0
      %1230 = vmatprep.mubr.bf16.mxu0 0
      %1231 = vmatmul.mubr.bf16.gmra.mxu0 %v1078
      %v1232 = vpop.f32.mrf.mxu0
      %v1233 = vadd.f32 0.0, %v1232
      %v1234 = vpop.f32.mrf.mxu0
      %v1235 = vpop.f32.mrf.mxu0
      %v1236 = vadd.f32 0.0, %v1235
      %v1237 = vpop.f32.mrf.mxu0
      %1238 = vmatprep.mubr.bf16.mxu0 0
      %1239 = vmatmul.mubr.bf16.gmra.mxu0 %v1081
      %v1240 = vpop.f32.mrf.mxu0
      %v1241 = vadd.f32 0.0, %v1240
      %v1242 = vpop.f32.mrf.mxu0
      %v1243 = vpop.f32.mrf.mxu0
      %v1244 = vadd.f32 0.0, %v1243
      %v1245 = vpop.f32.mrf.mxu0
      %1246 = vdwg.mxu0
      %v1247 = vld [vmem:[#allocation4] sm:$0xff]
      %v1248 = vld [vmem:[#allocation4 + $0x8] sm:$0xff]
      %v1249 = vld [vmem:[#allocation4 + $0x10] sm:$0xff]
      %v1250 = vld [vmem:[#allocation4 + $0x18] sm:$0xff]
      %v1251 = vld [vmem:[#allocation4 + $0x20] sm:$0xff]
      %v1252 = vld [vmem:[#allocation4 + $0x28] sm:$0xff]
      %v1253 = vld [vmem:[#allocation4 + $0x30] sm:$0xff]
      %v1254 = vld [vmem:[#allocation4 + $0x38] sm:$0xff]
      %v1255 = vld [vmem:[#allocation4 + $0x40] sm:$0xff]
      %v1256 = vld [vmem:[#allocation4 + $0x48] sm:$0xff]
      %v1257 = vld [vmem:[#allocation4 + $0x50] sm:$0xff]
      %v1258 = vld [vmem:[#allocation4 + $0x58] sm:$0xff]
      %v1259 = vld [vmem:[#allocation4 + $0x60] sm:$0xff]
      %v1260 = vld [vmem:[#allocation4 + $0x68] sm:$0xff]
      %v1261 = vld [vmem:[#allocation4 + $0x70] sm:$0xff]
      %v1262 = vld [vmem:[#allocation4 + $0x78] sm:$0xff]
      %v1263 = vld [vmem:[#allocation4 + $0x80] sm:$0xff]
      %v1264 = vld [vmem:[#allocation4 + $0x88] sm:$0xff]
      %v1265 = vld [vmem:[#allocation4 + $0x90] sm:$0xff]
      %v1266 = vld [vmem:[#allocation4 + $0x98] sm:$0xff]
      %v1267 = vld [vmem:[#allocation4 + $0xa0] sm:$0xff]
      %v1268 = vld [vmem:[#allocation4 + $0xa8] sm:$0xff]
      %v1269 = vld [vmem:[#allocation4 + $0xb0] sm:$0xff]
      %v1270 = vld [vmem:[#allocation4 + $0xb8] sm:$0xff]
      %v1271 = vld [vmem:[#allocation4 + $0xc0] sm:$0xff]
      %v1272 = vld [vmem:[#allocation4 + $0xc8] sm:$0xff]
      %v1273 = vld [vmem:[#allocation4 + $0xd0] sm:$0xff]
      %v1274 = vld [vmem:[#allocation4 + $0xd8] sm:$0xff]
      %v1275 = vld [vmem:[#allocation4 + $0xe0] sm:$0xff]
      %v1276 = vld [vmem:[#allocation4 + $0xe8] sm:$0xff]
      %v1277 = vld [vmem:[#allocation4 + $0xf0] sm:$0xff]
      %v1278 = vld [vmem:[#allocation4 + $0xf8] sm:$0xff]
      %v1279 = vadd.f32 %v1247, %v1121
      %v1280 = vadd.f32 %v1248, %v1124
      %v1281 = vadd.f32 %v1249, %v1129
      %v1282 = vadd.f32 %v1250, %v1132
      %v1283 = vadd.f32 %v1251, %v1137
      %v1284 = vadd.f32 %v1252, %v1140
      %v1285 = vadd.f32 %v1253, %v1145
      %v1286 = vadd.f32 %v1254, %v1148
      %v1287 = vadd.f32 %v1255, %v1153
      %v1288 = vadd.f32 %v1256, %v1156
      %v1289 = vadd.f32 %v1257, %v1161
      %v1290 = vadd.f32 %v1258, %v1164
      %v1291 = vadd.f32 %v1259, %v1169
      %v1292 = vadd.f32 %v1260, %v1172
      %v1293 = vadd.f32 %v1261, %v1177
      %v1294 = vadd.f32 %v1262, %v1180
      %v1295 = vadd.f32 %v1263, %v1185
      %v1296 = vadd.f32 %v1264, %v1188
      %v1297 = vadd.f32 %v1265, %v1193
      %v1298 = vadd.f32 %v1266, %v1196
      %v1299 = vadd.f32 %v1267, %v1201
      %v1300 = vadd.f32 %v1268, %v1204
      %v1301 = vadd.f32 %v1269, %v1209
      %v1302 = vadd.f32 %v1270, %v1212
      %v1303 = vadd.f32 %v1271, %v1217
      %v1304 = vadd.f32 %v1272, %v1220
      %v1305 = vadd.f32 %v1273, %v1225
      %v1306 = vadd.f32 %v1274, %v1228
      %v1307 = vadd.f32 %v1275, %v1233
      %v1308 = vadd.f32 %v1276, %v1236
      %v1309 = vadd.f32 %v1277, %v1241
      %v1310 = vadd.f32 %v1278, %v1244
      %1311 = vst.msk [vmem:[#allocation4] sm:$0xff] %vm226, %v1279
      %1312 = vst.msk [vmem:[#allocation4 + $0x8] sm:$0xff] %vm226, %v1280
      %1313 = vst.msk [vmem:[#allocation4 + $0x10] sm:$0xff] %vm226, %v1281
      %1314 = vst.msk [vmem:[#allocation4 + $0x18] sm:$0xff] %vm226, %v1282
      %1315 = vst.msk [vmem:[#allocation4 + $0x20] sm:$0xff] %vm226, %v1283
      %1316 = vst.msk [vmem:[#allocation4 + $0x28] sm:$0xff] %vm226, %v1284
      %1317 = vst.msk [vmem:[#allocation4 + $0x30] sm:$0xff] %vm226, %v1285
      %1318 = vst.msk [vmem:[#allocation4 + $0x38] sm:$0xff] %vm226, %v1286
      %1319 = vst.msk [vmem:[#allocation4 + $0x40] sm:$0xff] %vm226, %v1287
      %1320 = vst.msk [vmem:[#allocation4 + $0x48] sm:$0xff] %vm226, %v1288
      %1321 = vst.msk [vmem:[#allocation4 + $0x50] sm:$0xff] %vm226, %v1289
      %1322 = vst.msk [vmem:[#allocation4 + $0x58] sm:$0xff] %vm226, %v1290
      %1323 = vst.msk [vmem:[#allocation4 + $0x60] sm:$0xff] %vm226, %v1291
      %1324 = vst.msk [vmem:[#allocation4 + $0x68] sm:$0xff] %vm226, %v1292
      %1325 = vst.msk [vmem:[#allocation4 + $0x70] sm:$0xff] %vm226, %v1293
      %1326 = vst.msk [vmem:[#allocation4 + $0x78] sm:$0xff] %vm226, %v1294
      %1327 = vst.msk [vmem:[#allocation4 + $0x80] sm:$0xff] %vm226, %v1295
      %1328 = vst.msk [vmem:[#allocation4 + $0x88] sm:$0xff] %vm226, %v1296
      %1329 = vst.msk [vmem:[#allocation4 + $0x90] sm:$0xff] %vm226, %v1297
      %1330 = vst.msk [vmem:[#allocation4 + $0x98] sm:$0xff] %vm226, %v1298
      %1331 = vst.msk [vmem:[#allocation4 + $0xa0] sm:$0xff] %vm226, %v1299
      %1332 = vst.msk [vmem:[#allocation4 + $0xa8] sm:$0xff] %vm226, %v1300
      %1333 = vst.msk [vmem:[#allocation4 + $0xb0] sm:$0xff] %vm226, %v1301
      %1334 = vst.msk [vmem:[#allocation4 + $0xb8] sm:$0xff] %vm226, %v1302
      %1335 = vst.msk [vmem:[#allocation4 + $0xc0] sm:$0xff] %vm226, %v1303
      %1336 = vst.msk [vmem:[#allocation4 + $0xc8] sm:$0xff] %vm226, %v1304
      %1337 = vst.msk [vmem:[#allocation4 + $0xd0] sm:$0xff] %vm226, %v1305
      %1338 = vst.msk [vmem:[#allocation4 + $0xd8] sm:$0xff] %vm226, %v1306
      %1339 = vst.msk [vmem:[#allocation4 + $0xe0] sm:$0xff] %vm226, %v1307
      %1340 = vst.msk [vmem:[#allocation4 + $0xe8] sm:$0xff] %vm226, %v1308
      %1341 = vst.msk [vmem:[#allocation4 + $0xf0] sm:$0xff] %vm226, %v1309
      %1342 = vst.msk [vmem:[#allocation4 + $0xf8] sm:$0xff] %vm226, %v1310
      %v1343 = vld [vmem:[%s236 + $0x7] sm:$0xff]
      %v1344 = vld [vmem:[%s236 + $0xf] sm:$0xff]
      %v1345 = vld [vmem:[%s236 + $0x27] sm:$0xff]
      %v1346 = vld [vmem:[%s236 + $0x2f] sm:$0xff]
      %v1347 = vld [vmem:[%s236 + $0x47] sm:$0xff]
      %v1348 = vld [vmem:[%s236 + $0x4f] sm:$0xff]
      %v1349 = vld [vmem:[%s236 + $0x67] sm:$0xff]
      %v1350 = vld [vmem:[%s236 + $0x6f] sm:$0xff]
      %v1351 = vld [vmem:[%s236 + $0x87] sm:$0xff]
      %v1352 = vld [vmem:[%s236 + $0x8f] sm:$0xff]
      %v1353 = vld [vmem:[%s236 + $0xa7] sm:$0xff]
      %v1354 = vld [vmem:[%s236 + $0xaf] sm:$0xff]
      %v1355 = vld [vmem:[%s236 + $0xc7] sm:$0xff]
      %v1356 = vld [vmem:[%s236 + $0xcf] sm:$0xff]
      %v1357 = vld [vmem:[%s236 + $0xe7] sm:$0xff]
      %v1358 = vld [vmem:[%s236 + $0xef] sm:$0xff]
      %v1359 = vld [vmem:[%s236 + $0x107] sm:$0xff]
      %v1360 = vld [vmem:[%s236 + $0x10f] sm:$0xff]
      %v1361 = vld [vmem:[%s236 + $0x127] sm:$0xff]
      %v1362 = vld [vmem:[%s236 + $0x12f] sm:$0xff]
      %v1363 = vld [vmem:[%s236 + $0x147] sm:$0xff]
      %v1364 = vld [vmem:[%s236 + $0x14f] sm:$0xff]
      %v1365 = vld [vmem:[%s236 + $0x167] sm:$0xff]
      %v1366 = vld [vmem:[%s236 + $0x16f] sm:$0xff]
      %v1367 = vld [vmem:[%s236 + $0x187] sm:$0xff]
      %v1368 = vld [vmem:[%s236 + $0x18f] sm:$0xff]
      %v1369 = vld [vmem:[%s236 + $0x1a7] sm:$0xff]
      %v1370 = vld [vmem:[%s236 + $0x1af] sm:$0xff]
      %v1371 = vld [vmem:[%s236 + $0x1c7] sm:$0xff]
      %v1372 = vld [vmem:[%s236 + $0x1cf] sm:$0xff]
      %v1373 = vld [vmem:[%s236 + $0x1e7] sm:$0xff]
      %v1374 = vld [vmem:[%s236 + $0x1ef] sm:$0xff]
      %v1375 = vpack.c.bf16 %v1344, %v1343
      %v1376 = vpack.c.bf16 %v1346, %v1345
      %v1377 = vpack.c.bf16 %v1348, %v1347
      %v1378 = vpack.c.bf16 %v1350, %v1349
      %v1379 = vpack.c.bf16 %v1352, %v1351
      %v1380 = vpack.c.bf16 %v1354, %v1353
      %v1381 = vpack.c.bf16 %v1356, %v1355
      %v1382 = vpack.c.bf16 %v1358, %v1357
      %v1383 = vpack.c.bf16 %v1360, %v1359
      %v1384 = vpack.c.bf16 %v1362, %v1361
      %v1385 = vpack.c.bf16 %v1364, %v1363
      %v1386 = vpack.c.bf16 %v1366, %v1365
      %v1387 = vpack.c.bf16 %v1368, %v1367
      %v1388 = vpack.c.bf16 %v1370, %v1369
      %v1389 = vpack.c.bf16 %v1372, %v1371
      %v1390 = vpack.c.bf16 %v1374, %v1373
      %s1391 = scalar_lea.vmem %s1, 6
      %v1392 = vld [vmem:[%s1391] sm:$0x3]
      %v1394 = vsel %vm226, %v1375, 0
      %v1397 = vsel %vm226, %v1376, 0
      %v1400 = vsel %vm226, %v1377, 0
      %v1403 = vsel %vm226, %v1378, 0
      %v1406 = vsel %vm226, %v1379, 0
      %v1409 = vsel %vm226, %v1380, 0
      %v1412 = vsel %vm226, %v1381, 0
      %v1415 = vsel %vm226, %v1382, 0
      %v1418 = vsel %vm226, %v1383, 0
      %v1421 = vsel %vm226, %v1384, 0
      %v1424 = vsel %vm226, %v1385, 0
      %v1427 = vsel %vm226, %v1386, 0
      %v1430 = vsel %vm226, %v1387, 0
      %v1433 = vsel %vm226, %v1388, 0
      %v1436 = vsel %vm226, %v1389, 0
      %v1439 = vsel %vm226, %v1390, 0
      %v1442 = vsel %vm430, %v1392, 0
      %1444 = vmatprep.subr.bf16.mxu0 0
      %1445 = vmatpush1.bf16.msra.mxu0 0
      %1446 = vmatprep.subr.bf16.mxu0 0
      %1447 = vmatpush1.bf16.msra.mxu0 0
      %1448 = vmatprep.subr.bf16.mxu0 0
      %1449 = vmatpush1.bf16.msra.mxu0 0
      %1450 = vmatprep.subr.bf16.mxu0 0
      %1451 = vmatpush1.bf16.msra.mxu0 0
      %1452 = vmatprep.subr.bf16.mxu0 0
      %1453 = vmatpush1.bf16.msra.mxu0 0
      %1454 = vmatprep.subr.bf16.mxu0 0
      %1455 = vmatpush1.bf16.msra.mxu0 0
      %1456 = vmatprep.subr.bf16.mxu0 0
      %1457 = vmatpush1.bf16.msra.mxu0 0
      %1458 = vmatprep.subr.bf16.mxu0 0
      %1459 = vmatpush1.bf16.msra.mxu0 %v1442
      %1460 = vmatprep.subr.bf16.mxu0 0
      %1461 = vmatpush2.bf16.msra.mxu0 0
      %1462 = vmatprep.subr.bf16.mxu0 0
      %1463 = vmatpush2.bf16.msra.mxu0 0
      %1464 = vmatprep.subr.bf16.mxu0 0
      %1465 = vmatpush2.bf16.msra.mxu0 0
      %1466 = vmatprep.subr.bf16.mxu0 0
      %1467 = vmatpush2.bf16.msra.mxu0 0
      %1468 = vmatprep.subr.bf16.mxu0 0
      %1469 = vmatpush2.bf16.msra.mxu0 0
      %1470 = vmatprep.subr.bf16.mxu0 0
      %1471 = vmatpush2.bf16.msra.mxu0 0
      %1472 = vmatprep.subr.bf16.mxu0 0
      %1473 = vmatpush2.bf16.msra.mxu0 0
      %1474 = vmatprep.subr.bf16.mxu0 0
      %1475 = vmatpush2.bf16.msra.mxu0 0
      %1476 = vmatprep.mubr.bf16.mxu0 0
      %1477 = vmatmul.mubr.bf16.gmra.mxu0 %v1394
      %v1478 = vpop.f32.mrf.mxu0
      %v1479 = vadd.f32 0.0, %v1478
      %v1480 = vpop.f32.mrf.mxu0
      %v1481 = vpop.f32.mrf.mxu0
      %v1482 = vadd.f32 0.0, %v1481
      %v1483 = vpop.f32.mrf.mxu0
      %1484 = vmatprep.mubr.bf16.mxu0 0
      %1485 = vmatmul.mubr.bf16.gmra.mxu0 %v1397
      %v1486 = vpop.f32.mrf.mxu0
      %v1487 = vadd.f32 0.0, %v1486
      %v1488 = vpop.f32.mrf.mxu0
      %v1489 = vpop.f32.mrf.mxu0
      %v1490 = vadd.f32 0.0, %v1489
      %v1491 = vpop.f32.mrf.mxu0
      %1492 = vmatprep.mubr.bf16.mxu0 0
      %1493 = vmatmul.mubr.bf16.gmra.mxu0 %v1400
      %v1494 = vpop.f32.mrf.mxu0
      %v1495 = vadd.f32 0.0, %v1494
      %v1496 = vpop.f32.mrf.mxu0
      %v1497 = vpop.f32.mrf.mxu0
      %v1498 = vadd.f32 0.0, %v1497
      %v1499 = vpop.f32.mrf.mxu0
      %1500 = vmatprep.mubr.bf16.mxu0 0
      %1501 = vmatmul.mubr.bf16.gmra.mxu0 %v1403
      %v1502 = vpop.f32.mrf.mxu0
      %v1503 = vadd.f32 0.0, %v1502
      %v1504 = vpop.f32.mrf.mxu0
      %v1505 = vpop.f32.mrf.mxu0
      %v1506 = vadd.f32 0.0, %v1505
      %v1507 = vpop.f32.mrf.mxu0
      %1508 = vmatprep.mubr.bf16.mxu0 0
      %1509 = vmatmul.mubr.bf16.gmra.mxu0 %v1406
      %v1510 = vpop.f32.mrf.mxu0
      %v1511 = vadd.f32 0.0, %v1510
      %v1512 = vpop.f32.mrf.mxu0
      %v1513 = vpop.f32.mrf.mxu0
      %v1514 = vadd.f32 0.0, %v1513
      %v1515 = vpop.f32.mrf.mxu0
      %1516 = vmatprep.mubr.bf16.mxu0 0
      %1517 = vmatmul.mubr.bf16.gmra.mxu0 %v1409
      %v1518 = vpop.f32.mrf.mxu0
      %v1519 = vadd.f32 0.0, %v1518
      %v1520 = vpop.f32.mrf.mxu0
      %v1521 = vpop.f32.mrf.mxu0
      %v1522 = vadd.f32 0.0, %v1521
      %v1523 = vpop.f32.mrf.mxu0
      %1524 = vmatprep.mubr.bf16.mxu0 0
      %1525 = vmatmul.mubr.bf16.gmra.mxu0 %v1412
      %v1526 = vpop.f32.mrf.mxu0
      %v1527 = vadd.f32 0.0, %v1526
      %v1528 = vpop.f32.mrf.mxu0
      %v1529 = vpop.f32.mrf.mxu0
      %v1530 = vadd.f32 0.0, %v1529
      %v1531 = vpop.f32.mrf.mxu0
      %1532 = vmatprep.mubr.bf16.mxu0 0
      %1533 = vmatmul.mubr.bf16.gmra.mxu0 %v1415
      %v1534 = vpop.f32.mrf.mxu0
      %v1535 = vadd.f32 0.0, %v1534
      %v1536 = vpop.f32.mrf.mxu0
      %v1537 = vpop.f32.mrf.mxu0
      %v1538 = vadd.f32 0.0, %v1537
      %v1539 = vpop.f32.mrf.mxu0
      %1540 = vmatprep.mubr.bf16.mxu0 0
      %1541 = vmatmul.mubr.bf16.gmra.mxu0 %v1418
      %v1542 = vpop.f32.mrf.mxu0
      %v1543 = vadd.f32 0.0, %v1542
      %v1544 = vpop.f32.mrf.mxu0
      %v1545 = vpop.f32.mrf.mxu0
      %v1546 = vadd.f32 0.0, %v1545
      %v1547 = vpop.f32.mrf.mxu0
      %1548 = vmatprep.mubr.bf16.mxu0 0
      %1549 = vmatmul.mubr.bf16.gmra.mxu0 %v1421
      %v1550 = vpop.f32.mrf.mxu0
      %v1551 = vadd.f32 0.0, %v1550
      %v1552 = vpop.f32.mrf.mxu0
      %v1553 = vpop.f32.mrf.mxu0
      %v1554 = vadd.f32 0.0, %v1553
      %v1555 = vpop.f32.mrf.mxu0
      %1556 = vmatprep.mubr.bf16.mxu0 0
      %1557 = vmatmul.mubr.bf16.gmra.mxu0 %v1424
      %v1558 = vpop.f32.mrf.mxu0
      %v1559 = vadd.f32 0.0, %v1558
      %v1560 = vpop.f32.mrf.mxu0
      %v1561 = vpop.f32.mrf.mxu0
      %v1562 = vadd.f32 0.0, %v1561
      %v1563 = vpop.f32.mrf.mxu0
      %1564 = vmatprep.mubr.bf16.mxu0 0
      %1565 = vmatmul.mubr.bf16.gmra.mxu0 %v1427
      %v1566 = vpop.f32.mrf.mxu0
      %v1567 = vadd.f32 0.0, %v1566
      %v1568 = vpop.f32.mrf.mxu0
      %v1569 = vpop.f32.mrf.mxu0
      %v1570 = vadd.f32 0.0, %v1569
      %v1571 = vpop.f32.mrf.mxu0
      %1572 = vmatprep.mubr.bf16.mxu0 0
      %1573 = vmatmul.mubr.bf16.gmra.mxu0 %v1430
      %v1574 = vpop.f32.mrf.mxu0
      %v1575 = vadd.f32 0.0, %v1574
      %v1576 = vpop.f32.mrf.mxu0
      %v1577 = vpop.f32.mrf.mxu0
      %v1578 = vadd.f32 0.0, %v1577
      %v1579 = vpop.f32.mrf.mxu0
      %1580 = vmatprep.mubr.bf16.mxu0 0
      %1581 = vmatmul.mubr.bf16.gmra.mxu0 %v1433
      %v1582 = vpop.f32.mrf.mxu0
      %v1583 = vadd.f32 0.0, %v1582
      %v1584 = vpop.f32.mrf.mxu0
      %v1585 = vpop.f32.mrf.mxu0
      %v1586 = vadd.f32 0.0, %v1585
      %v1587 = vpop.f32.mrf.mxu0
      %1588 = vmatprep.mubr.bf16.mxu0 0
      %1589 = vmatmul.mubr.bf16.gmra.mxu0 %v1436
      %v1590 = vpop.f32.mrf.mxu0
      %v1591 = vadd.f32 0.0, %v1590
      %v1592 = vpop.f32.mrf.mxu0
      %v1593 = vpop.f32.mrf.mxu0
      %v1594 = vadd.f32 0.0, %v1593
      %v1595 = vpop.f32.mrf.mxu0
      %1596 = vmatprep.mubr.bf16.mxu0 0
      %1597 = vmatmul.mubr.bf16.gmra.mxu0 %v1439
      %v1598 = vpop.f32.mrf.mxu0
      %v1599 = vadd.f32 0.0, %v1598
      %v1600 = vpop.f32.mrf.mxu0
      %v1601 = vpop.f32.mrf.mxu0
      %v1602 = vadd.f32 0.0, %v1601
      %v1603 = vpop.f32.mrf.mxu0
      %1604 = vdwg.mxu0
      %v1605 = vld [vmem:[#allocation4] sm:$0xff]
      %v1606 = vld [vmem:[#allocation4 + $0x8] sm:$0xff]
      %v1607 = vld [vmem:[#allocation4 + $0x10] sm:$0xff]
      %v1608 = vld [vmem:[#allocation4 + $0x18] sm:$0xff]
      %v1609 = vld [vmem:[#allocation4 + $0x20] sm:$0xff]
      %v1610 = vld [vmem:[#allocation4 + $0x28] sm:$0xff]
      %v1611 = vld [vmem:[#allocation4 + $0x30] sm:$0xff]
      %v1612 = vld [vmem:[#allocation4 + $0x38] sm:$0xff]
      %v1613 = vld [vmem:[#allocation4 + $0x40] sm:$0xff]
      %v1614 = vld [vmem:[#allocation4 + $0x48] sm:$0xff]
      %v1615 = vld [vmem:[#allocation4 + $0x50] sm:$0xff]
      %v1616 = vld [vmem:[#allocation4 + $0x58] sm:$0xff]
      %v1617 = vld [vmem:[#allocation4 + $0x60] sm:$0xff]
      %v1618 = vld [vmem:[#allocation4 + $0x68] sm:$0xff]
      %v1619 = vld [vmem:[#allocation4 + $0x70] sm:$0xff]
      %v1620 = vld [vmem:[#allocation4 + $0x78] sm:$0xff]
      %v1621 = vld [vmem:[#allocation4 + $0x80] sm:$0xff]
      %v1622 = vld [vmem:[#allocation4 + $0x88] sm:$0xff]
      %v1623 = vld [vmem:[#allocation4 + $0x90] sm:$0xff]
      %v1624 = vld [vmem:[#allocation4 + $0x98] sm:$0xff]
      %v1625 = vld [vmem:[#allocation4 + $0xa0] sm:$0xff]
      %v1626 = vld [vmem:[#allocation4 + $0xa8] sm:$0xff]
      %v1627 = vld [vmem:[#allocation4 + $0xb0] sm:$0xff]
      %v1628 = vld [vmem:[#allocation4 + $0xb8] sm:$0xff]
      %v1629 = vld [vmem:[#allocation4 + $0xc0] sm:$0xff]
      %v1630 = vld [vmem:[#allocation4 + $0xc8] sm:$0xff]
      %v1631 = vld [vmem:[#allocation4 + $0xd0] sm:$0xff]
      %v1632 = vld [vmem:[#allocation4 + $0xd8] sm:$0xff]
      %v1633 = vld [vmem:[#allocation4 + $0xe0] sm:$0xff]
      %v1634 = vld [vmem:[#allocation4 + $0xe8] sm:$0xff]
      %v1635 = vld [vmem:[#allocation4 + $0xf0] sm:$0xff]
      %v1636 = vld [vmem:[#allocation4 + $0xf8] sm:$0xff]
      %v1637 = vadd.f32 %v1605, %v1479
      %v1638 = vadd.f32 %v1606, %v1482
      %v1639 = vadd.f32 %v1607, %v1487
      %v1640 = vadd.f32 %v1608, %v1490
      %v1641 = vadd.f32 %v1609, %v1495
      %v1642 = vadd.f32 %v1610, %v1498
      %v1643 = vadd.f32 %v1611, %v1503
      %v1644 = vadd.f32 %v1612, %v1506
      %v1645 = vadd.f32 %v1613, %v1511
      %v1646 = vadd.f32 %v1614, %v1514
      %v1647 = vadd.f32 %v1615, %v1519
      %v1648 = vadd.f32 %v1616, %v1522
      %v1649 = vadd.f32 %v1617, %v1527
      %v1650 = vadd.f32 %v1618, %v1530
      %v1651 = vadd.f32 %v1619, %v1535
      %v1652 = vadd.f32 %v1620, %v1538
      %v1653 = vadd.f32 %v1621, %v1543
      %v1654 = vadd.f32 %v1622, %v1546
      %v1655 = vadd.f32 %v1623, %v1551
      %v1656 = vadd.f32 %v1624, %v1554
      %v1657 = vadd.f32 %v1625, %v1559
      %v1658 = vadd.f32 %v1626, %v1562
      %v1659 = vadd.f32 %v1627, %v1567
      %v1660 = vadd.f32 %v1628, %v1570
      %v1661 = vadd.f32 %v1629, %v1575
      %v1662 = vadd.f32 %v1630, %v1578
      %v1663 = vadd.f32 %v1631, %v1583
      %v1664 = vadd.f32 %v1632, %v1586
      %v1665 = vadd.f32 %v1633, %v1591
      %v1666 = vadd.f32 %v1634, %v1594
      %v1667 = vadd.f32 %v1635, %v1599
      %v1668 = vadd.f32 %v1636, %v1602
      %1669 = vst.msk [vmem:[#allocation4] sm:$0xff] %vm226, %v1637
      %1670 = vst.msk [vmem:[#allocation4 + $0x8] sm:$0xff] %vm226, %v1638
      %1671 = vst.msk [vmem:[#allocation4 + $0x10] sm:$0xff] %vm226, %v1639
      %1672 = vst.msk [vmem:[#allocation4 + $0x18] sm:$0xff] %vm226, %v1640
      %1673 = vst.msk [vmem:[#allocation4 + $0x20] sm:$0xff] %vm226, %v1641
      %1674 = vst.msk [vmem:[#allocation4 + $0x28] sm:$0xff] %vm226, %v1642
      %1675 = vst.msk [vmem:[#allocation4 + $0x30] sm:$0xff] %vm226, %v1643
      %1676 = vst.msk [vmem:[#allocation4 + $0x38] sm:$0xff] %vm226, %v1644
      %1677 = vst.msk [vmem:[#allocation4 + $0x40] sm:$0xff] %vm226, %v1645
      %1678 = vst.msk [vmem:[#allocation4 + $0x48] sm:$0xff] %vm226, %v1646
      %1679 = vst.msk [vmem:[#allocation4 + $0x50] sm:$0xff] %vm226, %v1647
      %1680 = vst.msk [vmem:[#allocation4 + $0x58] sm:$0xff] %vm226, %v1648
      %1681 = vst.msk [vmem:[#allocation4 + $0x60] sm:$0xff] %vm226, %v1649
      %1682 = vst.msk [vmem:[#allocation4 + $0x68] sm:$0xff] %vm226, %v1650
      %1683 = vst.msk [vmem:[#allocation4 + $0x70] sm:$0xff] %vm226, %v1651
      %1684 = vst.msk [vmem:[#allocation4 + $0x78] sm:$0xff] %vm226, %v1652
      %1685 = vst.msk [vmem:[#allocation4 + $0x80] sm:$0xff] %vm226, %v1653
      %1686 = vst.msk [vmem:[#allocation4 + $0x88] sm:$0xff] %vm226, %v1654
      %1687 = vst.msk [vmem:[#allocation4 + $0x90] sm:$0xff] %vm226, %v1655
      %1688 = vst.msk [vmem:[#allocation4 + $0x98] sm:$0xff] %vm226, %v1656
      %1689 = vst.msk [vmem:[#allocation4 + $0xa0] sm:$0xff] %vm226, %v1657
      %1690 = vst.msk [vmem:[#allocation4 + $0xa8] sm:$0xff] %vm226, %v1658
      %1691 = vst.msk [vmem:[#allocation4 + $0xb0] sm:$0xff] %vm226, %v1659
      %1692 = vst.msk [vmem:[#allocation4 + $0xb8] sm:$0xff] %vm226, %v1660
      %1693 = vst.msk [vmem:[#allocation4 + $0xc0] sm:$0xff] %vm226, %v1661
      %1694 = vst.msk [vmem:[#allocation4 + $0xc8] sm:$0xff] %vm226, %v1662
      %1695 = vst.msk [vmem:[#allocation4 + $0xd0] sm:$0xff] %vm226, %v1663
      %1696 = vst.msk [vmem:[#allocation4 + $0xd8] sm:$0xff] %vm226, %v1664
      %1697 = vst.msk [vmem:[#allocation4 + $0xe0] sm:$0xff] %vm226, %v1665
      %1698 = vst.msk [vmem:[#allocation4 + $0xe8] sm:$0xff] %vm226, %v1666
      %1699 = vst.msk [vmem:[#allocation4 + $0xf0] sm:$0xff] %vm226, %v1667
      %1700 = vst.msk [vmem:[#allocation4 + $0xf8] sm:$0xff] %vm226, %v1668
      %v1701 = vld [vmem:[%s236 + $0x8] sm:$0xff]
      %v1702 = vld [vmem:[%s236 + $0x10] sm:$0xff]
      %v1703 = vld [vmem:[%s236 + $0x28] sm:$0xff]
      %v1704 = vld [vmem:[%s236 + $0x30] sm:$0xff]
      %v1705 = vld [vmem:[%s236 + $0x48] sm:$0xff]
      %v1706 = vld [vmem:[%s236 + $0x50] sm:$0xff]
      %v1707 = vld [vmem:[%s236 + $0x68] sm:$0xff]
      %v1708 = vld [vmem:[%s236 + $0x70] sm:$0xff]
      %v1709 = vld [vmem:[%s236 + $0x88] sm:$0xff]
      %v1710 = vld [vmem:[%s236 + $0x90] sm:$0xff]
      %v1711 = vld [vmem:[%s236 + $0xa8] sm:$0xff]
      %v1712 = vld [vmem:[%s236 + $0xb0] sm:$0xff]
      %v1713 = vld [vmem:[%s236 + $0xc8] sm:$0xff]
      %v1714 = vld [vmem:[%s236 + $0xd0] sm:$0xff]
      %v1715 = vld [vmem:[%s236 + $0xe8] sm:$0xff]
      %v1716 = vld [vmem:[%s236 + $0xf0] sm:$0xff]
      %v1717 = vld [vmem:[%s236 + $0x108] sm:$0xff]
      %v1718 = vld [vmem:[%s236 + $0x110] sm:$0xff]
      %v1719 = vld [vmem:[%s236 + $0x128] sm:$0xff]
      %v1720 = vld [vmem:[%s236 + $0x130] sm:$0xff]
      %v1721 = vld [vmem:[%s236 + $0x148] sm:$0xff]
      %v1722 = vld [vmem:[%s236 + $0x150] sm:$0xff]
      %v1723 = vld [vmem:[%s236 + $0x168] sm:$0xff]
      %v1724 = vld [vmem:[%s236 + $0x170] sm:$0xff]
      %v1725 = vld [vmem:[%s236 + $0x188] sm:$0xff]
      %v1726 = vld [vmem:[%s236 + $0x190] sm:$0xff]
      %v1727 = vld [vmem:[%s236 + $0x1a8] sm:$0xff]
      %v1728 = vld [vmem:[%s236 + $0x1b0] sm:$0xff]
      %v1729 = vld [vmem:[%s236 + $0x1c8] sm:$0xff]
      %v1730 = vld [vmem:[%s236 + $0x1d0] sm:$0xff]
      %v1731 = vld [vmem:[%s236 + $0x1e8] sm:$0xff]
      %v1732 = vld [vmem:[%s236 + $0x1f0] sm:$0xff]
      %v1733 = vpack.c.bf16 %v1702, %v1701
      %v1734 = vpack.c.bf16 %v1704, %v1703
      %v1735 = vpack.c.bf16 %v1706, %v1705
      %v1736 = vpack.c.bf16 %v1708, %v1707
      %v1737 = vpack.c.bf16 %v1710, %v1709
      %v1738 = vpack.c.bf16 %v1712, %v1711
      %v1739 = vpack.c.bf16 %v1714, %v1713
      %v1740 = vpack.c.bf16 %v1716, %v1715
      %v1741 = vpack.c.bf16 %v1718, %v1717
      %v1742 = vpack.c.bf16 %v1720, %v1719
      %v1743 = vpack.c.bf16 %v1722, %v1721
      %v1744 = vpack.c.bf16 %v1724, %v1723
      %v1745 = vpack.c.bf16 %v1726, %v1725
      %v1746 = vpack.c.bf16 %v1728, %v1727
      %v1747 = vpack.c.bf16 %v1730, %v1729
      %v1748 = vpack.c.bf16 %v1732, %v1731
      %s1749 = scalar_lea.vmem %s1, 8
      %v1750 = vld [vmem:[%s1749] sm:$0x3]
      %v1752 = vsel %vm226, %v1733, 0
      %v1755 = vsel %vm226, %v1734, 0
      %v1758 = vsel %vm226, %v1735, 0
      %v1761 = vsel %vm226, %v1736, 0
      %v1764 = vsel %vm226, %v1737, 0
      %v1767 = vsel %vm226, %v1738, 0
      %v1770 = vsel %vm226, %v1739, 0
      %v1773 = vsel %vm226, %v1740, 0
      %v1776 = vsel %vm226, %v1741, 0
      %v1779 = vsel %vm226, %v1742, 0
      %v1782 = vsel %vm226, %v1743, 0
      %v1785 = vsel %vm226, %v1744, 0
      %v1788 = vsel %vm226, %v1745, 0
      %v1791 = vsel %vm226, %v1746, 0
      %v1794 = vsel %vm226, %v1747, 0
      %v1797 = vsel %vm226, %v1748, 0
      %v1800 = vsel %vm430, %v1750, 0
      %1802 = vmatprep.subr.bf16.mxu0 0
      %1803 = vmatpush1.bf16.msra.mxu0 0
      %1804 = vmatprep.subr.bf16.mxu0 0
      %1805 = vmatpush1.bf16.msra.mxu0 0
      %1806 = vmatprep.subr.bf16.mxu0 0
      %1807 = vmatpush1.bf16.msra.mxu0 0
      %1808 = vmatprep.subr.bf16.mxu0 0
      %1809 = vmatpush1.bf16.msra.mxu0 0
      %1810 = vmatprep.subr.bf16.mxu0 0
      %1811 = vmatpush1.bf16.msra.mxu0 0
      %1812 = vmatprep.subr.bf16.mxu0 0
      %1813 = vmatpush1.bf16.msra.mxu0 0
      %1814 = vmatprep.subr.bf16.mxu0 0
      %1815 = vmatpush1.bf16.msra.mxu0 0
      %1816 = vmatprep.subr.bf16.mxu0 0
      %1817 = vmatpush1.bf16.msra.mxu0 %v1800
      %1818 = vmatprep.subr.bf16.mxu0 0
      %1819 = vmatpush2.bf16.msra.mxu0 0
      %1820 = vmatprep.subr.bf16.mxu0 0
      %1821 = vmatpush2.bf16.msra.mxu0 0
      %1822 = vmatprep.subr.bf16.mxu0 0
      %1823 = vmatpush2.bf16.msra.mxu0 0
      %1824 = vmatprep.subr.bf16.mxu0 0
      %1825 = vmatpush2.bf16.msra.mxu0 0
      %1826 = vmatprep.subr.bf16.mxu0 0
      %1827 = vmatpush2.bf16.msra.mxu0 0
      %1828 = vmatprep.subr.bf16.mxu0 0
      %1829 = vmatpush2.bf16.msra.mxu0 0
      %1830 = vmatprep.subr.bf16.mxu0 0
      %1831 = vmatpush2.bf16.msra.mxu0 0
      %1832 = vmatprep.subr.bf16.mxu0 0
      %1833 = vmatpush2.bf16.msra.mxu0 0
      %1834 = vmatprep.mubr.bf16.mxu0 0
      %1835 = vmatmul.mubr.bf16.gmra.mxu0 %v1752
      %v1836 = vpop.f32.mrf.mxu0
      %v1837 = vadd.f32 0.0, %v1836
      %v1838 = vpop.f32.mrf.mxu0
      %v1839 = vpop.f32.mrf.mxu0
      %v1840 = vadd.f32 0.0, %v1839
      %v1841 = vpop.f32.mrf.mxu0
      %1842 = vmatprep.mubr.bf16.mxu0 0
      %1843 = vmatmul.mubr.bf16.gmra.mxu0 %v1755
      %v1844 = vpop.f32.mrf.mxu0
      %v1845 = vadd.f32 0.0, %v1844
      %v1846 = vpop.f32.mrf.mxu0
      %v1847 = vpop.f32.mrf.mxu0
      %v1848 = vadd.f32 0.0, %v1847
      %v1849 = vpop.f32.mrf.mxu0
      %1850 = vmatprep.mubr.bf16.mxu0 0
      %1851 = vmatmul.mubr.bf16.gmra.mxu0 %v1758
      %v1852 = vpop.f32.mrf.mxu0
      %v1853 = vadd.f32 0.0, %v1852
      %v1854 = vpop.f32.mrf.mxu0
      %v1855 = vpop.f32.mrf.mxu0
      %v1856 = vadd.f32 0.0, %v1855
      %v1857 = vpop.f32.mrf.mxu0
      %1858 = vmatprep.mubr.bf16.mxu0 0
      %1859 = vmatmul.mubr.bf16.gmra.mxu0 %v1761
      %v1860 = vpop.f32.mrf.mxu0
      %v1861 = vadd.f32 0.0, %v1860
      %v1862 = vpop.f32.mrf.mxu0
      %v1863 = vpop.f32.mrf.mxu0
      %v1864 = vadd.f32 0.0, %v1863
      %v1865 = vpop.f32.mrf.mxu0
      %1866 = vmatprep.mubr.bf16.mxu0 0
      %1867 = vmatmul.mubr.bf16.gmra.mxu0 %v1764
      %v1868 = vpop.f32.mrf.mxu0
      %v1869 = vadd.f32 0.0, %v1868
      %v1870 = vpop.f32.mrf.mxu0
      %v1871 = vpop.f32.mrf.mxu0
      %v1872 = vadd.f32 0.0, %v1871
      %v1873 = vpop.f32.mrf.mxu0
      %1874 = vmatprep.mubr.bf16.mxu0 0
      %1875 = vmatmul.mubr.bf16.gmra.mxu0 %v1767
      %v1876 = vpop.f32.mrf.mxu0
      %v1877 = vadd.f32 0.0, %v1876
      %v1878 = vpop.f32.mrf.mxu0
      %v1879 = vpop.f32.mrf.mxu0
      %v1880 = vadd.f32 0.0, %v1879
      %v1881 = vpop.f32.mrf.mxu0
      %1882 = vmatprep.mubr.bf16.mxu0 0
      %1883 = vmatmul.mubr.bf16.gmra.mxu0 %v1770
      %v1884 = vpop.f32.mrf.mxu0
      %v1885 = vadd.f32 0.0, %v1884
      %v1886 = vpop.f32.mrf.mxu0
      %v1887 = vpop.f32.mrf.mxu0
      %v1888 = vadd.f32 0.0, %v1887
      %v1889 = vpop.f32.mrf.mxu0
      %1890 = vmatprep.mubr.bf16.mxu0 0
      %1891 = vmatmul.mubr.bf16.gmra.mxu0 %v1773
      %v1892 = vpop.f32.mrf.mxu0
      %v1893 = vadd.f32 0.0, %v1892
      %v1894 = vpop.f32.mrf.mxu0
      %v1895 = vpop.f32.mrf.mxu0
      %v1896 = vadd.f32 0.0, %v1895
      %v1897 = vpop.f32.mrf.mxu0
      %1898 = vmatprep.mubr.bf16.mxu0 0
      %1899 = vmatmul.mubr.bf16.gmra.mxu0 %v1776
      %v1900 = vpop.f32.mrf.mxu0
      %v1901 = vadd.f32 0.0, %v1900
      %v1902 = vpop.f32.mrf.mxu0
      %v1903 = vpop.f32.mrf.mxu0
      %v1904 = vadd.f32 0.0, %v1903
      %v1905 = vpop.f32.mrf.mxu0
      %1906 = vmatprep.mubr.bf16.mxu0 0
      %1907 = vmatmul.mubr.bf16.gmra.mxu0 %v1779
      %v1908 = vpop.f32.mrf.mxu0
      %v1909 = vadd.f32 0.0, %v1908
      %v1910 = vpop.f32.mrf.mxu0
      %v1911 = vpop.f32.mrf.mxu0
      %v1912 = vadd.f32 0.0, %v1911
      %v1913 = vpop.f32.mrf.mxu0
      %1914 = vmatprep.mubr.bf16.mxu0 0
      %1915 = vmatmul.mubr.bf16.gmra.mxu0 %v1782
      %v1916 = vpop.f32.mrf.mxu0
      %v1917 = vadd.f32 0.0, %v1916
      %v1918 = vpop.f32.mrf.mxu0
      %v1919 = vpop.f32.mrf.mxu0
      %v1920 = vadd.f32 0.0, %v1919
      %v1921 = vpop.f32.mrf.mxu0
      %1922 = vmatprep.mubr.bf16.mxu0 0
      %1923 = vmatmul.mubr.bf16.gmra.mxu0 %v1785
      %v1924 = vpop.f32.mrf.mxu0
      %v1925 = vadd.f32 0.0, %v1924
      %v1926 = vpop.f32.mrf.mxu0
      %v1927 = vpop.f32.mrf.mxu0
      %v1928 = vadd.f32 0.0, %v1927
      %v1929 = vpop.f32.mrf.mxu0
      %1930 = vmatprep.mubr.bf16.mxu0 0
      %1931 = vmatmul.mubr.bf16.gmra.mxu0 %v1788
      %v1932 = vpop.f32.mrf.mxu0
      %v1933 = vadd.f32 0.0, %v1932
      %v1934 = vpop.f32.mrf.mxu0
      %v1935 = vpop.f32.mrf.mxu0
      %v1936 = vadd.f32 0.0, %v1935
      %v1937 = vpop.f32.mrf.mxu0
      %1938 = vmatprep.mubr.bf16.mxu0 0
      %1939 = vmatmul.mubr.bf16.gmra.mxu0 %v1791
      %v1940 = vpop.f32.mrf.mxu0
      %v1941 = vadd.f32 0.0, %v1940
      %v1942 = vpop.f32.mrf.mxu0
      %v1943 = vpop.f32.mrf.mxu0
      %v1944 = vadd.f32 0.0, %v1943
      %v1945 = vpop.f32.mrf.mxu0
      %1946 = vmatprep.mubr.bf16.mxu0 0
      %1947 = vmatmul.mubr.bf16.gmra.mxu0 %v1794
      %v1948 = vpop.f32.mrf.mxu0
      %v1949 = vadd.f32 0.0, %v1948
      %v1950 = vpop.f32.mrf.mxu0
      %v1951 = vpop.f32.mrf.mxu0
      %v1952 = vadd.f32 0.0, %v1951
      %v1953 = vpop.f32.mrf.mxu0
      %1954 = vmatprep.mubr.bf16.mxu0 0
      %1955 = vmatmul.mubr.bf16.gmra.mxu0 %v1797
      %v1956 = vpop.f32.mrf.mxu0
      %v1957 = vadd.f32 0.0, %v1956
      %v1958 = vpop.f32.mrf.mxu0
      %v1959 = vpop.f32.mrf.mxu0
      %v1960 = vadd.f32 0.0, %v1959
      %v1961 = vpop.f32.mrf.mxu0
      %1962 = vdwg.mxu0
      %v1963 = vld [vmem:[#allocation4] sm:$0xff]
      %v1964 = vld [vmem:[#allocation4 + $0x8] sm:$0xff]
      %v1965 = vld [vmem:[#allocation4 + $0x10] sm:$0xff]
      %v1966 = vld [vmem:[#allocation4 + $0x18] sm:$0xff]
      %v1967 = vld [vmem:[#allocation4 + $0x20] sm:$0xff]
      %v1968 = vld [vmem:[#allocation4 + $0x28] sm:$0xff]
      %v1969 = vld [vmem:[#allocation4 + $0x30] sm:$0xff]
      %v1970 = vld [vmem:[#allocation4 + $0x38] sm:$0xff]
      %v1971 = vld [vmem:[#allocation4 + $0x40] sm:$0xff]
      %v1972 = vld [vmem:[#allocation4 + $0x48] sm:$0xff]
      %v1973 = vld [vmem:[#allocation4 + $0x50] sm:$0xff]
      %v1974 = vld [vmem:[#allocation4 + $0x58] sm:$0xff]
      %v1975 = vld [vmem:[#allocation4 + $0x60] sm:$0xff]
      %v1976 = vld [vmem:[#allocation4 + $0x68] sm:$0xff]
      %v1977 = vld [vmem:[#allocation4 + $0x70] sm:$0xff]
      %v1978 = vld [vmem:[#allocation4 + $0x78] sm:$0xff]
      %v1979 = vld [vmem:[#allocation4 + $0x80] sm:$0xff]
      %v1980 = vld [vmem:[#allocation4 + $0x88] sm:$0xff]
      %v1981 = vld [vmem:[#allocation4 + $0x90] sm:$0xff]
      %v1982 = vld [vmem:[#allocation4 + $0x98] sm:$0xff]
      %v1983 = vld [vmem:[#allocation4 + $0xa0] sm:$0xff]
      %v1984 = vld [vmem:[#allocation4 + $0xa8] sm:$0xff]
      %v1985 = vld [vmem:[#allocation4 + $0xb0] sm:$0xff]
      %v1986 = vld [vmem:[#allocation4 + $0xb8] sm:$0xff]
      %v1987 = vld [vmem:[#allocation4 + $0xc0] sm:$0xff]
      %v1988 = vld [vmem:[#allocation4 + $0xc8] sm:$0xff]
      %v1989 = vld [vmem:[#allocation4 + $0xd0] sm:$0xff]
      %v1990 = vld [vmem:[#allocation4 + $0xd8] sm:$0xff]
      %v1991 = vld [vmem:[#allocation4 + $0xe0] sm:$0xff]
      %v1992 = vld [vmem:[#allocation4 + $0xe8] sm:$0xff]
      %v1993 = vld [vmem:[#allocation4 + $0xf0] sm:$0xff]
      %v1994 = vld [vmem:[#allocation4 + $0xf8] sm:$0xff]
      %v1995 = vadd.f32 %v1963, %v1837
      %v1996 = vadd.f32 %v1964, %v1840
      %v1997 = vadd.f32 %v1965, %v1845
      %v1998 = vadd.f32 %v1966, %v1848
      %v1999 = vadd.f32 %v1967, %v1853
      %v2000 = vadd.f32 %v1968, %v1856
      %v2001 = vadd.f32 %v1969, %v1861
      %v2002 = vadd.f32 %v1970, %v1864
      %v2003 = vadd.f32 %v1971, %v1869
      %v2004 = vadd.f32 %v1972, %v1872
      %v2005 = vadd.f32 %v1973, %v1877
      %v2006 = vadd.f32 %v1974, %v1880
      %v2007 = vadd.f32 %v1975, %v1885
      %v2008 = vadd.f32 %v1976, %v1888
      %v2009 = vadd.f32 %v1977, %v1893
      %v2010 = vadd.f32 %v1978, %v1896
      %v2011 = vadd.f32 %v1979, %v1901
      %v2012 = vadd.f32 %v1980, %v1904
      %v2013 = vadd.f32 %v1981, %v1909
      %v2014 = vadd.f32 %v1982, %v1912
      %v2015 = vadd.f32 %v1983, %v1917
      %v2016 = vadd.f32 %v1984, %v1920
      %v2017 = vadd.f32 %v1985, %v1925
      %v2018 = vadd.f32 %v1986, %v1928
      %v2019 = vadd.f32 %v1987, %v1933
      %v2020 = vadd.f32 %v1988, %v1936
      %v2021 = vadd.f32 %v1989, %v1941
      %v2022 = vadd.f32 %v1990, %v1944
      %v2023 = vadd.f32 %v1991, %v1949
      %v2024 = vadd.f32 %v1992, %v1952
      %v2025 = vadd.f32 %v1993, %v1957
      %v2026 = vadd.f32 %v1994, %v1960
      %2027 = vst.msk [vmem:[#allocation4] sm:$0xff] %vm226, %v1995
      %2028 = vst.msk [vmem:[#allocation4 + $0x8] sm:$0xff] %vm226, %v1996
      %2029 = vst.msk [vmem:[#allocation4 + $0x10] sm:$0xff] %vm226, %v1997
      %2030 = vst.msk [vmem:[#allocation4 + $0x18] sm:$0xff] %vm226, %v1998
      %2031 = vst.msk [vmem:[#allocation4 + $0x20] sm:$0xff] %vm226, %v1999
      %2032 = vst.msk [vmem:[#allocation4 + $0x28] sm:$0xff] %vm226, %v2000
      %2033 = vst.msk [vmem:[#allocation4 + $0x30] sm:$0xff] %vm226, %v2001
      %2034 = vst.msk [vmem:[#allocation4 + $0x38] sm:$0xff] %vm226, %v2002
      %2035 = vst.msk [vmem:[#allocation4 + $0x40] sm:$0xff] %vm226, %v2003
      %2036 = vst.msk [vmem:[#allocation4 + $0x48] sm:$0xff] %vm226, %v2004
      %2037 = vst.msk [vmem:[#allocation4 + $0x50] sm:$0xff] %vm226, %v2005
      %2038 = vst.msk [vmem:[#allocation4 + $0x58] sm:$0xff] %vm226, %v2006
      %2039 = vst.msk [vmem:[#allocation4 + $0x60] sm:$0xff] %vm226, %v2007
      %2040 = vst.msk [vmem:[#allocation4 + $0x68] sm:$0xff] %vm226, %v2008
      %2041 = vst.msk [vmem:[#allocation4 + $0x70] sm:$0xff] %vm226, %v2009
      %2042 = vst.msk [vmem:[#allocation4 + $0x78] sm:$0xff] %vm226, %v2010
      %2043 = vst.msk [vmem:[#allocation4 + $0x80] sm:$0xff] %vm226, %v2011
      %2044 = vst.msk [vmem:[#allocation4 + $0x88] sm:$0xff] %vm226, %v2012
      %2045 = vst.msk [vmem:[#allocation4 + $0x90] sm:$0xff] %vm226, %v2013
      %2046 = vst.msk [vmem:[#allocation4 + $0x98] sm:$0xff] %vm226, %v2014
      %2047 = vst.msk [vmem:[#allocation4 + $0xa0] sm:$0xff] %vm226, %v2015
      %2048 = vst.msk [vmem:[#allocation4 + $0xa8] sm:$0xff] %vm226, %v2016
      %2049 = vst.msk [vmem:[#allocation4 + $0xb0] sm:$0xff] %vm226, %v2017
      %2050 = vst.msk [vmem:[#allocation4 + $0xb8] sm:$0xff] %vm226, %v2018
      %2051 = vst.msk [vmem:[#allocation4 + $0xc0] sm:$0xff] %vm226, %v2019
      %2052 = vst.msk [vmem:[#allocation4 + $0xc8] sm:$0xff] %vm226, %v2020
      %2053 = vst.msk [vmem:[#allocation4 + $0xd0] sm:$0xff] %vm226, %v2021
      %2054 = vst.msk [vmem:[#allocation4 + $0xd8] sm:$0xff] %vm226, %v2022
      %2055 = vst.msk [vmem:[#allocation4 + $0xe0] sm:$0xff] %vm226, %v2023
      %2056 = vst.msk [vmem:[#allocation4 + $0xe8] sm:$0xff] %vm226, %v2024
      %2057 = vst.msk [vmem:[#allocation4 + $0xf0] sm:$0xff] %vm226, %v2025
      %2058 = vst.msk [vmem:[#allocation4 + $0xf8] sm:$0xff] %vm226, %v2026
      %v2059 = vld [vmem:[%s236 + $0x9] sm:$0xff]
      %v2060 = vld [vmem:[%s236 + $0x11] sm:$0xff]
      %v2061 = vld [vmem:[%s236 + $0x29] sm:$0xff]
      %v2062 = vld [vmem:[%s236 + $0x31] sm:$0xff]
      %v2063 = vld [vmem:[%s236 + $0x49] sm:$0xff]
      %v2064 = vld [vmem:[%s236 + $0x51] sm:$0xff]
      %v2065 = vld [vmem:[%s236 + $0x69] sm:$0xff]
      %v2066 = vld [vmem:[%s236 + $0x71] sm:$0xff]
      %v2067 = vld [vmem:[%s236 + $0x89] sm:$0xff]
      %v2068 = vld [vmem:[%s236 + $0x91] sm:$0xff]
      %v2069 = vld [vmem:[%s236 + $0xa9] sm:$0xff]
      %v2070 = vld [vmem:[%s236 + $0xb1] sm:$0xff]
      %v2071 = vld [vmem:[%s236 + $0xc9] sm:$0xff]
      %v2072 = vld [vmem:[%s236 + $0xd1] sm:$0xff]
      %v2073 = vld [vmem:[%s236 + $0xe9] sm:$0xff]
      %v2074 = vld [vmem:[%s236 + $0xf1] sm:$0xff]
      %v2075 = vld [vmem:[%s236 + $0x109] sm:$0xff]
      %v2076 = vld [vmem:[%s236 + $0x111] sm:$0xff]
      %v2077 = vld [vmem:[%s236 + $0x129] sm:$0xff]
      %v2078 = vld [vmem:[%s236 + $0x131] sm:$0xff]
      %v2079 = vld [vmem:[%s236 + $0x149] sm:$0xff]
      %v2080 = vld [vmem:[%s236 + $0x151] sm:$0xff]
      %v2081 = vld [vmem:[%s236 + $0x169] sm:$0xff]
      %v2082 = vld [vmem:[%s236 + $0x171] sm:$0xff]
      %v2083 = vld [vmem:[%s236 + $0x189] sm:$0xff]
      %v2084 = vld [vmem:[%s236 + $0x191] sm:$0xff]
      %v2085 = vld [vmem:[%s236 + $0x1a9] sm:$0xff]
      %v2086 = vld [vmem:[%s236 + $0x1b1] sm:$0xff]
      %v2087 = vld [vmem:[%s236 + $0x1c9] sm:$0xff]
      %v2088 = vld [vmem:[%s236 + $0x1d1] sm:$0xff]
      %v2089 = vld [vmem:[%s236 + $0x1e9] sm:$0xff]
      %v2090 = vld [vmem:[%s236 + $0x1f1] sm:$0xff]
      %v2091 = vpack.c.bf16 %v2060, %v2059
      %v2092 = vpack.c.bf16 %v2062, %v2061
      %v2093 = vpack.c.bf16 %v2064, %v2063
      %v2094 = vpack.c.bf16 %v2066, %v2065
      %v2095 = vpack.c.bf16 %v2068, %v2067
      %v2096 = vpack.c.bf16 %v2070, %v2069
      %v2097 = vpack.c.bf16 %v2072, %v2071
      %v2098 = vpack.c.bf16 %v2074, %v2073
      %v2099 = vpack.c.bf16 %v2076, %v2075
      %v2100 = vpack.c.bf16 %v2078, %v2077
      %v2101 = vpack.c.bf16 %v2080, %v2079
      %v2102 = vpack.c.bf16 %v2082, %v2081
      %v2103 = vpack.c.bf16 %v2084, %v2083
      %v2104 = vpack.c.bf16 %v2086, %v2085
      %v2105 = vpack.c.bf16 %v2088, %v2087
      %v2106 = vpack.c.bf16 %v2090, %v2089
      %s2107 = scalar_lea.vmem %s1, 10
      %v2108 = vld [vmem:[%s2107] sm:$0x3]
      %v2110 = vsel %vm226, %v2091, 0
      %v2113 = vsel %vm226, %v2092, 0
      %v2116 = vsel %vm226, %v2093, 0
      %v2119 = vsel %vm226, %v2094, 0
      %v2122 = vsel %vm226, %v2095, 0
      %v2125 = vsel %vm226, %v2096, 0
      %v2128 = vsel %vm226, %v2097, 0
      %v2131 = vsel %vm226, %v2098, 0
      %v2134 = vsel %vm226, %v2099, 0
      %v2137 = vsel %vm226, %v2100, 0
      %v2140 = vsel %vm226, %v2101, 0
      %v2143 = vsel %vm226, %v2102, 0
      %v2146 = vsel %vm226, %v2103, 0
      %v2149 = vsel %vm226, %v2104, 0
      %v2152 = vsel %vm226, %v2105, 0
      %v2155 = vsel %vm226, %v2106, 0
      %v2158 = vsel %vm430, %v2108, 0
      %2160 = vmatprep.subr.bf16.mxu0 0
      %2161 = vmatpush1.bf16.msra.mxu0 0
      %2162 = vmatprep.subr.bf16.mxu0 0
      %2163 = vmatpush1.bf16.msra.mxu0 0
      %2164 = vmatprep.subr.bf16.mxu0 0
      %2165 = vmatpush1.bf16.msra.mxu0 0
      %2166 = vmatprep.subr.bf16.mxu0 0
      %2167 = vmatpush1.bf16.msra.mxu0 0
      %2168 = vmatprep.subr.bf16.mxu0 0
      %2169 = vmatpush1.bf16.msra.mxu0 0
      %2170 = vmatprep.subr.bf16.mxu0 0
      %2171 = vmatpush1.bf16.msra.mxu0 0
      %2172 = vmatprep.subr.bf16.mxu0 0
      %2173 = vmatpush1.bf16.msra.mxu0 0
      %2174 = vmatprep.subr.bf16.mxu0 0
      %2175 = vmatpush1.bf16.msra.mxu0 %v2158
      %2176 = vmatprep.subr.bf16.mxu0 0
      %2177 = vmatpush2.bf16.msra.mxu0 0
      %2178 = vmatprep.subr.bf16.mxu0 0
      %2179 = vmatpush2.bf16.msra.mxu0 0
      %2180 = vmatprep.subr.bf16.mxu0 0
      %2181 = vmatpush2.bf16.msra.mxu0 0
      %2182 = vmatprep.subr.bf16.mxu0 0
      %2183 = vmatpush2.bf16.msra.mxu0 0
      %2184 = vmatprep.subr.bf16.mxu0 0
      %2185 = vmatpush2.bf16.msra.mxu0 0
      %2186 = vmatprep.subr.bf16.mxu0 0
      %2187 = vmatpush2.bf16.msra.mxu0 0
      %2188 = vmatprep.subr.bf16.mxu0 0
      %2189 = vmatpush2.bf16.msra.mxu0 0
      %2190 = vmatprep.subr.bf16.mxu0 0
      %2191 = vmatpush2.bf16.msra.mxu0 0
      %2192 = vmatprep.mubr.bf16.mxu0 0
      %2193 = vmatmul.mubr.bf16.gmra.mxu0 %v2110
      %v2194 = vpop.f32.mrf.mxu0
      %v2195 = vadd.f32 0.0, %v2194
      %v2196 = vpop.f32.mrf.mxu0
      %v2197 = vpop.f32.mrf.mxu0
      %v2198 = vadd.f32 0.0, %v2197
      %v2199 = vpop.f32.mrf.mxu0
      %2200 = vmatprep.mubr.bf16.mxu0 0
      %2201 = vmatmul.mubr.bf16.gmra.mxu0 %v2113
      %v2202 = vpop.f32.mrf.mxu0
      %v2203 = vadd.f32 0.0, %v2202
      %v2204 = vpop.f32.mrf.mxu0
      %v2205 = vpop.f32.mrf.mxu0
      %v2206 = vadd.f32 0.0, %v2205
      %v2207 = vpop.f32.mrf.mxu0
      %2208 = vmatprep.mubr.bf16.mxu0 0
      %2209 = vmatmul.mubr.bf16.gmra.mxu0 %v2116
      %v2210 = vpop.f32.mrf.mxu0
      %v2211 = vadd.f32 0.0, %v2210
      %v2212 = vpop.f32.mrf.mxu0
      %v2213 = vpop.f32.mrf.mxu0
      %v2214 = vadd.f32 0.0, %v2213
      %v2215 = vpop.f32.mrf.mxu0
      %2216 = vmatprep.mubr.bf16.mxu0 0
      %2217 = vmatmul.mubr.bf16.gmra.mxu0 %v2119
      %v2218 = vpop.f32.mrf.mxu0
      %v2219 = vadd.f32 0.0, %v2218
      %v2220 = vpop.f32.mrf.mxu0
      %v2221 = vpop.f32.mrf.mxu0
      %v2222 = vadd.f32 0.0, %v2221
      %v2223 = vpop.f32.mrf.mxu0
      %2224 = vmatprep.mubr.bf16.mxu0 0
      %2225 = vmatmul.mubr.bf16.gmra.mxu0 %v2122
      %v2226 = vpop.f32.mrf.mxu0
      %v2227 = vadd.f32 0.0, %v2226
      %v2228 = vpop.f32.mrf.mxu0
      %v2229 = vpop.f32.mrf.mxu0
      %v2230 = vadd.f32 0.0, %v2229
      %v2231 = vpop.f32.mrf.mxu0
      %2232 = vmatprep.mubr.bf16.mxu0 0
      %2233 = vmatmul.mubr.bf16.gmra.mxu0 %v2125
      %v2234 = vpop.f32.mrf.mxu0
      %v2235 = vadd.f32 0.0, %v2234
      %v2236 = vpop.f32.mrf.mxu0
      %v2237 = vpop.f32.mrf.mxu0
      %v2238 = vadd.f32 0.0, %v2237
      %v2239 = vpop.f32.mrf.mxu0
      %2240 = vmatprep.mubr.bf16.mxu0 0
      %2241 = vmatmul.mubr.bf16.gmra.mxu0 %v2128
      %v2242 = vpop.f32.mrf.mxu0
      %v2243 = vadd.f32 0.0, %v2242
      %v2244 = vpop.f32.mrf.mxu0
      %v2245 = vpop.f32.mrf.mxu0
      %v2246 = vadd.f32 0.0, %v2245
      %v2247 = vpop.f32.mrf.mxu0
      %2248 = vmatprep.mubr.bf16.mxu0 0
      %2249 = vmatmul.mubr.bf16.gmra.mxu0 %v2131
      %v2250 = vpop.f32.mrf.mxu0
      %v2251 = vadd.f32 0.0, %v2250
      %v2252 = vpop.f32.mrf.mxu0
      %v2253 = vpop.f32.mrf.mxu0
      %v2254 = vadd.f32 0.0, %v2253
      %v2255 = vpop.f32.mrf.mxu0
      %2256 = vmatprep.mubr.bf16.mxu0 0
      %2257 = vmatmul.mubr.bf16.gmra.mxu0 %v2134
      %v2258 = vpop.f32.mrf.mxu0
      %v2259 = vadd.f32 0.0, %v2258
      %v2260 = vpop.f32.mrf.mxu0
      %v2261 = vpop.f32.mrf.mxu0
      %v2262 = vadd.f32 0.0, %v2261
      %v2263 = vpop.f32.mrf.mxu0
      %2264 = vmatprep.mubr.bf16.mxu0 0
      %2265 = vmatmul.mubr.bf16.gmra.mxu0 %v2137
      %v2266 = vpop.f32.mrf.mxu0
      %v2267 = vadd.f32 0.0, %v2266
      %v2268 = vpop.f32.mrf.mxu0
      %v2269 = vpop.f32.mrf.mxu0
      %v2270 = vadd.f32 0.0, %v2269
      %v2271 = vpop.f32.mrf.mxu0
      %2272 = vmatprep.mubr.bf16.mxu0 0
      %2273 = vmatmul.mubr.bf16.gmra.mxu0 %v2140
      %v2274 = vpop.f32.mrf.mxu0
      %v2275 = vadd.f32 0.0, %v2274
      %v2276 = vpop.f32.mrf.mxu0
      %v2277 = vpop.f32.mrf.mxu0
      %v2278 = vadd.f32 0.0, %v2277
      %v2279 = vpop.f32.mrf.mxu0
      %2280 = vmatprep.mubr.bf16.mxu0 0
      %2281 = vmatmul.mubr.bf16.gmra.mxu0 %v2143
      %v2282 = vpop.f32.mrf.mxu0
      %v2283 = vadd.f32 0.0, %v2282
      %v2284 = vpop.f32.mrf.mxu0
      %v2285 = vpop.f32.mrf.mxu0
      %v2286 = vadd.f32 0.0, %v2285
      %v2287 = vpop.f32.mrf.mxu0
      %2288 = vmatprep.mubr.bf16.mxu0 0
      %2289 = vmatmul.mubr.bf16.gmra.mxu0 %v2146
      %v2290 = vpop.f32.mrf.mxu0
      %v2291 = vadd.f32 0.0, %v2290
      %v2292 = vpop.f32.mrf.mxu0
      %v2293 = vpop.f32.mrf.mxu0
      %v2294 = vadd.f32 0.0, %v2293
      %v2295 = vpop.f32.mrf.mxu0
      %2296 = vmatprep.mubr.bf16.mxu0 0
      %2297 = vmatmul.mubr.bf16.gmra.mxu0 %v2149
      %v2298 = vpop.f32.mrf.mxu0
      %v2299 = vadd.f32 0.0, %v2298
      %v2300 = vpop.f32.mrf.mxu0
      %v2301 = vpop.f32.mrf.mxu0
      %v2302 = vadd.f32 0.0, %v2301
      %v2303 = vpop.f32.mrf.mxu0
      %2304 = vmatprep.mubr.bf16.mxu0 0
      %2305 = vmatmul.mubr.bf16.gmra.mxu0 %v2152
      %v2306 = vpop.f32.mrf.mxu0
      %v2307 = vadd.f32 0.0, %v2306
      %v2308 = vpop.f32.mrf.mxu0
      %v2309 = vpop.f32.mrf.mxu0
      %v2310 = vadd.f32 0.0, %v2309
      %v2311 = vpop.f32.mrf.mxu0
      %2312 = vmatprep.mubr.bf16.mxu0 0
      %2313 = vmatmul.mubr.bf16.gmra.mxu0 %v2155
      %v2314 = vpop.f32.mrf.mxu0
      %v2315 = vadd.f32 0.0, %v2314
      %v2316 = vpop.f32.mrf.mxu0
      %v2317 = vpop.f32.mrf.mxu0
      %v2318 = vadd.f32 0.0, %v2317
      %v2319 = vpop.f32.mrf.mxu0
      %2320 = vdwg.mxu0
      %v2321 = vld [vmem:[#allocation4] sm:$0xff]
      %v2322 = vld [vmem:[#allocation4 + $0x8] sm:$0xff]
      %v2323 = vld [vmem:[#allocation4 + $0x10] sm:$0xff]
      %v2324 = vld [vmem:[#allocation4 + $0x18] sm:$0xff]
      %v2325 = vld [vmem:[#allocation4 + $0x20] sm:$0xff]
      %v2326 = vld [vmem:[#allocation4 + $0x28] sm:$0xff]
      %v2327 = vld [vmem:[#allocation4 + $0x30] sm:$0xff]
      %v2328 = vld [vmem:[#allocation4 + $0x38] sm:$0xff]
      %v2329 = vld [vmem:[#allocation4 + $0x40] sm:$0xff]
      %v2330 = vld [vmem:[#allocation4 + $0x48] sm:$0xff]
      %v2331 = vld [vmem:[#allocation4 + $0x50] sm:$0xff]
      %v2332 = vld [vmem:[#allocation4 + $0x58] sm:$0xff]
      %v2333 = vld [vmem:[#allocation4 + $0x60] sm:$0xff]
      %v2334 = vld [vmem:[#allocation4 + $0x68] sm:$0xff]
      %v2335 = vld [vmem:[#allocation4 + $0x70] sm:$0xff]
      %v2336 = vld [vmem:[#allocation4 + $0x78] sm:$0xff]
      %v2337 = vld [vmem:[#allocation4 + $0x80] sm:$0xff]
      %v2338 = vld [vmem:[#allocation4 + $0x88] sm:$0xff]
      %v2339 = vld [vmem:[#allocation4 + $0x90] sm:$0xff]
      %v2340 = vld [vmem:[#allocation4 + $0x98] sm:$0xff]
      %v2341 = vld [vmem:[#allocation4 + $0xa0] sm:$0xff]
      %v2342 = vld [vmem:[#allocation4 + $0xa8] sm:$0xff]
      %v2343 = vld [vmem:[#allocation4 + $0xb0] sm:$0xff]
      %v2344 = vld [vmem:[#allocation4 + $0xb8] sm:$0xff]
      %v2345 = vld [vmem:[#allocation4 + $0xc0] sm:$0xff]
      %v2346 = vld [vmem:[#allocation4 + $0xc8] sm:$0xff]
      %v2347 = vld [vmem:[#allocation4 + $0xd0] sm:$0xff]
      %v2348 = vld [vmem:[#allocation4 + $0xd8] sm:$0xff]
      %v2349 = vld [vmem:[#allocation4 + $0xe0] sm:$0xff]
      %v2350 = vld [vmem:[#allocation4 + $0xe8] sm:$0xff]
      %v2351 = vld [vmem:[#allocation4 + $0xf0] sm:$0xff]
      %v2352 = vld [vmem:[#allocation4 + $0xf8] sm:$0xff]
      %v2353 = vadd.f32 %v2321, %v2195
      %v2354 = vadd.f32 %v2322, %v2198
      %v2355 = vadd.f32 %v2323, %v2203
      %v2356 = vadd.f32 %v2324, %v2206
      %v2357 = vadd.f32 %v2325, %v2211
      %v2358 = vadd.f32 %v2326, %v2214
      %v2359 = vadd.f32 %v2327, %v2219
      %v2360 = vadd.f32 %v2328, %v2222
      %v2361 = vadd.f32 %v2329, %v2227
      %v2362 = vadd.f32 %v2330, %v2230
      %v2363 = vadd.f32 %v2331, %v2235
      %v2364 = vadd.f32 %v2332, %v2238
      %v2365 = vadd.f32 %v2333, %v2243
      %v2366 = vadd.f32 %v2334, %v2246
      %v2367 = vadd.f32 %v2335, %v2251
      %v2368 = vadd.f32 %v2336, %v2254
      %v2369 = vadd.f32 %v2337, %v2259
      %v2370 = vadd.f32 %v2338, %v2262
      %v2371 = vadd.f32 %v2339, %v2267
      %v2372 = vadd.f32 %v2340, %v2270
      %v2373 = vadd.f32 %v2341, %v2275
      %v2374 = vadd.f32 %v2342, %v2278
      %v2375 = vadd.f32 %v2343, %v2283
      %v2376 = vadd.f32 %v2344, %v2286
      %v2377 = vadd.f32 %v2345, %v2291
      %v2378 = vadd.f32 %v2346, %v2294
      %v2379 = vadd.f32 %v2347, %v2299
      %v2380 = vadd.f32 %v2348, %v2302
      %v2381 = vadd.f32 %v2349, %v2307
      %v2382 = vadd.f32 %v2350, %v2310
      %v2383 = vadd.f32 %v2351, %v2315
      %v2384 = vadd.f32 %v2352, %v2318
      %2385 = vst.msk [vmem:[#allocation4] sm:$0xff] %vm226, %v2353
      %2386 = vst.msk [vmem:[#allocation4 + $0x8] sm:$0xff] %vm226, %v2354
      %2387 = vst.msk [vmem:[#allocation4 + $0x10] sm:$0xff] %vm226, %v2355
      %2388 = vst.msk [vmem:[#allocation4 + $0x18] sm:$0xff] %vm226, %v2356
      %2389 = vst.msk [vmem:[#allocation4 + $0x20] sm:$0xff] %vm226, %v2357
      %2390 = vst.msk [vmem:[#allocation4 + $0x28] sm:$0xff] %vm226, %v2358
      %2391 = vst.msk [vmem:[#allocation4 + $0x30] sm:$0xff] %vm226, %v2359
      %2392 = vst.msk [vmem:[#allocation4 + $0x38] sm:$0xff] %vm226, %v2360
      %2393 = vst.msk [vmem:[#allocation4 + $0x40] sm:$0xff] %vm226, %v2361
      %2394 = vst.msk [vmem:[#allocation4 + $0x48] sm:$0xff] %vm226, %v2362
      %2395 = vst.msk [vmem:[#allocation4 + $0x50] sm:$0xff] %vm226, %v2363
      %2396 = vst.msk [vmem:[#allocation4 + $0x58] sm:$0xff] %vm226, %v2364
      %2397 = vst.msk [vmem:[#allocation4 + $0x60] sm:$0xff] %vm226, %v2365
      %2398 = vst.msk [vmem:[#allocation4 + $0x68] sm:$0xff] %vm226, %v2366
      %2399 = vst.msk [vmem:[#allocation4 + $0x70] sm:$0xff] %vm226, %v2367
      %2400 = vst.msk [vmem:[#allocation4 + $0x78] sm:$0xff] %vm226, %v2368
      %2401 = vst.msk [vmem:[#allocation4 + $0x80] sm:$0xff] %vm226, %v2369
      %2402 = vst.msk [vmem:[#allocation4 + $0x88] sm:$0xff] %vm226, %v2370
      %2403 = vst.msk [vmem:[#allocation4 + $0x90] sm:$0xff] %vm226, %v2371
      %2404 = vst.msk [vmem:[#allocation4 + $0x98] sm:$0xff] %vm226, %v2372
      %2405 = vst.msk [vmem:[#allocation4 + $0xa0] sm:$0xff] %vm226, %v2373
      %2406 = vst.msk [vmem:[#allocation4 + $0xa8] sm:$0xff] %vm226, %v2374
      %2407 = vst.msk [vmem:[#allocation4 + $0xb0] sm:$0xff] %vm226, %v2375
      %2408 = vst.msk [vmem:[#allocation4 + $0xb8] sm:$0xff] %vm226, %v2376
      %2409 = vst.msk [vmem:[#allocation4 + $0xc0] sm:$0xff] %vm226, %v2377
      %2410 = vst.msk [vmem:[#allocation4 + $0xc8] sm:$0xff] %vm226, %v2378
      %2411 = vst.msk [vmem:[#allocation4 + $0xd0] sm:$0xff] %vm226, %v2379
      %2412 = vst.msk [vmem:[#allocation4 + $0xd8] sm:$0xff] %vm226, %v2380
      %2413 = vst.msk [vmem:[#allocation4 + $0xe0] sm:$0xff] %vm226, %v2381
      %2414 = vst.msk [vmem:[#allocation4 + $0xe8] sm:$0xff] %vm226, %v2382
      %2415 = vst.msk [vmem:[#allocation4 + $0xf0] sm:$0xff] %vm226, %v2383
      %2416 = vst.msk [vmem:[#allocation4 + $0xf8] sm:$0xff] %vm226, %v2384
      %s2417 = scalar_lea.vmem [#allocation2], 64
      %v2418 = vld [vmem:[%s2417 + $0x7] sm:$0xff]
      %v2419 = vld [vmem:[%s2417 + $0xf] sm:$0xff]
      %v2420 = vld [vmem:[%s2417 + $0x27] sm:$0xff]
      %v2421 = vld [vmem:[%s2417 + $0x2f] sm:$0xff]
      %v2422 = vld [vmem:[%s2417 + $0x47] sm:$0xff]
      %v2423 = vld [vmem:[%s2417 + $0x4f] sm:$0xff]
      %v2424 = vld [vmem:[%s2417 + $0x67] sm:$0xff]
      %v2425 = vld [vmem:[%s2417 + $0x6f] sm:$0xff]
      %v2426 = vld [vmem:[%s2417 + $0x87] sm:$0xff]
      %v2427 = vld [vmem:[%s2417 + $0x8f] sm:$0xff]
      %v2428 = vld [vmem:[%s2417 + $0xa7] sm:$0xff]
      %v2429 = vld [vmem:[%s2417 + $0xaf] sm:$0xff]
      %v2430 = vld [vmem:[%s2417 + $0xc7] sm:$0xff]
      %v2431 = vld [vmem:[%s2417 + $0xcf] sm:$0xff]
      %v2432 = vld [vmem:[%s2417 + $0xe7] sm:$0xff]
      %v2433 = vld [vmem:[%s2417 + $0xef] sm:$0xff]
      %v2434 = vld [vmem:[%s2417 + $0x107] sm:$0xff]
      %v2435 = vld [vmem:[%s2417 + $0x10f] sm:$0xff]
      %v2436 = vld [vmem:[%s2417 + $0x127] sm:$0xff]
      %v2437 = vld [vmem:[%s2417 + $0x12f] sm:$0xff]
      %v2438 = vld [vmem:[%s2417 + $0x147] sm:$0xff]
      %v2439 = vld [vmem:[%s2417 + $0x14f] sm:$0xff]
      %v2440 = vld [vmem:[%s2417 + $0x167] sm:$0xff]
      %v2441 = vld [vmem:[%s2417 + $0x16f] sm:$0xff]
      %v2442 = vld [vmem:[%s2417 + $0x187] sm:$0xff]
      %v2443 = vld [vmem:[%s2417 + $0x18f] sm:$0xff]
      %v2444 = vld [vmem:[%s2417 + $0x1a7] sm:$0xff]
      %v2445 = vld [vmem:[%s2417 + $0x1af] sm:$0xff]
      %v2446 = vld [vmem:[%s2417 + $0x1c7] sm:$0xff]
      %v2447 = vld [vmem:[%s2417 + $0x1cf] sm:$0xff]
      %v2448 = vld [vmem:[%s2417 + $0x1e7] sm:$0xff]
      %v2449 = vld [vmem:[%s2417 + $0x1ef] sm:$0xff]
      %v2450 = vpack.c.bf16 %v2419, %v2418
      %v2451 = vpack.c.bf16 %v2421, %v2420
      %v2452 = vpack.c.bf16 %v2423, %v2422
      %v2453 = vpack.c.bf16 %v2425, %v2424
      %v2454 = vpack.c.bf16 %v2427, %v2426
      %v2455 = vpack.c.bf16 %v2429, %v2428
      %v2456 = vpack.c.bf16 %v2431, %v2430
      %v2457 = vpack.c.bf16 %v2433, %v2432
      %v2458 = vpack.c.bf16 %v2435, %v2434
      %v2459 = vpack.c.bf16 %v2437, %v2436
      %v2460 = vpack.c.bf16 %v2439, %v2438
      %v2461 = vpack.c.bf16 %v2441, %v2440
      %v2462 = vpack.c.bf16 %v2443, %v2442
      %v2463 = vpack.c.bf16 %v2445, %v2444
      %v2464 = vpack.c.bf16 %v2447, %v2446
      %v2465 = vpack.c.bf16 %v2449, %v2448
      %s2466 = scalar_lea.vmem %s1, 12
      %v2467 = vld [vmem:[%s2466] sm:$0x3]
      %v2469 = vsel %vm226, %v2450, 0
      %v2472 = vsel %vm226, %v2451, 0
      %v2475 = vsel %vm226, %v2452, 0
      %v2478 = vsel %vm226, %v2453, 0
      %v2481 = vsel %vm226, %v2454, 0
      %v2484 = vsel %vm226, %v2455, 0
      %v2487 = vsel %vm226, %v2456, 0
      %v2490 = vsel %vm226, %v2457, 0
      %v2493 = vsel %vm226, %v2458, 0
      %v2496 = vsel %vm226, %v2459, 0
      %v2499 = vsel %vm226, %v2460, 0
      %v2502 = vsel %vm226, %v2461, 0
      %v2505 = vsel %vm226, %v2462, 0
      %v2508 = vsel %vm226, %v2463, 0
      %v2511 = vsel %vm226, %v2464, 0
      %v2514 = vsel %vm226, %v2465, 0
      %v2517 = vsel %vm430, %v2467, 0
      %2519 = vmatprep.subr.bf16.mxu0 0
      %2520 = vmatpush1.bf16.msra.mxu0 0
      %2521 = vmatprep.subr.bf16.mxu0 0
      %2522 = vmatpush1.bf16.msra.mxu0 0
      %2523 = vmatprep.subr.bf16.mxu0 0
      %2524 = vmatpush1.bf16.msra.mxu0 0
      %2525 = vmatprep.subr.bf16.mxu0 0
      %2526 = vmatpush1.bf16.msra.mxu0 0
      %2527 = vmatprep.subr.bf16.mxu0 0
      %2528 = vmatpush1.bf16.msra.mxu0 0
      %2529 = vmatprep.subr.bf16.mxu0 0
      %2530 = vmatpush1.bf16.msra.mxu0 0
      %2531 = vmatprep.subr.bf16.mxu0 0
      %2532 = vmatpush1.bf16.msra.mxu0 0
      %2533 = vmatprep.subr.bf16.mxu0 0
      %2534 = vmatpush1.bf16.msra.mxu0 %v2517
      %2535 = vmatprep.subr.bf16.mxu0 0
      %2536 = vmatpush2.bf16.msra.mxu0 0
      %2537 = vmatprep.subr.bf16.mxu0 0
      %2538 = vmatpush2.bf16.msra.mxu0 0
      %2539 = vmatprep.subr.bf16.mxu0 0
      %2540 = vmatpush2.bf16.msra.mxu0 0
      %2541 = vmatprep.subr.bf16.mxu0 0
      %2542 = vmatpush2.bf16.msra.mxu0 0
      %2543 = vmatprep.subr.bf16.mxu0 0
      %2544 = vmatpush2.bf16.msra.mxu0 0
      %2545 = vmatprep.subr.bf16.mxu0 0
      %2546 = vmatpush2.bf16.msra.mxu0 0
      %2547 = vmatprep.subr.bf16.mxu0 0
      %2548 = vmatpush2.bf16.msra.mxu0 0
      %2549 = vmatprep.subr.bf16.mxu0 0
      %2550 = vmatpush2.bf16.msra.mxu0 0
      %2551 = vmatprep.mubr.bf16.mxu0 0
      %2552 = vmatmul.mubr.bf16.gmra.mxu0 %v2469
      %v2553 = vpop.f32.mrf.mxu0
      %v2554 = vadd.f32 0.0, %v2553
      %v2555 = vpop.f32.mrf.mxu0
      %v2556 = vpop.f32.mrf.mxu0
      %v2557 = vadd.f32 0.0, %v2556
      %v2558 = vpop.f32.mrf.mxu0
      %2559 = vmatprep.mubr.bf16.mxu0 0
      %2560 = vmatmul.mubr.bf16.gmra.mxu0 %v2472
      %v2561 = vpop.f32.mrf.mxu0
      %v2562 = vadd.f32 0.0, %v2561
      %v2563 = vpop.f32.mrf.mxu0
      %v2564 = vpop.f32.mrf.mxu0
      %v2565 = vadd.f32 0.0, %v2564
      %v2566 = vpop.f32.mrf.mxu0
      %2567 = vmatprep.mubr.bf16.mxu0 0
      %2568 = vmatmul.mubr.bf16.gmra.mxu0 %v2475
      %v2569 = vpop.f32.mrf.mxu0
      %v2570 = vadd.f32 0.0, %v2569
      %v2571 = vpop.f32.mrf.mxu0
      %v2572 = vpop.f32.mrf.mxu0
      %v2573 = vadd.f32 0.0, %v2572
      %v2574 = vpop.f32.mrf.mxu0
      %2575 = vmatprep.mubr.bf16.mxu0 0
      %2576 = vmatmul.mubr.bf16.gmra.mxu0 %v2478
      %v2577 = vpop.f32.mrf.mxu0
      %v2578 = vadd.f32 0.0, %v2577
      %v2579 = vpop.f32.mrf.mxu0
      %v2580 = vpop.f32.mrf.mxu0
      %v2581 = vadd.f32 0.0, %v2580
      %v2582 = vpop.f32.mrf.mxu0
      %2583 = vmatprep.mubr.bf16.mxu0 0
      %2584 = vmatmul.mubr.bf16.gmra.mxu0 %v2481
      %v2585 = vpop.f32.mrf.mxu0
      %v2586 = vadd.f32 0.0, %v2585
      %v2587 = vpop.f32.mrf.mxu0
      %v2588 = vpop.f32.mrf.mxu0
      %v2589 = vadd.f32 0.0, %v2588
      %v2590 = vpop.f32.mrf.mxu0
      %2591 = vmatprep.mubr.bf16.mxu0 0
      %2592 = vmatmul.mubr.bf16.gmra.mxu0 %v2484
      %v2593 = vpop.f32.mrf.mxu0
      %v2594 = vadd.f32 0.0, %v2593
      %v2595 = vpop.f32.mrf.mxu0
      %v2596 = vpop.f32.mrf.mxu0
      %v2597 = vadd.f32 0.0, %v2596
      %v2598 = vpop.f32.mrf.mxu0
      %2599 = vmatprep.mubr.bf16.mxu0 0
      %2600 = vmatmul.mubr.bf16.gmra.mxu0 %v2487
      %v2601 = vpop.f32.mrf.mxu0
      %v2602 = vadd.f32 0.0, %v2601
      %v2603 = vpop.f32.mrf.mxu0
      %v2604 = vpop.f32.mrf.mxu0
      %v2605 = vadd.f32 0.0, %v2604
      %v2606 = vpop.f32.mrf.mxu0
      %2607 = vmatprep.mubr.bf16.mxu0 0
      %2608 = vmatmul.mubr.bf16.gmra.mxu0 %v2490
      %v2609 = vpop.f32.mrf.mxu0
      %v2610 = vadd.f32 0.0, %v2609
      %v2611 = vpop.f32.mrf.mxu0
      %v2612 = vpop.f32.mrf.mxu0
      %v2613 = vadd.f32 0.0, %v2612
      %v2614 = vpop.f32.mrf.mxu0
      %2615 = vmatprep.mubr.bf16.mxu0 0
      %2616 = vmatmul.mubr.bf16.gmra.mxu0 %v2493
      %v2617 = vpop.f32.mrf.mxu0
      %v2618 = vadd.f32 0.0, %v2617
      %v2619 = vpop.f32.mrf.mxu0
      %v2620 = vpop.f32.mrf.mxu0
      %v2621 = vadd.f32 0.0, %v2620
      %v2622 = vpop.f32.mrf.mxu0
      %2623 = vmatprep.mubr.bf16.mxu0 0
      %2624 = vmatmul.mubr.bf16.gmra.mxu0 %v2496
      %v2625 = vpop.f32.mrf.mxu0
      %v2626 = vadd.f32 0.0, %v2625
      %v2627 = vpop.f32.mrf.mxu0
      %v2628 = vpop.f32.mrf.mxu0
      %v2629 = vadd.f32 0.0, %v2628
      %v2630 = vpop.f32.mrf.mxu0
      %2631 = vmatprep.mubr.bf16.mxu0 0
      %2632 = vmatmul.mubr.bf16.gmra.mxu0 %v2499
      %v2633 = vpop.f32.mrf.mxu0
      %v2634 = vadd.f32 0.0, %v2633
      %v2635 = vpop.f32.mrf.mxu0
      %v2636 = vpop.f32.mrf.mxu0
      %v2637 = vadd.f32 0.0, %v2636
      %v2638 = vpop.f32.mrf.mxu0
      %2639 = vmatprep.mubr.bf16.mxu0 0
      %2640 = vmatmul.mubr.bf16.gmra.mxu0 %v2502
      %v2641 = vpop.f32.mrf.mxu0
      %v2642 = vadd.f32 0.0, %v2641
      %v2643 = vpop.f32.mrf.mxu0
      %v2644 = vpop.f32.mrf.mxu0
      %v2645 = vadd.f32 0.0, %v2644
      %v2646 = vpop.f32.mrf.mxu0
      %2647 = vmatprep.mubr.bf16.mxu0 0
      %2648 = vmatmul.mubr.bf16.gmra.mxu0 %v2505
      %v2649 = vpop.f32.mrf.mxu0
      %v2650 = vadd.f32 0.0, %v2649
      %v2651 = vpop.f32.mrf.mxu0
      %v2652 = vpop.f32.mrf.mxu0
      %v2653 = vadd.f32 0.0, %v2652
      %v2654 = vpop.f32.mrf.mxu0
      %2655 = vmatprep.mubr.bf16.mxu0 0
      %2656 = vmatmul.mubr.bf16.gmra.mxu0 %v2508
      %v2657 = vpop.f32.mrf.mxu0
      %v2658 = vadd.f32 0.0, %v2657
      %v2659 = vpop.f32.mrf.mxu0
      %v2660 = vpop.f32.mrf.mxu0
      %v2661 = vadd.f32 0.0, %v2660
      %v2662 = vpop.f32.mrf.mxu0
      %2663 = vmatprep.mubr.bf16.mxu0 0
      %2664 = vmatmul.mubr.bf16.gmra.mxu0 %v2511
      %v2665 = vpop.f32.mrf.mxu0
      %v2666 = vadd.f32 0.0, %v2665
      %v2667 = vpop.f32.mrf.mxu0
      %v2668 = vpop.f32.mrf.mxu0
      %v2669 = vadd.f32 0.0, %v2668
      %v2670 = vpop.f32.mrf.mxu0
      %2671 = vmatprep.mubr.bf16.mxu0 0
      %2672 = vmatmul.mubr.bf16.gmra.mxu0 %v2514
      %v2673 = vpop.f32.mrf.mxu0
      %v2674 = vadd.f32 0.0, %v2673
      %v2675 = vpop.f32.mrf.mxu0
      %v2676 = vpop.f32.mrf.mxu0
      %v2677 = vadd.f32 0.0, %v2676
      %v2678 = vpop.f32.mrf.mxu0
      %2679 = vdwg.mxu0
      %v2680 = vld [vmem:[#allocation4] sm:$0xff]
      %v2681 = vld [vmem:[#allocation4 + $0x8] sm:$0xff]
      %v2682 = vld [vmem:[#allocation4 + $0x10] sm:$0xff]
      %v2683 = vld [vmem:[#allocation4 + $0x18] sm:$0xff]
      %v2684 = vld [vmem:[#allocation4 + $0x20] sm:$0xff]
      %v2685 = vld [vmem:[#allocation4 + $0x28] sm:$0xff]
      %v2686 = vld [vmem:[#allocation4 + $0x30] sm:$0xff]
      %v2687 = vld [vmem:[#allocation4 + $0x38] sm:$0xff]
      %v2688 = vld [vmem:[#allocation4 + $0x40] sm:$0xff]
      %v2689 = vld [vmem:[#allocation4 + $0x48] sm:$0xff]
      %v2690 = vld [vmem:[#allocation4 + $0x50] sm:$0xff]
      %v2691 = vld [vmem:[#allocation4 + $0x58] sm:$0xff]
      %v2692 = vld [vmem:[#allocation4 + $0x60] sm:$0xff]
      %v2693 = vld [vmem:[#allocation4 + $0x68] sm:$0xff]
      %v2694 = vld [vmem:[#allocation4 + $0x70] sm:$0xff]
      %v2695 = vld [vmem:[#allocation4 + $0x78] sm:$0xff]
      %v2696 = vld [vmem:[#allocation4 + $0x80] sm:$0xff]
      %v2697 = vld [vmem:[#allocation4 + $0x88] sm:$0xff]
      %v2698 = vld [vmem:[#allocation4 + $0x90] sm:$0xff]
      %v2699 = vld [vmem:[#allocation4 + $0x98] sm:$0xff]
      %v2700 = vld [vmem:[#allocation4 + $0xa0] sm:$0xff]
      %v2701 = vld [vmem:[#allocation4 + $0xa8] sm:$0xff]
      %v2702 = vld [vmem:[#allocation4 + $0xb0] sm:$0xff]
      %v2703 = vld [vmem:[#allocation4 + $0xb8] sm:$0xff]
      %v2704 = vld [vmem:[#allocation4 + $0xc0] sm:$0xff]
      %v2705 = vld [vmem:[#allocation4 + $0xc8] sm:$0xff]
      %v2706 = vld [vmem:[#allocation4 + $0xd0] sm:$0xff]
      %v2707 = vld [vmem:[#allocation4 + $0xd8] sm:$0xff]
      %v2708 = vld [vmem:[#allocation4 + $0xe0] sm:$0xff]
      %v2709 = vld [vmem:[#allocation4 + $0xe8] sm:$0xff]
      %v2710 = vld [vmem:[#allocation4 + $0xf0] sm:$0xff]
      %v2711 = vld [vmem:[#allocation4 + $0xf8] sm:$0xff]
      %v2712 = vadd.f32 %v2680, %v2554
      %v2713 = vadd.f32 %v2681, %v2557
      %v2714 = vadd.f32 %v2682, %v2562
      %v2715 = vadd.f32 %v2683, %v2565
      %v2716 = vadd.f32 %v2684, %v2570
      %v2717 = vadd.f32 %v2685, %v2573
      %v2718 = vadd.f32 %v2686, %v2578
      %v2719 = vadd.f32 %v2687, %v2581
      %v2720 = vadd.f32 %v2688, %v2586
      %v2721 = vadd.f32 %v2689, %v2589
      %v2722 = vadd.f32 %v2690, %v2594
      %v2723 = vadd.f32 %v2691, %v2597
      %v2724 = vadd.f32 %v2692, %v2602
      %v2725 = vadd.f32 %v2693, %v2605
      %v2726 = vadd.f32 %v2694, %v2610
      %v2727 = vadd.f32 %v2695, %v2613
      %v2728 = vadd.f32 %v2696, %v2618
      %v2729 = vadd.f32 %v2697, %v2621
      %v2730 = vadd.f32 %v2698, %v2626
      %v2731 = vadd.f32 %v2699, %v2629
      %v2732 = vadd.f32 %v2700, %v2634
      %v2733 = vadd.f32 %v2701, %v2637
      %v2734 = vadd.f32 %v2702, %v2642
      %v2735 = vadd.f32 %v2703, %v2645
      %v2736 = vadd.f32 %v2704, %v2650
      %v2737 = vadd.f32 %v2705, %v2653
      %v2738 = vadd.f32 %v2706, %v2658
      %v2739 = vadd.f32 %v2707, %v2661
      %v2740 = vadd.f32 %v2708, %v2666
      %v2741 = vadd.f32 %v2709, %v2669
      %v2742 = vadd.f32 %v2710, %v2674
      %v2743 = vadd.f32 %v2711, %v2677
      %2744 = vst.msk [vmem:[#allocation4] sm:$0xff] %vm226, %v2712
      %2745 = vst.msk [vmem:[#allocation4 + $0x8] sm:$0xff] %vm226, %v2713
      %2746 = vst.msk [vmem:[#allocation4 + $0x10] sm:$0xff] %vm226, %v2714
      %2747 = vst.msk [vmem:[#allocation4 + $0x18] sm:$0xff] %vm226, %v2715
      %2748 = vst.msk [vmem:[#allocation4 + $0x20] sm:$0xff] %vm226, %v2716
      %2749 = vst.msk [vmem:[#allocation4 + $0x28] sm:$0xff] %vm226, %v2717
      %2750 = vst.msk [vmem:[#allocation4 + $0x30] sm:$0xff] %vm226, %v2718
      %2751 = vst.msk [vmem:[#allocation4 + $0x38] sm:$0xff] %vm226, %v2719
      %2752 = vst.msk [vmem:[#allocation4 + $0x40] sm:$0xff] %vm226, %v2720
      %2753 = vst.msk [vmem:[#allocation4 + $0x48] sm:$0xff] %vm226, %v2721
      %2754 = vst.msk [vmem:[#allocation4 + $0x50] sm:$0xff] %vm226, %v2722
      %2755 = vst.msk [vmem:[#allocation4 + $0x58] sm:$0xff] %vm226, %v2723
      %2756 = vst.msk [vmem:[#allocation4 + $0x60] sm:$0xff] %vm226, %v2724
      %2757 = vst.msk [vmem:[#allocation4 + $0x68] sm:$0xff] %vm226, %v2725
      %2758 = vst.msk [vmem:[#allocation4 + $0x70] sm:$0xff] %vm226, %v2726
      %2759 = vst.msk [vmem:[#allocation4 + $0x78] sm:$0xff] %vm226, %v2727
      %2760 = vst.msk [vmem:[#allocation4 + $0x80] sm:$0xff] %vm226, %v2728
      %2761 = vst.msk [vmem:[#allocation4 + $0x88] sm:$0xff] %vm226, %v2729
      %2762 = vst.msk [vmem:[#allocation4 + $0x90] sm:$0xff] %vm226, %v2730
      %2763 = vst.msk [vmem:[#allocation4 + $0x98] sm:$0xff] %vm226, %v2731
      %2764 = vst.msk [vmem:[#allocation4 + $0xa0] sm:$0xff] %vm226, %v2732
      %2765 = vst.msk [vmem:[#allocation4 + $0xa8] sm:$0xff] %vm226, %v2733
      %2766 = vst.msk [vmem:[#allocation4 + $0xb0] sm:$0xff] %vm226, %v2734
      %2767 = vst.msk [vmem:[#allocation4 + $0xb8] sm:$0xff] %vm226, %v2735
      %2768 = vst.msk [vmem:[#allocation4 + $0xc0] sm:$0xff] %vm226, %v2736
      %2769 = vst.msk [vmem:[#allocation4 + $0xc8] sm:$0xff] %vm226, %v2737
      %2770 = vst.msk [vmem:[#allocation4 + $0xd0] sm:$0xff] %vm226, %v2738
      %2771 = vst.msk [vmem:[#allocation4 + $0xd8] sm:$0xff] %vm226, %v2739
      %2772 = vst.msk [vmem:[#allocation4 + $0xe0] sm:$0xff] %vm226, %v2740
      %2773 = vst.msk [vmem:[#allocation4 + $0xe8] sm:$0xff] %vm226, %v2741
      %2774 = vst.msk [vmem:[#allocation4 + $0xf0] sm:$0xff] %vm226, %v2742
      %2775 = vst.msk [vmem:[#allocation4 + $0xf8] sm:$0xff] %vm226, %v2743
      %v2776 = vld [vmem:[%s2417 + $0x8] sm:$0xff]
      %v2777 = vld [vmem:[%s2417 + $0x10] sm:$0xff]
      %v2778 = vld [vmem:[%s2417 + $0x28] sm:$0xff]
      %v2779 = vld [vmem:[%s2417 + $0x30] sm:$0xff]
      %v2780 = vld [vmem:[%s2417 + $0x48] sm:$0xff]
      %v2781 = vld [vmem:[%s2417 + $0x50] sm:$0xff]
      %v2782 = vld [vmem:[%s2417 + $0x68] sm:$0xff]
      %v2783 = vld [vmem:[%s2417 + $0x70] sm:$0xff]
      %v2784 = vld [vmem:[%s2417 + $0x88] sm:$0xff]
      %v2785 = vld [vmem:[%s2417 + $0x90] sm:$0xff]
      %v2786 = vld [vmem:[%s2417 + $0xa8] sm:$0xff]
      %v2787 = vld [vmem:[%s2417 + $0xb0] sm:$0xff]
      %v2788 = vld [vmem:[%s2417 + $0xc8] sm:$0xff]
      %v2789 = vld [vmem:[%s2417 + $0xd0] sm:$0xff]
      %v2790 = vld [vmem:[%s2417 + $0xe8] sm:$0xff]
      %v2791 = vld [vmem:[%s2417 + $0xf0] sm:$0xff]
      %v2792 = vld [vmem:[%s2417 + $0x108] sm:$0xff]
      %v2793 = vld [vmem:[%s2417 + $0x110] sm:$0xff]
      %v2794 = vld [vmem:[%s2417 + $0x128] sm:$0xff]
      %v2795 = vld [vmem:[%s2417 + $0x130] sm:$0xff]
      %v2796 = vld [vmem:[%s2417 + $0x148] sm:$0xff]
      %v2797 = vld [vmem:[%s2417 + $0x150] sm:$0xff]
      %v2798 = vld [vmem:[%s2417 + $0x168] sm:$0xff]
      %v2799 = vld [vmem:[%s2417 + $0x170] sm:$0xff]
      %v2800 = vld [vmem:[%s2417 + $0x188] sm:$0xff]
      %v2801 = vld [vmem:[%s2417 + $0x190] sm:$0xff]
      %v2802 = vld [vmem:[%s2417 + $0x1a8] sm:$0xff]
      %v2803 = vld [vmem:[%s2417 + $0x1b0] sm:$0xff]
      %v2804 = vld [vmem:[%s2417 + $0x1c8] sm:$0xff]
      %v2805 = vld [vmem:[%s2417 + $0x1d0] sm:$0xff]
      %v2806 = vld [vmem:[%s2417 + $0x1e8] sm:$0xff]
      %v2807 = vld [vmem:[%s2417 + $0x1f0] sm:$0xff]
      %v2808 = vpack.c.bf16 %v2777, %v2776
      %v2809 = vpack.c.bf16 %v2779, %v2778
      %v2810 = vpack.c.bf16 %v2781, %v2780
      %v2811 = vpack.c.bf16 %v2783, %v2782
      %v2812 = vpack.c.bf16 %v2785, %v2784
      %v2813 = vpack.c.bf16 %v2787, %v2786
      %v2814 = vpack.c.bf16 %v2789, %v2788
      %v2815 = vpack.c.bf16 %v2791, %v2790
      %v2816 = vpack.c.bf16 %v2793, %v2792
      %v2817 = vpack.c.bf16 %v2795, %v2794
      %v2818 = vpack.c.bf16 %v2797, %v2796
      %v2819 = vpack.c.bf16 %v2799, %v2798
      %v2820 = vpack.c.bf16 %v2801, %v2800
      %v2821 = vpack.c.bf16 %v2803, %v2802
      %v2822 = vpack.c.bf16 %v2805, %v2804
      %v2823 = vpack.c.bf16 %v2807, %v2806
      %s2824 = scalar_lea.vmem %s1, 14
      %v2825 = vld [vmem:[%s2824] sm:$0x3]
      %v2827 = vsel %vm226, %v2808, 0
      %v2830 = vsel %vm226, %v2809, 0
      %v2833 = vsel %vm226, %v2810, 0
      %v2836 = vsel %vm226, %v2811, 0
      %v2839 = vsel %vm226, %v2812, 0
      %v2842 = vsel %vm226, %v2813, 0
      %v2845 = vsel %vm226, %v2814, 0
      %v2848 = vsel %vm226, %v2815, 0
      %v2851 = vsel %vm226, %v2816, 0
      %v2854 = vsel %vm226, %v2817, 0
      %v2857 = vsel %vm226, %v2818, 0
      %v2860 = vsel %vm226, %v2819, 0
      %v2863 = vsel %vm226, %v2820, 0
      %v2866 = vsel %vm226, %v2821, 0
      %v2869 = vsel %vm226, %v2822, 0
      %v2872 = vsel %vm226, %v2823, 0
      %v2875 = vsel %vm430, %v2825, 0
      %2877 = vmatprep.subr.bf16.mxu0 0
      %2878 = vmatpush1.bf16.msra.mxu0 0
      %2879 = vmatprep.subr.bf16.mxu0 0
      %2880 = vmatpush1.bf16.msra.mxu0 0
      %2881 = vmatprep.subr.bf16.mxu0 0
      %2882 = vmatpush1.bf16.msra.mxu0 0
      %2883 = vmatprep.subr.bf16.mxu0 0
      %2884 = vmatpush1.bf16.msra.mxu0 0
      %2885 = vmatprep.subr.bf16.mxu0 0
      %2886 = vmatpush1.bf16.msra.mxu0 0
      %2887 = vmatprep.subr.bf16.mxu0 0
      %2888 = vmatpush1.bf16.msra.mxu0 0
      %2889 = vmatprep.subr.bf16.mxu0 0
      %2890 = vmatpush1.bf16.msra.mxu0 0
      %2891 = vmatprep.subr.bf16.mxu0 0
      %2892 = vmatpush1.bf16.msra.mxu0 %v2875
      %2893 = vmatprep.subr.bf16.mxu0 0
      %2894 = vmatpush2.bf16.msra.mxu0 0
      %2895 = vmatprep.subr.bf16.mxu0 0
      %2896 = vmatpush2.bf16.msra.mxu0 0
      %2897 = vmatprep.subr.bf16.mxu0 0
      %2898 = vmatpush2.bf16.msra.mxu0 0
      %2899 = vmatprep.subr.bf16.mxu0 0
      %2900 = vmatpush2.bf16.msra.mxu0 0
      %2901 = vmatprep.subr.bf16.mxu0 0
      %2902 = vmatpush2.bf16.msra.mxu0 0
      %2903 = vmatprep.subr.bf16.mxu0 0
      %2904 = vmatpush2.bf16.msra.mxu0 0
      %2905 = vmatprep.subr.bf16.mxu0 0
      %2906 = vmatpush2.bf16.msra.mxu0 0
      %2907 = vmatprep.subr.bf16.mxu0 0
      %2908 = vmatpush2.bf16.msra.mxu0 0
      %2909 = vmatprep.mubr.bf16.mxu0 0
      %2910 = vmatmul.mubr.bf16.gmra.mxu0 %v2827
      %v2911 = vpop.f32.mrf.mxu0
      %v2912 = vadd.f32 0.0, %v2911
      %v2913 = vpop.f32.mrf.mxu0
      %v2914 = vpop.f32.mrf.mxu0
      %v2915 = vadd.f32 0.0, %v2914
      %v2916 = vpop.f32.mrf.mxu0
      %2917 = vmatprep.mubr.bf16.mxu0 0
      %2918 = vmatmul.mubr.bf16.gmra.mxu0 %v2830
      %v2919 = vpop.f32.mrf.mxu0
      %v2920 = vadd.f32 0.0, %v2919
      %v2921 = vpop.f32.mrf.mxu0
      %v2922 = vpop.f32.mrf.mxu0
      %v2923 = vadd.f32 0.0, %v2922
      %v2924 = vpop.f32.mrf.mxu0
      %2925 = vmatprep.mubr.bf16.mxu0 0
      %2926 = vmatmul.mubr.bf16.gmra.mxu0 %v2833
      %v2927 = vpop.f32.mrf.mxu0
      %v2928 = vadd.f32 0.0, %v2927
      %v2929 = vpop.f32.mrf.mxu0
      %v2930 = vpop.f32.mrf.mxu0
      %v2931 = vadd.f32 0.0, %v2930
      %v2932 = vpop.f32.mrf.mxu0
      %2933 = vmatprep.mubr.bf16.mxu0 0
      %2934 = vmatmul.mubr.bf16.gmra.mxu0 %v2836
      %v2935 = vpop.f32.mrf.mxu0
      %v2936 = vadd.f32 0.0, %v2935
      %v2937 = vpop.f32.mrf.mxu0
      %v2938 = vpop.f32.mrf.mxu0
      %v2939 = vadd.f32 0.0, %v2938
      %v2940 = vpop.f32.mrf.mxu0
      %2941 = vmatprep.mubr.bf16.mxu0 0
      %2942 = vmatmul.mubr.bf16.gmra.mxu0 %v2839
      %v2943 = vpop.f32.mrf.mxu0
      %v2944 = vadd.f32 0.0, %v2943
      %v2945 = vpop.f32.mrf.mxu0
      %v2946 = vpop.f32.mrf.mxu0
      %v2947 = vadd.f32 0.0, %v2946
      %v2948 = vpop.f32.mrf.mxu0
      %2949 = vmatprep.mubr.bf16.mxu0 0
      %2950 = vmatmul.mubr.bf16.gmra.mxu0 %v2842
      %v2951 = vpop.f32.mrf.mxu0
      %v2952 = vadd.f32 0.0, %v2951
      %v2953 = vpop.f32.mrf.mxu0
      %v2954 = vpop.f32.mrf.mxu0
      %v2955 = vadd.f32 0.0, %v2954
      %v2956 = vpop.f32.mrf.mxu0
      %2957 = vmatprep.mubr.bf16.mxu0 0
      %2958 = vmatmul.mubr.bf16.gmra.mxu0 %v2845
      %v2959 = vpop.f32.mrf.mxu0
      %v2960 = vadd.f32 0.0, %v2959
      %v2961 = vpop.f32.mrf.mxu0
      %v2962 = vpop.f32.mrf.mxu0
      %v2963 = vadd.f32 0.0, %v2962
      %v2964 = vpop.f32.mrf.mxu0
      %2965 = vmatprep.mubr.bf16.mxu0 0
      %2966 = vmatmul.mubr.bf16.gmra.mxu0 %v2848
      %v2967 = vpop.f32.mrf.mxu0
      %v2968 = vadd.f32 0.0, %v2967
      %v2969 = vpop.f32.mrf.mxu0
      %v2970 = vpop.f32.mrf.mxu0
      %v2971 = vadd.f32 0.0, %v2970
      %v2972 = vpop.f32.mrf.mxu0
      %2973 = vmatprep.mubr.bf16.mxu0 0
      %2974 = vmatmul.mubr.bf16.gmra.mxu0 %v2851
      %v2975 = vpop.f32.mrf.mxu0
      %v2976 = vadd.f32 0.0, %v2975
      %v2977 = vpop.f32.mrf.mxu0
      %v2978 = vpop.f32.mrf.mxu0
      %v2979 = vadd.f32 0.0, %v2978
      %v2980 = vpop.f32.mrf.mxu0
      %2981 = vmatprep.mubr.bf16.mxu0 0
      %2982 = vmatmul.mubr.bf16.gmra.mxu0 %v2854
      %v2983 = vpop.f32.mrf.mxu0
      %v2984 = vadd.f32 0.0, %v2983
      %v2985 = vpop.f32.mrf.mxu0
      %v2986 = vpop.f32.mrf.mxu0
      %v2987 = vadd.f32 0.0, %v2986
      %v2988 = vpop.f32.mrf.mxu0
      %2989 = vmatprep.mubr.bf16.mxu0 0
      %2990 = vmatmul.mubr.bf16.gmra.mxu0 %v2857
      %v2991 = vpop.f32.mrf.mxu0
      %v2992 = vadd.f32 0.0, %v2991
      %v2993 = vpop.f32.mrf.mxu0
      %v2994 = vpop.f32.mrf.mxu0
      %v2995 = vadd.f32 0.0, %v2994
      %v2996 = vpop.f32.mrf.mxu0
      %2997 = vmatprep.mubr.bf16.mxu0 0
      %2998 = vmatmul.mubr.bf16.gmra.mxu0 %v2860
      %v2999 = vpop.f32.mrf.mxu0
      %v3000 = vadd.f32 0.0, %v2999
      %v3001 = vpop.f32.mrf.mxu0
      %v3002 = vpop.f32.mrf.mxu0
      %v3003 = vadd.f32 0.0, %v3002
      %v3004 = vpop.f32.mrf.mxu0
      %3005 = vmatprep.mubr.bf16.mxu0 0
      %3006 = vmatmul.mubr.bf16.gmra.mxu0 %v2863
      %v3007 = vpop.f32.mrf.mxu0
      %v3008 = vadd.f32 0.0, %v3007
      %v3009 = vpop.f32.mrf.mxu0
      %v3010 = vpop.f32.mrf.mxu0
      %v3011 = vadd.f32 0.0, %v3010
      %v3012 = vpop.f32.mrf.mxu0
      %3013 = vmatprep.mubr.bf16.mxu0 0
      %3014 = vmatmul.mubr.bf16.gmra.mxu0 %v2866
      %v3015 = vpop.f32.mrf.mxu0
      %v3016 = vadd.f32 0.0, %v3015
      %v3017 = vpop.f32.mrf.mxu0
      %v3018 = vpop.f32.mrf.mxu0
      %v3019 = vadd.f32 0.0, %v3018
      %v3020 = vpop.f32.mrf.mxu0
      %3021 = vmatprep.mubr.bf16.mxu0 0
      %3022 = vmatmul.mubr.bf16.gmra.mxu0 %v2869
      %v3023 = vpop.f32.mrf.mxu0
      %v3024 = vadd.f32 0.0, %v3023
      %v3025 = vpop.f32.mrf.mxu0
      %v3026 = vpop.f32.mrf.mxu0
      %v3027 = vadd.f32 0.0, %v3026
      %v3028 = vpop.f32.mrf.mxu0
      %3029 = vmatprep.mubr.bf16.mxu0 0
      %3030 = vmatmul.mubr.bf16.gmra.mxu0 %v2872
      %v3031 = vpop.f32.mrf.mxu0
      %v3032 = vadd.f32 0.0, %v3031
      %v3033 = vpop.f32.mrf.mxu0
      %v3034 = vpop.f32.mrf.mxu0
      %v3035 = vadd.f32 0.0, %v3034
      %v3036 = vpop.f32.mrf.mxu0
      %3037 = vdwg.mxu0
      %v3038 = vld [vmem:[#allocation4] sm:$0xff]
      %v3039 = vld [vmem:[#allocation4 + $0x8] sm:$0xff]
      %v3040 = vld [vmem:[#allocation4 + $0x10] sm:$0xff]
      %v3041 = vld [vmem:[#allocation4 + $0x18] sm:$0xff]
      %v3042 = vld [vmem:[#allocation4 + $0x20] sm:$0xff]
      %v3043 = vld [vmem:[#allocation4 + $0x28] sm:$0xff]
      %v3044 = vld [vmem:[#allocation4 + $0x30] sm:$0xff]
      %v3045 = vld [vmem:[#allocation4 + $0x38] sm:$0xff]
      %v3046 = vld [vmem:[#allocation4 + $0x40] sm:$0xff]
      %v3047 = vld [vmem:[#allocation4 + $0x48] sm:$0xff]
      %v3048 = vld [vmem:[#allocation4 + $0x50] sm:$0xff]
      %v3049 = vld [vmem:[#allocation4 + $0x58] sm:$0xff]
      %v3050 = vld [vmem:[#allocation4 + $0x60] sm:$0xff]
      %v3051 = vld [vmem:[#allocation4 + $0x68] sm:$0xff]
      %v3052 = vld [vmem:[#allocation4 + $0x70] sm:$0xff]
      %v3053 = vld [vmem:[#allocation4 + $0x78] sm:$0xff]
      %v3054 = vld [vmem:[#allocation4 + $0x80] sm:$0xff]
      %v3055 = vld [vmem:[#allocation4 + $0x88] sm:$0xff]
      %v3056 = vld [vmem:[#allocation4 + $0x90] sm:$0xff]
      %v3057 = vld [vmem:[#allocation4 + $0x98] sm:$0xff]
      %v3058 = vld [vmem:[#allocation4 + $0xa0] sm:$0xff]
      %v3059 = vld [vmem:[#allocation4 + $0xa8] sm:$0xff]
      %v3060 = vld [vmem:[#allocation4 + $0xb0] sm:$0xff]
      %v3061 = vld [vmem:[#allocation4 + $0xb8] sm:$0xff]
      %v3062 = vld [vmem:[#allocation4 + $0xc0] sm:$0xff]
      %v3063 = vld [vmem:[#allocation4 + $0xc8] sm:$0xff]
      %v3064 = vld [vmem:[#allocation4 + $0xd0] sm:$0xff]
      %v3065 = vld [vmem:[#allocation4 + $0xd8] sm:$0xff]
      %v3066 = vld [vmem:[#allocation4 + $0xe0] sm:$0xff]
      %v3067 = vld [vmem:[#allocation4 + $0xe8] sm:$0xff]
      %v3068 = vld [vmem:[#allocation4 + $0xf0] sm:$0xff]
      %v3069 = vld [vmem:[#allocation4 + $0xf8] sm:$0xff]
      %v3070 = vadd.f32 %v3038, %v2912
      %v3071 = vadd.f32 %v3039, %v2915
      %v3072 = vadd.f32 %v3040, %v2920
      %v3073 = vadd.f32 %v3041, %v2923
      %v3074 = vadd.f32 %v3042, %v2928
      %v3075 = vadd.f32 %v3043, %v2931
      %v3076 = vadd.f32 %v3044, %v2936
      %v3077 = vadd.f32 %v3045, %v2939
      %v3078 = vadd.f32 %v3046, %v2944
      %v3079 = vadd.f32 %v3047, %v2947
      %v3080 = vadd.f32 %v3048, %v2952
      %v3081 = vadd.f32 %v3049, %v2955
      %v3082 = vadd.f32 %v3050, %v2960
      %v3083 = vadd.f32 %v3051, %v2963
      %v3084 = vadd.f32 %v3052, %v2968
      %v3085 = vadd.f32 %v3053, %v2971
      %v3086 = vadd.f32 %v3054, %v2976
      %v3087 = vadd.f32 %v3055, %v2979
      %v3088 = vadd.f32 %v3056, %v2984
      %v3089 = vadd.f32 %v3057, %v2987
      %v3090 = vadd.f32 %v3058, %v2992
      %v3091 = vadd.f32 %v3059, %v2995
      %v3092 = vadd.f32 %v3060, %v3000
      %v3093 = vadd.f32 %v3061, %v3003
      %v3094 = vadd.f32 %v3062, %v3008
      %v3095 = vadd.f32 %v3063, %v3011
      %v3096 = vadd.f32 %v3064, %v3016
      %v3097 = vadd.f32 %v3065, %v3019
      %v3098 = vadd.f32 %v3066, %v3024
      %v3099 = vadd.f32 %v3067, %v3027
      %v3100 = vadd.f32 %v3068, %v3032
      %v3101 = vadd.f32 %v3069, %v3035
      %3102 = vst.msk [vmem:[#allocation4] sm:$0xff] %vm226, %v3070
      %3103 = vst.msk [vmem:[#allocation4 + $0x8] sm:$0xff] %vm226, %v3071
      %3104 = vst.msk [vmem:[#allocation4 + $0x10] sm:$0xff] %vm226, %v3072
      %3105 = vst.msk [vmem:[#allocation4 + $0x18] sm:$0xff] %vm226, %v3073
      %3106 = vst.msk [vmem:[#allocation4 + $0x20] sm:$0xff] %vm226, %v3074
      %3107 = vst.msk [vmem:[#allocation4 + $0x28] sm:$0xff] %vm226, %v3075
      %3108 = vst.msk [vmem:[#allocation4 + $0x30] sm:$0xff] %vm226, %v3076
      %3109 = vst.msk [vmem:[#allocation4 + $0x38] sm:$0xff] %vm226, %v3077
      %3110 = vst.msk [vmem:[#allocation4 + $0x40] sm:$0xff] %vm226, %v3078
      %3111 = vst.msk [vmem:[#allocation4 + $0x48] sm:$0xff] %vm226, %v3079
      %3112 = vst.msk [vmem:[#allocation4 + $0x50] sm:$0xff] %vm226, %v3080
      %3113 = vst.msk [vmem:[#allocation4 + $0x58] sm:$0xff] %vm226, %v3081
      %3114 = vst.msk [vmem:[#allocation4 + $0x60] sm:$0xff] %vm226, %v3082
      %3115 = vst.msk [vmem:[#allocation4 + $0x68] sm:$0xff] %vm226, %v3083
      %3116 = vst.msk [vmem:[#allocation4 + $0x70] sm:$0xff] %vm226, %v3084
      %3117 = vst.msk [vmem:[#allocation4 + $0x78] sm:$0xff] %vm226, %v3085
      %3118 = vst.msk [vmem:[#allocation4 + $0x80] sm:$0xff] %vm226, %v3086
      %3119 = vst.msk [vmem:[#allocation4 + $0x88] sm:$0xff] %vm226, %v3087
      %3120 = vst.msk [vmem:[#allocation4 + $0x90] sm:$0xff] %vm226, %v3088
      %3121 = vst.msk [vmem:[#allocation4 + $0x98] sm:$0xff] %vm226, %v3089
      %3122 = vst.msk [vmem:[#allocation4 + $0xa0] sm:$0xff] %vm226, %v3090
      %3123 = vst.msk [vmem:[#allocation4 + $0xa8] sm:$0xff] %vm226, %v3091
      %3124 = vst.msk [vmem:[#allocation4 + $0xb0] sm:$0xff] %vm226, %v3092
      %3125 = vst.msk [vmem:[#allocation4 + $0xb8] sm:$0xff] %vm226, %v3093
      %3126 = vst.msk [vmem:[#allocation4 + $0xc0] sm:$0xff] %vm226, %v3094
      %3127 = vst.msk [vmem:[#allocation4 + $0xc8] sm:$0xff] %vm226, %v3095
      %3128 = vst.msk [vmem:[#allocation4 + $0xd0] sm:$0xff] %vm226, %v3096
      %3129 = vst.msk [vmem:[#allocation4 + $0xd8] sm:$0xff] %vm226, %v3097
      %3130 = vst.msk [vmem:[#allocation4 + $0xe0] sm:$0xff] %vm226, %v3098
      %3131 = vst.msk [vmem:[#allocation4 + $0xe8] sm:$0xff] %vm226, %v3099
      %3132 = vst.msk [vmem:[#allocation4 + $0xf0] sm:$0xff] %vm226, %v3100
      %3133 = vst.msk [vmem:[#allocation4 + $0xf8] sm:$0xff] %vm226, %v3101
      %v3134 = vld [vmem:[%s2417 + $0x9] sm:$0xff]
      %v3135 = vld [vmem:[%s2417 + $0x11] sm:$0xff]
      %v3136 = vld [vmem:[%s2417 + $0x29] sm:$0xff]
      %v3137 = vld [vmem:[%s2417 + $0x31] sm:$0xff]
      %v3138 = vld [vmem:[%s2417 + $0x49] sm:$0xff]
      %v3139 = vld [vmem:[%s2417 + $0x51] sm:$0xff]
      %v3140 = vld [vmem:[%s2417 + $0x69] sm:$0xff]
      %v3141 = vld [vmem:[%s2417 + $0x71] sm:$0xff]
      %v3142 = vld [vmem:[%s2417 + $0x89] sm:$0xff]
      %v3143 = vld [vmem:[%s2417 + $0x91] sm:$0xff]
      %v3144 = vld [vmem:[%s2417 + $0xa9] sm:$0xff]
      %v3145 = vld [vmem:[%s2417 + $0xb1] sm:$0xff]
      %v3146 = vld [vmem:[%s2417 + $0xc9] sm:$0xff]
      %v3147 = vld [vmem:[%s2417 + $0xd1] sm:$0xff]
      %v3148 = vld [vmem:[%s2417 + $0xe9] sm:$0xff]
      %v3149 = vld [vmem:[%s2417 + $0xf1] sm:$0xff]
      %v3150 = vld [vmem:[%s2417 + $0x109] sm:$0xff]
      %v3151 = vld [vmem:[%s2417 + $0x111] sm:$0xff]
      %v3152 = vld [vmem:[%s2417 + $0x129] sm:$0xff]
      %v3153 = vld [vmem:[%s2417 + $0x131] sm:$0xff]
      %v3154 = vld [vmem:[%s2417 + $0x149] sm:$0xff]
      %v3155 = vld [vmem:[%s2417 + $0x151] sm:$0xff]
      %v3156 = vld [vmem:[%s2417 + $0x169] sm:$0xff]
      %v3157 = vld [vmem:[%s2417 + $0x171] sm:$0xff]
      %v3158 = vld [vmem:[%s2417 + $0x189] sm:$0xff]
      %v3159 = vld [vmem:[%s2417 + $0x191] sm:$0xff]
      %v3160 = vld [vmem:[%s2417 + $0x1a9] sm:$0xff]
      %v3161 = vld [vmem:[%s2417 + $0x1b1] sm:$0xff]
      %v3162 = vld [vmem:[%s2417 + $0x1c9] sm:$0xff]
      %v3163 = vld [vmem:[%s2417 + $0x1d1] sm:$0xff]
      %v3164 = vld [vmem:[%s2417 + $0x1e9] sm:$0xff]
      %v3165 = vld [vmem:[%s2417 + $0x1f1] sm:$0xff]
      %v3166 = vpack.c.bf16 %v3135, %v3134
      %v3167 = vpack.c.bf16 %v3137, %v3136
      %v3168 = vpack.c.bf16 %v3139, %v3138
      %v3169 = vpack.c.bf16 %v3141, %v3140
      %v3170 = vpack.c.bf16 %v3143, %v3142
      %v3171 = vpack.c.bf16 %v3145, %v3144
      %v3172 = vpack.c.bf16 %v3147, %v3146
      %v3173 = vpack.c.bf16 %v3149, %v3148
      %v3174 = vpack.c.bf16 %v3151, %v3150
      %v3175 = vpack.c.bf16 %v3153, %v3152
      %v3176 = vpack.c.bf16 %v3155, %v3154
      %v3177 = vpack.c.bf16 %v3157, %v3156
      %v3178 = vpack.c.bf16 %v3159, %v3158
      %v3179 = vpack.c.bf16 %v3161, %v3160
      %v3180 = vpack.c.bf16 %v3163, %v3162
      %v3181 = vpack.c.bf16 %v3165, %v3164
      %s3182 = scalar_lea.vmem %s1, 16
      %v3183 = vld [vmem:[%s3182] sm:$0x3]
      %v3185 = vsel %vm226, %v3166, 0
      %v3188 = vsel %vm226, %v3167, 0
      %v3191 = vsel %vm226, %v3168, 0
      %v3194 = vsel %vm226, %v3169, 0
      %v3197 = vsel %vm226, %v3170, 0
      %v3200 = vsel %vm226, %v3171, 0
      %v3203 = vsel %vm226, %v3172, 0
      %v3206 = vsel %vm226, %v3173, 0
      %v3209 = vsel %vm226, %v3174, 0
      %v3212 = vsel %vm226, %v3175, 0
      %v3215 = vsel %vm226, %v3176, 0
      %v3218 = vsel %vm226, %v3177, 0
      %v3221 = vsel %vm226, %v3178, 0
      %v3224 = vsel %vm226, %v3179, 0
      %v3227 = vsel %vm226, %v3180, 0
      %v3230 = vsel %vm226, %v3181, 0
      %v3233 = vsel %vm430, %v3183, 0
      %3235 = vmatprep.subr.bf16.mxu0 0
      %3236 = vmatpush1.bf16.msra.mxu0 0
      %3237 = vmatprep.subr.bf16.mxu0 0
      %3238 = vmatpush1.bf16.msra.mxu0 0
      %3239 = vmatprep.subr.bf16.mxu0 0
      %3240 = vmatpush1.bf16.msra.mxu0 0
      %3241 = vmatprep.subr.bf16.mxu0 0
      %3242 = vmatpush1.bf16.msra.mxu0 0
      %3243 = vmatprep.subr.bf16.mxu0 0
      %3244 = vmatpush1.bf16.msra.mxu0 0
      %3245 = vmatprep.subr.bf16.mxu0 0
      %3246 = vmatpush1.bf16.msra.mxu0 0
      %3247 = vmatprep.subr.bf16.mxu0 0
      %3248 = vmatpush1.bf16.msra.mxu0 0
      %3249 = vmatprep.subr.bf16.mxu0 0
      %3250 = vmatpush1.bf16.msra.mxu0 %v3233
      %3251 = vmatprep.subr.bf16.mxu0 0
      %3252 = vmatpush2.bf16.msra.mxu0 0
      %3253 = vmatprep.subr.bf16.mxu0 0
      %3254 = vmatpush2.bf16.msra.mxu0 0
      %3255 = vmatprep.subr.bf16.mxu0 0
      %3256 = vmatpush2.bf16.msra.mxu0 0
      %3257 = vmatprep.subr.bf16.mxu0 0
      %3258 = vmatpush2.bf16.msra.mxu0 0
      %3259 = vmatprep.subr.bf16.mxu0 0
      %3260 = vmatpush2.bf16.msra.mxu0 0
      %3261 = vmatprep.subr.bf16.mxu0 0
      %3262 = vmatpush2.bf16.msra.mxu0 0
      %3263 = vmatprep.subr.bf16.mxu0 0
      %3264 = vmatpush2.bf16.msra.mxu0 0
      %3265 = vmatprep.subr.bf16.mxu0 0
      %3266 = vmatpush2.bf16.msra.mxu0 0
      %3267 = vmatprep.mubr.bf16.mxu0 0
      %3268 = vmatmul.mubr.bf16.gmra.mxu0 %v3185
      %v3269 = vpop.f32.mrf.mxu0
      %v3270 = vadd.f32 0.0, %v3269
      %v3271 = vpop.f32.mrf.mxu0
      %v3272 = vpop.f32.mrf.mxu0
      %v3273 = vadd.f32 0.0, %v3272
      %v3274 = vpop.f32.mrf.mxu0
      %3275 = vmatprep.mubr.bf16.mxu0 0
      %3276 = vmatmul.mubr.bf16.gmra.mxu0 %v3188
      %v3277 = vpop.f32.mrf.mxu0
      %v3278 = vadd.f32 0.0, %v3277
      %v3279 = vpop.f32.mrf.mxu0
      %v3280 = vpop.f32.mrf.mxu0
      %v3281 = vadd.f32 0.0, %v3280
      %v3282 = vpop.f32.mrf.mxu0
      %3283 = vmatprep.mubr.bf16.mxu0 0
      %3284 = vmatmul.mubr.bf16.gmra.mxu0 %v3191
      %v3285 = vpop.f32.mrf.mxu0
      %v3286 = vadd.f32 0.0, %v3285
      %v3287 = vpop.f32.mrf.mxu0
      %v3288 = vpop.f32.mrf.mxu0
      %v3289 = vadd.f32 0.0, %v3288
      %v3290 = vpop.f32.mrf.mxu0
      %3291 = vmatprep.mubr.bf16.mxu0 0
      %3292 = vmatmul.mubr.bf16.gmra.mxu0 %v3194
      %v3293 = vpop.f32.mrf.mxu0
      %v3294 = vadd.f32 0.0, %v3293
      %v3295 = vpop.f32.mrf.mxu0
      %v3296 = vpop.f32.mrf.mxu0
      %v3297 = vadd.f32 0.0, %v3296
      %v3298 = vpop.f32.mrf.mxu0
      %3299 = vmatprep.mubr.bf16.mxu0 0
      %3300 = vmatmul.mubr.bf16.gmra.mxu0 %v3197
      %v3301 = vpop.f32.mrf.mxu0
      %v3302 = vadd.f32 0.0, %v3301
      %v3303 = vpop.f32.mrf.mxu0
      %v3304 = vpop.f32.mrf.mxu0
      %v3305 = vadd.f32 0.0, %v3304
      %v3306 = vpop.f32.mrf.mxu0
      %3307 = vmatprep.mubr.bf16.mxu0 0
      %3308 = vmatmul.mubr.bf16.gmra.mxu0 %v3200
      %v3309 = vpop.f32.mrf.mxu0
      %v3310 = vadd.f32 0.0, %v3309
      %v3311 = vpop.f32.mrf.mxu0
      %v3312 = vpop.f32.mrf.mxu0
      %v3313 = vadd.f32 0.0, %v3312
      %v3314 = vpop.f32.mrf.mxu0
      %3315 = vmatprep.mubr.bf16.mxu0 0
      %3316 = vmatmul.mubr.bf16.gmra.mxu0 %v3203
      %v3317 = vpop.f32.mrf.mxu0
      %v3318 = vadd.f32 0.0, %v3317
      %v3319 = vpop.f32.mrf.mxu0
      %v3320 = vpop.f32.mrf.mxu0
      %v3321 = vadd.f32 0.0, %v3320
      %v3322 = vpop.f32.mrf.mxu0
      %3323 = vmatprep.mubr.bf16.mxu0 0
      %3324 = vmatmul.mubr.bf16.gmra.mxu0 %v3206
      %v3325 = vpop.f32.mrf.mxu0
      %v3326 = vadd.f32 0.0, %v3325
      %v3327 = vpop.f32.mrf.mxu0
      %v3328 = vpop.f32.mrf.mxu0
      %v3329 = vadd.f32 0.0, %v3328
      %v3330 = vpop.f32.mrf.mxu0
      %3331 = vmatprep.mubr.bf16.mxu0 0
      %3332 = vmatmul.mubr.bf16.gmra.mxu0 %v3209
      %v3333 = vpop.f32.mrf.mxu0
      %v3334 = vadd.f32 0.0, %v3333
      %v3335 = vpop.f32.mrf.mxu0
      %v3336 = vpop.f32.mrf.mxu0
      %v3337 = vadd.f32 0.0, %v3336
      %v3338 = vpop.f32.mrf.mxu0
      %3339 = vmatprep.mubr.bf16.mxu0 0
      %3340 = vmatmul.mubr.bf16.gmra.mxu0 %v3212
      %v3341 = vpop.f32.mrf.mxu0
      %v3342 = vadd.f32 0.0, %v3341
      %v3343 = vpop.f32.mrf.mxu0
      %v3344 = vpop.f32.mrf.mxu0
      %v3345 = vadd.f32 0.0, %v3344
      %v3346 = vpop.f32.mrf.mxu0
      %3347 = vmatprep.mubr.bf16.mxu0 0
      %3348 = vmatmul.mubr.bf16.gmra.mxu0 %v3215
      %v3349 = vpop.f32.mrf.mxu0
      %v3350 = vadd.f32 0.0, %v3349
      %v3351 = vpop.f32.mrf.mxu0
      %v3352 = vpop.f32.mrf.mxu0
      %v3353 = vadd.f32 0.0, %v3352
      %v3354 = vpop.f32.mrf.mxu0
      %3355 = vmatprep.mubr.bf16.mxu0 0
      %3356 = vmatmul.mubr.bf16.gmra.mxu0 %v3218
      %v3357 = vpop.f32.mrf.mxu0
      %v3358 = vadd.f32 0.0, %v3357
      %v3359 = vpop.f32.mrf.mxu0
      %v3360 = vpop.f32.mrf.mxu0
      %v3361 = vadd.f32 0.0, %v3360
      %v3362 = vpop.f32.mrf.mxu0
      %3363 = vmatprep.mubr.bf16.mxu0 0
      %3364 = vmatmul.mubr.bf16.gmra.mxu0 %v3221
      %v3365 = vpop.f32.mrf.mxu0
      %v3366 = vadd.f32 0.0, %v3365
      %v3367 = vpop.f32.mrf.mxu0
      %v3368 = vpop.f32.mrf.mxu0
      %v3369 = vadd.f32 0.0, %v3368
      %v3370 = vpop.f32.mrf.mxu0
      %3371 = vmatprep.mubr.bf16.mxu0 0
      %3372 = vmatmul.mubr.bf16.gmra.mxu0 %v3224
      %v3373 = vpop.f32.mrf.mxu0
      %v3374 = vadd.f32 0.0, %v3373
      %v3375 = vpop.f32.mrf.mxu0
      %v3376 = vpop.f32.mrf.mxu0
      %v3377 = vadd.f32 0.0, %v3376
      %v3378 = vpop.f32.mrf.mxu0
      %3379 = vmatprep.mubr.bf16.mxu0 0
      %3380 = vmatmul.mubr.bf16.gmra.mxu0 %v3227
      %v3381 = vpop.f32.mrf.mxu0
      %v3382 = vadd.f32 0.0, %v3381
      %v3383 = vpop.f32.mrf.mxu0
      %v3384 = vpop.f32.mrf.mxu0
      %v3385 = vadd.f32 0.0, %v3384
      %v3386 = vpop.f32.mrf.mxu0
      %3387 = vmatprep.mubr.bf16.mxu0 0
      %3388 = vmatmul.mubr.bf16.gmra.mxu0 %v3230
      %v3389 = vpop.f32.mrf.mxu0
      %v3390 = vadd.f32 0.0, %v3389
      %v3391 = vpop.f32.mrf.mxu0
      %v3392 = vpop.f32.mrf.mxu0
      %v3393 = vadd.f32 0.0, %v3392
      %v3394 = vpop.f32.mrf.mxu0
      %3395 = vdwg.mxu0
      %v3396 = vld [vmem:[#allocation4] sm:$0xff]
      %v3397 = vld [vmem:[#allocation4 + $0x8] sm:$0xff]
      %v3398 = vld [vmem:[#allocation4 + $0x10] sm:$0xff]
      %v3399 = vld [vmem:[#allocation4 + $0x18] sm:$0xff]
      %v3400 = vld [vmem:[#allocation4 + $0x20] sm:$0xff]
      %v3401 = vld [vmem:[#allocation4 + $0x28] sm:$0xff]
      %v3402 = vld [vmem:[#allocation4 + $0x30] sm:$0xff]
      %v3403 = vld [vmem:[#allocation4 + $0x38] sm:$0xff]
      %v3404 = vld [vmem:[#allocation4 + $0x40] sm:$0xff]
      %v3405 = vld [vmem:[#allocation4 + $0x48] sm:$0xff]
      %v3406 = vld [vmem:[#allocation4 + $0x50] sm:$0xff]
      %v3407 = vld [vmem:[#allocation4 + $0x58] sm:$0xff]
      %v3408 = vld [vmem:[#allocation4 + $0x60] sm:$0xff]
      %v3409 = vld [vmem:[#allocation4 + $0x68] sm:$0xff]
      %v3410 = vld [vmem:[#allocation4 + $0x70] sm:$0xff]
      %v3411 = vld [vmem:[#allocation4 + $0x78] sm:$0xff]
      %v3412 = vld [vmem:[#allocation4 + $0x80] sm:$0xff]
      %v3413 = vld [vmem:[#allocation4 + $0x88] sm:$0xff]
      %v3414 = vld [vmem:[#allocation4 + $0x90] sm:$0xff]
      %v3415 = vld [vmem:[#allocation4 + $0x98] sm:$0xff]
      %v3416 = vld [vmem:[#allocation4 + $0xa0] sm:$0xff]
      %v3417 = vld [vmem:[#allocation4 + $0xa8] sm:$0xff]
      %v3418 = vld [vmem:[#allocation4 + $0xb0] sm:$0xff]
      %v3419 = vld [vmem:[#allocation4 + $0xb8] sm:$0xff]
      %v3420 = vld [vmem:[#allocation4 + $0xc0] sm:$0xff]
      %v3421 = vld [vmem:[#allocation4 + $0xc8] sm:$0xff]
      %v3422 = vld [vmem:[#allocation4 + $0xd0] sm:$0xff]
      %v3423 = vld [vmem:[#allocation4 + $0xd8] sm:$0xff]
      %v3424 = vld [vmem:[#allocation4 + $0xe0] sm:$0xff]
      %v3425 = vld [vmem:[#allocation4 + $0xe8] sm:$0xff]
      %v3426 = vld [vmem:[#allocation4 + $0xf0] sm:$0xff]
      %v3427 = vld [vmem:[#allocation4 + $0xf8] sm:$0xff]
      %v3428 = vadd.f32 %v3396, %v3270
      %v3429 = vadd.f32 %v3397, %v3273
      %v3430 = vadd.f32 %v3398, %v3278
      %v3431 = vadd.f32 %v3399, %v3281
      %v3432 = vadd.f32 %v3400, %v3286
      %v3433 = vadd.f32 %v3401, %v3289
      %v3434 = vadd.f32 %v3402, %v3294
      %v3435 = vadd.f32 %v3403, %v3297
      %v3436 = vadd.f32 %v3404, %v3302
      %v3437 = vadd.f32 %v3405, %v3305
      %v3438 = vadd.f32 %v3406, %v3310
      %v3439 = vadd.f32 %v3407, %v3313
      %v3440 = vadd.f32 %v3408, %v3318
      %v3441 = vadd.f32 %v3409, %v3321
      %v3442 = vadd.f32 %v3410, %v3326
      %v3443 = vadd.f32 %v3411, %v3329
      %v3444 = vadd.f32 %v3412, %v3334
      %v3445 = vadd.f32 %v3413, %v3337
      %v3446 = vadd.f32 %v3414, %v3342
      %v3447 = vadd.f32 %v3415, %v3345
      %v3448 = vadd.f32 %v3416, %v3350
      %v3449 = vadd.f32 %v3417, %v3353
      %v3450 = vadd.f32 %v3418, %v3358
      %v3451 = vadd.f32 %v3419, %v3361
      %v3452 = vadd.f32 %v3420, %v3366
      %v3453 = vadd.f32 %v3421, %v3369
      %v3454 = vadd.f32 %v3422, %v3374
      %v3455 = vadd.f32 %v3423, %v3377
      %v3456 = vadd.f32 %v3424, %v3382
      %v3457 = vadd.f32 %v3425, %v3385
      %v3458 = vadd.f32 %v3426, %v3390
      %v3459 = vadd.f32 %v3427, %v3393
      %3460 = vst.msk [vmem:[#allocation4] sm:$0xff] %vm226, %v3428
      %3461 = vst.msk [vmem:[#allocation4 + $0x8] sm:$0xff] %vm226, %v3429
      %3462 = vst.msk [vmem:[#allocation4 + $0x10] sm:$0xff] %vm226, %v3430
      %3463 = vst.msk [vmem:[#allocation4 + $0x18] sm:$0xff] %vm226, %v3431
      %3464 = vst.msk [vmem:[#allocation4 + $0x20] sm:$0xff] %vm226, %v3432
      %3465 = vst.msk [vmem:[#allocation4 + $0x28] sm:$0xff] %vm226, %v3433
      %3466 = vst.msk [vmem:[#allocation4 + $0x30] sm:$0xff] %vm226, %v3434
      %3467 = vst.msk [vmem:[#allocation4 + $0x38] sm:$0xff] %vm226, %v3435
      %3468 = vst.msk [vmem:[#allocation4 + $0x40] sm:$0xff] %vm226, %v3436
      %3469 = vst.msk [vmem:[#allocation4 + $0x48] sm:$0xff] %vm226, %v3437
      %3470 = vst.msk [vmem:[#allocation4 + $0x50] sm:$0xff] %vm226, %v3438
      %3471 = vst.msk [vmem:[#allocation4 + $0x58] sm:$0xff] %vm226, %v3439
      %3472 = vst.msk [vmem:[#allocation4 + $0x60] sm:$0xff] %vm226, %v3440
      %3473 = vst.msk [vmem:[#allocation4 + $0x68] sm:$0xff] %vm226, %v3441
      %3474 = vst.msk [vmem:[#allocation4 + $0x70] sm:$0xff] %vm226, %v3442
      %3475 = vst.msk [vmem:[#allocation4 + $0x78] sm:$0xff] %vm226, %v3443
      %3476 = vst.msk [vmem:[#allocation4 + $0x80] sm:$0xff] %vm226, %v3444
      %3477 = vst.msk [vmem:[#allocation4 + $0x88] sm:$0xff] %vm226, %v3445
      %3478 = vst.msk [vmem:[#allocation4 + $0x90] sm:$0xff] %vm226, %v3446
      %3479 = vst.msk [vmem:[#allocation4 + $0x98] sm:$0xff] %vm226, %v3447
      %3480 = vst.msk [vmem:[#allocation4 + $0xa0] sm:$0xff] %vm226, %v3448
      %3481 = vst.msk [vmem:[#allocation4 + $0xa8] sm:$0xff] %vm226, %v3449
      %3482 = vst.msk [vmem:[#allocation4 + $0xb0] sm:$0xff] %vm226, %v3450
      %3483 = vst.msk [vmem:[#allocation4 + $0xb8] sm:$0xff] %vm226, %v3451
      %3484 = vst.msk [vmem:[#allocation4 + $0xc0] sm:$0xff] %vm226, %v3452
      %3485 = vst.msk [vmem:[#allocation4 + $0xc8] sm:$0xff] %vm226, %v3453
      %3486 = vst.msk [vmem:[#allocation4 + $0xd0] sm:$0xff] %vm226, %v3454
      %3487 = vst.msk [vmem:[#allocation4 + $0xd8] sm:$0xff] %vm226, %v3455
      %3488 = vst.msk [vmem:[#allocation4 + $0xe0] sm:$0xff] %vm226, %v3456
      %3489 = vst.msk [vmem:[#allocation4 + $0xe8] sm:$0xff] %vm226, %v3457
      %3490 = vst.msk [vmem:[#allocation4 + $0xf0] sm:$0xff] %vm226, %v3458
      %3491 = vst.msk [vmem:[#allocation4 + $0xf8] sm:$0xff] %vm226, %v3459
      %v3492 = vld [vmem:[#allocation4] sm:$0xff]
      %v3493 = vld [vmem:[#allocation4 + $0x8] sm:$0xff]
      %v3494 = vld [vmem:[#allocation4 + $0x10] sm:$0xff]
      %v3495 = vld [vmem:[#allocation4 + $0x18] sm:$0xff]
      %v3496 = vld [vmem:[#allocation4 + $0x20] sm:$0xff]
      %v3497 = vld [vmem:[#allocation4 + $0x28] sm:$0xff]
      %v3498 = vld [vmem:[#allocation4 + $0x30] sm:$0xff]
      %v3499 = vld [vmem:[#allocation4 + $0x38] sm:$0xff]
      %v3500 = vld [vmem:[#allocation4 + $0x40] sm:$0xff]
      %v3501 = vld [vmem:[#allocation4 + $0x48] sm:$0xff]
      %v3502 = vld [vmem:[#allocation4 + $0x50] sm:$0xff]
      %v3503 = vld [vmem:[#allocation4 + $0x58] sm:$0xff]
      %v3504 = vld [vmem:[#allocation4 + $0x60] sm:$0xff]
      %v3505 = vld [vmem:[#allocation4 + $0x68] sm:$0xff]
      %v3506 = vld [vmem:[#allocation4 + $0x70] sm:$0xff]
      %v3507 = vld [vmem:[#allocation4 + $0x78] sm:$0xff]
      %v3508 = vld [vmem:[#allocation4 + $0x80] sm:$0xff]
      %v3509 = vld [vmem:[#allocation4 + $0x88] sm:$0xff]
      %v3510 = vld [vmem:[#allocation4 + $0x90] sm:$0xff]
      %v3511 = vld [vmem:[#allocation4 + $0x98] sm:$0xff]
      %v3512 = vld [vmem:[#allocation4 + $0xa0] sm:$0xff]
      %v3513 = vld [vmem:[#allocation4 + $0xa8] sm:$0xff]
      %v3514 = vld [vmem:[#allocation4 + $0xb0] sm:$0xff]
      %v3515 = vld [vmem:[#allocation4 + $0xb8] sm:$0xff]
      %v3516 = vld [vmem:[#allocation4 + $0xc0] sm:$0xff]
      %v3517 = vld [vmem:[#allocation4 + $0xc8] sm:$0xff]
      %v3518 = vld [vmem:[#allocation4 + $0xd0] sm:$0xff]
      %v3519 = vld [vmem:[#allocation4 + $0xd8] sm:$0xff]
      %v3520 = vld [vmem:[#allocation4 + $0xe0] sm:$0xff]
      %v3521 = vld [vmem:[#allocation4 + $0xe8] sm:$0xff]
      %v3522 = vld [vmem:[#allocation4 + $0xf0] sm:$0xff]
      %v3523 = vld [vmem:[#allocation4 + $0xf8] sm:$0xff]
      %v3524 = vld [vmem:[%s2] sm:$0x1]
      %v3526 = vlaneseq
      %v3527 = vshrl.u32 %v3526, 7
      %v3528 = vsub.s32 0, %v3527
      %v3529 = vrot.slane %v3524, %v3528
      %v3531 = vadd.f32 %v3492, %v3529
      %v3532 = vadd.f32 %v3493, %v3529
      %v3533 = vadd.f32 %v3494, %v3529
      %v3534 = vadd.f32 %v3495, %v3529
      %v3535 = vadd.f32 %v3496, %v3529
      %v3536 = vadd.f32 %v3497, %v3529
      %v3537 = vadd.f32 %v3498, %v3529
      %v3538 = vadd.f32 %v3499, %v3529
      %v3539 = vadd.f32 %v3500, %v3529
      %v3540 = vadd.f32 %v3501, %v3529
      %v3541 = vadd.f32 %v3502, %v3529
      %v3542 = vadd.f32 %v3503, %v3529
      %v3543 = vadd.f32 %v3504, %v3529
      %v3544 = vadd.f32 %v3505, %v3529
      %v3545 = vadd.f32 %v3506, %v3529
      %v3546 = vadd.f32 %v3507, %v3529
      %v3547 = vadd.f32 %v3508, %v3529
      %v3548 = vadd.f32 %v3509, %v3529
      %v3549 = vadd.f32 %v3510, %v3529
      %v3550 = vadd.f32 %v3511, %v3529
      %v3551 = vadd.f32 %v3512, %v3529
      %v3552 = vadd.f32 %v3513, %v3529
      %v3553 = vadd.f32 %v3514, %v3529
      %v3554 = vadd.f32 %v3515, %v3529
      %v3555 = vadd.f32 %v3516, %v3529
      %v3556 = vadd.f32 %v3517, %v3529
      %v3557 = vadd.f32 %v3518, %v3529
      %v3558 = vadd.f32 %v3519, %v3529
      %v3559 = vadd.f32 %v3520, %v3529
      %v3560 = vadd.f32 %v3521, %v3529
      %v3561 = vadd.f32 %v3522, %v3529
      %v3562 = vadd.f32 %v3523, %v3529
      %vm3563 = vcmp.gt.f32.partialorder %v3531, 0.0
      %vm3564 = vcmp.gt.f32.partialorder %v3532, 0.0
      %vm3565 = vcmp.gt.f32.partialorder %v3533, 0.0
      %vm3566 = vcmp.gt.f32.partialorder %v3534, 0.0
      %vm3567 = vcmp.gt.f32.partialorder %v3535, 0.0
      %vm3568 = vcmp.gt.f32.partialorder %v3536, 0.0
      %vm3569 = vcmp.gt.f32.partialorder %v3537, 0.0
      %vm3570 = vcmp.gt.f32.partialorder %v3538, 0.0
      %vm3571 = vcmp.gt.f32.partialorder %v3539, 0.0
      %vm3572 = vcmp.gt.f32.partialorder %v3540, 0.0
      %vm3573 = vcmp.gt.f32.partialorder %v3541, 0.0
      %vm3574 = vcmp.gt.f32.partialorder %v3542, 0.0
      %vm3575 = vcmp.gt.f32.partialorder %v3543, 0.0
      %vm3576 = vcmp.gt.f32.partialorder %v3544, 0.0
      %vm3577 = vcmp.gt.f32.partialorder %v3545, 0.0
      %vm3578 = vcmp.gt.f32.partialorder %v3546, 0.0
      %vm3579 = vcmp.gt.f32.partialorder %v3547, 0.0
      %vm3580 = vcmp.gt.f32.partialorder %v3548, 0.0
      %vm3581 = vcmp.gt.f32.partialorder %v3549, 0.0
      %vm3582 = vcmp.gt.f32.partialorder %v3550, 0.0
      %vm3583 = vcmp.gt.f32.partialorder %v3551, 0.0
      %vm3584 = vcmp.gt.f32.partialorder %v3552, 0.0
      %vm3585 = vcmp.gt.f32.partialorder %v3553, 0.0
      %vm3586 = vcmp.gt.f32.partialorder %v3554, 0.0
      %vm3587 = vcmp.gt.f32.partialorder %v3555, 0.0
      %vm3588 = vcmp.gt.f32.partialorder %v3556, 0.0
      %vm3589 = vcmp.gt.f32.partialorder %v3557, 0.0
      %vm3590 = vcmp.gt.f32.partialorder %v3558, 0.0
      %vm3591 = vcmp.gt.f32.partialorder %v3559, 0.0
      %vm3592 = vcmp.gt.f32.partialorder %v3560, 0.0
      %vm3593 = vcmp.gt.f32.partialorder %v3561, 0.0
      %vm3594 = vcmp.gt.f32.partialorder %v3562, 0.0
      %v3595 = vmul.f32 %v3531, 0.2
      %v3596 = vmul.f32 %v3532, 0.2
      %v3597 = vmul.f32 %v3533, 0.2
      %v3598 = vmul.f32 %v3534, 0.2
      %v3599 = vmul.f32 %v3535, 0.2
      %v3600 = vmul.f32 %v3536, 0.2
      %v3601 = vmul.f32 %v3537, 0.2
      %v3602 = vmul.f32 %v3538, 0.2
      %v3603 = vmul.f32 %v3539, 0.2
      %v3604 = vmul.f32 %v3540, 0.2
      %v3605 = vmul.f32 %v3541, 0.2
      %v3606 = vmul.f32 %v3542, 0.2
      %v3607 = vmul.f32 %v3543, 0.2
      %v3608 = vmul.f32 %v3544, 0.2
      %v3609 = vmul.f32 %v3545, 0.2
      %v3610 = vmul.f32 %v3546, 0.2
      %v3611 = vmul.f32 %v3547, 0.2
      %v3612 = vmul.f32 %v3548, 0.2
      %v3613 = vmul.f32 %v3549, 0.2
      %v3614 = vmul.f32 %v3550, 0.2
      %v3615 = vmul.f32 %v3551, 0.2
      %v3616 = vmul.f32 %v3552, 0.2
      %v3617 = vmul.f32 %v3553, 0.2
      %v3618 = vmul.f32 %v3554, 0.2
      %v3619 = vmul.f32 %v3555, 0.2
      %v3620 = vmul.f32 %v3556, 0.2
      %v3621 = vmul.f32 %v3557, 0.2
      %v3622 = vmul.f32 %v3558, 0.2
      %v3623 = vmul.f32 %v3559, 0.2
      %v3624 = vmul.f32 %v3560, 0.2
      %v3625 = vmul.f32 %v3561, 0.2
      %v3626 = vmul.f32 %v3562, 0.2
      %v3627 = vsel %vm3563, %v3531, %v3595
      %v3628 = vsel %vm3564, %v3532, %v3596
      %v3629 = vsel %vm3565, %v3533, %v3597
      %v3630 = vsel %vm3566, %v3534, %v3598
      %v3631 = vsel %vm3567, %v3535, %v3599
      %v3632 = vsel %vm3568, %v3536, %v3600
      %v3633 = vsel %vm3569, %v3537, %v3601
      %v3634 = vsel %vm3570, %v3538, %v3602
      %v3635 = vsel %vm3571, %v3539, %v3603
      %v3636 = vsel %vm3572, %v3540, %v3604
      %v3637 = vsel %vm3573, %v3541, %v3605
      %v3638 = vsel %vm3574, %v3542, %v3606
      %v3639 = vsel %vm3575, %v3543, %v3607
      %v3640 = vsel %vm3576, %v3544, %v3608
      %v3641 = vsel %vm3577, %v3545, %v3609
      %v3642 = vsel %vm3578, %v3546, %v3610
      %v3643 = vsel %vm3579, %v3547, %v3611
      %v3644 = vsel %vm3580, %v3548, %v3612
      %v3645 = vsel %vm3581, %v3549, %v3613
      %v3646 = vsel %vm3582, %v3550, %v3614
      %v3647 = vsel %vm3583, %v3551, %v3615
      %v3648 = vsel %vm3584, %v3552, %v3616
      %v3649 = vsel %vm3585, %v3553, %v3617
      %v3650 = vsel %vm3586, %v3554, %v3618
      %v3651 = vsel %vm3587, %v3555, %v3619
      %v3652 = vsel %vm3588, %v3556, %v3620
      %v3653 = vsel %vm3589, %v3557, %v3621
      %v3654 = vsel %vm3590, %v3558, %v3622
      %v3655 = vsel %vm3591, %v3559, %v3623
      %v3656 = vsel %vm3592, %v3560, %v3624
      %v3657 = vsel %vm3593, %v3561, %v3625
      %v3658 = vsel %vm3594, %v3562, %v3626
      %3659 = vst.msk [vmem:[%s236 + $0x8] sm:$0xff] %vm226, %v3627
      %3660 = vst.msk [vmem:[%s236 + $0x10] sm:$0xff] %vm226, %v3628
      %3661 = vst.msk [vmem:[%s236 + $0x28] sm:$0xff] %vm226, %v3629
      %3662 = vst.msk [vmem:[%s236 + $0x30] sm:$0xff] %vm226, %v3630
      %3663 = vst.msk [vmem:[%s236 + $0x48] sm:$0xff] %vm226, %v3631
      %3664 = vst.msk [vmem:[%s236 + $0x50] sm:$0xff] %vm226, %v3632
      %3665 = vst.msk [vmem:[%s236 + $0x68] sm:$0xff] %vm226, %v3633
      %3666 = vst.msk [vmem:[%s236 + $0x70] sm:$0xff] %vm226, %v3634
      %3667 = vst.msk [vmem:[%s236 + $0x88] sm:$0xff] %vm226, %v3635
      %3668 = vst.msk [vmem:[%s236 + $0x90] sm:$0xff] %vm226, %v3636
      %3669 = vst.msk [vmem:[%s236 + $0xa8] sm:$0xff] %vm226, %v3637
      %3670 = vst.msk [vmem:[%s236 + $0xb0] sm:$0xff] %vm226, %v3638
      %3671 = vst.msk [vmem:[%s236 + $0xc8] sm:$0xff] %vm226, %v3639
      %3672 = vst.msk [vmem:[%s236 + $0xd0] sm:$0xff] %vm226, %v3640
      %3673 = vst.msk [vmem:[%s236 + $0xe8] sm:$0xff] %vm226, %v3641
      %3674 = vst.msk [vmem:[%s236 + $0xf0] sm:$0xff] %vm226, %v3642
      %3675 = vst.msk [vmem:[%s236 + $0x108] sm:$0xff] %vm226, %v3643
      %3676 = vst.msk [vmem:[%s236 + $0x110] sm:$0xff] %vm226, %v3644
      %3677 = vst.msk [vmem:[%s236 + $0x128] sm:$0xff] %vm226, %v3645
      %3678 = vst.msk [vmem:[%s236 + $0x130] sm:$0xff] %vm226, %v3646
      %3679 = vst.msk [vmem:[%s236 + $0x148] sm:$0xff] %vm226, %v3647
      %3680 = vst.msk [vmem:[%s236 + $0x150] sm:$0xff] %vm226, %v3648
      %3681 = vst.msk [vmem:[%s236 + $0x168] sm:$0xff] %vm226, %v3649
      %3682 = vst.msk [vmem:[%s236 + $0x170] sm:$0xff] %vm226, %v3650
      %3683 = vst.msk [vmem:[%s236 + $0x188] sm:$0xff] %vm226, %v3651
      %3684 = vst.msk [vmem:[%s236 + $0x190] sm:$0xff] %vm226, %v3652
      %3685 = vst.msk [vmem:[%s236 + $0x1a8] sm:$0xff] %vm226, %v3653
      %3686 = vst.msk [vmem:[%s236 + $0x1b0] sm:$0xff] %vm226, %v3654
      %3687 = vst.msk [vmem:[%s236 + $0x1c8] sm:$0xff] %vm226, %v3655
      %3688 = vst.msk [vmem:[%s236 + $0x1d0] sm:$0xff] %vm226, %v3656
      %3689 = vst.msk [vmem:[%s236 + $0x1e8] sm:$0xff] %vm226, %v3657
      %3690 = vst.msk [vmem:[%s236 + $0x1f0] sm:$0xff] %vm226, %v3658
      %v3691 = vld [vmem:[#allocation2] sm:$0xff]
      %v3692 = vld [vmem:[#allocation2 + $0x8] sm:$0xff]
      %v3693 = vld [vmem:[#allocation2 + $0x10] sm:$0xff]
      %v3694 = vld [vmem:[#allocation2 + $0x18] sm:$0xff]
      %v3695 = vld [vmem:[#allocation2 + $0x20] sm:$0xff]
      %v3696 = vld [vmem:[#allocation2 + $0x28] sm:$0xff]
      %v3697 = vld [vmem:[#allocation2 + $0x30] sm:$0xff]
      %v3698 = vld [vmem:[#allocation2 + $0x38] sm:$0xff]
      %v3699 = vld [vmem:[#allocation2 + $0x40] sm:$0xff]
      %v3700 = vld [vmem:[#allocation2 + $0x48] sm:$0xff]
      %v3701 = vld [vmem:[#allocation2 + $0x50] sm:$0xff]
      %v3702 = vld [vmem:[#allocation2 + $0x58] sm:$0xff]
      %v3703 = vld [vmem:[#allocation2 + $0x60] sm:$0xff]
      %v3704 = vld [vmem:[#allocation2 + $0x68] sm:$0xff]
      %v3705 = vld [vmem:[#allocation2 + $0x70] sm:$0xff]
      %v3706 = vld [vmem:[#allocation2 + $0x78] sm:$0xff]
      %v3707 = vld [vmem:[#allocation2 + $0x80] sm:$0xff]
      %v3708 = vld [vmem:[#allocation2 + $0x88] sm:$0xff]
      %v3709 = vld [vmem:[#allocation2 + $0x90] sm:$0xff]
      %v3710 = vld [vmem:[#allocation2 + $0x98] sm:$0xff]
      %v3711 = vld [vmem:[#allocation2 + $0xa0] sm:$0xff]
      %v3712 = vld [vmem:[#allocation2 + $0xa8] sm:$0xff]
      %v3713 = vld [vmem:[#allocation2 + $0xb0] sm:$0xff]
      %v3714 = vld [vmem:[#allocation2 + $0xb8] sm:$0xff]
      %v3715 = vld [vmem:[#allocation2 + $0xc0] sm:$0xff]
      %v3716 = vld [vmem:[#allocation2 + $0xc8] sm:$0xff]
      %v3717 = vld [vmem:[#allocation2 + $0xd0] sm:$0xff]
      %v3718 = vld [vmem:[#allocation2 + $0xd8] sm:$0xff]
      %v3719 = vld [vmem:[#allocation2 + $0xe0] sm:$0xff]
      %v3720 = vld [vmem:[#allocation2 + $0xe8] sm:$0xff]
      %v3721 = vld [vmem:[#allocation2 + $0xf0] sm:$0xff]
      %v3722 = vld [vmem:[#allocation2 + $0xf8] sm:$0xff]
      %v3723 = vld [vmem:[#allocation2 + $0x100] sm:$0xff]
      %v3724 = vld [vmem:[#allocation2 + $0x108] sm:$0xff]
      %v3725 = vld [vmem:[#allocation2 + $0x110] sm:$0xff]
      %v3726 = vld [vmem:[#allocation2 + $0x118] sm:$0xff]
      %v3727 = vld [vmem:[#allocation2 + $0x120] sm:$0xff]
      %v3728 = vld [vmem:[#allocation2 + $0x128] sm:$0xff]
      %v3729 = vld [vmem:[#allocation2 + $0x130] sm:$0xff]
      %v3730 = vld [vmem:[#allocation2 + $0x138] sm:$0xff]
      %v3731 = vld [vmem:[#allocation2 + $0x140] sm:$0xff]
      %v3732 = vld [vmem:[#allocation2 + $0x148] sm:$0xff]
      %v3733 = vld [vmem:[#allocation2 + $0x150] sm:$0xff]
      %v3734 = vld [vmem:[#allocation2 + $0x158] sm:$0xff]
      %v3735 = vld [vmem:[#allocation2 + $0x160] sm:$0xff]
      %v3736 = vld [vmem:[#allocation2 + $0x168] sm:$0xff]
      %v3737 = vld [vmem:[#allocation2 + $0x170] sm:$0xff]
      %v3738 = vld [vmem:[#allocation2 + $0x178] sm:$0xff]
      %v3739 = vld [vmem:[#allocation2 + $0x180] sm:$0xff]
      %v3740 = vld [vmem:[#allocation2 + $0x188] sm:$0xff]
      %v3741 = vld [vmem:[#allocation2 + $0x190] sm:$0xff]
      %v3742 = vld [vmem:[#allocation2 + $0x198] sm:$0xff]
      %v3743 = vld [vmem:[#allocation2 + $0x1a0] sm:$0xff]
      %v3744 = vld [vmem:[#allocation2 + $0x1a8] sm:$0xff]
      %v3745 = vld [vmem:[#allocation2 + $0x1b0] sm:$0xff]
      %v3746 = vld [vmem:[#allocation2 + $0x1b8] sm:$0xff]
      %v3747 = vld [vmem:[#allocation2 + $0x1c0] sm:$0xff]
      %v3748 = vld [vmem:[#allocation2 + $0x1c8] sm:$0xff]
      %v3749 = vld [vmem:[#allocation2 + $0x1d0] sm:$0xff]
      %v3750 = vld [vmem:[#allocation2 + $0x1d8] sm:$0xff]
      %v3751 = vld [vmem:[#allocation2 + $0x1e0] sm:$0xff]
      %v3752 = vld [vmem:[#allocation2 + $0x1e8] sm:$0xff]
      %v3753 = vld [vmem:[#allocation2 + $0x1f0] sm:$0xff]
      %v3754 = vld [vmem:[#allocation2 + $0x1f8] sm:$0xff]
      %v3755 = vld [vmem:[%s236] sm:$0xff]
      %v3756 = vld [vmem:[%s236 + $0x8] sm:$0xff]
      %v3757 = vld [vmem:[%s236 + $0x10] sm:$0xff]
      %v3758 = vld [vmem:[%s236 + $0x18] sm:$0xff]
      %v3759 = vld [vmem:[%s236 + $0x20] sm:$0xff]
      %v3760 = vld [vmem:[%s236 + $0x28] sm:$0xff]
      %v3761 = vld [vmem:[%s236 + $0x30] sm:$0xff]
      %v3762 = vld [vmem:[%s236 + $0x38] sm:$0xff]
      %v3763 = vld [vmem:[%s236 + $0x40] sm:$0xff]
      %v3764 = vld [vmem:[%s236 + $0x48] sm:$0xff]
      %v3765 = vld [vmem:[%s236 + $0x50] sm:$0xff]
      %v3766 = vld [vmem:[%s236 + $0x58] sm:$0xff]
      %v3767 = vld [vmem:[%s236 + $0x60] sm:$0xff]
      %v3768 = vld [vmem:[%s236 + $0x68] sm:$0xff]
      %v3769 = vld [vmem:[%s236 + $0x70] sm:$0xff]
      %v3770 = vld [vmem:[%s236 + $0x78] sm:$0xff]
      %v3771 = vld [vmem:[%s236 + $0x80] sm:$0xff]
      %v3772 = vld [vmem:[%s236 + $0x88] sm:$0xff]
      %v3773 = vld [vmem:[%s236 + $0x90] sm:$0xff]
      %v3774 = vld [vmem:[%s236 + $0x98] sm:$0xff]
      %v3775 = vld [vmem:[%s236 + $0xa0] sm:$0xff]
      %v3776 = vld [vmem:[%s236 + $0xa8] sm:$0xff]
      %v3777 = vld [vmem:[%s236 + $0xb0] sm:$0xff]
      %v3778 = vld [vmem:[%s236 + $0xb8] sm:$0xff]
      %v3779 = vld [vmem:[%s236 + $0xc0] sm:$0xff]
      %v3780 = vld [vmem:[%s236 + $0xc8] sm:$0xff]
      %v3781 = vld [vmem:[%s236 + $0xd0] sm:$0xff]
      %v3782 = vld [vmem:[%s236 + $0xd8] sm:$0xff]
      %v3783 = vld [vmem:[%s236 + $0xe0] sm:$0xff]
      %v3784 = vld [vmem:[%s236 + $0xe8] sm:$0xff]
      %v3785 = vld [vmem:[%s236 + $0xf0] sm:$0xff]
      %v3786 = vld [vmem:[%s236 + $0xf8] sm:$0xff]
      %v3787 = vld [vmem:[%s236 + $0x100] sm:$0xff]
      %v3788 = vld [vmem:[%s236 + $0x108] sm:$0xff]
      %v3789 = vld [vmem:[%s236 + $0x110] sm:$0xff]
      %v3790 = vld [vmem:[%s236 + $0x118] sm:$0xff]
      %v3791 = vld [vmem:[%s236 + $0x120] sm:$0xff]
      %v3792 = vld [vmem:[%s236 + $0x128] sm:$0xff]
      %v3793 = vld [vmem:[%s236 + $0x130] sm:$0xff]
      %v3794 = vld [vmem:[%s236 + $0x138] sm:$0xff]
      %v3795 = vld [vmem:[%s236 + $0x140] sm:$0xff]
      %v3796 = vld [vmem:[%s236 + $0x148] sm:$0xff]
      %v3797 = vld [vmem:[%s236 + $0x150] sm:$0xff]
      %v3798 = vld [vmem:[%s236 + $0x158] sm:$0xff]
      %v3799 = vld [vmem:[%s236 + $0x160] sm:$0xff]
      %v3800 = vld [vmem:[%s236 + $0x168] sm:$0xff]
      %v3801 = vld [vmem:[%s236 + $0x170] sm:$0xff]
      %v3802 = vld [vmem:[%s236 + $0x178] sm:$0xff]
      %v3803 = vld [vmem:[%s236 + $0x180] sm:$0xff]
      %v3804 = vld [vmem:[%s236 + $0x188] sm:$0xff]
      %v3805 = vld [vmem:[%s236 + $0x190] sm:$0xff]
      %v3806 = vld [vmem:[%s236 + $0x198] sm:$0xff]
      %v3807 = vld [vmem:[%s236 + $0x1a0] sm:$0xff]
      %v3808 = vld [vmem:[%s236 + $0x1a8] sm:$0xff]
      %v3809 = vld [vmem:[%s236 + $0x1b0] sm:$0xff]
      %v3810 = vld [vmem:[%s236 + $0x1b8] sm:$0xff]
      %v3811 = vld [vmem:[%s236 + $0x1c0] sm:$0xff]
      %v3812 = vld [vmem:[%s236 + $0x1c8] sm:$0xff]
      %v3813 = vld [vmem:[%s236 + $0x1d0] sm:$0xff]
      %v3814 = vld [vmem:[%s236 + $0x1d8] sm:$0xff]
      %v3815 = vld [vmem:[%s236 + $0x1e0] sm:$0xff]
      %v3816 = vld [vmem:[%s236 + $0x1e8] sm:$0xff]
      %v3817 = vld [vmem:[%s236 + $0x1f0] sm:$0xff]
      %v3818 = vld [vmem:[%s236 + $0x1f8] sm:$0xff]
      %v3819 = vmul.f32 %v3755, 2.0
      %v3820 = vmul.f32 %v3756, 2.0
      %v3821 = vmul.f32 %v3757, 2.0
      %v3822 = vmul.f32 %v3758, 2.0
      %v3823 = vmul.f32 %v3759, 2.0
      %v3824 = vmul.f32 %v3760, 2.0
      %v3825 = vmul.f32 %v3761, 2.0
      %v3826 = vmul.f32 %v3762, 2.0
      %v3827 = vmul.f32 %v3763, 2.0
      %v3828 = vmul.f32 %v3764, 2.0
      %v3829 = vmul.f32 %v3765, 2.0
      %v3830 = vmul.f32 %v3766, 2.0
      %v3831 = vmul.f32 %v3767, 2.0
      %v3832 = vmul.f32 %v3768, 2.0
      %v3833 = vmul.f32 %v3769, 2.0
      %v3834 = vmul.f32 %v3770, 2.0
      %v3835 = vmul.f32 %v3771, 2.0
      %v3836 = vmul.f32 %v3772, 2.0
      %v3837 = vmul.f32 %v3773, 2.0
      %v3838 = vmul.f32 %v3774, 2.0
      %v3839 = vmul.f32 %v3775, 2.0
      %v3840 = vmul.f32 %v3776, 2.0
      %v3841 = vmul.f32 %v3777, 2.0
      %v3842 = vmul.f32 %v3778, 2.0
      %v3843 = vmul.f32 %v3779, 2.0
      %v3844 = vmul.f32 %v3780, 2.0
      %v3845 = vmul.f32 %v3781, 2.0
      %v3846 = vmul.f32 %v3782, 2.0
      %v3847 = vmul.f32 %v3783, 2.0
      %v3848 = vmul.f32 %v3784, 2.0
      %v3849 = vmul.f32 %v3785, 2.0
      %v3850 = vmul.f32 %v3786, 2.0
      %v3851 = vmul.f32 %v3787, 2.0
      %v3852 = vmul.f32 %v3788, 2.0
      %v3853 = vmul.f32 %v3789, 2.0
      %v3854 = vmul.f32 %v3790, 2.0
      %v3855 = vmul.f32 %v3791, 2.0
      %v3856 = vmul.f32 %v3792, 2.0
      %v3857 = vmul.f32 %v3793, 2.0
      %v3858 = vmul.f32 %v3794, 2.0
      %v3859 = vmul.f32 %v3795, 2.0
      %v3860 = vmul.f32 %v3796, 2.0
      %v3861 = vmul.f32 %v3797, 2.0
      %v3862 = vmul.f32 %v3798, 2.0
      %v3863 = vmul.f32 %v3799, 2.0
      %v3864 = vmul.f32 %v3800, 2.0
      %v3865 = vmul.f32 %v3801, 2.0
      %v3866 = vmul.f32 %v3802, 2.0
      %v3867 = vmul.f32 %v3803, 2.0
      %v3868 = vmul.f32 %v3804, 2.0
      %v3869 = vmul.f32 %v3805, 2.0
      %v3870 = vmul.f32 %v3806, 2.0
      %v3871 = vmul.f32 %v3807, 2.0
      %v3872 = vmul.f32 %v3808, 2.0
      %v3873 = vmul.f32 %v3809, 2.0
      %v3874 = vmul.f32 %v3810, 2.0
      %v3875 = vmul.f32 %v3811, 2.0
      %v3876 = vmul.f32 %v3812, 2.0
      %v3877 = vmul.f32 %v3813, 2.0
      %v3878 = vmul.f32 %v3814, 2.0
      %v3879 = vmul.f32 %v3815, 2.0
      %v3880 = vmul.f32 %v3816, 2.0
      %v3881 = vmul.f32 %v3817, 2.0
      %v3882 = vmul.f32 %v3818, 2.0
      %v3883 = vadd.f32 %v3691, %v3819
      %v3884 = vadd.f32 %v3692, %v3820
      %v3885 = vadd.f32 %v3693, %v3821
      %v3886 = vadd.f32 %v3694, %v3822
      %v3887 = vadd.f32 %v3695, %v3823
      %v3888 = vadd.f32 %v3696, %v3824
      %v3889 = vadd.f32 %v3697, %v3825
      %v3890 = vadd.f32 %v3698, %v3826
      %v3891 = vadd.f32 %v3699, %v3827
      %v3892 = vadd.f32 %v3700, %v3828
      %v3893 = vadd.f32 %v3701, %v3829
      %v3894 = vadd.f32 %v3702, %v3830
      %v3895 = vadd.f32 %v3703, %v3831
      %v3896 = vadd.f32 %v3704, %v3832
      %v3897 = vadd.f32 %v3705, %v3833
      %v3898 = vadd.f32 %v3706, %v3834
      %v3899 = vadd.f32 %v3707, %v3835
      %v3900 = vadd.f32 %v3708, %v3836
      %v3901 = vadd.f32 %v3709, %v3837
      %v3902 = vadd.f32 %v3710, %v3838
      %v3903 = vadd.f32 %v3711, %v3839
      %v3904 = vadd.f32 %v3712, %v3840
      %v3905 = vadd.f32 %v3713, %v3841
      %v3906 = vadd.f32 %v3714, %v3842
      %v3907 = vadd.f32 %v3715, %v3843
      %v3908 = vadd.f32 %v3716, %v3844
      %v3909 = vadd.f32 %v3717, %v3845
      %v3910 = vadd.f32 %v3718, %v3846
      %v3911 = vadd.f32 %v3719, %v3847
      %v3912 = vadd.f32 %v3720, %v3848
      %v3913 = vadd.f32 %v3721, %v3849
      %v3914 = vadd.f32 %v3722, %v3850
      %v3915 = vadd.f32 %v3723, %v3851
      %v3916 = vadd.f32 %v3724, %v3852
      %v3917 = vadd.f32 %v3725, %v3853
      %v3918 = vadd.f32 %v3726, %v3854
      %v3919 = vadd.f32 %v3727, %v3855
      %v3920 = vadd.f32 %v3728, %v3856
      %v3921 = vadd.f32 %v3729, %v3857
      %v3922 = vadd.f32 %v3730, %v3858
      %v3923 = vadd.f32 %v3731, %v3859
      %v3924 = vadd.f32 %v3732, %v3860
      %v3925 = vadd.f32 %v3733, %v3861
      %v3926 = vadd.f32 %v3734, %v3862
      %v3927 = vadd.f32 %v3735, %v3863
      %v3928 = vadd.f32 %v3736, %v3864
      %v3929 = vadd.f32 %v3737, %v3865
      %v3930 = vadd.f32 %v3738, %v3866
      %v3931 = vadd.f32 %v3739, %v3867
      %v3932 = vadd.f32 %v3740, %v3868
      %v3933 = vadd.f32 %v3741, %v3869
      %v3934 = vadd.f32 %v3742, %v3870
      %v3935 = vadd.f32 %v3743, %v3871
      %v3936 = vadd.f32 %v3744, %v3872
      %v3937 = vadd.f32 %v3745, %v3873
      %v3938 = vadd.f32 %v3746, %v3874
      %v3939 = vadd.f32 %v3747, %v3875
      %v3940 = vadd.f32 %v3748, %v3876
      %v3941 = vadd.f32 %v3749, %v3877
      %v3942 = vadd.f32 %v3750, %v3878
      %v3943 = vadd.f32 %v3751, %v3879
      %v3944 = vadd.f32 %v3752, %v3880
      %v3945 = vadd.f32 %v3753, %v3881
      %v3946 = vadd.f32 %v3754, %v3882
      %v3947 = vld [vmem:[%s2417] sm:$0xff]
      %v3948 = vld [vmem:[%s2417 + $0x8] sm:$0xff]
      %v3949 = vld [vmem:[%s2417 + $0x10] sm:$0xff]
      %v3950 = vld [vmem:[%s2417 + $0x18] sm:$0xff]
      %v3951 = vld [vmem:[%s2417 + $0x20] sm:$0xff]
      %v3952 = vld [vmem:[%s2417 + $0x28] sm:$0xff]
      %v3953 = vld [vmem:[%s2417 + $0x30] sm:$0xff]
      %v3954 = vld [vmem:[%s2417 + $0x38] sm:$0xff]
      %v3955 = vld [vmem:[%s2417 + $0x40] sm:$0xff]
      %v3956 = vld [vmem:[%s2417 + $0x48] sm:$0xff]
      %v3957 = vld [vmem:[%s2417 + $0x50] sm:$0xff]
      %v3958 = vld [vmem:[%s2417 + $0x58] sm:$0xff]
      %v3959 = vld [vmem:[%s2417 + $0x60] sm:$0xff]
      %v3960 = vld [vmem:[%s2417 + $0x68] sm:$0xff]
      %v3961 = vld [vmem:[%s2417 + $0x70] sm:$0xff]
      %v3962 = vld [vmem:[%s2417 + $0x78] sm:$0xff]
      %v3963 = vld [vmem:[%s2417 + $0x80] sm:$0xff]
      %v3964 = vld [vmem:[%s2417 + $0x88] sm:$0xff]
      %v3965 = vld [vmem:[%s2417 + $0x90] sm:$0xff]
      %v3966 = vld [vmem:[%s2417 + $0x98] sm:$0xff]
      %v3967 = vld [vmem:[%s2417 + $0xa0] sm:$0xff]
      %v3968 = vld [vmem:[%s2417 + $0xa8] sm:$0xff]
      %v3969 = vld [vmem:[%s2417 + $0xb0] sm:$0xff]
      %v3970 = vld [vmem:[%s2417 + $0xb8] sm:$0xff]
      %v3971 = vld [vmem:[%s2417 + $0xc0] sm:$0xff]
      %v3972 = vld [vmem:[%s2417 + $0xc8] sm:$0xff]
      %v3973 = vld [vmem:[%s2417 + $0xd0] sm:$0xff]
      %v3974 = vld [vmem:[%s2417 + $0xd8] sm:$0xff]
      %v3975 = vld [vmem:[%s2417 + $0xe0] sm:$0xff]
      %v3976 = vld [vmem:[%s2417 + $0xe8] sm:$0xff]
      %v3977 = vld [vmem:[%s2417 + $0xf0] sm:$0xff]
      %v3978 = vld [vmem:[%s2417 + $0xf8] sm:$0xff]
      %v3979 = vld [vmem:[%s2417 + $0x100] sm:$0xff]
      %v3980 = vld [vmem:[%s2417 + $0x108] sm:$0xff]
      %v3981 = vld [vmem:[%s2417 + $0x110] sm:$0xff]
      %v3982 = vld [vmem:[%s2417 + $0x118] sm:$0xff]
      %v3983 = vld [vmem:[%s2417 + $0x120] sm:$0xff]
      %v3984 = vld [vmem:[%s2417 + $0x128] sm:$0xff]
      %v3985 = vld [vmem:[%s2417 + $0x130] sm:$0xff]
      %v3986 = vld [vmem:[%s2417 + $0x138] sm:$0xff]
      %v3987 = vld [vmem:[%s2417 + $0x140] sm:$0xff]
      %v3988 = vld [vmem:[%s2417 + $0x148] sm:$0xff]
      %v3989 = vld [vmem:[%s2417 + $0x150] sm:$0xff]
      %v3990 = vld [vmem:[%s2417 + $0x158] sm:$0xff]
      %v3991 = vld [vmem:[%s2417 + $0x160] sm:$0xff]
      %v3992 = vld [vmem:[%s2417 + $0x168] sm:$0xff]
      %v3993 = vld [vmem:[%s2417 + $0x170] sm:$0xff]
      %v3994 = vld [vmem:[%s2417 + $0x178] sm:$0xff]
      %v3995 = vld [vmem:[%s2417 + $0x180] sm:$0xff]
      %v3996 = vld [vmem:[%s2417 + $0x188] sm:$0xff]
      %v3997 = vld [vmem:[%s2417 + $0x190] sm:$0xff]
      %v3998 = vld [vmem:[%s2417 + $0x198] sm:$0xff]
      %v3999 = vld [vmem:[%s2417 + $0x1a0] sm:$0xff]
      %v4000 = vld [vmem:[%s2417 + $0x1a8] sm:$0xff]
      %v4001 = vld [vmem:[%s2417 + $0x1b0] sm:$0xff]
      %v4002 = vld [vmem:[%s2417 + $0x1b8] sm:$0xff]
      %v4003 = vld [vmem:[%s2417 + $0x1c0] sm:$0xff]
      %v4004 = vld [vmem:[%s2417 + $0x1c8] sm:$0xff]
      %v4005 = vld [vmem:[%s2417 + $0x1d0] sm:$0xff]
      %v4006 = vld [vmem:[%s2417 + $0x1d8] sm:$0xff]
      %v4007 = vld [vmem:[%s2417 + $0x1e0] sm:$0xff]
      %v4008 = vld [vmem:[%s2417 + $0x1e8] sm:$0xff]
      %v4009 = vld [vmem:[%s2417 + $0x1f0] sm:$0xff]
      %v4010 = vld [vmem:[%s2417 + $0x1f8] sm:$0xff]
      %v4011 = vadd.f32 %v3883, %v3947
      %v4012 = vadd.f32 %v3884, %v3948
      %v4013 = vadd.f32 %v3885, %v3949
      %v4014 = vadd.f32 %v3886, %v3950
      %v4015 = vadd.f32 %v3887, %v3951
      %v4016 = vadd.f32 %v3888, %v3952
      %v4017 = vadd.f32 %v3889, %v3953
      %v4018 = vadd.f32 %v3890, %v3954
      %v4019 = vadd.f32 %v3891, %v3955
      %v4020 = vadd.f32 %v3892, %v3956
      %v4021 = vadd.f32 %v3893, %v3957
      %v4022 = vadd.f32 %v3894, %v3958
      %v4023 = vadd.f32 %v3895, %v3959
      %v4024 = vadd.f32 %v3896, %v3960
      %v4025 = vadd.f32 %v3897, %v3961
      %v4026 = vadd.f32 %v3898, %v3962
      %v4027 = vadd.f32 %v3899, %v3963
      %v4028 = vadd.f32 %v3900, %v3964
      %v4029 = vadd.f32 %v3901, %v3965
      %v4030 = vadd.f32 %v3902, %v3966
      %v4031 = vadd.f32 %v3903, %v3967
      %v4032 = vadd.f32 %v3904, %v3968
      %v4033 = vadd.f32 %v3905, %v3969
      %v4034 = vadd.f32 %v3906, %v3970
      %v4035 = vadd.f32 %v3907, %v3971
      %v4036 = vadd.f32 %v3908, %v3972
      %v4037 = vadd.f32 %v3909, %v3973
      %v4038 = vadd.f32 %v3910, %v3974
      %v4039 = vadd.f32 %v3911, %v3975
      %v4040 = vadd.f32 %v3912, %v3976
      %v4041 = vadd.f32 %v3913, %v3977
      %v4042 = vadd.f32 %v3914, %v3978
      %v4043 = vadd.f32 %v3915, %v3979
      %v4044 = vadd.f32 %v3916, %v3980
      %v4045 = vadd.f32 %v3917, %v3981
      %v4046 = vadd.f32 %v3918, %v3982
      %v4047 = vadd.f32 %v3919, %v3983
      %v4048 = vadd.f32 %v3920, %v3984
      %v4049 = vadd.f32 %v3921, %v3985
      %v4050 = vadd.f32 %v3922, %v3986
      %v4051 = vadd.f32 %v3923, %v3987
      %v4052 = vadd.f32 %v3924, %v3988
      %v4053 = vadd.f32 %v3925, %v3989
      %v4054 = vadd.f32 %v3926, %v3990
      %v4055 = vadd.f32 %v3927, %v3991
      %v4056 = vadd.f32 %v3928, %v3992
      %v4057 = vadd.f32 %v3929, %v3993
      %v4058 = vadd.f32 %v3930, %v3994
      %v4059 = vadd.f32 %v3931, %v3995
      %v4060 = vadd.f32 %v3932, %v3996
      %v4061 = vadd.f32 %v3933, %v3997
      %v4062 = vadd.f32 %v3934, %v3998
      %v4063 = vadd.f32 %v3935, %v3999
      %v4064 = vadd.f32 %v3936, %v4000
      %v4065 = vadd.f32 %v3937, %v4001
      %v4066 = vadd.f32 %v3938, %v4002
      %v4067 = vadd.f32 %v3939, %v4003
      %v4068 = vadd.f32 %v3940, %v4004
      %v4069 = vadd.f32 %v3941, %v4005
      %v4070 = vadd.f32 %v3942, %v4006
      %v4071 = vadd.f32 %v3943, %v4007
      %v4072 = vadd.f32 %v3944, %v4008
      %v4073 = vadd.f32 %v3945, %v4009
      %v4074 = vadd.f32 %v3946, %v4010
      %4075 = vst.msk [vmem:[#allocation3] sm:$0xff] %vm226, %v4011
      %4076 = vst.msk [vmem:[#allocation3 + $0x8] sm:$0xff] %vm226, %v4012
      %4077 = vst.msk [vmem:[#allocation3 + $0x10] sm:$0xff] %vm226, %v4013
      %4078 = vst.msk [vmem:[#allocation3 + $0x18] sm:$0xff] %vm226, %v4014
      %4079 = vst.msk [vmem:[#allocation3 + $0x20] sm:$0xff] %vm226, %v4015
      %4080 = vst.msk [vmem:[#allocation3 + $0x28] sm:$0xff] %vm226, %v4016
      %4081 = vst.msk [vmem:[#allocation3 + $0x30] sm:$0xff] %vm226, %v4017
      %4082 = vst.msk [vmem:[#allocation3 + $0x38] sm:$0xff] %vm226, %v4018
      %4083 = vst.msk [vmem:[#allocation3 + $0x40] sm:$0xff] %vm226, %v4019
      %4084 = vst.msk [vmem:[#allocation3 + $0x48] sm:$0xff] %vm226, %v4020
      %4085 = vst.msk [vmem:[#allocation3 + $0x50] sm:$0xff] %vm226, %v4021
      %4086 = vst.msk [vmem:[#allocation3 + $0x58] sm:$0xff] %vm226, %v4022
      %4087 = vst.msk [vmem:[#allocation3 + $0x60] sm:$0xff] %vm226, %v4023
      %4088 = vst.msk [vmem:[#allocation3 + $0x68] sm:$0xff] %vm226, %v4024
      %4089 = vst.msk [vmem:[#allocation3 + $0x70] sm:$0xff] %vm226, %v4025
      %4090 = vst.msk [vmem:[#allocation3 + $0x78] sm:$0xff] %vm226, %v4026
      %4091 = vst.msk [vmem:[#allocation3 + $0x80] sm:$0xff] %vm226, %v4027
      %4092 = vst.msk [vmem:[#allocation3 + $0x88] sm:$0xff] %vm226, %v4028
      %4093 = vst.msk [vmem:[#allocation3 + $0x90] sm:$0xff] %vm226, %v4029
      %4094 = vst.msk [vmem:[#allocation3 + $0x98] sm:$0xff] %vm226, %v4030
      %4095 = vst.msk [vmem:[#allocation3 + $0xa0] sm:$0xff] %vm226, %v4031
      %4096 = vst.msk [vmem:[#allocation3 + $0xa8] sm:$0xff] %vm226, %v4032
      %4097 = vst.msk [vmem:[#allocation3 + $0xb0] sm:$0xff] %vm226, %v4033
      %4098 = vst.msk [vmem:[#allocation3 + $0xb8] sm:$0xff] %vm226, %v4034
      %4099 = vst.msk [vmem:[#allocation3 + $0xc0] sm:$0xff] %vm226, %v4035
      %4100 = vst.msk [vmem:[#allocation3 + $0xc8] sm:$0xff] %vm226, %v4036
      %4101 = vst.msk [vmem:[#allocation3 + $0xd0] sm:$0xff] %vm226, %v4037
      %4102 = vst.msk [vmem:[#allocation3 + $0xd8] sm:$0xff] %vm226, %v4038
      %4103 = vst.msk [vmem:[#allocation3 + $0xe0] sm:$0xff] %vm226, %v4039
      %4104 = vst.msk [vmem:[#allocation3 + $0xe8] sm:$0xff] %vm226, %v4040
      %4105 = vst.msk [vmem:[#allocation3 + $0xf0] sm:$0xff] %vm226, %v4041
      %4106 = vst.msk [vmem:[#allocation3 + $0xf8] sm:$0xff] %vm226, %v4042
      %4107 = vst.msk [vmem:[#allocation3 + $0x100] sm:$0xff] %vm226, %v4043
      %4108 = vst.msk [vmem:[#allocation3 + $0x108] sm:$0xff] %vm226, %v4044
      %4109 = vst.msk [vmem:[#allocation3 + $0x110] sm:$0xff] %vm226, %v4045
      %4110 = vst.msk [vmem:[#allocation3 + $0x118] sm:$0xff] %vm226, %v4046
      %4111 = vst.msk [vmem:[#allocation3 + $0x120] sm:$0xff] %vm226, %v4047
      %4112 = vst.msk [vmem:[#allocation3 + $0x128] sm:$0xff] %vm226, %v4048
      %4113 = vst.msk [vmem:[#allocation3 + $0x130] sm:$0xff] %vm226, %v4049
      %4114 = vst.msk [vmem:[#allocation3 + $0x138] sm:$0xff] %vm226, %v4050
      %4115 = vst.msk [vmem:[#allocation3 + $0x140] sm:$0xff] %vm226, %v4051
      %4116 = vst.msk [vmem:[#allocation3 + $0x148] sm:$0xff] %vm226, %v4052
      %4117 = vst.msk [vmem:[#allocation3 + $0x150] sm:$0xff] %vm226, %v4053
      %4118 = vst.msk [vmem:[#allocation3 + $0x158] sm:$0xff] %vm226, %v4054
      %4119 = vst.msk [vmem:[#allocation3 + $0x160] sm:$0xff] %vm226, %v4055
      %4120 = vst.msk [vmem:[#allocation3 + $0x168] sm:$0xff] %vm226, %v4056
      %4121 = vst.msk [vmem:[#allocation3 + $0x170] sm:$0xff] %vm226, %v4057
      %4122 = vst.msk [vmem:[#allocation3 + $0x178] sm:$0xff] %vm226, %v4058
      %4123 = vst.msk [vmem:[#allocation3 + $0x180] sm:$0xff] %vm226, %v4059
      %4124 = vst.msk [vmem:[#allocation3 + $0x188] sm:$0xff] %vm226, %v4060
      %4125 = vst.msk [vmem:[#allocation3 + $0x190] sm:$0xff] %vm226, %v4061
      %4126 = vst.msk [vmem:[#allocation3 + $0x198] sm:$0xff] %vm226, %v4062
      %4127 = vst.msk [vmem:[#allocation3 + $0x1a0] sm:$0xff] %vm226, %v4063
      %4128 = vst.msk [vmem:[#allocation3 + $0x1a8] sm:$0xff] %vm226, %v4064
      %4129 = vst.msk [vmem:[#allocation3 + $0x1b0] sm:$0xff] %vm226, %v4065
      %4130 = vst.msk [vmem:[#allocation3 + $0x1b8] sm:$0xff] %vm226, %v4066
      %4131 = vst.msk [vmem:[#allocation3 + $0x1c0] sm:$0xff] %vm226, %v4067
      %4132 = vst.msk [vmem:[#allocation3 + $0x1c8] sm:$0xff] %vm226, %v4068
      %4133 = vst.msk [vmem:[#allocation3 + $0x1d0] sm:$0xff] %vm226, %v4069
      %4134 = vst.msk [vmem:[#allocation3 + $0x1d8] sm:$0xff] %vm226, %v4070
      %4135 = vst.msk [vmem:[#allocation3 + $0x1e0] sm:$0xff] %vm226, %v4071
      %4136 = vst.msk [vmem:[#allocation3 + $0x1e8] sm:$0xff] %vm226, %v4072
      %4137 = vst.msk [vmem:[#allocation3 + $0x1f0] sm:$0xff] %vm226, %v4073
      %4138 = vst.msk [vmem:[#allocation3 + $0x1f8] sm:$0xff] %vm226, %v4074
      %v4139 = vld [vmem:[#allocation3 + $0x7] sm:$0xff]
      %v4140 = vld [vmem:[#allocation3 + $0xf] sm:$0xff]
      %v4141 = vld [vmem:[#allocation3 + $0x27] sm:$0xff]
      %v4142 = vld [vmem:[#allocation3 + $0x2f] sm:$0xff]
      %v4143 = vld [vmem:[#allocation3 + $0x47] sm:$0xff]
      %v4144 = vld [vmem:[#allocation3 + $0x4f] sm:$0xff]
      %v4145 = vld [vmem:[#allocation3 + $0x67] sm:$0xff]
      %v4146 = vld [vmem:[#allocation3 + $0x6f] sm:$0xff]
      %v4147 = vld [vmem:[#allocation3 + $0x87] sm:$0xff]
      %v4148 = vld [vmem:[#allocation3 + $0x8f] sm:$0xff]
      %v4149 = vld [vmem:[#allocation3 + $0xa7] sm:$0xff]
      %v4150 = vld [vmem:[#allocation3 + $0xaf] sm:$0xff]
      %v4151 = vld [vmem:[#allocation3 + $0xc7] sm:$0xff]
      %v4152 = vld [vmem:[#allocation3 + $0xcf] sm:$0xff]
      %v4153 = vld [vmem:[#allocation3 + $0xe7] sm:$0xff]
      %v4154 = vld [vmem:[#allocation3 + $0xef] sm:$0xff]
      %v4155 = vld [vmem:[#allocation3 + $0x107] sm:$0xff]
      %v4156 = vld [vmem:[#allocation3 + $0x10f] sm:$0xff]
      %v4157 = vld [vmem:[#allocation3 + $0x127] sm:$0xff]
      %v4158 = vld [vmem:[#allocation3 + $0x12f] sm:$0xff]
      %v4159 = vld [vmem:[#allocation3 + $0x147] sm:$0xff]
      %v4160 = vld [vmem:[#allocation3 + $0x14f] sm:$0xff]
      %v4161 = vld [vmem:[#allocation3 + $0x167] sm:$0xff]
      %v4162 = vld [vmem:[#allocation3 + $0x16f] sm:$0xff]
      %v4163 = vld [vmem:[#allocation3 + $0x187] sm:$0xff]
      %v4164 = vld [vmem:[#allocation3 + $0x18f] sm:$0xff]
      %v4165 = vld [vmem:[#allocation3 + $0x1a7] sm:$0xff]
      %v4166 = vld [vmem:[#allocation3 + $0x1af] sm:$0xff]
      %v4167 = vld [vmem:[#allocation3 + $0x1c7] sm:$0xff]
      %v4168 = vld [vmem:[#allocation3 + $0x1cf] sm:$0xff]
      %v4169 = vld [vmem:[#allocation3 + $0x1e7] sm:$0xff]
      %v4170 = vld [vmem:[#allocation3 + $0x1ef] sm:$0xff]
      %v4171 = vld [vmem:[#allocation3 + $0x8] sm:$0xff]
      %v4172 = vld [vmem:[#allocation3 + $0x10] sm:$0xff]
      %v4173 = vld [vmem:[#allocation3 + $0x28] sm:$0xff]
      %v4174 = vld [vmem:[#allocation3 + $0x30] sm:$0xff]
      %v4175 = vld [vmem:[#allocation3 + $0x48] sm:$0xff]
      %v4176 = vld [vmem:[#allocation3 + $0x50] sm:$0xff]
      %v4177 = vld [vmem:[#allocation3 + $0x68] sm:$0xff]
      %v4178 = vld [vmem:[#allocation3 + $0x70] sm:$0xff]
      %v4179 = vld [vmem:[#allocation3 + $0x88] sm:$0xff]
      %v4180 = vld [vmem:[#allocation3 + $0x90] sm:$0xff]
      %v4181 = vld [vmem:[#allocation3 + $0xa8] sm:$0xff]
      %v4182 = vld [vmem:[#allocation3 + $0xb0] sm:$0xff]
      %v4183 = vld [vmem:[#allocation3 + $0xc8] sm:$0xff]
      %v4184 = vld [vmem:[#allocation3 + $0xd0] sm:$0xff]
      %v4185 = vld [vmem:[#allocation3 + $0xe8] sm:$0xff]
      %v4186 = vld [vmem:[#allocation3 + $0xf0] sm:$0xff]
      %v4187 = vld [vmem:[#allocation3 + $0x108] sm:$0xff]
      %v4188 = vld [vmem:[#allocation3 + $0x110] sm:$0xff]
      %v4189 = vld [vmem:[#allocation3 + $0x128] sm:$0xff]
      %v4190 = vld [vmem:[#allocation3 + $0x130] sm:$0xff]
      %v4191 = vld [vmem:[#allocation3 + $0x148] sm:$0xff]
      %v4192 = vld [vmem:[#allocation3 + $0x150] sm:$0xff]
      %v4193 = vld [vmem:[#allocation3 + $0x168] sm:$0xff]
      %v4194 = vld [vmem:[#allocation3 + $0x170] sm:$0xff]
      %v4195 = vld [vmem:[#allocation3 + $0x188] sm:$0xff]
      %v4196 = vld [vmem:[#allocation3 + $0x190] sm:$0xff]
      %v4197 = vld [vmem:[#allocation3 + $0x1a8] sm:$0xff]
      %v4198 = vld [vmem:[#allocation3 + $0x1b0] sm:$0xff]
      %v4199 = vld [vmem:[#allocation3 + $0x1c8] sm:$0xff]
      %v4200 = vld [vmem:[#allocation3 + $0x1d0] sm:$0xff]
      %v4201 = vld [vmem:[#allocation3 + $0x1e8] sm:$0xff]
      %v4202 = vld [vmem:[#allocation3 + $0x1f0] sm:$0xff]
      %v4203 = vmul.f32 %v4171, 2.0
      %v4204 = vmul.f32 %v4172, 2.0
      %v4205 = vmul.f32 %v4173, 2.0
      %v4206 = vmul.f32 %v4174, 2.0
      %v4207 = vmul.f32 %v4175, 2.0
      %v4208 = vmul.f32 %v4176, 2.0
      %v4209 = vmul.f32 %v4177, 2.0
      %v4210 = vmul.f32 %v4178, 2.0
      %v4211 = vmul.f32 %v4179, 2.0
      %v4212 = vmul.f32 %v4180, 2.0
      %v4213 = vmul.f32 %v4181, 2.0
      %v4214 = vmul.f32 %v4182, 2.0
      %v4215 = vmul.f32 %v4183, 2.0
      %v4216 = vmul.f32 %v4184, 2.0
      %v4217 = vmul.f32 %v4185, 2.0
      %v4218 = vmul.f32 %v4186, 2.0
      %v4219 = vmul.f32 %v4187, 2.0
      %v4220 = vmul.f32 %v4188, 2.0
      %v4221 = vmul.f32 %v4189, 2.0
      %v4222 = vmul.f32 %v4190, 2.0
      %v4223 = vmul.f32 %v4191, 2.0
      %v4224 = vmul.f32 %v4192, 2.0
      %v4225 = vmul.f32 %v4193, 2.0
      %v4226 = vmul.f32 %v4194, 2.0
      %v4227 = vmul.f32 %v4195, 2.0
      %v4228 = vmul.f32 %v4196, 2.0
      %v4229 = vmul.f32 %v4197, 2.0
      %v4230 = vmul.f32 %v4198, 2.0
      %v4231 = vmul.f32 %v4199, 2.0
      %v4232 = vmul.f32 %v4200, 2.0
      %v4233 = vmul.f32 %v4201, 2.0
      %v4234 = vmul.f32 %v4202, 2.0
      %v4235 = vadd.f32 %v4139, %v4203
      %v4236 = vadd.f32 %v4140, %v4204
      %v4237 = vadd.f32 %v4141, %v4205
      %v4238 = vadd.f32 %v4142, %v4206
      %v4239 = vadd.f32 %v4143, %v4207
      %v4240 = vadd.f32 %v4144, %v4208
      %v4241 = vadd.f32 %v4145, %v4209
      %v4242 = vadd.f32 %v4146, %v4210
      %v4243 = vadd.f32 %v4147, %v4211
      %v4244 = vadd.f32 %v4148, %v4212
      %v4245 = vadd.f32 %v4149, %v4213
      %v4246 = vadd.f32 %v4150, %v4214
      %v4247 = vadd.f32 %v4151, %v4215
      %v4248 = vadd.f32 %v4152, %v4216
      %v4249 = vadd.f32 %v4153, %v4217
      %v4250 = vadd.f32 %v4154, %v4218
      %v4251 = vadd.f32 %v4155, %v4219
      %v4252 = vadd.f32 %v4156, %v4220
      %v4253 = vadd.f32 %v4157, %v4221
      %v4254 = vadd.f32 %v4158, %v4222
      %v4255 = vadd.f32 %v4159, %v4223
      %v4256 = vadd.f32 %v4160, %v4224
      %v4257 = vadd.f32 %v4161, %v4225
      %v4258 = vadd.f32 %v4162, %v4226
      %v4259 = vadd.f32 %v4163, %v4227
      %v4260 = vadd.f32 %v4164, %v4228
      %v4261 = vadd.f32 %v4165, %v4229
      %v4262 = vadd.f32 %v4166, %v4230
      %v4263 = vadd.f32 %v4167, %v4231
      %v4264 = vadd.f32 %v4168, %v4232
      %v4265 = vadd.f32 %v4169, %v4233
      %v4266 = vadd.f32 %v4170, %v4234
      %v4267 = vld [vmem:[#allocation3 + $0x9] sm:$0xff]
      %v4268 = vld [vmem:[#allocation3 + $0x11] sm:$0xff]
      %v4269 = vld [vmem:[#allocation3 + $0x29] sm:$0xff]
      %v4270 = vld [vmem:[#allocation3 + $0x31] sm:$0xff]
      %v4271 = vld [vmem:[#allocation3 + $0x49] sm:$0xff]
      %v4272 = vld [vmem:[#allocation3 + $0x51] sm:$0xff]
      %v4273 = vld [vmem:[#allocation3 + $0x69] sm:$0xff]
      %v4274 = vld [vmem:[#allocation3 + $0x71] sm:$0xff]
      %v4275 = vld [vmem:[#allocation3 + $0x89] sm:$0xff]
      %v4276 = vld [vmem:[#allocation3 + $0x91] sm:$0xff]
      %v4277 = vld [vmem:[#allocation3 + $0xa9] sm:$0xff]
      %v4278 = vld [vmem:[#allocation3 + $0xb1] sm:$0xff]
      %v4279 = vld [vmem:[#allocation3 + $0xc9] sm:$0xff]
      %v4280 = vld [vmem:[#allocation3 + $0xd1] sm:$0xff]
      %v4281 = vld [vmem:[#allocation3 + $0xe9] sm:$0xff]
      %v4282 = vld [vmem:[#allocation3 + $0xf1] sm:$0xff]
      %v4283 = vld [vmem:[#allocation3 + $0x109] sm:$0xff]
      %v4284 = vld [vmem:[#allocation3 + $0x111] sm:$0xff]
      %v4285 = vld [vmem:[#allocation3 + $0x129] sm:$0xff]
      %v4286 = vld [vmem:[#allocation3 + $0x131] sm:$0xff]
      %v4287 = vld [vmem:[#allocation3 + $0x149] sm:$0xff]
      %v4288 = vld [vmem:[#allocation3 + $0x151] sm:$0xff]
      %v4289 = vld [vmem:[#allocation3 + $0x169] sm:$0xff]
      %v4290 = vld [vmem:[#allocation3 + $0x171] sm:$0xff]
      %v4291 = vld [vmem:[#allocation3 + $0x189] sm:$0xff]
      %v4292 = vld [vmem:[#allocation3 + $0x191] sm:$0xff]
      %v4293 = vld [vmem:[#allocation3 + $0x1a9] sm:$0xff]
      %v4294 = vld [vmem:[#allocation3 + $0x1b1] sm:$0xff]
      %v4295 = vld [vmem:[#allocation3 + $0x1c9] sm:$0xff]
      %v4296 = vld [vmem:[#allocation3 + $0x1d1] sm:$0xff]
      %v4297 = vld [vmem:[#allocation3 + $0x1e9] sm:$0xff]
      %v4298 = vld [vmem:[#allocation3 + $0x1f1] sm:$0xff]
      %v4299 = vadd.f32 %v4235, %v4267
      %v4300 = vadd.f32 %v4236, %v4268
      %v4301 = vadd.f32 %v4237, %v4269
      %v4302 = vadd.f32 %v4238, %v4270
      %v4303 = vadd.f32 %v4239, %v4271
      %v4304 = vadd.f32 %v4240, %v4272
      %v4305 = vadd.f32 %v4241, %v4273
      %v4306 = vadd.f32 %v4242, %v4274
      %v4307 = vadd.f32 %v4243, %v4275
      %v4308 = vadd.f32 %v4244, %v4276
      %v4309 = vadd.f32 %v4245, %v4277
      %v4310 = vadd.f32 %v4246, %v4278
      %v4311 = vadd.f32 %v4247, %v4279
      %v4312 = vadd.f32 %v4248, %v4280
      %v4313 = vadd.f32 %v4249, %v4281
      %v4314 = vadd.f32 %v4250, %v4282
      %v4315 = vadd.f32 %v4251, %v4283
      %v4316 = vadd.f32 %v4252, %v4284
      %v4317 = vadd.f32 %v4253, %v4285
      %v4318 = vadd.f32 %v4254, %v4286
      %v4319 = vadd.f32 %v4255, %v4287
      %v4320 = vadd.f32 %v4256, %v4288
      %v4321 = vadd.f32 %v4257, %v4289
      %v4322 = vadd.f32 %v4258, %v4290
      %v4323 = vadd.f32 %v4259, %v4291
      %v4324 = vadd.f32 %v4260, %v4292
      %v4325 = vadd.f32 %v4261, %v4293
      %v4326 = vadd.f32 %v4262, %v4294
      %v4327 = vadd.f32 %v4263, %v4295
      %v4328 = vadd.f32 %v4264, %v4296
      %v4329 = vadd.f32 %v4265, %v4297
      %v4330 = vadd.f32 %v4266, %v4298
      %4331 = vst.msk [vmem:[%s236 + $0x8] sm:$0xff] %vm226, %v4299
      %4332 = vst.msk [vmem:[%s236 + $0x10] sm:$0xff] %vm226, %v4300
      %4333 = vst.msk [vmem:[%s236 + $0x28] sm:$0xff] %vm226, %v4301
      %4334 = vst.msk [vmem:[%s236 + $0x30] sm:$0xff] %vm226, %v4302
      %4335 = vst.msk [vmem:[%s236 + $0x48] sm:$0xff] %vm226, %v4303
      %4336 = vst.msk [vmem:[%s236 + $0x50] sm:$0xff] %vm226, %v4304
      %4337 = vst.msk [vmem:[%s236 + $0x68] sm:$0xff] %vm226, %v4305
      %4338 = vst.msk [vmem:[%s236 + $0x70] sm:$0xff] %vm226, %v4306
      %4339 = vst.msk [vmem:[%s236 + $0x88] sm:$0xff] %vm226, %v4307
      %4340 = vst.msk [vmem:[%s236 + $0x90] sm:$0xff] %vm226, %v4308
      %4341 = vst.msk [vmem:[%s236 + $0xa8] sm:$0xff] %vm226, %v4309
      %4342 = vst.msk [vmem:[%s236 + $0xb0] sm:$0xff] %vm226, %v4310
      %4343 = vst.msk [vmem:[%s236 + $0xc8] sm:$0xff] %vm226, %v4311
      %4344 = vst.msk [vmem:[%s236 + $0xd0] sm:$0xff] %vm226, %v4312
      %4345 = vst.msk [vmem:[%s236 + $0xe8] sm:$0xff] %vm226, %v4313
      %4346 = vst.msk [vmem:[%s236 + $0xf0] sm:$0xff] %vm226, %v4314
      %4347 = vst.msk [vmem:[%s236 + $0x108] sm:$0xff] %vm226, %v4315
      %4348 = vst.msk [vmem:[%s236 + $0x110] sm:$0xff] %vm226, %v4316
      %4349 = vst.msk [vmem:[%s236 + $0x128] sm:$0xff] %vm226, %v4317
      %4350 = vst.msk [vmem:[%s236 + $0x130] sm:$0xff] %vm226, %v4318
      %4351 = vst.msk [vmem:[%s236 + $0x148] sm:$0xff] %vm226, %v4319
      %4352 = vst.msk [vmem:[%s236 + $0x150] sm:$0xff] %vm226, %v4320
      %4353 = vst.msk [vmem:[%s236 + $0x168] sm:$0xff] %vm226, %v4321
      %4354 = vst.msk [vmem:[%s236 + $0x170] sm:$0xff] %vm226, %v4322
      %4355 = vst.msk [vmem:[%s236 + $0x188] sm:$0xff] %vm226, %v4323
      %4356 = vst.msk [vmem:[%s236 + $0x190] sm:$0xff] %vm226, %v4324
      %4357 = vst.msk [vmem:[%s236 + $0x1a8] sm:$0xff] %vm226, %v4325
      %4358 = vst.msk [vmem:[%s236 + $0x1b0] sm:$0xff] %vm226, %v4326
      %4359 = vst.msk [vmem:[%s236 + $0x1c8] sm:$0xff] %vm226, %v4327
      %4360 = vst.msk [vmem:[%s236 + $0x1d0] sm:$0xff] %vm226, %v4328
      %4361 = vst.msk [vmem:[%s236 + $0x1e8] sm:$0xff] %vm226, %v4329
      %4362 = vst.msk [vmem:[%s236 + $0x1f0] sm:$0xff] %vm226, %v4330
      %s4363 = scalar_lea.vmem [#allocation2], 7
      %v4364 = vld [vmem:[%s4363] ss:$2 sm:$0xff]
      %s4365 = scalar_lea.vmem [#allocation2], 39
      %v4366 = vld [vmem:[%s4365] ss:$2 sm:$0xff]
      %s4367 = scalar_lea.vmem [#allocation2], 71
      %v4368 = vld [vmem:[%s4367] ss:$2 sm:$0xff]
      %s4369 = scalar_lea.vmem [#allocation2], 103
      %v4370 = vld [vmem:[%s4369] ss:$2 sm:$0xff]
      %s4371 = scalar_lea.vmem [#allocation2], 135
      %v4372 = vld [vmem:[%s4371] ss:$2 sm:$0xff]
      %s4373 = scalar_lea.vmem [#allocation2], 167
      %v4374 = vld [vmem:[%s4373] ss:$2 sm:$0xff]
      %s4375 = scalar_lea.vmem [#allocation2], 199
      %v4376 = vld [vmem:[%s4375] ss:$2 sm:$0xff]
      %s4377 = scalar_lea.vmem [#allocation2], 231
      %v4378 = vld [vmem:[%s4377] ss:$2 sm:$0xff]
      %s4379 = scalar_lea.vmem [#allocation2], 263
      %v4380 = vld [vmem:[%s4379] ss:$2 sm:$0xff]
      %s4381 = scalar_lea.vmem [#allocation2], 295
      %v4382 = vld [vmem:[%s4381] ss:$2 sm:$0xff]
      %s4383 = scalar_lea.vmem [#allocation2], 327
      %v4384 = vld [vmem:[%s4383] ss:$2 sm:$0xff]
      %s4385 = scalar_lea.vmem [#allocation2], 359
      %v4386 = vld [vmem:[%s4385] ss:$2 sm:$0xff]
      %s4387 = scalar_lea.vmem [#allocation2], 391
      %v4388 = vld [vmem:[%s4387] ss:$2 sm:$0xff]
      %s4389 = scalar_lea.vmem [#allocation2], 423
      %v4390 = vld [vmem:[%s4389] ss:$2 sm:$0xff]
      %s4391 = scalar_lea.vmem [#allocation2], 455
      %v4392 = vld [vmem:[%s4391] ss:$2 sm:$0xff]
      %s4393 = scalar_lea.vmem [#allocation2], 487
      %v4394 = vld [vmem:[%s4393] ss:$2 sm:$0xff]
      %s4395 = scalar_lea.vmem [#allocation2], 519
      %v4396 = vld [vmem:[%s4395] ss:$2 sm:$0xff]
      %s4397 = scalar_lea.vmem [#allocation2], 551
      %v4398 = vld [vmem:[%s4397] ss:$2 sm:$0xff]
      %4399 = vst.msk [vmem:[#allocation5] sm:$0xff] %vm226, %v4364
      %4400 = vst.msk [vmem:[#allocation5 + $0x8] sm:$0xff] %vm226, %v4366
      %4401 = vst.msk [vmem:[#allocation5 + $0x10] sm:$0xff] %vm226, %v4368
      %4402 = vst.msk [vmem:[#allocation5 + $0x18] sm:$0xff] %vm226, %v4370
      %4403 = vst.msk [vmem:[#allocation5 + $0x20] sm:$0xff] %vm226, %v4372
      %4404 = vst.msk [vmem:[#allocation5 + $0x28] sm:$0xff] %vm226, %v4374
      %4405 = vst.msk [vmem:[#allocation5 + $0x30] sm:$0xff] %vm226, %v4376
      %4406 = vst.msk [vmem:[#allocation5 + $0x38] sm:$0xff] %vm226, %v4378
      %4407 = vst.msk [vmem:[#allocation5 + $0x40] sm:$0xff] %vm226, %v4380
      %4408 = vst.msk [vmem:[#allocation5 + $0x48] sm:$0xff] %vm226, %v4382
      %4409 = vst.msk [vmem:[#allocation5 + $0x50] sm:$0xff] %vm226, %v4384
      %4410 = vst.msk [vmem:[#allocation5 + $0x58] sm:$0xff] %vm226, %v4386
      %4411 = vst.msk [vmem:[#allocation5 + $0x60] sm:$0xff] %vm226, %v4388
      %4412 = vst.msk [vmem:[#allocation5 + $0x68] sm:$0xff] %vm226, %v4390
      %4413 = vst.msk [vmem:[#allocation5 + $0x70] sm:$0xff] %vm226, %v4392
      %4414 = vst.msk [vmem:[#allocation5 + $0x78] sm:$0xff] %vm226, %v4394
      %4415 = vst.msk [vmem:[#allocation5 + $0x80] sm:$0xff] %vm226, %v4396
      %4416 = vst.msk [vmem:[#allocation5 + $0x88] sm:$0xff] %vm226, %v4398
      %s4417 = scalar_lea.vmem [#allocation2], 8
      %v4418 = vld [vmem:[%s4417] ss:$2 sm:$0xff]
      %s4419 = scalar_lea.vmem [#allocation2], 40
      %v4420 = vld [vmem:[%s4419] ss:$2 sm:$0xff]
      %s4421 = scalar_lea.vmem [#allocation2], 72
      %v4422 = vld [vmem:[%s4421] ss:$2 sm:$0xff]
      %s4423 = scalar_lea.vmem [#allocation2], 104
      %v4424 = vld [vmem:[%s4423] ss:$2 sm:$0xff]
      %s4425 = scalar_lea.vmem [#allocation2], 136
      %v4426 = vld [vmem:[%s4425] ss:$2 sm:$0xff]
      %s4427 = scalar_lea.vmem [#allocation2], 168
      %v4428 = vld [vmem:[%s4427] ss:$2 sm:$0xff]
      %s4429 = scalar_lea.vmem [#allocation2], 200
      %v4430 = vld [vmem:[%s4429] ss:$2 sm:$0xff]
      %s4431 = scalar_lea.vmem [#allocation2], 232
      %v4432 = vld [vmem:[%s4431] ss:$2 sm:$0xff]
      %s4433 = scalar_lea.vmem [#allocation2], 264
      %v4434 = vld [vmem:[%s4433] ss:$2 sm:$0xff]
      %s4435 = scalar_lea.vmem [#allocation2], 296
      %v4436 = vld [vmem:[%s4435] ss:$2 sm:$0xff]
      %s4437 = scalar_lea.vmem [#allocation2], 328
      %v4438 = vld [vmem:[%s4437] ss:$2 sm:$0xff]
      %s4439 = scalar_lea.vmem [#allocation2], 360
      %v4440 = vld [vmem:[%s4439] ss:$2 sm:$0xff]
      %s4441 = scalar_lea.vmem [#allocation2], 392
      %v4442 = vld [vmem:[%s4441] ss:$2 sm:$0xff]
      %s4443 = scalar_lea.vmem [#allocation2], 424
      %v4444 = vld [vmem:[%s4443] ss:$2 sm:$0xff]
      %s4445 = scalar_lea.vmem [#allocation2], 456
      %v4446 = vld [vmem:[%s4445] ss:$2 sm:$0xff]
      %s4447 = scalar_lea.vmem [#allocation2], 488
      %v4448 = vld [vmem:[%s4447] ss:$2 sm:$0xff]
      %s4449 = scalar_lea.vmem [#allocation2], 520
      %v4450 = vld [vmem:[%s4449] ss:$2 sm:$0xff]
      %s4451 = scalar_lea.vmem [#allocation2], 552
      %v4452 = vld [vmem:[%s4451] ss:$2 sm:$0xff]
      %4453 = vst.msk [vmem:[#allocation6] sm:$0xff] %vm226, %v4418
      %4454 = vst.msk [vmem:[#allocation6 + $0x8] sm:$0xff] %vm226, %v4420
      %4455 = vst.msk [vmem:[#allocation6 + $0x10] sm:$0xff] %vm226, %v4422
      %4456 = vst.msk [vmem:[#allocation6 + $0x18] sm:$0xff] %vm226, %v4424
      %4457 = vst.msk [vmem:[#allocation6 + $0x20] sm:$0xff] %vm226, %v4426
      %4458 = vst.msk [vmem:[#allocation6 + $0x28] sm:$0xff] %vm226, %v4428
      %4459 = vst.msk [vmem:[#allocation6 + $0x30] sm:$0xff] %vm226, %v4430
      %4460 = vst.msk [vmem:[#allocation6 + $0x38] sm:$0xff] %vm226, %v4432
      %4461 = vst.msk [vmem:[#allocation6 + $0x40] sm:$0xff] %vm226, %v4434
      %4462 = vst.msk [vmem:[#allocation6 + $0x48] sm:$0xff] %vm226, %v4436
      %4463 = vst.msk [vmem:[#allocation6 + $0x50] sm:$0xff] %vm226, %v4438
      %4464 = vst.msk [vmem:[#allocation6 + $0x58] sm:$0xff] %vm226, %v4440
      %4465 = vst.msk [vmem:[#allocation6 + $0x60] sm:$0xff] %vm226, %v4442
      %4466 = vst.msk [vmem:[#allocation6 + $0x68] sm:$0xff] %vm226, %v4444
      %4467 = vst.msk [vmem:[#allocation6 + $0x70] sm:$0xff] %vm226, %v4446
      %4468 = vst.msk [vmem:[#allocation6 + $0x78] sm:$0xff] %vm226, %v4448
      %4469 = vst.msk [vmem:[#allocation6 + $0x80] sm:$0xff] %vm226, %v4450
      %4470 = vst.msk [vmem:[#allocation6 + $0x88] sm:$0xff] %vm226, %v4452
      %s4471 = scalar_lea.vmem [#allocation2], 9
      %v4472 = vld [vmem:[%s4471] ss:$2 sm:$0xff]
      %s4473 = scalar_lea.vmem [#allocation2], 41
      %v4474 = vld [vmem:[%s4473] ss:$2 sm:$0xff]
      %s4475 = scalar_lea.vmem [#allocation2], 73
      %v4476 = vld [vmem:[%s4475] ss:$2 sm:$0xff]
      %s4477 = scalar_lea.vmem [#allocation2], 105
      %v4478 = vld [vmem:[%s4477] ss:$2 sm:$0xff]
      %s4479 = scalar_lea.vmem [#allocation2], 137
      %v4480 = vld [vmem:[%s4479] ss:$2 sm:$0xff]
      %s4481 = scalar_lea.vmem [#allocation2], 169
      %v4482 = vld [vmem:[%s4481] ss:$2 sm:$0xff]
      %s4483 = scalar_lea.vmem [#allocation2], 201
      %v4484 = vld [vmem:[%s4483] ss:$2 sm:$0xff]
      %s4485 = scalar_lea.vmem [#allocation2], 233
      %v4486 = vld [vmem:[%s4485] ss:$2 sm:$0xff]
      %s4487 = scalar_lea.vmem [#allocation2], 265
      %v4488 = vld [vmem:[%s4487] ss:$2 sm:$0xff]
      %s4489 = scalar_lea.vmem [#allocation2], 297
      %v4490 = vld [vmem:[%s4489] ss:$2 sm:$0xff]
      %s4491 = scalar_lea.vmem [#allocation2], 329
      %v4492 = vld [vmem:[%s4491] ss:$2 sm:$0xff]
      %s4493 = scalar_lea.vmem [#allocation2], 361
      %v4494 = vld [vmem:[%s4493] ss:$2 sm:$0xff]
      %s4495 = scalar_lea.vmem [#allocation2], 393
      %v4496 = vld [vmem:[%s4495] ss:$2 sm:$0xff]
      %s4497 = scalar_lea.vmem [#allocation2], 425
      %v4498 = vld [vmem:[%s4497] ss:$2 sm:$0xff]
      %s4499 = scalar_lea.vmem [#allocation2], 457
      %v4500 = vld [vmem:[%s4499] ss:$2 sm:$0xff]
      %s4501 = scalar_lea.vmem [#allocation2], 489
      %v4502 = vld [vmem:[%s4501] ss:$2 sm:$0xff]
      %s4503 = scalar_lea.vmem [#allocation2], 521
      %v4504 = vld [vmem:[%s4503] ss:$2 sm:$0xff]
      %s4505 = scalar_lea.vmem [#allocation2], 553
      %v4506 = vld [vmem:[%s4505] ss:$2 sm:$0xff]
      %4507 = vst.msk [vmem:[#allocation7] sm:$0xff] %vm226, %v4472
      %4508 = vst.msk [vmem:[#allocation7 + $0x8] sm:$0xff] %vm226, %v4474
      %4509 = vst.msk [vmem:[#allocation7 + $0x10] sm:$0xff] %vm226, %v4476
      %4510 = vst.msk [vmem:[#allocation7 + $0x18] sm:$0xff] %vm226, %v4478
      %4511 = vst.msk [vmem:[#allocation7 + $0x20] sm:$0xff] %vm226, %v4480
      %4512 = vst.msk [vmem:[#allocation7 + $0x28] sm:$0xff] %vm226, %v4482
      %4513 = vst.msk [vmem:[#allocation7 + $0x30] sm:$0xff] %vm226, %v4484
      %4514 = vst.msk [vmem:[#allocation7 + $0x38] sm:$0xff] %vm226, %v4486
      %4515 = vst.msk [vmem:[#allocation7 + $0x40] sm:$0xff] %vm226, %v4488
      %4516 = vst.msk [vmem:[#allocation7 + $0x48] sm:$0xff] %vm226, %v4490
      %4517 = vst.msk [vmem:[#allocation7 + $0x50] sm:$0xff] %vm226, %v4492
      %4518 = vst.msk [vmem:[#allocation7 + $0x58] sm:$0xff] %vm226, %v4494
      %4519 = vst.msk [vmem:[#allocation7 + $0x60] sm:$0xff] %vm226, %v4496
      %4520 = vst.msk [vmem:[#allocation7 + $0x68] sm:$0xff] %vm226, %v4498
      %4521 = vst.msk [vmem:[#allocation7 + $0x70] sm:$0xff] %vm226, %v4500
      %4522 = vst.msk [vmem:[#allocation7 + $0x78] sm:$0xff] %vm226, %v4502
      %4523 = vst.msk [vmem:[#allocation7 + $0x80] sm:$0xff] %vm226, %v4504
      %4524 = vst.msk [vmem:[#allocation7 + $0x88] sm:$0xff] %vm226, %v4506
      %v4525 = vld [vmem:[#allocation5] sm:$0xff]
      %v4526 = vld [vmem:[#allocation5 + $0x10] sm:$0xff]
      %v4527 = vld [vmem:[#allocation5 + $0x20] sm:$0xff]
      %v4528 = vld [vmem:[#allocation5 + $0x30] sm:$0xff]
      %v4529 = vld [vmem:[#allocation5 + $0x40] sm:$0xff]
      %v4530 = vld [vmem:[#allocation5 + $0x50] sm:$0xff]
      %v4531 = vld [vmem:[#allocation5 + $0x60] sm:$0xff]
      %v4532 = vld [vmem:[#allocation5 + $0x70] sm:$0xff]
      %v4533 = vpack.c.bf16 %v4526, %v4525
      %v4534 = vpack.c.bf16 %v4528, %v4527
      %v4535 = vpack.c.bf16 %v4530, %v4529
      %v4536 = vpack.c.bf16 %v4532, %v4531
      %v4537 = vld [vmem:[%s3] sm:$0x3]
      %v4539 = vsel %vm226, %v4533, 0
      %v4542 = vsel %vm226, %v4534, 0
      %v4545 = vsel %vm226, %v4535, 0
      %v4548 = vsel %vm226, %v4536, 0
      %v4551 = vsel %vm430, %v4537, 0
      %4553 = vmatprep.subr.bf16.mxu0 0
      %4554 = vmatpush1.bf16.msra.mxu0 0
      %4555 = vmatprep.subr.bf16.mxu0 0
      %4556 = vmatpush1.bf16.msra.mxu0 0
      %4557 = vmatprep.subr.bf16.mxu0 0
      %4558 = vmatpush1.bf16.msra.mxu0 0
      %4559 = vmatprep.subr.bf16.mxu0 0
      %4560 = vmatpush1.bf16.msra.mxu0 0
      %4561 = vmatprep.subr.bf16.mxu0 0
      %4562 = vmatpush1.bf16.msra.mxu0 0
      %4563 = vmatprep.subr.bf16.mxu0 0
      %4564 = vmatpush1.bf16.msra.mxu0 0
      %4565 = vmatprep.subr.bf16.mxu0 0
      %4566 = vmatpush1.bf16.msra.mxu0 0
      %4567 = vmatprep.subr.bf16.mxu0 0
      %4568 = vmatpush1.bf16.msra.mxu0 %v4551
      %4569 = vmatprep.subr.bf16.mxu0 0
      %4570 = vmatpush2.bf16.msra.mxu0 0
      %4571 = vmatprep.subr.bf16.mxu0 0
      %4572 = vmatpush2.bf16.msra.mxu0 0
      %4573 = vmatprep.subr.bf16.mxu0 0
      %4574 = vmatpush2.bf16.msra.mxu0 0
      %4575 = vmatprep.subr.bf16.mxu0 0
      %4576 = vmatpush2.bf16.msra.mxu0 0
      %4577 = vmatprep.subr.bf16.mxu0 0
      %4578 = vmatpush2.bf16.msra.mxu0 0
      %4579 = vmatprep.subr.bf16.mxu0 0
      %4580 = vmatpush2.bf16.msra.mxu0 0
      %4581 = vmatprep.subr.bf16.mxu0 0
      %4582 = vmatpush2.bf16.msra.mxu0 0
      %4583 = vmatprep.subr.bf16.mxu0 0
      %4584 = vmatpush2.bf16.msra.mxu0 0
      %4585 = vmatprep.mubr.bf16.mxu0 0
      %4586 = vmatmul.mubr.bf16.gmra.mxu0 %v4539
      %v4587 = vpop.f32.mrf.mxu0
      %v4588 = vadd.f32 0.0, %v4587
      %v4589 = vpop.f32.mrf.mxu0
      %v4590 = vpop.f32.mrf.mxu0
      %v4591 = vadd.f32 0.0, %v4590
      %v4592 = vpop.f32.mrf.mxu0
      %4593 = vmatprep.mubr.bf16.mxu0 0
      %4594 = vmatmul.mubr.bf16.gmra.mxu0 %v4542
      %v4595 = vpop.f32.mrf.mxu0
      %v4596 = vadd.f32 0.0, %v4595
      %v4597 = vpop.f32.mrf.mxu0
      %v4598 = vpop.f32.mrf.mxu0
      %v4599 = vadd.f32 0.0, %v4598
      %v4600 = vpop.f32.mrf.mxu0
      %4601 = vmatprep.mubr.bf16.mxu0 0
      %4602 = vmatmul.mubr.bf16.gmra.mxu0 %v4545
      %v4603 = vpop.f32.mrf.mxu0
      %v4604 = vadd.f32 0.0, %v4603
      %v4605 = vpop.f32.mrf.mxu0
      %v4606 = vpop.f32.mrf.mxu0
      %v4607 = vadd.f32 0.0, %v4606
      %v4608 = vpop.f32.mrf.mxu0
      %4609 = vmatprep.mubr.bf16.mxu0 0
      %4610 = vmatmul.mubr.bf16.gmra.mxu0 %v4548
      %v4611 = vpop.f32.mrf.mxu0
      %v4612 = vadd.f32 0.0, %v4611
      %v4613 = vpop.f32.mrf.mxu0
      %v4614 = vpop.f32.mrf.mxu0
      %v4615 = vadd.f32 0.0, %v4614
      %v4616 = vpop.f32.mrf.mxu0
      %4617 = vdwg.mxu0
      %vm4618 = vcmask 64512
      %4619 = vst.msk [vmem:[%s224] sm:$0xff] %vm4618, %v4588
      %4620 = vst.msk [vmem:[%s224 + $0x8] sm:$0xff] %vm4618, %v4591
      %4621 = vst.msk [vmem:[%s224 + $0x10] sm:$0xff] %vm4618, %v4596
      %4622 = vst.msk [vmem:[%s224 + $0x18] sm:$0xff] %vm4618, %v4599
      %4623 = vst.msk [vmem:[%s224 + $0x20] sm:$0xff] %vm4618, %v4604
      %4624 = vst.msk [vmem:[%s224 + $0x28] sm:$0xff] %vm4618, %v4607
      %4625 = vst.msk [vmem:[%s224 + $0x30] sm:$0xff] %vm4618, %v4612
      %4626 = vst.msk [vmem:[%s224 + $0x38] sm:$0xff] %vm4618, %v4615
      %v4627 = vld [vmem:[#allocation6] sm:$0xff]
      %v4628 = vld [vmem:[#allocation6 + $0x10] sm:$0xff]
      %v4629 = vld [vmem:[#allocation6 + $0x20] sm:$0xff]
      %v4630 = vld [vmem:[#allocation6 + $0x30] sm:$0xff]
      %v4631 = vld [vmem:[#allocation6 + $0x40] sm:$0xff]
      %v4632 = vld [vmem:[#allocation6 + $0x50] sm:$0xff]
      %v4633 = vld [vmem:[#allocation6 + $0x60] sm:$0xff]
      %v4634 = vld [vmem:[#allocation6 + $0x70] sm:$0xff]
      %v4635 = vpack.c.bf16 %v4628, %v4627
      %v4636 = vpack.c.bf16 %v4630, %v4629
      %v4637 = vpack.c.bf16 %v4632, %v4631
      %v4638 = vpack.c.bf16 %v4634, %v4633
      %s4639 = scalar_lea.vmem %s3, 2
      %v4640 = vld [vmem:[%s4639] sm:$0x3]
      %v4642 = vsel %vm226, %v4635, 0
      %v4645 = vsel %vm226, %v4636, 0
      %v4648 = vsel %vm226, %v4637, 0
      %v4651 = vsel %vm226, %v4638, 0
      %v4654 = vsel %vm430, %v4640, 0
      %4656 = vmatprep.subr.bf16.mxu0 0
      %4657 = vmatpush1.bf16.msra.mxu0 0
      %4658 = vmatprep.subr.bf16.mxu0 0
      %4659 = vmatpush1.bf16.msra.mxu0 0
      %4660 = vmatprep.subr.bf16.mxu0 0
      %4661 = vmatpush1.bf16.msra.mxu0 0
      %4662 = vmatprep.subr.bf16.mxu0 0
      %4663 = vmatpush1.bf16.msra.mxu0 0
      %4664 = vmatprep.subr.bf16.mxu0 0
      %4665 = vmatpush1.bf16.msra.mxu0 0
      %4666 = vmatprep.subr.bf16.mxu0 0
      %4667 = vmatpush1.bf16.msra.mxu0 0
      %4668 = vmatprep.subr.bf16.mxu0 0
      %4669 = vmatpush1.bf16.msra.mxu0 0
      %4670 = vmatprep.subr.bf16.mxu0 0
      %4671 = vmatpush1.bf16.msra.mxu0 %v4654
      %4672 = vmatprep.subr.bf16.mxu0 0
      %4673 = vmatpush2.bf16.msra.mxu0 0
      %4674 = vmatprep.subr.bf16.mxu0 0
      %4675 = vmatpush2.bf16.msra.mxu0 0
      %4676 = vmatprep.subr.bf16.mxu0 0
      %4677 = vmatpush2.bf16.msra.mxu0 0
      %4678 = vmatprep.subr.bf16.mxu0 0
      %4679 = vmatpush2.bf16.msra.mxu0 0
      %4680 = vmatprep.subr.bf16.mxu0 0
      %4681 = vmatpush2.bf16.msra.mxu0 0
      %4682 = vmatprep.subr.bf16.mxu0 0
      %4683 = vmatpush2.bf16.msra.mxu0 0
      %4684 = vmatprep.subr.bf16.mxu0 0
      %4685 = vmatpush2.bf16.msra.mxu0 0
      %4686 = vmatprep.subr.bf16.mxu0 0
      %4687 = vmatpush2.bf16.msra.mxu0 0
      %4688 = vmatprep.mubr.bf16.mxu0 0
      %4689 = vmatmul.mubr.bf16.gmra.mxu0 %v4642
      %v4690 = vpop.f32.mrf.mxu0
      %v4691 = vadd.f32 0.0, %v4690
      %v4692 = vpop.f32.mrf.mxu0
      %v4693 = vpop.f32.mrf.mxu0
      %v4694 = vadd.f32 0.0, %v4693
      %v4695 = vpop.f32.mrf.mxu0
      %4696 = vmatprep.mubr.bf16.mxu0 0
      %4697 = vmatmul.mubr.bf16.gmra.mxu0 %v4645
      %v4698 = vpop.f32.mrf.mxu0
      %v4699 = vadd.f32 0.0, %v4698
      %v4700 = vpop.f32.mrf.mxu0
      %v4701 = vpop.f32.mrf.mxu0
      %v4702 = vadd.f32 0.0, %v4701
      %v4703 = vpop.f32.mrf.mxu0
      %4704 = vmatprep.mubr.bf16.mxu0 0
      %4705 = vmatmul.mubr.bf16.gmra.mxu0 %v4648
      %v4706 = vpop.f32.mrf.mxu0
      %v4707 = vadd.f32 0.0, %v4706
      %v4708 = vpop.f32.mrf.mxu0
      %v4709 = vpop.f32.mrf.mxu0
      %v4710 = vadd.f32 0.0, %v4709
      %v4711 = vpop.f32.mrf.mxu0
      %4712 = vmatprep.mubr.bf16.mxu0 0
      %4713 = vmatmul.mubr.bf16.gmra.mxu0 %v4651
      %v4714 = vpop.f32.mrf.mxu0
      %v4715 = vadd.f32 0.0, %v4714
      %v4716 = vpop.f32.mrf.mxu0
      %v4717 = vpop.f32.mrf.mxu0
      %v4718 = vadd.f32 0.0, %v4717
      %v4719 = vpop.f32.mrf.mxu0
      %4720 = vdwg.mxu0
      %v4721 = vld [vmem:[%s224] sm:$0xff]
      %v4722 = vld [vmem:[%s224 + $0x8] sm:$0xff]
      %v4723 = vld [vmem:[%s224 + $0x10] sm:$0xff]
      %v4724 = vld [vmem:[%s224 + $0x18] sm:$0xff]
      %v4725 = vld [vmem:[%s224 + $0x20] sm:$0xff]
      %v4726 = vld [vmem:[%s224 + $0x28] sm:$0xff]
      %v4727 = vld [vmem:[%s224 + $0x30] sm:$0xff]
      %v4728 = vld [vmem:[%s224 + $0x38] sm:$0xff]
      %v4729 = vadd.f32 %v4721, %v4691
      %v4730 = vadd.f32 %v4722, %v4694
      %v4731 = vadd.f32 %v4723, %v4699
      %v4732 = vadd.f32 %v4724, %v4702
      %v4733 = vadd.f32 %v4725, %v4707
      %v4734 = vadd.f32 %v4726, %v4710
      %v4735 = vadd.f32 %v4727, %v4715
      %v4736 = vadd.f32 %v4728, %v4718
      %4737 = vst.msk [vmem:[%s224] sm:$0xff] %vm4618, %v4729
      %4738 = vst.msk [vmem:[%s224 + $0x8] sm:$0xff] %vm4618, %v4730
      %4739 = vst.msk [vmem:[%s224 + $0x10] sm:$0xff] %vm4618, %v4731
      %4740 = vst.msk [vmem:[%s224 + $0x18] sm:$0xff] %vm4618, %v4732
      %4741 = vst.msk [vmem:[%s224 + $0x20] sm:$0xff] %vm4618, %v4733
      %4742 = vst.msk [vmem:[%s224 + $0x28] sm:$0xff] %vm4618, %v4734
      %4743 = vst.msk [vmem:[%s224 + $0x30] sm:$0xff] %vm4618, %v4735
      %4744 = vst.msk [vmem:[%s224 + $0x38] sm:$0xff] %vm4618, %v4736
      %v4745 = vld [vmem:[#allocation7] sm:$0xff]
      %v4746 = vld [vmem:[#allocation7 + $0x10] sm:$0xff]
      %v4747 = vld [vmem:[#allocation7 + $0x20] sm:$0xff]
      %v4748 = vld [vmem:[#allocation7 + $0x30] sm:$0xff]
      %v4749 = vld [vmem:[#allocation7 + $0x40] sm:$0xff]
      %v4750 = vld [vmem:[#allocation7 + $0x50] sm:$0xff]
      %v4751 = vld [vmem:[#allocation7 + $0x60] sm:$0xff]
      %v4752 = vld [vmem:[#allocation7 + $0x70] sm:$0xff]
      %v4753 = vpack.c.bf16 %v4746, %v4745
      %v4754 = vpack.c.bf16 %v4748, %v4747
      %v4755 = vpack.c.bf16 %v4750, %v4749
      %v4756 = vpack.c.bf16 %v4752, %v4751
      %s4757 = scalar_lea.vmem %s3, 4
      %v4758 = vld [vmem:[%s4757] sm:$0x3]
      %v4760 = vsel %vm226, %v4753, 0
      %v4763 = vsel %vm226, %v4754, 0
      %v4766 = vsel %vm226, %v4755, 0
      %v4769 = vsel %vm226, %v4756, 0
      %v4772 = vsel %vm430, %v4758, 0
      %4774 = vmatprep.subr.bf16.mxu0 0
      %4775 = vmatpush1.bf16.msra.mxu0 0
      %4776 = vmatprep.subr.bf16.mxu0 0
      %4777 = vmatpush1.bf16.msra.mxu0 0
      %4778 = vmatprep.subr.bf16.mxu0 0
      %4779 = vmatpush1.bf16.msra.mxu0 0
      %4780 = vmatprep.subr.bf16.mxu0 0
      %4781 = vmatpush1.bf16.msra.mxu0 0
      %4782 = vmatprep.subr.bf16.mxu0 0
      %4783 = vmatpush1.bf16.msra.mxu0 0
      %4784 = vmatprep.subr.bf16.mxu0 0
      %4785 = vmatpush1.bf16.msra.mxu0 0
      %4786 = vmatprep.subr.bf16.mxu0 0
      %4787 = vmatpush1.bf16.msra.mxu0 0
      %4788 = vmatprep.subr.bf16.mxu0 0
      %4789 = vmatpush1.bf16.msra.mxu0 %v4772
      %4790 = vmatprep.subr.bf16.mxu0 0
      %4791 = vmatpush2.bf16.msra.mxu0 0
      %4792 = vmatprep.subr.bf16.mxu0 0
      %4793 = vmatpush2.bf16.msra.mxu0 0
      %4794 = vmatprep.subr.bf16.mxu0 0
      %4795 = vmatpush2.bf16.msra.mxu0 0
      %4796 = vmatprep.subr.bf16.mxu0 0
      %4797 = vmatpush2.bf16.msra.mxu0 0
      %4798 = vmatprep.subr.bf16.mxu0 0
      %4799 = vmatpush2.bf16.msra.mxu0 0
      %4800 = vmatprep.subr.bf16.mxu0 0
      %4801 = vmatpush2.bf16.msra.mxu0 0
      %4802 = vmatprep.subr.bf16.mxu0 0
      %4803 = vmatpush2.bf16.msra.mxu0 0
      %4804 = vmatprep.subr.bf16.mxu0 0
      %4805 = vmatpush2.bf16.msra.mxu0 0
      %4806 = vmatprep.mubr.bf16.mxu0 0
      %4807 = vmatmul.mubr.bf16.gmra.mxu0 %v4760
      %v4808 = vpop.f32.mrf.mxu0
      %v4809 = vadd.f32 0.0, %v4808
      %v4810 = vpop.f32.mrf.mxu0
      %v4811 = vpop.f32.mrf.mxu0
      %v4812 = vadd.f32 0.0, %v4811
      %v4813 = vpop.f32.mrf.mxu0
      %4814 = vmatprep.mubr.bf16.mxu0 0
      %4815 = vmatmul.mubr.bf16.gmra.mxu0 %v4763
      %v4816 = vpop.f32.mrf.mxu0
      %v4817 = vadd.f32 0.0, %v4816
      %v4818 = vpop.f32.mrf.mxu0
      %v4819 = vpop.f32.mrf.mxu0
      %v4820 = vadd.f32 0.0, %v4819
      %v4821 = vpop.f32.mrf.mxu0
      %4822 = vmatprep.mubr.bf16.mxu0 0
      %4823 = vmatmul.mubr.bf16.gmra.mxu0 %v4766
      %v4824 = vpop.f32.mrf.mxu0
      %v4825 = vadd.f32 0.0, %v4824
      %v4826 = vpop.f32.mrf.mxu0
      %v4827 = vpop.f32.mrf.mxu0
      %v4828 = vadd.f32 0.0, %v4827
      %v4829 = vpop.f32.mrf.mxu0
      %4830 = vmatprep.mubr.bf16.mxu0 0
      %4831 = vmatmul.mubr.bf16.gmra.mxu0 %v4769
      %v4832 = vpop.f32.mrf.mxu0
      %v4833 = vadd.f32 0.0, %v4832
      %v4834 = vpop.f32.mrf.mxu0
      %v4835 = vpop.f32.mrf.mxu0
      %v4836 = vadd.f32 0.0, %v4835
      %v4837 = vpop.f32.mrf.mxu0
      %4838 = vdwg.mxu0
      %v4839 = vld [vmem:[%s224] sm:$0xff]
      %v4840 = vld [vmem:[%s224 + $0x8] sm:$0xff]
      %v4841 = vld [vmem:[%s224 + $0x10] sm:$0xff]
      %v4842 = vld [vmem:[%s224 + $0x18] sm:$0xff]
      %v4843 = vld [vmem:[%s224 + $0x20] sm:$0xff]
      %v4844 = vld [vmem:[%s224 + $0x28] sm:$0xff]
      %v4845 = vld [vmem:[%s224 + $0x30] sm:$0xff]
      %v4846 = vld [vmem:[%s224 + $0x38] sm:$0xff]
      %v4847 = vadd.f32 %v4839, %v4809
      %v4848 = vadd.f32 %v4840, %v4812
      %v4849 = vadd.f32 %v4841, %v4817
      %v4850 = vadd.f32 %v4842, %v4820
      %v4851 = vadd.f32 %v4843, %v4825
      %v4852 = vadd.f32 %v4844, %v4828
      %v4853 = vadd.f32 %v4845, %v4833
      %v4854 = vadd.f32 %v4846, %v4836
      %4855 = vst.msk [vmem:[%s224] sm:$0xff] %vm4618, %v4847
      %4856 = vst.msk [vmem:[%s224 + $0x8] sm:$0xff] %vm4618, %v4848
      %4857 = vst.msk [vmem:[%s224 + $0x10] sm:$0xff] %vm4618, %v4849
      %4858 = vst.msk [vmem:[%s224 + $0x18] sm:$0xff] %vm4618, %v4850
      %4859 = vst.msk [vmem:[%s224 + $0x20] sm:$0xff] %vm4618, %v4851
      %4860 = vst.msk [vmem:[%s224 + $0x28] sm:$0xff] %vm4618, %v4852
      %4861 = vst.msk [vmem:[%s224 + $0x30] sm:$0xff] %vm4618, %v4853
      %4862 = vst.msk [vmem:[%s224 + $0x38] sm:$0xff] %vm4618, %v4854
      %s4863 = scalar_lea.vmem [#allocation5], 8
      %v4864 = vld [vmem:[%s4863] sm:$0xff]
      %v4865 = vld [vmem:[%s4863 + $0x10] sm:$0xff]
      %v4866 = vld [vmem:[%s4863 + $0x20] sm:$0xff]
      %v4867 = vld [vmem:[%s4863 + $0x30] sm:$0xff]
      %v4868 = vld [vmem:[%s4863 + $0x40] sm:$0xff]
      %v4869 = vld [vmem:[%s4863 + $0x50] sm:$0xff]
      %v4870 = vld [vmem:[%s4863 + $0x60] sm:$0xff]
      %v4871 = vld [vmem:[%s4863 + $0x70] sm:$0xff]
      %v4872 = vpack.c.bf16 %v4865, %v4864
      %v4873 = vpack.c.bf16 %v4867, %v4866
      %v4874 = vpack.c.bf16 %v4869, %v4868
      %v4875 = vpack.c.bf16 %v4871, %v4870
      %s4876 = scalar_lea.vmem %s3, 6
      %v4877 = vld [vmem:[%s4876] sm:$0x3]
      %v4879 = vsel %vm226, %v4872, 0
      %v4882 = vsel %vm226, %v4873, 0
      %v4885 = vsel %vm226, %v4874, 0
      %v4888 = vsel %vm226, %v4875, 0
      %v4891 = vsel %vm430, %v4877, 0
      %4893 = vmatprep.subr.bf16.mxu0 0
      %4894 = vmatpush1.bf16.msra.mxu0 0
      %4895 = vmatprep.subr.bf16.mxu0 0
      %4896 = vmatpush1.bf16.msra.mxu0 0
      %4897 = vmatprep.subr.bf16.mxu0 0
      %4898 = vmatpush1.bf16.msra.mxu0 0
      %4899 = vmatprep.subr.bf16.mxu0 0
      %4900 = vmatpush1.bf16.msra.mxu0 0
      %4901 = vmatprep.subr.bf16.mxu0 0
      %4902 = vmatpush1.bf16.msra.mxu0 0
      %4903 = vmatprep.subr.bf16.mxu0 0
      %4904 = vmatpush1.bf16.msra.mxu0 0
      %4905 = vmatprep.subr.bf16.mxu0 0
      %4906 = vmatpush1.bf16.msra.mxu0 0
      %4907 = vmatprep.subr.bf16.mxu0 0
      %4908 = vmatpush1.bf16.msra.mxu0 %v4891
      %4909 = vmatprep.subr.bf16.mxu0 0
      %4910 = vmatpush2.bf16.msra.mxu0 0
      %4911 = vmatprep.subr.bf16.mxu0 0
      %4912 = vmatpush2.bf16.msra.mxu0 0
      %4913 = vmatprep.subr.bf16.mxu0 0
      %4914 = vmatpush2.bf16.msra.mxu0 0
      %4915 = vmatprep.subr.bf16.mxu0 0
      %4916 = vmatpush2.bf16.msra.mxu0 0
      %4917 = vmatprep.subr.bf16.mxu0 0
      %4918 = vmatpush2.bf16.msra.mxu0 0
      %4919 = vmatprep.subr.bf16.mxu0 0
      %4920 = vmatpush2.bf16.msra.mxu0 0
      %4921 = vmatprep.subr.bf16.mxu0 0
      %4922 = vmatpush2.bf16.msra.mxu0 0
      %4923 = vmatprep.subr.bf16.mxu0 0
      %4924 = vmatpush2.bf16.msra.mxu0 0
      %4925 = vmatprep.mubr.bf16.mxu0 0
      %4926 = vmatmul.mubr.bf16.gmra.mxu0 %v4879
      %v4927 = vpop.f32.mrf.mxu0
      %v4928 = vadd.f32 0.0, %v4927
      %v4929 = vpop.f32.mrf.mxu0
      %v4930 = vpop.f32.mrf.mxu0
      %v4931 = vadd.f32 0.0, %v4930
      %v4932 = vpop.f32.mrf.mxu0
      %4933 = vmatprep.mubr.bf16.mxu0 0
      %4934 = vmatmul.mubr.bf16.gmra.mxu0 %v4882
      %v4935 = vpop.f32.mrf.mxu0
      %v4936 = vadd.f32 0.0, %v4935
      %v4937 = vpop.f32.mrf.mxu0
      %v4938 = vpop.f32.mrf.mxu0
      %v4939 = vadd.f32 0.0, %v4938
      %v4940 = vpop.f32.mrf.mxu0
      %4941 = vmatprep.mubr.bf16.mxu0 0
      %4942 = vmatmul.mubr.bf16.gmra.mxu0 %v4885
      %v4943 = vpop.f32.mrf.mxu0
      %v4944 = vadd.f32 0.0, %v4943
      %v4945 = vpop.f32.mrf.mxu0
      %v4946 = vpop.f32.mrf.mxu0
      %v4947 = vadd.f32 0.0, %v4946
      %v4948 = vpop.f32.mrf.mxu0
      %4949 = vmatprep.mubr.bf16.mxu0 0
      %4950 = vmatmul.mubr.bf16.gmra.mxu0 %v4888
      %v4951 = vpop.f32.mrf.mxu0
      %v4952 = vadd.f32 0.0, %v4951
      %v4953 = vpop.f32.mrf.mxu0
      %v4954 = vpop.f32.mrf.mxu0
      %v4955 = vadd.f32 0.0, %v4954
      %v4956 = vpop.f32.mrf.mxu0
      %4957 = vdwg.mxu0
      %v4958 = vld [vmem:[%s224] sm:$0xff]
      %v4959 = vld [vmem:[%s224 + $0x8] sm:$0xff]
      %v4960 = vld [vmem:[%s224 + $0x10] sm:$0xff]
      %v4961 = vld [vmem:[%s224 + $0x18] sm:$0xff]
      %v4962 = vld [vmem:[%s224 + $0x20] sm:$0xff]
      %v4963 = vld [vmem:[%s224 + $0x28] sm:$0xff]
      %v4964 = vld [vmem:[%s224 + $0x30] sm:$0xff]
      %v4965 = vld [vmem:[%s224 + $0x38] sm:$0xff]
      %v4966 = vadd.f32 %v4958, %v4928
      %v4967 = vadd.f32 %v4959, %v4931
      %v4968 = vadd.f32 %v4960, %v4936
      %v4969 = vadd.f32 %v4961, %v4939
      %v4970 = vadd.f32 %v4962, %v4944
      %v4971 = vadd.f32 %v4963, %v4947
      %v4972 = vadd.f32 %v4964, %v4952
      %v4973 = vadd.f32 %v4965, %v4955
      %4974 = vst.msk [vmem:[%s224] sm:$0xff] %vm4618, %v4966
      %4975 = vst.msk [vmem:[%s224 + $0x8] sm:$0xff] %vm4618, %v4967
      %4976 = vst.msk [vmem:[%s224 + $0x10] sm:$0xff] %vm4618, %v4968
      %4977 = vst.msk [vmem:[%s224 + $0x18] sm:$0xff] %vm4618, %v4969
      %4978 = vst.msk [vmem:[%s224 + $0x20] sm:$0xff] %vm4618, %v4970
      %4979 = vst.msk [vmem:[%s224 + $0x28] sm:$0xff] %vm4618, %v4971
      %4980 = vst.msk [vmem:[%s224 + $0x30] sm:$0xff] %vm4618, %v4972
      %4981 = vst.msk [vmem:[%s224 + $0x38] sm:$0xff] %vm4618, %v4973
      %s4982 = scalar_lea.vmem [#allocation6], 8
      %v4983 = vld [vmem:[%s4982] sm:$0xff]
      %v4984 = vld [vmem:[%s4982 + $0x10] sm:$0xff]
      %v4985 = vld [vmem:[%s4982 + $0x20] sm:$0xff]
      %v4986 = vld [vmem:[%s4982 + $0x30] sm:$0xff]
      %v4987 = vld [vmem:[%s4982 + $0x40] sm:$0xff]
      %v4988 = vld [vmem:[%s4982 + $0x50] sm:$0xff]
      %v4989 = vld [vmem:[%s4982 + $0x60] sm:$0xff]
      %v4990 = vld [vmem:[%s4982 + $0x70] sm:$0xff]
      %v4991 = vpack.c.bf16 %v4984, %v4983
      %v4992 = vpack.c.bf16 %v4986, %v4985
      %v4993 = vpack.c.bf16 %v4988, %v4987
      %v4994 = vpack.c.bf16 %v4990, %v4989
      %s4995 = scalar_lea.vmem %s3, 8
      %v4996 = vld [vmem:[%s4995] sm:$0x3]
      %v4998 = vsel %vm226, %v4991, 0
      %v5001 = vsel %vm226, %v4992, 0
      %v5004 = vsel %vm226, %v4993, 0
      %v5007 = vsel %vm226, %v4994, 0
      %v5010 = vsel %vm430, %v4996, 0
      %5012 = vmatprep.subr.bf16.mxu0 0
      %5013 = vmatpush1.bf16.msra.mxu0 0
      %5014 = vmatprep.subr.bf16.mxu0 0
      %5015 = vmatpush1.bf16.msra.mxu0 0
      %5016 = vmatprep.subr.bf16.mxu0 0
      %5017 = vmatpush1.bf16.msra.mxu0 0
      %5018 = vmatprep.subr.bf16.mxu0 0
      %5019 = vmatpush1.bf16.msra.mxu0 0
      %5020 = vmatprep.subr.bf16.mxu0 0
      %5021 = vmatpush1.bf16.msra.mxu0 0
      %5022 = vmatprep.subr.bf16.mxu0 0
      %5023 = vmatpush1.bf16.msra.mxu0 0
      %5024 = vmatprep.subr.bf16.mxu0 0
      %5025 = vmatpush1.bf16.msra.mxu0 0
      %5026 = vmatprep.subr.bf16.mxu0 0
      %5027 = vmatpush1.bf16.msra.mxu0 %v5010
      %5028 = vmatprep.subr.bf16.mxu0 0
      %5029 = vmatpush2.bf16.msra.mxu0 0
      %5030 = vmatprep.subr.bf16.mxu0 0
      %5031 = vmatpush2.bf16.msra.mxu0 0
      %5032 = vmatprep.subr.bf16.mxu0 0
      %5033 = vmatpush2.bf16.msra.mxu0 0
      %5034 = vmatprep.subr.bf16.mxu0 0
      %5035 = vmatpush2.bf16.msra.mxu0 0
      %5036 = vmatprep.subr.bf16.mxu0 0
      %5037 = vmatpush2.bf16.msra.mxu0 0
      %5038 = vmatprep.subr.bf16.mxu0 0
      %5039 = vmatpush2.bf16.msra.mxu0 0
      %5040 = vmatprep.subr.bf16.mxu0 0
      %5041 = vmatpush2.bf16.msra.mxu0 0
      %5042 = vmatprep.subr.bf16.mxu0 0
      %5043 = vmatpush2.bf16.msra.mxu0 0
      %5044 = vmatprep.mubr.bf16.mxu0 0
      %5045 = vmatmul.mubr.bf16.gmra.mxu0 %v4998
      %v5046 = vpop.f32.mrf.mxu0
      %v5047 = vadd.f32 0.0, %v5046
      %v5048 = vpop.f32.mrf.mxu0
      %v5049 = vpop.f32.mrf.mxu0
      %v5050 = vadd.f32 0.0, %v5049
      %v5051 = vpop.f32.mrf.mxu0
      %5052 = vmatprep.mubr.bf16.mxu0 0
      %5053 = vmatmul.mubr.bf16.gmra.mxu0 %v5001
      %v5054 = vpop.f32.mrf.mxu0
      %v5055 = vadd.f32 0.0, %v5054
      %v5056 = vpop.f32.mrf.mxu0
      %v5057 = vpop.f32.mrf.mxu0
      %v5058 = vadd.f32 0.0, %v5057
      %v5059 = vpop.f32.mrf.mxu0
      %5060 = vmatprep.mubr.bf16.mxu0 0
      %5061 = vmatmul.mubr.bf16.gmra.mxu0 %v5004
      %v5062 = vpop.f32.mrf.mxu0
      %v5063 = vadd.f32 0.0, %v5062
      %v5064 = vpop.f32.mrf.mxu0
      %v5065 = vpop.f32.mrf.mxu0
      %v5066 = vadd.f32 0.0, %v5065
      %v5067 = vpop.f32.mrf.mxu0
      %5068 = vmatprep.mubr.bf16.mxu0 0
      %5069 = vmatmul.mubr.bf16.gmra.mxu0 %v5007
      %v5070 = vpop.f32.mrf.mxu0
      %v5071 = vadd.f32 0.0, %v5070
      %v5072 = vpop.f32.mrf.mxu0
      %v5073 = vpop.f32.mrf.mxu0
      %v5074 = vadd.f32 0.0, %v5073
      %v5075 = vpop.f32.mrf.mxu0
      %5076 = vdwg.mxu0
      %v5077 = vld [vmem:[%s224] sm:$0xff]
      %v5078 = vld [vmem:[%s224 + $0x8] sm:$0xff]
      %v5079 = vld [vmem:[%s224 + $0x10] sm:$0xff]
      %v5080 = vld [vmem:[%s224 + $0x18] sm:$0xff]
      %v5081 = vld [vmem:[%s224 + $0x20] sm:$0xff]
      %v5082 = vld [vmem:[%s224 + $0x28] sm:$0xff]
      %v5083 = vld [vmem:[%s224 + $0x30] sm:$0xff]
      %v5084 = vld [vmem:[%s224 + $0x38] sm:$0xff]
      %v5085 = vadd.f32 %v5077, %v5047
      %v5086 = vadd.f32 %v5078, %v5050
      %v5087 = vadd.f32 %v5079, %v5055
      %v5088 = vadd.f32 %v5080, %v5058
      %v5089 = vadd.f32 %v5081, %v5063
      %v5090 = vadd.f32 %v5082, %v5066
      %v5091 = vadd.f32 %v5083, %v5071
      %v5092 = vadd.f32 %v5084, %v5074
      %5093 = vst.msk [vmem:[%s224] sm:$0xff] %vm4618, %v5085
      %5094 = vst.msk [vmem:[%s224 + $0x8] sm:$0xff] %vm4618, %v5086
      %5095 = vst.msk [vmem:[%s224 + $0x10] sm:$0xff] %vm4618, %v5087
      %5096 = vst.msk [vmem:[%s224 + $0x18] sm:$0xff] %vm4618, %v5088
      %5097 = vst.msk [vmem:[%s224 + $0x20] sm:$0xff] %vm4618, %v5089
      %5098 = vst.msk [vmem:[%s224 + $0x28] sm:$0xff] %vm4618, %v5090
      %5099 = vst.msk [vmem:[%s224 + $0x30] sm:$0xff] %vm4618, %v5091
      %5100 = vst.msk [vmem:[%s224 + $0x38] sm:$0xff] %vm4618, %v5092
      %s5101 = scalar_lea.vmem [#allocation7], 8
      %v5102 = vld [vmem:[%s5101] sm:$0xff]
      %v5103 = vld [vmem:[%s5101 + $0x10] sm:$0xff]
      %v5104 = vld [vmem:[%s5101 + $0x20] sm:$0xff]
      %v5105 = vld [vmem:[%s5101 + $0x30] sm:$0xff]
      %v5106 = vld [vmem:[%s5101 + $0x40] sm:$0xff]
      %v5107 = vld [vmem:[%s5101 + $0x50] sm:$0xff]
      %v5108 = vld [vmem:[%s5101 + $0x60] sm:$0xff]
      %v5109 = vld [vmem:[%s5101 + $0x70] sm:$0xff]
      %v5110 = vpack.c.bf16 %v5103, %v5102
      %v5111 = vpack.c.bf16 %v5105, %v5104
      %v5112 = vpack.c.bf16 %v5107, %v5106
      %v5113 = vpack.c.bf16 %v5109, %v5108
      %s5114 = scalar_lea.vmem %s3, 10
      %v5115 = vld [vmem:[%s5114] sm:$0x3]
      %v5117 = vsel %vm226, %v5110, 0
      %v5120 = vsel %vm226, %v5111, 0
      %v5123 = vsel %vm226, %v5112, 0
      %v5126 = vsel %vm226, %v5113, 0
      %v5129 = vsel %vm430, %v5115, 0
      %5131 = vmatprep.subr.bf16.mxu0 0
      %5132 = vmatpush1.bf16.msra.mxu0 0
      %5133 = vmatprep.subr.bf16.mxu0 0
      %5134 = vmatpush1.bf16.msra.mxu0 0
      %5135 = vmatprep.subr.bf16.mxu0 0
      %5136 = vmatpush1.bf16.msra.mxu0 0
      %5137 = vmatprep.subr.bf16.mxu0 0
      %5138 = vmatpush1.bf16.msra.mxu0 0
      %5139 = vmatprep.subr.bf16.mxu0 0
      %5140 = vmatpush1.bf16.msra.mxu0 0
      %5141 = vmatprep.subr.bf16.mxu0 0
      %5142 = vmatpush1.bf16.msra.mxu0 0
      %5143 = vmatprep.subr.bf16.mxu0 0
      %5144 = vmatpush1.bf16.msra.mxu0 0
      %5145 = vmatprep.subr.bf16.mxu0 0
      %5146 = vmatpush1.bf16.msra.mxu0 %v5129
      %5147 = vmatprep.subr.bf16.mxu0 0
      %5148 = vmatpush2.bf16.msra.mxu0 0
      %5149 = vmatprep.subr.bf16.mxu0 0
      %5150 = vmatpush2.bf16.msra.mxu0 0
      %5151 = vmatprep.subr.bf16.mxu0 0
      %5152 = vmatpush2.bf16.msra.mxu0 0
      %5153 = vmatprep.subr.bf16.mxu0 0
      %5154 = vmatpush2.bf16.msra.mxu0 0
      %5155 = vmatprep.subr.bf16.mxu0 0
      %5156 = vmatpush2.bf16.msra.mxu0 0
      %5157 = vmatprep.subr.bf16.mxu0 0
      %5158 = vmatpush2.bf16.msra.mxu0 0
      %5159 = vmatprep.subr.bf16.mxu0 0
      %5160 = vmatpush2.bf16.msra.mxu0 0
      %5161 = vmatprep.subr.bf16.mxu0 0
      %5162 = vmatpush2.bf16.msra.mxu0 0
      %5163 = vmatprep.mubr.bf16.mxu0 0
      %5164 = vmatmul.mubr.bf16.gmra.mxu0 %v5117
      %v5165 = vpop.f32.mrf.mxu0
      %v5166 = vadd.f32 0.0, %v5165
      %v5167 = vpop.f32.mrf.mxu0
      %v5168 = vpop.f32.mrf.mxu0
      %v5169 = vadd.f32 0.0, %v5168
      %v5170 = vpop.f32.mrf.mxu0
      %5171 = vmatprep.mubr.bf16.mxu0 0
      %5172 = vmatmul.mubr.bf16.gmra.mxu0 %v5120
      %v5173 = vpop.f32.mrf.mxu0
      %v5174 = vadd.f32 0.0, %v5173
      %v5175 = vpop.f32.mrf.mxu0
      %v5176 = vpop.f32.mrf.mxu0
      %v5177 = vadd.f32 0.0, %v5176
      %v5178 = vpop.f32.mrf.mxu0
      %5179 = vmatprep.mubr.bf16.mxu0 0
      %5180 = vmatmul.mubr.bf16.gmra.mxu0 %v5123
      %v5181 = vpop.f32.mrf.mxu0
      %v5182 = vadd.f32 0.0, %v5181
      %v5183 = vpop.f32.mrf.mxu0
      %v5184 = vpop.f32.mrf.mxu0
      %v5185 = vadd.f32 0.0, %v5184
      %v5186 = vpop.f32.mrf.mxu0
      %5187 = vmatprep.mubr.bf16.mxu0 0
      %5188 = vmatmul.mubr.bf16.gmra.mxu0 %v5126
      %v5189 = vpop.f32.mrf.mxu0
      %v5190 = vadd.f32 0.0, %v5189
      %v5191 = vpop.f32.mrf.mxu0
      %v5192 = vpop.f32.mrf.mxu0
      %v5193 = vadd.f32 0.0, %v5192
      %v5194 = vpop.f32.mrf.mxu0
      %5195 = vdwg.mxu0
      %v5196 = vld [vmem:[%s224] sm:$0xff]
      %v5197 = vld [vmem:[%s224 + $0x8] sm:$0xff]
      %v5198 = vld [vmem:[%s224 + $0x10] sm:$0xff]
      %v5199 = vld [vmem:[%s224 + $0x18] sm:$0xff]
      %v5200 = vld [vmem:[%s224 + $0x20] sm:$0xff]
      %v5201 = vld [vmem:[%s224 + $0x28] sm:$0xff]
      %v5202 = vld [vmem:[%s224 + $0x30] sm:$0xff]
      %v5203 = vld [vmem:[%s224 + $0x38] sm:$0xff]
      %v5204 = vadd.f32 %v5196, %v5166
      %v5205 = vadd.f32 %v5197, %v5169
      %v5206 = vadd.f32 %v5198, %v5174
      %v5207 = vadd.f32 %v5199, %v5177
      %v5208 = vadd.f32 %v5200, %v5182
      %v5209 = vadd.f32 %v5201, %v5185
      %v5210 = vadd.f32 %v5202, %v5190
      %v5211 = vadd.f32 %v5203, %v5193
      %5212 = vst.msk [vmem:[%s224] sm:$0xff] %vm4618, %v5204
      %5213 = vst.msk [vmem:[%s224 + $0x8] sm:$0xff] %vm4618, %v5205
      %5214 = vst.msk [vmem:[%s224 + $0x10] sm:$0xff] %vm4618, %v5206
      %5215 = vst.msk [vmem:[%s224 + $0x18] sm:$0xff] %vm4618, %v5207
      %5216 = vst.msk [vmem:[%s224 + $0x20] sm:$0xff] %vm4618, %v5208
      %5217 = vst.msk [vmem:[%s224 + $0x28] sm:$0xff] %vm4618, %v5209
      %5218 = vst.msk [vmem:[%s224 + $0x30] sm:$0xff] %vm4618, %v5210
      %5219 = vst.msk [vmem:[%s224 + $0x38] sm:$0xff] %vm4618, %v5211
      %s5220 = scalar_lea.vmem [#allocation5], 16
      %v5221 = vld [vmem:[%s5220] sm:$0xff]
      %v5222 = vld [vmem:[%s5220 + $0x10] sm:$0xff]
      %v5223 = vld [vmem:[%s5220 + $0x20] sm:$0xff]
      %v5224 = vld [vmem:[%s5220 + $0x30] sm:$0xff]
      %v5225 = vld [vmem:[%s5220 + $0x40] sm:$0xff]
      %v5226 = vld [vmem:[%s5220 + $0x50] sm:$0xff]
      %v5227 = vld [vmem:[%s5220 + $0x60] sm:$0xff]
      %v5228 = vld [vmem:[%s5220 + $0x70] sm:$0xff]
      %v5229 = vpack.c.bf16 %v5222, %v5221
      %v5230 = vpack.c.bf16 %v5224, %v5223
      %v5231 = vpack.c.bf16 %v5226, %v5225
      %v5232 = vpack.c.bf16 %v5228, %v5227
      %s5233 = scalar_lea.vmem %s3, 12
      %v5234 = vld [vmem:[%s5233] sm:$0x3]
      %v5236 = vsel %vm226, %v5229, 0
      %v5239 = vsel %vm226, %v5230, 0
      %v5242 = vsel %vm226, %v5231, 0
      %v5245 = vsel %vm226, %v5232, 0
      %v5248 = vsel %vm430, %v5234, 0
      %5250 = vmatprep.subr.bf16.mxu0 0
      %5251 = vmatpush1.bf16.msra.mxu0 0
      %5252 = vmatprep.subr.bf16.mxu0 0
      %5253 = vmatpush1.bf16.msra.mxu0 0
      %5254 = vmatprep.subr.bf16.mxu0 0
      %5255 = vmatpush1.bf16.msra.mxu0 0
      %5256 = vmatprep.subr.bf16.mxu0 0
      %5257 = vmatpush1.bf16.msra.mxu0 0
      %5258 = vmatprep.subr.bf16.mxu0 0
      %5259 = vmatpush1.bf16.msra.mxu0 0
      %5260 = vmatprep.subr.bf16.mxu0 0
      %5261 = vmatpush1.bf16.msra.mxu0 0
      %5262 = vmatprep.subr.bf16.mxu0 0
      %5263 = vmatpush1.bf16.msra.mxu0 0
      %5264 = vmatprep.subr.bf16.mxu0 0
      %5265 = vmatpush1.bf16.msra.mxu0 %v5248
      %5266 = vmatprep.subr.bf16.mxu0 0
      %5267 = vmatpush2.bf16.msra.mxu0 0
      %5268 = vmatprep.subr.bf16.mxu0 0
      %5269 = vmatpush2.bf16.msra.mxu0 0
      %5270 = vmatprep.subr.bf16.mxu0 0
      %5271 = vmatpush2.bf16.msra.mxu0 0
      %5272 = vmatprep.subr.bf16.mxu0 0
      %5273 = vmatpush2.bf16.msra.mxu0 0
      %5274 = vmatprep.subr.bf16.mxu0 0
      %5275 = vmatpush2.bf16.msra.mxu0 0
      %5276 = vmatprep.subr.bf16.mxu0 0
      %5277 = vmatpush2.bf16.msra.mxu0 0
      %5278 = vmatprep.subr.bf16.mxu0 0
      %5279 = vmatpush2.bf16.msra.mxu0 0
      %5280 = vmatprep.subr.bf16.mxu0 0
      %5281 = vmatpush2.bf16.msra.mxu0 0
      %5282 = vmatprep.mubr.bf16.mxu0 0
      %5283 = vmatmul.mubr.bf16.gmra.mxu0 %v5236
      %v5284 = vpop.f32.mrf.mxu0
      %v5285 = vadd.f32 0.0, %v5284
      %v5286 = vpop.f32.mrf.mxu0
      %v5287 = vpop.f32.mrf.mxu0
      %v5288 = vadd.f32 0.0, %v5287
      %v5289 = vpop.f32.mrf.mxu0
      %5290 = vmatprep.mubr.bf16.mxu0 0
      %5291 = vmatmul.mubr.bf16.gmra.mxu0 %v5239
      %v5292 = vpop.f32.mrf.mxu0
      %v5293 = vadd.f32 0.0, %v5292
      %v5294 = vpop.f32.mrf.mxu0
      %v5295 = vpop.f32.mrf.mxu0
      %v5296 = vadd.f32 0.0, %v5295
      %v5297 = vpop.f32.mrf.mxu0
      %5298 = vmatprep.mubr.bf16.mxu0 0
      %5299 = vmatmul.mubr.bf16.gmra.mxu0 %v5242
      %v5300 = vpop.f32.mrf.mxu0
      %v5301 = vadd.f32 0.0, %v5300
      %v5302 = vpop.f32.mrf.mxu0
      %v5303 = vpop.f32.mrf.mxu0
      %v5304 = vadd.f32 0.0, %v5303
      %v5305 = vpop.f32.mrf.mxu0
      %5306 = vmatprep.mubr.bf16.mxu0 0
      %5307 = vmatmul.mubr.bf16.gmra.mxu0 %v5245
      %v5308 = vpop.f32.mrf.mxu0
      %v5309 = vadd.f32 0.0, %v5308
      %v5310 = vpop.f32.mrf.mxu0
      %v5311 = vpop.f32.mrf.mxu0
      %v5312 = vadd.f32 0.0, %v5311
      %v5313 = vpop.f32.mrf.mxu0
      %5314 = vdwg.mxu0
      %v5315 = vld [vmem:[%s224] sm:$0xff]
      %v5316 = vld [vmem:[%s224 + $0x8] sm:$0xff]
      %v5317 = vld [vmem:[%s224 + $0x10] sm:$0xff]
      %v5318 = vld [vmem:[%s224 + $0x18] sm:$0xff]
      %v5319 = vld [vmem:[%s224 + $0x20] sm:$0xff]
      %v5320 = vld [vmem:[%s224 + $0x28] sm:$0xff]
      %v5321 = vld [vmem:[%s224 + $0x30] sm:$0xff]
      %v5322 = vld [vmem:[%s224 + $0x38] sm:$0xff]
      %v5323 = vadd.f32 %v5315, %v5285
      %v5324 = vadd.f32 %v5316, %v5288
      %v5325 = vadd.f32 %v5317, %v5293
      %v5326 = vadd.f32 %v5318, %v5296
      %v5327 = vadd.f32 %v5319, %v5301
      %v5328 = vadd.f32 %v5320, %v5304
      %v5329 = vadd.f32 %v5321, %v5309
      %v5330 = vadd.f32 %v5322, %v5312
      %5331 = vst.msk [vmem:[%s224] sm:$0xff] %vm4618, %v5323
      %5332 = vst.msk [vmem:[%s224 + $0x8] sm:$0xff] %vm4618, %v5324
      %5333 = vst.msk [vmem:[%s224 + $0x10] sm:$0xff] %vm4618, %v5325
      %5334 = vst.msk [vmem:[%s224 + $0x18] sm:$0xff] %vm4618, %v5326
      %5335 = vst.msk [vmem:[%s224 + $0x20] sm:$0xff] %vm4618, %v5327
      %5336 = vst.msk [vmem:[%s224 + $0x28] sm:$0xff] %vm4618, %v5328
      %5337 = vst.msk [vmem:[%s224 + $0x30] sm:$0xff] %vm4618, %v5329
      %5338 = vst.msk [vmem:[%s224 + $0x38] sm:$0xff] %vm4618, %v5330
      %s5339 = scalar_lea.vmem [#allocation6], 16
      %v5340 = vld [vmem:[%s5339] sm:$0xff]
      %v5341 = vld [vmem:[%s5339 + $0x10] sm:$0xff]
      %v5342 = vld [vmem:[%s5339 + $0x20] sm:$0xff]
      %v5343 = vld [vmem:[%s5339 + $0x30] sm:$0xff]
      %v5344 = vld [vmem:[%s5339 + $0x40] sm:$0xff]
      %v5345 = vld [vmem:[%s5339 + $0x50] sm:$0xff]
      %v5346 = vld [vmem:[%s5339 + $0x60] sm:$0xff]
      %v5347 = vld [vmem:[%s5339 + $0x70] sm:$0xff]
      %v5348 = vpack.c.bf16 %v5341, %v5340
      %v5349 = vpack.c.bf16 %v5343, %v5342
      %v5350 = vpack.c.bf16 %v5345, %v5344
      %v5351 = vpack.c.bf16 %v5347, %v5346
      %s5352 = scalar_lea.vmem %s3, 14
      %v5353 = vld [vmem:[%s5352] sm:$0x3]
      %v5355 = vsel %vm226, %v5348, 0
      %v5358 = vsel %vm226, %v5349, 0
      %v5361 = vsel %vm226, %v5350, 0
      %v5364 = vsel %vm226, %v5351, 0
      %v5367 = vsel %vm430, %v5353, 0
      %5369 = vmatprep.subr.bf16.mxu0 0
      %5370 = vmatpush1.bf16.msra.mxu0 0
      %5371 = vmatprep.subr.bf16.mxu0 0
      %5372 = vmatpush1.bf16.msra.mxu0 0
      %5373 = vmatprep.subr.bf16.mxu0 0
      %5374 = vmatpush1.bf16.msra.mxu0 0
      %5375 = vmatprep.subr.bf16.mxu0 0
      %5376 = vmatpush1.bf16.msra.mxu0 0
      %5377 = vmatprep.subr.bf16.mxu0 0
      %5378 = vmatpush1.bf16.msra.mxu0 0
      %5379 = vmatprep.subr.bf16.mxu0 0
      %5380 = vmatpush1.bf16.msra.mxu0 0
      %5381 = vmatprep.subr.bf16.mxu0 0
      %5382 = vmatpush1.bf16.msra.mxu0 0
      %5383 = vmatprep.subr.bf16.mxu0 0
      %5384 = vmatpush1.bf16.msra.mxu0 %v5367
      %5385 = vmatprep.subr.bf16.mxu0 0
      %5386 = vmatpush2.bf16.msra.mxu0 0
      %5387 = vmatprep.subr.bf16.mxu0 0
      %5388 = vmatpush2.bf16.msra.mxu0 0
      %5389 = vmatprep.subr.bf16.mxu0 0
      %5390 = vmatpush2.bf16.msra.mxu0 0
      %5391 = vmatprep.subr.bf16.mxu0 0
      %5392 = vmatpush2.bf16.msra.mxu0 0
      %5393 = vmatprep.subr.bf16.mxu0 0
      %5394 = vmatpush2.bf16.msra.mxu0 0
      %5395 = vmatprep.subr.bf16.mxu0 0
      %5396 = vmatpush2.bf16.msra.mxu0 0
      %5397 = vmatprep.subr.bf16.mxu0 0
      %5398 = vmatpush2.bf16.msra.mxu0 0
      %5399 = vmatprep.subr.bf16.mxu0 0
      %5400 = vmatpush2.bf16.msra.mxu0 0
      %5401 = vmatprep.mubr.bf16.mxu0 0
      %5402 = vmatmul.mubr.bf16.gmra.mxu0 %v5355
      %v5403 = vpop.f32.mrf.mxu0
      %v5404 = vadd.f32 0.0, %v5403
      %v5405 = vpop.f32.mrf.mxu0
      %v5406 = vpop.f32.mrf.mxu0
      %v5407 = vadd.f32 0.0, %v5406
      %v5408 = vpop.f32.mrf.mxu0
      %5409 = vmatprep.mubr.bf16.mxu0 0
      %5410 = vmatmul.mubr.bf16.gmra.mxu0 %v5358
      %v5411 = vpop.f32.mrf.mxu0
      %v5412 = vadd.f32 0.0, %v5411
      %v5413 = vpop.f32.mrf.mxu0
      %v5414 = vpop.f32.mrf.mxu0
      %v5415 = vadd.f32 0.0, %v5414
      %v5416 = vpop.f32.mrf.mxu0
      %5417 = vmatprep.mubr.bf16.mxu0 0
      %5418 = vmatmul.mubr.bf16.gmra.mxu0 %v5361
      %v5419 = vpop.f32.mrf.mxu0
      %v5420 = vadd.f32 0.0, %v5419
      %v5421 = vpop.f32.mrf.mxu0
      %v5422 = vpop.f32.mrf.mxu0
      %v5423 = vadd.f32 0.0, %v5422
      %v5424 = vpop.f32.mrf.mxu0
      %5425 = vmatprep.mubr.bf16.mxu0 0
      %5426 = vmatmul.mubr.bf16.gmra.mxu0 %v5364
      %v5427 = vpop.f32.mrf.mxu0
      %v5428 = vadd.f32 0.0, %v5427
      %v5429 = vpop.f32.mrf.mxu0
      %v5430 = vpop.f32.mrf.mxu0
      %v5431 = vadd.f32 0.0, %v5430
      %v5432 = vpop.f32.mrf.mxu0
      %5433 = vdwg.mxu0
      %v5434 = vld [vmem:[%s224] sm:$0xff]
      %v5435 = vld [vmem:[%s224 + $0x8] sm:$0xff]
      %v5436 = vld [vmem:[%s224 + $0x10] sm:$0xff]
      %v5437 = vld [vmem:[%s224 + $0x18] sm:$0xff]
      %v5438 = vld [vmem:[%s224 + $0x20] sm:$0xff]
      %v5439 = vld [vmem:[%s224 + $0x28] sm:$0xff]
      %v5440 = vld [vmem:[%s224 + $0x30] sm:$0xff]
      %v5441 = vld [vmem:[%s224 + $0x38] sm:$0xff]
      %v5442 = vadd.f32 %v5434, %v5404
      %v5443 = vadd.f32 %v5435, %v5407
      %v5444 = vadd.f32 %v5436, %v5412
      %v5445 = vadd.f32 %v5437, %v5415
      %v5446 = vadd.f32 %v5438, %v5420
      %v5447 = vadd.f32 %v5439, %v5423
      %v5448 = vadd.f32 %v5440, %v5428
      %v5449 = vadd.f32 %v5441, %v5431
      %5450 = vst.msk [vmem:[%s224] sm:$0xff] %vm4618, %v5442
      %5451 = vst.msk [vmem:[%s224 + $0x8] sm:$0xff] %vm4618, %v5443
      %5452 = vst.msk [vmem:[%s224 + $0x10] sm:$0xff] %vm4618, %v5444
      %5453 = vst.msk [vmem:[%s224 + $0x18] sm:$0xff] %vm4618, %v5445
      %5454 = vst.msk [vmem:[%s224 + $0x20] sm:$0xff] %vm4618, %v5446
      %5455 = vst.msk [vmem:[%s224 + $0x28] sm:$0xff] %vm4618, %v5447
      %5456 = vst.msk [vmem:[%s224 + $0x30] sm:$0xff] %vm4618, %v5448
      %5457 = vst.msk [vmem:[%s224 + $0x38] sm:$0xff] %vm4618, %v5449
      %s5458 = scalar_lea.vmem [#allocation7], 16
      %v5459 = vld [vmem:[%s5458] sm:$0xff]
      %v5460 = vld [vmem:[%s5458 + $0x10] sm:$0xff]
      %v5461 = vld [vmem:[%s5458 + $0x20] sm:$0xff]
      %v5462 = vld [vmem:[%s5458 + $0x30] sm:$0xff]
      %v5463 = vld [vmem:[%s5458 + $0x40] sm:$0xff]
      %v5464 = vld [vmem:[%s5458 + $0x50] sm:$0xff]
      %v5465 = vld [vmem:[%s5458 + $0x60] sm:$0xff]
      %v5466 = vld [vmem:[%s5458 + $0x70] sm:$0xff]
      %v5467 = vpack.c.bf16 %v5460, %v5459
      %v5468 = vpack.c.bf16 %v5462, %v5461
      %v5469 = vpack.c.bf16 %v5464, %v5463
      %v5470 = vpack.c.bf16 %v5466, %v5465
      %s5471 = scalar_lea.vmem %s3, 16
      %v5472 = vld [vmem:[%s5471] sm:$0x3]
      %v5474 = vsel %vm226, %v5467, 0
      %v5477 = vsel %vm226, %v5468, 0
      %v5480 = vsel %vm226, %v5469, 0
      %v5483 = vsel %vm226, %v5470, 0
      %v5486 = vsel %vm430, %v5472, 0
      %5488 = vmatprep.subr.bf16.mxu0 0
      %5489 = vmatpush1.bf16.msra.mxu0 0
      %5490 = vmatprep.subr.bf16.mxu0 0
      %5491 = vmatpush1.bf16.msra.mxu0 0
      %5492 = vmatprep.subr.bf16.mxu0 0
      %5493 = vmatpush1.bf16.msra.mxu0 0
      %5494 = vmatprep.subr.bf16.mxu0 0
      %5495 = vmatpush1.bf16.msra.mxu0 0
      %5496 = vmatprep.subr.bf16.mxu0 0
      %5497 = vmatpush1.bf16.msra.mxu0 0
      %5498 = vmatprep.subr.bf16.mxu0 0
      %5499 = vmatpush1.bf16.msra.mxu0 0
      %5500 = vmatprep.subr.bf16.mxu0 0
      %5501 = vmatpush1.bf16.msra.mxu0 0
      %5502 = vmatprep.subr.bf16.mxu0 0
      %5503 = vmatpush1.bf16.msra.mxu0 %v5486
      %5504 = vmatprep.subr.bf16.mxu0 0
      %5505 = vmatpush2.bf16.msra.mxu0 0
      %5506 = vmatprep.subr.bf16.mxu0 0
      %5507 = vmatpush2.bf16.msra.mxu0 0
      %5508 = vmatprep.subr.bf16.mxu0 0
      %5509 = vmatpush2.bf16.msra.mxu0 0
      %5510 = vmatprep.subr.bf16.mxu0 0
      %5511 = vmatpush2.bf16.msra.mxu0 0
      %5512 = vmatprep.subr.bf16.mxu0 0
      %5513 = vmatpush2.bf16.msra.mxu0 0
      %5514 = vmatprep.subr.bf16.mxu0 0
      %5515 = vmatpush2.bf16.msra.mxu0 0
      %5516 = vmatprep.subr.bf16.mxu0 0
      %5517 = vmatpush2.bf16.msra.mxu0 0
      %5518 = vmatprep.subr.bf16.mxu0 0
      %5519 = vmatpush2.bf16.msra.mxu0 0
      %5520 = vmatprep.mubr.bf16.mxu0 0
      %5521 = vmatmul.mubr.bf16.gmra.mxu0 %v5474
      %v5522 = vpop.f32.mrf.mxu0
      %v5523 = vadd.f32 0.0, %v5522
      %v5524 = vpop.f32.mrf.mxu0
      %v5525 = vpop.f32.mrf.mxu0
      %v5526 = vadd.f32 0.0, %v5525
      %v5527 = vpop.f32.mrf.mxu0
      %5528 = vmatprep.mubr.bf16.mxu0 0
      %5529 = vmatmul.mubr.bf16.gmra.mxu0 %v5477
      %v5530 = vpop.f32.mrf.mxu0
      %v5531 = vadd.f32 0.0, %v5530
      %v5532 = vpop.f32.mrf.mxu0
      %v5533 = vpop.f32.mrf.mxu0
      %v5534 = vadd.f32 0.0, %v5533
      %v5535 = vpop.f32.mrf.mxu0
      %5536 = vmatprep.mubr.bf16.mxu0 0
      %5537 = vmatmul.mubr.bf16.gmra.mxu0 %v5480
      %v5538 = vpop.f32.mrf.mxu0
      %v5539 = vadd.f32 0.0, %v5538
      %v5540 = vpop.f32.mrf.mxu0
      %v5541 = vpop.f32.mrf.mxu0
      %v5542 = vadd.f32 0.0, %v5541
      %v5543 = vpop.f32.mrf.mxu0
      %5544 = vmatprep.mubr.bf16.mxu0 0
      %5545 = vmatmul.mubr.bf16.gmra.mxu0 %v5483
      %v5546 = vpop.f32.mrf.mxu0
      %v5547 = vadd.f32 0.0, %v5546
      %v5548 = vpop.f32.mrf.mxu0
      %v5549 = vpop.f32.mrf.mxu0
      %v5550 = vadd.f32 0.0, %v5549
      %v5551 = vpop.f32.mrf.mxu0
      %5552 = vdwg.mxu0
      %v5553 = vld [vmem:[%s224] sm:$0xff]
      %v5554 = vld [vmem:[%s224 + $0x8] sm:$0xff]
      %v5555 = vld [vmem:[%s224 + $0x10] sm:$0xff]
      %v5556 = vld [vmem:[%s224 + $0x18] sm:$0xff]
      %v5557 = vld [vmem:[%s224 + $0x20] sm:$0xff]
      %v5558 = vld [vmem:[%s224 + $0x28] sm:$0xff]
      %v5559 = vld [vmem:[%s224 + $0x30] sm:$0xff]
      %v5560 = vld [vmem:[%s224 + $0x38] sm:$0xff]
      %v5561 = vadd.f32 %v5553, %v5523
      %v5562 = vadd.f32 %v5554, %v5526
      %v5563 = vadd.f32 %v5555, %v5531
      %v5564 = vadd.f32 %v5556, %v5534
      %v5565 = vadd.f32 %v5557, %v5539
      %v5566 = vadd.f32 %v5558, %v5542
      %v5567 = vadd.f32 %v5559, %v5547
      %v5568 = vadd.f32 %v5560, %v5550
      %5569 = vst.msk [vmem:[%s224] sm:$0xff] %vm4618, %v5561
      %5570 = vst.msk [vmem:[%s224 + $0x8] sm:$0xff] %vm4618, %v5562
      %5571 = vst.msk [vmem:[%s224 + $0x10] sm:$0xff] %vm4618, %v5563
      %5572 = vst.msk [vmem:[%s224 + $0x18] sm:$0xff] %vm4618, %v5564
      %5573 = vst.msk [vmem:[%s224 + $0x20] sm:$0xff] %vm4618, %v5565
      %5574 = vst.msk [vmem:[%s224 + $0x28] sm:$0xff] %vm4618, %v5566
      %5575 = vst.msk [vmem:[%s224 + $0x30] sm:$0xff] %vm4618, %v5567
      %5576 = vst.msk [vmem:[%s224 + $0x38] sm:$0xff] %vm4618, %v5568
      %v5577 = vld [vmem:[%s224] sm:$0xff]
      %v5578 = vld [vmem:[%s224 + $0x8] sm:$0xff]
      %v5579 = vld [vmem:[%s224 + $0x10] sm:$0xff]
      %v5580 = vld [vmem:[%s224 + $0x18] sm:$0xff]
      %v5581 = vld [vmem:[%s224 + $0x20] sm:$0xff]
      %v5582 = vld [vmem:[%s224 + $0x28] sm:$0xff]
      %v5583 = vld [vmem:[%s224 + $0x30] sm:$0xff]
      %v5584 = vld [vmem:[%s224 + $0x38] sm:$0xff]
      %v5585 = vld [vmem:[%s4] sm:$0x1]
      %v5587 = vlaneseq
      %v5588 = vshrl.u32 %v5587, 7
      %v5589 = vsub.s32 0, %v5588
      %v5590 = vrot.slane %v5585, %v5589
      %v5592 = vadd.f32 %v5577, %v5590
      %v5593 = vadd.f32 %v5578, %v5590
      %v5594 = vadd.f32 %v5579, %v5590
      %v5595 = vadd.f32 %v5580, %v5590
      %v5596 = vadd.f32 %v5581, %v5590
      %v5597 = vadd.f32 %v5582, %v5590
      %v5598 = vadd.f32 %v5583, %v5590
      %v5599 = vadd.f32 %v5584, %v5590
      %vm5600 = vcmp.gt.f32.partialorder %v5592, 0.0
      %vm5601 = vcmp.gt.f32.partialorder %v5593, 0.0
      %vm5602 = vcmp.gt.f32.partialorder %v5594, 0.0
      %vm5603 = vcmp.gt.f32.partialorder %v5595, 0.0
      %vm5604 = vcmp.gt.f32.partialorder %v5596, 0.0
      %vm5605 = vcmp.gt.f32.partialorder %v5597, 0.0
      %vm5606 = vcmp.gt.f32.partialorder %v5598, 0.0
      %vm5607 = vcmp.gt.f32.partialorder %v5599, 0.0
      %v5608 = vmul.f32 %v5592, 0.2
      %v5609 = vmul.f32 %v5593, 0.2
      %v5610 = vmul.f32 %v5594, 0.2
      %v5611 = vmul.f32 %v5595, 0.2
      %v5612 = vmul.f32 %v5596, 0.2
      %v5613 = vmul.f32 %v5597, 0.2
      %v5614 = vmul.f32 %v5598, 0.2
      %v5615 = vmul.f32 %v5599, 0.2
      %v5616 = vsel %vm5600, %v5592, %v5608
      %v5617 = vsel %vm5601, %v5593, %v5609
      %v5618 = vsel %vm5602, %v5594, %v5610
      %v5619 = vsel %vm5603, %v5595, %v5611
      %v5620 = vsel %vm5604, %v5596, %v5612
      %v5621 = vsel %vm5605, %v5597, %v5613
      %v5622 = vsel %vm5606, %v5598, %v5614
      %v5623 = vsel %vm5607, %v5599, %v5615
      %5624 = vst.msk [vmem:[%s224] sm:$0xff] %vm4618, %v5616
      %5625 = vst.msk [vmem:[%s224 + $0x8] sm:$0xff] %vm4618, %v5617
      %5626 = vst.msk [vmem:[%s224 + $0x10] sm:$0xff] %vm4618, %v5618
      %5627 = vst.msk [vmem:[%s224 + $0x18] sm:$0xff] %vm4618, %v5619
      %5628 = vst.msk [vmem:[%s224 + $0x20] sm:$0xff] %vm4618, %v5620
      %5629 = vst.msk [vmem:[%s224 + $0x28] sm:$0xff] %vm4618, %v5621
      %5630 = vst.msk [vmem:[%s224 + $0x30] sm:$0xff] %vm4618, %v5622
      %5631 = vst.msk [vmem:[%s224 + $0x38] sm:$0xff] %vm4618, %v5623
      %p5632 = scmp.lt.s32.totalorder %s16, 1
      %s5633 = scalar_select %p5632, %s16, 1
      %s5634 = smul.addr %s5633, 8
      %s5635 = smul.addr %s5634, 8
      %s5636 = scalar_lea.vmem %s5, %s5635
      // Predicated region
      $region41: #{tpu_custom_call.1} parent=39 // pred_check
        %p5637 = pneg %p144
      $region42: #{tpu_custom_call.1} parent=39 // pred_check_branch
        %5639 = sbr.rel (%p5637) target = $region44
      $region43: #{tpu_custom_call.1} parent=39 // pred_region
        _
      $region44: #{tpu_custom_call.1} parent=39 // pred_fallthru
        _
    $region40: #{tpu_custom_call.1} parent=5 // pred_fallthru
      _
    %p5640 = scmp.le.s32.totalorder 2, %s11
    // Predicated region
    $region45: #{tpu_custom_call.1} parent=5 // pred_check
      %p5641 = pneg %p5640
    $region46: #{tpu_custom_call.1} parent=5 // pred_check_branch
      %5643 = sbr.rel (%p5641) target = $region48
    $region47: #{tpu_custom_call.1} parent=5 // pred_region
      %s5644 = ssub.s32 %s11, 2
      // Predicated region
      $region49: #{tpu_custom_call.1} parent=47 // pred_check
        %p5645 = pneg %p150
      $region50: #{tpu_custom_call.1} parent=47 // pred_check_branch
        %5647 = sbr.rel (%p5645) target = $region52
      $region51: #{tpu_custom_call.1} parent=47 // pred_region
        %p5648 = scmp.lt.s32.totalorder %s17, 1
        %s5649 = scalar_select %p5648, %s17, 1
        %s5650 = smul.addr %s5649, 8
        %s5651 = smul.addr %s5650, 8
        %s5652 = scalar_lea.vmem %s5, %s5651
      $region52: #{tpu_custom_call.1} parent=47 // pred_fallthru
        _
    $region48: #{tpu_custom_call.1} parent=5 // pred_fallthru
      _
  $region6: #{tpu_custom_call.1} parent=0 // loop_footer
    %s15 = sadd.s32 1, %s11
  $region7: #{tpu_custom_call.1} parent=0 // loop_footer_branch
    %10 = sbr.rel target = $region3
  $region8: #{tpu_custom_call.1} parent=0 // loop_exit
    _

</llo_original>
